<compile_context>
chip_gen: v5e
topology: v5e:2x2
jax: 0.10.0
libtpu: 0.0.40
codegen_flags: <defaults>
</compile_context>

<pallas_src>
import functools

import jax
import jax.numpy as jnp
from jax.experimental import pallas as pl
from jax.experimental.pallas import tpu as pltpu

_MM_DTYPE = jnp.bfloat16   # MXU input dtype (f32 accumulate via preferred_element_type)


# ------------------------- in-kernel building blocks ------------------------ #

def _activate(acc, act):
    if act == 'leaky':
        return jnp.maximum(acc, 0.1 * acc)
    if act == 'relu':
        return jnp.maximum(acc, 0.0)
    return acc                      # 'linear'


def _conv_val(x, w_ref, b_ref, pad_ref, *, k, dil, act):
    """Same-padded stride-1 conv on an in-VMEM value.

    x:       (H, W, Cin) f32 value
    w_ref:   (k*k*Cin, Cout) bf16 ref (taps folded into K -> one MXU matmul)
    b_ref:   (1, Cout) f32 ref (BN folded)
    pad_ref: zero-initialized VMEM scratch used for spatial padding (k > 1 only)
    """
    H, W, cin = x.shape
    cout = w_ref.shape[1]
    if k == 1:
        lhs = x.reshape(H * W, cin)
    else:
        p = dil * (k // 2)
        # in-kernel padding: zero the scratch, write the interior, read k*k shifted taps
        pad_ref[...] = jnp.zeros(pad_ref.shape, jnp.float32)
        pad_ref[pl.ds(p, H), pl.ds(p, W), pl.ds(0, cin)] = x
        taps = [pad_ref[pl.ds(i * dil, H), pl.ds(j * dil, W), pl.ds(0, cin)]
                for i in range(k) for j in range(k)]
        # stack taps along K -> single (H*W, k*k*Cin) matmul operand
        lhs = jnp.concatenate(taps, axis=-1).reshape(H * W, k * k * cin)
    acc = jnp.dot(lhs.astype(_MM_DTYPE), w_ref[...],
                  preferred_element_type=jnp.float32)
    acc = acc + b_ref[...]                       # f32 bias / accumulator
    return _activate(acc, act).reshape(H, W, cout)


def _maxpool2_val(x):
    """2x2 / stride-2 max pool on a value (no strided ref access)."""
    H, W, C = x.shape
    x = x.reshape(H // 2, 2, W // 2, 2, C)
    return jnp.max(jnp.max(x, axis=3), axis=1)


def _upsample2_val(x):
    """Nearest-neighbor 2x upsample on a value."""
    H, W, C = x.shape
    x = jnp.broadcast_to(x[:, None, :, None, :], (H, 2, W, 2, C))
    return x.reshape(2 * H, 2 * W, C)


def _rfb_val(x, p, pad_ref, *, scale):
    """Receptive-Field-Block: 3 branches (1x1, 1x1->3x3, 1x1->3x3 dil2), fused
    1x1 linear over the implicit concat (sum of 3 matmuls on weight channel
    slices), 1x1 shortcut, scaled residual, relu.  All in VMEM."""
    H, W, _ = x.shape
    b0 = _conv_val(x, p['b0']['w'], p['b0']['b'], pad_ref, k=1, dil=1, act='relu')
    b1 = _conv_val(x, p['b1_0']['w'], p['b1_0']['b'], pad_ref, k=1, dil=1, act='relu')
    b1 = _conv_val(b1, p['b1_1']['w'], p['b1_1']['b'], pad_ref, k=3, dil=1, act='relu')
    b2 = _conv_val(x, p['b2_0']['w'], p['b2_0']['b'], pad_ref, k=1, dil=1, act='relu')
    b2 = _conv_val(b2, p['b2_1']['w'], p['b2_1']['b'], pad_ref, k=3, dil=2, act='relu')

    wl, bl = p['linear']['w'], p['linear']['b']
    inter = b0.shape[-1]
    cout = wl.shape[1]
    lin = bl[...]                                # start the accumulator from the bias
    for t, br in enumerate((b0, b1, b2)):        # 1x1-over-concat without the concat
        lin = lin + jnp.dot(br.reshape(H * W, inter).astype(_MM_DTYPE),
                            wl[pl.ds(t * inter, inter), :],
                            preferred_element_type=jnp.float32)
    lin = lin.reshape(H, W, cout)

    sc = _conv_val(x, p['shortcut']['w'], p['shortcut']['b'], pad_ref,
                   k=1, dil=1, act='linear')
    return jnp.maximum(scale * lin + sc, 0.0)


# ----------------------------- the fused kernel ----------------------------- #

def _network_kernel(*refs, treedef, module_defs, rfb_scales, n_params):
    """Whole DarkRFBNet forward for ONE image (grid iterates over batch)."""
    x_ref = refs[0]
    params = jax.tree_util.tree_unflatten(treedef, refs[1:1 + n_params])
    out_ref = refs[1 + n_params]
    pad_ref = refs[2 + n_params]                 # shared zero-padding scratch (VMEM)

    x = x_ref[...][0]                            # (H, W, Cin) f32
    layer_outputs = []
    for li, mdef in enumerate(module_defs):
        mtype = mdef['type']
        p = params[li]
        if mtype == 'convolutional':
            # TODO(synk): stride>1 and pad=0 darknet convs are not supported (not in cfg)
            x = _conv_val(x, p['w'], p['b'], pad_ref,
                          k=int(mdef['size']), dil=1,
                          act=mdef.get('activation', 'linear'))
        elif mtype == 'maxpool':
            # TODO(synk): only size=2/stride=2 pooling is implemented (matches cfg)
            x = _maxpool2_val(x)
        elif mtype == 'upsample':
            x = _upsample2_val(x)
        elif mtype == 'rfb':
            x = _rfb_val(x, p, pad_ref, scale=rfb_scales[li])
        elif mtype == 'route':
            idxs = [int(v) for v in mdef['layers'].split(',')]
            if len(idxs) == 1:
                x = layer_outputs[idxs[0]]
            else:
                # torch.cat(dim=1) over channels == last-axis concat in NHWC (in-VMEM)
                x = jnp.concatenate([layer_outputs[i] for i in idxs], axis=-1)
        elif mtype == 'shortcut':
            x = layer_outputs[-1] + layer_outputs[int(mdef['from'])]
        layer_outputs.append(x)

    out_ref[...] = x[None].astype(out_ref.dtype)


# ----------------------- parameters (deterministic init) -------------------- #

def _init_conv(key, k, cin, cout, bn=True):
    kw_, kb, kg, kbe, km, kv = jax.random.split(key, 6)
    w = 0.1 * jax.random.normal(kw_, (k, k, cin, cout), jnp.float32)
    if bn:  # fold eval-mode BatchNorm into conv weight/bias
        gamma = 1.0 + 0.1 * jax.random.normal(kg, (cout,), jnp.float32)
        beta = 0.1 * jax.random.normal(kbe, (cout,), jnp.float32)
        mean = 0.1 * jax.random.normal(km, (cout,), jnp.float32)
        var = 1.0 + 0.1 * jax.random.uniform(kv, (cout,), jnp.float32)
        scale = gamma / jnp.sqrt(var + 1e-5)
        w = w * scale
        bias = beta - mean * scale
    else:
        bias = 0.1 * jax.random.normal(kb, (cout,), jnp.float32)
    # (kh,kw,Cin,Cout) -> (kh*kw*Cin, Cout): taps folded into K so each conv is ONE
    # MXU matmul; weights bf16 (MXU-native), BN-folded bias stays f32.
    return {'w': w.reshape(k * k * cin, cout).astype(_MM_DTYPE),
            'b': bias.reshape(1, cout).astype(jnp.float32)}


def _init_rfb(key, cin):
    inter = max(cin // 2, 4)
    ks = jax.random.split(key, 7)
    return {
        'b0':       _init_conv(ks[0], 1, cin, inter),
        'b1_0':     _init_conv(ks[1], 1, cin, inter),
        'b1_1':     _init_conv(ks[2], 3, inter, inter),
        'b2_0':     _init_conv(ks[3], 1, cin, inter),
        'b2_1':     _init_conv(ks[4], 3, inter, inter),
        'linear':   _init_conv(ks[5], 1, 3 * inter, cin),
        'shortcut': _init_conv(ks[6], 1, cin, cin),
    }


# ------------------------------- the network -------------------------------- #

# Synthetic darknet-style cfg (stands in for parse_model_cfg(cfg_path)); exercises
# convolutional / maxpool / upsample / route / shortcut / rfb branches of forward().
MODULE_DEFS = [
    {'type': 'convolutional', 'batch_normalize': 1, 'filters': 8,  'size': 3, 'stride': 1, 'pad': 1, 'activation': 'leaky'},
    {'type': 'convolutional', 'batch_normalize': 1, 'filters': 16, 'size': 3, 'stride': 1, 'pad': 1, 'activation': 'leaky'},
    {'type': 'convolutional', 'batch_normalize': 1, 'filters': 8,  'size': 1, 'stride': 1, 'pad': 1, 'activation': 'leaky'},
    {'type': 'convolutional', 'batch_normalize': 1, 'filters': 16, 'size': 3, 'stride': 1, 'pad': 1, 'activation': 'leaky'},
    {'type': 'shortcut', 'from': '-3', 'activation': 'linear'},
    {'type': 'maxpool', 'size': 2, 'stride': 2},
    {'type': 'rfb', 'filters': 16},
    {'type': 'convolutional', 'batch_normalize': 1, 'filters': 32, 'size': 3, 'stride': 1, 'pad': 1, 'activation': 'leaky'},
    {'type': 'upsample', 'stride': 2},
    {'type': 'route', 'layers': '-1, 4'},
    {'type': 'convolutional', 'batch_normalize': 1, 'filters': 16, 'size': 1, 'stride': 1, 'pad': 1, 'activation': 'leaky'},
]


def _propagate_shapes(module_defs, in_c, H, W):
    """Static shape propagation; also sizes the shared padding scratch."""
    shapes = []
    h, w, c = H, W, in_c
    ph, pw, pc = 1, 1, 1
    for mdef in module_defs:
        t = mdef['type']
        if t == 'convolutional':
            k = int(mdef['size'])
            if k > 1:
                p = k // 2
                ph, pw, pc = max(ph, h + 2 * p), max(pw, w + 2 * p), max(pc, c)
            c = int(mdef['filters'])
        elif t == 'maxpool':
            h, w = h // 2, w // 2
        elif t == 'upsample':
            h, w = h * 2, w * 2
        elif t == 'rfb':
            inter = max(c // 2, 4)
            ph, pw, pc = max(ph, h + 4), max(pw, w + 4), max(pc, inter)  # 3x3 dil<=2
        elif t == 'route':
            idxs = [int(v) for v in mdef['layers'].split(',')]
            picked = [shapes[i] for i in idxs]
            h, w = picked[0][0], picked[0][1]
            c = sum(s[2] for s in picked)
        elif t == 'shortcut':
            h, w, c = shapes[int(mdef['from'])]
        shapes.append((h, w, c))
    return shapes, (ph, pw, pc)


class DarkRFBNetPallas:
    """DarkNet backbone + RFB; the whole forward loop is traced into ONE Pallas kernel."""

    def __init__(self, key, in_channels=4, img_size=16):
        self.module_defs = [dict(d) for d in MODULE_DEFS]
        self.img_size = img_size
        self.in_channels = in_channels
        self.params = []                 # per-module param pytree (None for param-less)
        self.rfb_scales = {}
        out_filters = [in_channels]
        for li, mdef in enumerate(self.module_defs):
            lkey = jax.random.fold_in(key, li)
            mtype = mdef['type']
            if mtype == 'convolutional':
                filters = int(mdef['filters'])
                bn = bool(int(mdef.get('batch_normalize', 0)))
                p = _init_conv(lkey, int(mdef['size']), out_filters[-1], filters, bn=bn)
            elif mtype == 'rfb':
                p = _init_rfb(lkey, out_filters[-1])
                self.rfb_scales[li] = 0.1
                filters = out_filters[-1]
            elif mtype in ('maxpool', 'upsample'):
                p, filters = None, out_filters[-1]
            elif mtype == 'route':
                idxs = [int(v) for v in mdef['layers'].split(',')]
                p, filters = None, sum(out_filters[1:][i] for i in idxs)
            elif mtype == 'shortcut':
                p, filters = None, out_filters[1:][int(mdef['from'])]
            else:
                raise ValueError(mtype)
            out_filters.append(filters)
            self.params.append(p)
        self._fwd_cache = {}

    def _build(self, N, H, W, C):
        shapes, pad_shape = _propagate_shapes(self.module_defs, C, H, W)
        Ho, Wo, Co = shapes[-1]
        leaves, treedef = jax.tree_util.tree_flatten(self.params)

        kernel = functools.partial(
            _network_kernel, treedef=treedef, module_defs=self.module_defs,
            rfb_scales=self.rfb_scales, n_params=len(leaves))

        # one image per grid program -> 2 parallel programs keep both v7x TCs busy;
        # weights use whole-array blocks with grid-independent index maps.
        in_specs = [pl.BlockSpec((1, H, W, C), lambda n: (n, 0, 0, 0))]
        for leaf in leaves:
            in_specs.append(pl.BlockSpec(leaf.shape,
                                         lambda n, nd=leaf.ndim: (0,) * nd))

        # TODO(synk): for real darknet resolutions, tile H with a halo and set
        # pltpu.CompilerParams(vmem_limit_bytes=...) so blocks fit v7x's 64 MiB VMEM.
        call = pl.pallas_call(
            kernel,
            out_shape=jax.ShapeDtypeStruct((N, Ho, Wo, Co), jnp.float32),
            grid=(N,),
            in_specs=in_specs,
            out_specs=pl.BlockSpec((1, Ho, Wo, Co), lambda n: (n, 0, 0, 0)),
            scratch_shapes=[pltpu.VMEM(pad_shape, jnp.float32)],
            compiler_params=pltpu.CompilerParams(
                dimension_semantics=("parallel",)),
        )
        return call, leaves

    def __call__(self, x_nchw, targets=None, var=0):
        # NCHW (PyTorch convention) -> NHWC (kernel layout)
        x = jnp.transpose(x_nchw.astype(jnp.float32), (0, 2, 3, 1))
        N, H, W, C = x.shape
        cache_key = (N, H, W, C)
        if cache_key not in self._fwd_cache:
            self._fwd_cache[cache_key] = self._build(N, H, W, C)
        call, leaves = self._fwd_cache[cache_key]
        y = call(x, *leaves)
        # NHWC -> NCHW to match the PyTorch return convention
        return jnp.transpose(y, (0, 3, 1, 2))


# ----------------------------------- main ----------------------------------- #

if __name__ == "__main__":
    key = jax.random.PRNGKey(0)
    pkey, xkey = jax.random.split(key)

    net = DarkRFBNetPallas(pkey, in_channels=4, img_size=16)

    x = jax.random.normal(xkey, (2, 4, 16, 16), jnp.float32)   # NCHW like PyTorch
    y = net(x)
    y = jax.block_until_ready(y)

    assert y.shape == (2, 16, 16, 16), y.shape
    assert bool(jnp.all(jnp.isfinite(y)))
    print("KERNEL_OK")
</pallas_src>

<mosaic_0001>
module attributes {stable_mosaic.version = 11 : i64} {
  func.func @_network_kernel(%arg0: i32, %arg1: memref<1x16x16x4xf32, #tpu.memory_space<vmem>>, %arg2: memref<1x8xf32, #tpu.memory_space<vmem>>, %arg3: memref<36x8xbf16, #tpu.memory_space<vmem>>, %arg4: memref<1x16xf32, #tpu.memory_space<vmem>>, %arg5: memref<72x16xbf16, #tpu.memory_space<vmem>>, %arg6: memref<1x8xf32, #tpu.memory_space<vmem>>, %arg7: memref<16x8xbf16, #tpu.memory_space<vmem>>, %arg8: memref<1x16xf32, #tpu.memory_space<vmem>>, %arg9: memref<72x16xbf16, #tpu.memory_space<vmem>>, %arg10: memref<1x8xf32, #tpu.memory_space<vmem>>, %arg11: memref<16x8xbf16, #tpu.memory_space<vmem>>, %arg12: memref<1x8xf32, #tpu.memory_space<vmem>>, %arg13: memref<16x8xbf16, #tpu.memory_space<vmem>>, %arg14: memref<1x8xf32, #tpu.memory_space<vmem>>, %arg15: memref<72x8xbf16, #tpu.memory_space<vmem>>, %arg16: memref<1x8xf32, #tpu.memory_space<vmem>>, %arg17: memref<16x8xbf16, #tpu.memory_space<vmem>>, %arg18: memref<1x8xf32, #tpu.memory_space<vmem>>, %arg19: memref<72x8xbf16, #tpu.memory_space<vmem>>, %arg20: memref<1x16xf32, #tpu.memory_space<vmem>>, %arg21: memref<24x16xbf16, #tpu.memory_space<vmem>>, %arg22: memref<1x16xf32, #tpu.memory_space<vmem>>, %arg23: memref<16x16xbf16, #tpu.memory_space<vmem>>, %arg24: memref<1x32xf32, #tpu.memory_space<vmem>>, %arg25: memref<144x32xbf16, #tpu.memory_space<vmem>>, %arg26: memref<1x16xf32, #tpu.memory_space<vmem>>, %arg27: memref<48x16xbf16, #tpu.memory_space<vmem>>, %arg28: memref<1x16x16x16xf32, #tpu.memory_space<vmem>>, %arg29: memref<18x18x16xf32, #tpu.memory_space<vmem>>) attributes {dimension_semantics = [#tpu.dimension_semantics<parallel>], iteration_bounds = array<i64: 2>, scalar_prefetch = 0 : i64, scratch_operands = 1 : i64, tpu.core_type = #tpu.core_type<tc>, window_params = [{transform_indices = @transform_0, window_bounds = array<i64: 1, 16, 16, 4>}, {pipeline_mode = #tpu.pipeline_mode<synchronous>, transform_indices = @transform_1, window_bounds = array<i64: 1, 8>}, {pipeline_mode = #tpu.pipeline_mode<synchronous>, transform_indices = @transform_2, window_bounds = array<i64: 36, 8>}, {pipeline_mode = #tpu.pipeline_mode<synchronous>, transform_indices = @transform_3, window_bounds = array<i64: 1, 16>}, {pipeline_mode = #tpu.pipeline_mode<synchronous>, transform_indices = @transform_4, window_bounds = array<i64: 72, 16>}, {pipeline_mode = #tpu.pipeline_mode<synchronous>, transform_indices = @transform_5, window_bounds = array<i64: 1, 8>}, {pipeline_mode = #tpu.pipeline_mode<synchronous>, transform_indices = @transform_6, window_bounds = array<i64: 16, 8>}, {pipeline_mode = #tpu.pipeline_mode<synchronous>, transform_indices = @transform_7, window_bounds = array<i64: 1, 16>}, {pipeline_mode = #tpu.pipeline_mode<synchronous>, transform_indices = @transform_8, window_bounds = array<i64: 72, 16>}, {pipeline_mode = #tpu.pipeline_mode<synchronous>, transform_indices = @transform_9, window_bounds = array<i64: 1, 8>}, {pipeline_mode = #tpu.pipeline_mode<synchronous>, transform_indices = @transform_10, window_bounds = array<i64: 16, 8>}, {pipeline_mode = #tpu.pipeline_mode<synchronous>, transform_indices = @transform_11, window_bounds = array<i64: 1, 8>}, {pipeline_mode = #tpu.pipeline_mode<synchronous>, transform_indices = @transform_12, window_bounds = array<i64: 16, 8>}, {pipeline_mode = #tpu.pipeline_mode<synchronous>, transform_indices = @transform_13, window_bounds = array<i64: 1, 8>}, {pipeline_mode = #tpu.pipeline_mode<synchronous>, transform_indices = @transform_14, window_bounds = array<i64: 72, 8>}, {pipeline_mode = #tpu.pipeline_mode<synchronous>, transform_indices = @transform_15, window_bounds = array<i64: 1, 8>}, {pipeline_mode = #tpu.pipeline_mode<synchronous>, transform_indices = @transform_16, window_bounds = array<i64: 16, 8>}, {pipeline_mode = #tpu.pipeline_mode<synchronous>, transform_indices = @transform_17, window_bounds = array<i64: 1, 8>}, {pipeline_mode = #tpu.pipeline_mode<synchronous>, transform_indices = @transform_18, window_bounds = array<i64: 72, 8>}, {pipeline_mode = #tpu.pipeline_mode<synchronous>, transform_indices = @transform_19, window_bounds = array<i64: 1, 16>}, {pipeline_mode = #tpu.pipeline_mode<synchronous>, transform_indices = @transform_20, window_bounds = array<i64: 24, 16>}, {pipeline_mode = #tpu.pipeline_mode<synchronous>, transform_indices = @transform_21, window_bounds = array<i64: 1, 16>}, {pipeline_mode = #tpu.pipeline_mode<synchronous>, transform_indices = @transform_22, window_bounds = array<i64: 16, 16>}, {pipeline_mode = #tpu.pipeline_mode<synchronous>, transform_indices = @transform_23, window_bounds = array<i64: 1, 32>}, {pipeline_mode = #tpu.pipeline_mode<synchronous>, transform_indices = @transform_24, window_bounds = array<i64: 144, 32>}, {pipeline_mode = #tpu.pipeline_mode<synchronous>, transform_indices = @transform_25, window_bounds = array<i64: 1, 16>}, {pipeline_mode = #tpu.pipeline_mode<synchronous>, transform_indices = @transform_26, window_bounds = array<i64: 48, 16>}, {transform_indices = @transform_27, window_bounds = array<i64: 1, 16, 16, 16>}]} {
    %c0 = arith.constant 0 : index
    %c0_0 = arith.constant 0 : index
    %c0_1 = arith.constant 0 : index
    %c0_2 = arith.constant 0 : index
    %0 = vector.load %arg1[%c0, %c0_0, %c0_1, %c0_2] : memref<1x16x16x4xf32, #tpu.memory_space<vmem>>, vector<1x16x16x4xf32>
    %1 = vector.shape_cast %0 : vector<1x16x16x4xf32> to vector<16x16x4xf32>
    %cst = arith.constant 0.000000e+00 : f32
    %2 = vector.broadcast %cst : f32 to vector<18x18x16xf32>
    %c0_3 = arith.constant 0 : index
    %c0_4 = arith.constant 0 : index
    %c0_5 = arith.constant 0 : index
    %3 = vector.load %arg29[%c0_3, %c0_4, %c0_5] : memref<18x18x16xf32, #tpu.memory_space<vmem>>, vector<18x18x16xf32>
    tpu.vector_store %arg29[%c0_3, %c0_4, %c0_5], %2 {strides = array<i32>} : memref<18x18x16xf32, #tpu.memory_space<vmem>>, vector<18x18x16xf32>,
    %c1 = arith.constant 1 : index
    %c1_6 = arith.constant 1 : index
    %c0_7 = arith.constant 0 : index
    %4 = vector.load %arg29[%c1, %c1_6, %c0_7] : memref<18x18x16xf32, #tpu.memory_space<vmem>>, vector<16x16x4xf32>
    tpu.vector_store %arg29[%c1, %c1_6, %c0_7], %1 {strides = array<i32>} : memref<18x18x16xf32, #tpu.memory_space<vmem>>, vector<16x16x4xf32>,
    %c0_8 = arith.constant 0 : index
    %c0_9 = arith.constant 0 : index
    %c0_10 = arith.constant 0 : index
    %5 = vector.load %arg29[%c0_8, %c0_9, %c0_10] : memref<18x18x16xf32, #tpu.memory_space<vmem>>, vector<16x16x4xf32>
    %c0_11 = arith.constant 0 : index
    %c1_12 = arith.constant 1 : index
    %c0_13 = arith.constant 0 : index
    %6 = vector.load %arg29[%c0_11, %c1_12, %c0_13] : memref<18x18x16xf32, #tpu.memory_space<vmem>>, vector<16x16x4xf32>
    %c0_14 = arith.constant 0 : index
    %c2 = arith.constant 2 : index
    %c0_15 = arith.constant 0 : index
    %7 = vector.load %arg29[%c0_14, %c2, %c0_15] : memref<18x18x16xf32, #tpu.memory_space<vmem>>, vector<16x16x4xf32>
    %c1_16 = arith.constant 1 : index
    %c0_17 = arith.constant 0 : index
    %c0_18 = arith.constant 0 : index
    %8 = vector.load %arg29[%c1_16, %c0_17, %c0_18] : memref<18x18x16xf32, #tpu.memory_space<vmem>>, vector<16x16x4xf32>
    %c1_19 = arith.constant 1 : index
    %c1_20 = arith.constant 1 : index
    %c0_21 = arith.constant 0 : index
    %9 = vector.load %arg29[%c1_19, %c1_20, %c0_21] : memref<18x18x16xf32, #tpu.memory_space<vmem>>, vector<16x16x4xf32>
    %c1_22 = arith.constant 1 : index
    %c2_23 = arith.constant 2 : index
    %c0_24 = arith.constant 0 : index
    %10 = vector.load %arg29[%c1_22, %c2_23, %c0_24] : memref<18x18x16xf32, #tpu.memory_space<vmem>>, vector<16x16x4xf32>
    %c2_25 = arith.constant 2 : index
    %c0_26 = arith.constant 0 : index
    %c0_27 = arith.constant 0 : index
    %11 = vector.load %arg29[%c2_25, %c0_26, %c0_27] : memref<18x18x16xf32, #tpu.memory_space<vmem>>, vector<16x16x4xf32>
    %c2_28 = arith.constant 2 : index
    %c1_29 = arith.constant 1 : index
    %c0_30 = arith.constant 0 : index
    %12 = vector.load %arg29[%c2_28, %c1_29, %c0_30] : memref<18x18x16xf32, #tpu.memory_space<vmem>>, vector<16x16x4xf32>
    %c2_31 = arith.constant 2 : index
    %c2_32 = arith.constant 2 : index
    %c0_33 = arith.constant 0 : index
    %13 = vector.load %arg29[%c2_31, %c2_32, %c0_33] : memref<18x18x16xf32, #tpu.memory_space<vmem>>, vector<16x16x4xf32>
    %14 = tpu.concatenate %5, %6, %7, %8, %9, %10, %11, %12, %13 in 2 : vector<16x16x4xf32>, vector<16x16x4xf32>, vector<16x16x4xf32>, vector<16x16x4xf32>, vector<16x16x4xf32>, vector<16x16x4xf32>, vector<16x16x4xf32>, vector<16x16x4xf32>, vector<16x16x4xf32> -> vector<16x16x36xf32>
    %15 = vector.shape_cast %14 : vector<16x16x36xf32> to vector<256x36xf32>
    %16 = arith.truncf %15 : vector<256x36xf32> to vector<256x36xbf16>
    %c0_34 = arith.constant 0 : index
    %c0_35 = arith.constant 0 : index
    %17 = vector.load %arg3[%c0_34, %c0_35] : memref<36x8xbf16, #tpu.memory_space<vmem>>, vector<36x8xbf16>
    %cst_36 = arith.constant dense<0.000000e+00> : vector<256x8xf32>
    %18 = tpu.matmul %16, %17, %cst_36 {dimension_numbers = #tpu.dot_dimension_numbers<[1], [0], [0], [1], [0, 0, 1, 1], [], []>} : vector<256x36xbf16>, vector<36x8xbf16>, vector<256x8xf32> -> vector<256x8xf32>
    %c0_37 = arith.constant 0 : index
    %c0_38 = arith.constant 0 : index
    %19 = vector.load %arg2[%c0_37, %c0_38] : memref<1x8xf32, #tpu.memory_space<vmem>>, vector<1x8xf32>
    %20 = vector.broadcast %19 : vector<1x8xf32> to vector<256x8xf32>
    %21 = arith.addf %18, %20 : vector<256x8xf32>
    %cst_39 = arith.constant 1.000000e-01 : f32
    %22 = vector.broadcast %cst_39 : f32 to vector<256x8xf32>
    %23 = arith.mulf %22, %21 : vector<256x8xf32>
    %24 = arith.maximumf %21, %23 : vector<256x8xf32>
    %25 = vector.shape_cast %24 : vector<256x8xf32> to vector<16x16x8xf32>
    %cst_40 = arith.constant 0.000000e+00 : f32
    %26 = vector.broadcast %cst_40 : f32 to vector<18x18x16xf32>
    %c0_41 = arith.constant 0 : index
    %c0_42 = arith.constant 0 : index
    %c0_43 = arith.constant 0 : index
    %27 = vector.load %arg29[%c0_41, %c0_42, %c0_43] : memref<18x18x16xf32, #tpu.memory_space<vmem>>, vector<18x18x16xf32>
    tpu.vector_store %arg29[%c0_41, %c0_42, %c0_43], %26 {strides = array<i32>} : memref<18x18x16xf32, #tpu.memory_space<vmem>>, vector<18x18x16xf32>,
    %c1_44 = arith.constant 1 : index
    %c1_45 = arith.constant 1 : index
    %c0_46 = arith.constant 0 : index
    %28 = vector.load %arg29[%c1_44, %c1_45, %c0_46] : memref<18x18x16xf32, #tpu.memory_space<vmem>>, vector<16x16x8xf32>
    tpu.vector_store %arg29[%c1_44, %c1_45, %c0_46], %25 {strides = array<i32>} : memref<18x18x16xf32, #tpu.memory_space<vmem>>, vector<16x16x8xf32>,
    %c0_47 = arith.constant 0 : index
    %c0_48 = arith.constant 0 : index
    %c0_49 = arith.constant 0 : index
    %29 = vector.load %arg29[%c0_47, %c0_48, %c0_49] : memref<18x18x16xf32, #tpu.memory_space<vmem>>, vector<16x16x8xf32>
    %c0_50 = arith.constant 0 : index
    %c1_51 = arith.constant 1 : index
    %c0_52 = arith.constant 0 : index
    %30 = vector.load %arg29[%c0_50, %c1_51, %c0_52] : memref<18x18x16xf32, #tpu.memory_space<vmem>>, vector<16x16x8xf32>
    %c0_53 = arith.constant 0 : index
    %c2_54 = arith.constant 2 : index
    %c0_55 = arith.constant 0 : index
    %31 = vector.load %arg29[%c0_53, %c2_54, %c0_55] : memref<18x18x16xf32, #tpu.memory_space<vmem>>, vector<16x16x8xf32>
    %c1_56 = arith.constant 1 : index
    %c0_57 = arith.constant 0 : index
    %c0_58 = arith.constant 0 : index
    %32 = vector.load %arg29[%c1_56, %c0_57, %c0_58] : memref<18x18x16xf32, #tpu.memory_space<vmem>>, vector<16x16x8xf32>
    %c1_59 = arith.constant 1 : index
    %c1_60 = arith.constant 1 : index
    %c0_61 = arith.constant 0 : index
    %33 = vector.load %arg29[%c1_59, %c1_60, %c0_61] : memref<18x18x16xf32, #tpu.memory_space<vmem>>, vector<16x16x8xf32>
    %c1_62 = arith.constant 1 : index
    %c2_63 = arith.constant 2 : index
    %c0_64 = arith.constant 0 : index
    %34 = vector.load %arg29[%c1_62, %c2_63, %c0_64] : memref<18x18x16xf32, #tpu.memory_space<vmem>>, vector<16x16x8xf32>
    %c2_65 = arith.constant 2 : index
    %c0_66 = arith.constant 0 : index
    %c0_67 = arith.constant 0 : index
    %35 = vector.load %arg29[%c2_65, %c0_66, %c0_67] : memref<18x18x16xf32, #tpu.memory_space<vmem>>, vector<16x16x8xf32>
    %c2_68 = arith.constant 2 : index
    %c1_69 = arith.constant 1 : index
    %c0_70 = arith.constant 0 : index
    %36 = vector.load %arg29[%c2_68, %c1_69, %c0_70] : memref<18x18x16xf32, #tpu.memory_space<vmem>>, vector<16x16x8xf32>
    %c2_71 = arith.constant 2 : index
    %c2_72 = arith.constant 2 : index
    %c0_73 = arith.constant 0 : index
    %37 = vector.load %arg29[%c2_71, %c2_72, %c0_73] : memref<18x18x16xf32, #tpu.memory_space<vmem>>, vector<16x16x8xf32>
    %38 = tpu.concatenate %29, %30, %31, %32, %33, %34, %35, %36, %37 in 2 : vector<16x16x8xf32>, vector<16x16x8xf32>, vector<16x16x8xf32>, vector<16x16x8xf32>, vector<16x16x8xf32>, vector<16x16x8xf32>, vector<16x16x8xf32>, vector<16x16x8xf32>, vector<16x16x8xf32> -> vector<16x16x72xf32>
    %39 = vector.shape_cast %38 : vector<16x16x72xf32> to vector<256x72xf32>
    %40 = arith.truncf %39 : vector<256x72xf32> to vector<256x72xbf16>
    %c0_74 = arith.constant 0 : index
    %c0_75 = arith.constant 0 : index
    %41 = vector.load %arg5[%c0_74, %c0_75] : memref<72x16xbf16, #tpu.memory_space<vmem>>, vector<72x16xbf16>
    %cst_76 = arith.constant dense<0.000000e+00> : vector<256x16xf32>
    %42 = tpu.matmul %40, %41, %cst_76 {dimension_numbers = #tpu.dot_dimension_numbers<[1], [0], [0], [1], [0, 0, 1, 1], [], []>} : vector<256x72xbf16>, vector<72x16xbf16>, vector<256x16xf32> -> vector<256x16xf32>
    %c0_77 = arith.constant 0 : index
    %c0_78 = arith.constant 0 : index
    %43 = vector.load %arg4[%c0_77, %c0_78] : memref<1x16xf32, #tpu.memory_space<vmem>>, vector<1x16xf32>
    %44 = vector.broadcast %43 : vector<1x16xf32> to vector<256x16xf32>
    %45 = arith.addf %42, %44 : vector<256x16xf32>
    %cst_79 = arith.constant 1.000000e-01 : f32
    %46 = vector.broadcast %cst_79 : f32 to vector<256x16xf32>
    %47 = arith.mulf %46, %45 : vector<256x16xf32>
    %48 = arith.maximumf %45, %47 : vector<256x16xf32>
    %49 = vector.shape_cast %48 : vector<256x16xf32> to vector<16x16x16xf32>
    %50 = vector.shape_cast %49 : vector<16x16x16xf32> to vector<256x16xf32>
    %51 = arith.truncf %50 : vector<256x16xf32> to vector<256x16xbf16>
    %c0_80 = arith.constant 0 : index
    %c0_81 = arith.constant 0 : index
    %52 = vector.load %arg7[%c0_80, %c0_81] : memref<16x8xbf16, #tpu.memory_space<vmem>>, vector<16x8xbf16>
    %cst_82 = arith.constant dense<0.000000e+00> : vector<256x8xf32>
    %53 = tpu.matmul %51, %52, %cst_82 {dimension_numbers = #tpu.dot_dimension_numbers<[1], [0], [0], [1], [0, 0, 1, 1], [], []>} : vector<256x16xbf16>, vector<16x8xbf16>, vector<256x8xf32> -> vector<256x8xf32>
    %c0_83 = arith.constant 0 : index
    %c0_84 = arith.constant 0 : index
    %54 = vector.load %arg6[%c0_83, %c0_84] : memref<1x8xf32, #tpu.memory_space<vmem>>, vector<1x8xf32>
    %55 = vector.broadcast %54 : vector<1x8xf32> to vector<256x8xf32>
    %56 = arith.addf %53, %55 : vector<256x8xf32>
    %cst_85 = arith.constant 1.000000e-01 : f32
    %57 = vector.broadcast %cst_85 : f32 to vector<256x8xf32>
    %58 = arith.mulf %57, %56 : vector<256x8xf32>
    %59 = arith.maximumf %56, %58 : vector<256x8xf32>
    %60 = vector.shape_cast %59 : vector<256x8xf32> to vector<16x16x8xf32>
    %cst_86 = arith.constant 0.000000e+00 : f32
    %61 = vector.broadcast %cst_86 : f32 to vector<18x18x16xf32>
    %c0_87 = arith.constant 0 : index
    %c0_88 = arith.constant 0 : index
    %c0_89 = arith.constant 0 : index
    %62 = vector.load %arg29[%c0_87, %c0_88, %c0_89] : memref<18x18x16xf32, #tpu.memory_space<vmem>>, vector<18x18x16xf32>
    tpu.vector_store %arg29[%c0_87, %c0_88, %c0_89], %61 {strides = array<i32>} : memref<18x18x16xf32, #tpu.memory_space<vmem>>, vector<18x18x16xf32>,
    %c1_90 = arith.constant 1 : index
    %c1_91 = arith.constant 1 : index
    %c0_92 = arith.constant 0 : index
    %63 = vector.load %arg29[%c1_90, %c1_91, %c0_92] : memref<18x18x16xf32, #tpu.memory_space<vmem>>, vector<16x16x8xf32>
    tpu.vector_store %arg29[%c1_90, %c1_91, %c0_92], %60 {strides = array<i32>} : memref<18x18x16xf32, #tpu.memory_space<vmem>>, vector<16x16x8xf32>,
    %c0_93 = arith.constant 0 : index
    %c0_94 = arith.constant 0 : index
    %c0_95 = arith.constant 0 : index
    %64 = vector.load %arg29[%c0_93, %c0_94, %c0_95] : memref<18x18x16xf32, #tpu.memory_space<vmem>>, vector<16x16x8xf32>
    %c0_96 = arith.constant 0 : index
    %c1_97 = arith.constant 1 : index
    %c0_98 = arith.constant 0 : index
    %65 = vector.load %arg29[%c0_96, %c1_97, %c0_98] : memref<18x18x16xf32, #tpu.memory_space<vmem>>, vector<16x16x8xf32>
    %c0_99 = arith.constant 0 : index
    %c2_100 = arith.constant 2 : index
    %c0_101 = arith.constant 0 : index
    %66 = vector.load %arg29[%c0_99, %c2_100, %c0_101] : memref<18x18x16xf32, #tpu.memory_space<vmem>>, vector<16x16x8xf32>
    %c1_102 = arith.constant 1 : index
    %c0_103 = arith.constant 0 : index
    %c0_104 = arith.constant 0 : index
    %67 = vector.load %arg29[%c1_102, %c0_103, %c0_104] : memref<18x18x16xf32, #tpu.memory_space<vmem>>, vector<16x16x8xf32>
    %c1_105 = arith.constant 1 : index
    %c1_106 = arith.constant 1 : index
    %c0_107 = arith.constant 0 : index
    %68 = vector.load %arg29[%c1_105, %c1_106, %c0_107] : memref<18x18x16xf32, #tpu.memory_space<vmem>>, vector<16x16x8xf32>
    %c1_108 = arith.constant 1 : index
    %c2_109 = arith.constant 2 : index
    %c0_110 = arith.constant 0 : index
    %69 = vector.load %arg29[%c1_108, %c2_109, %c0_110] : memref<18x18x16xf32, #tpu.memory_space<vmem>>, vector<16x16x8xf32>
    %c2_111 = arith.constant 2 : index
    %c0_112 = arith.constant 0 : index
    %c0_113 = arith.constant 0 : index
    %70 = vector.load %arg29[%c2_111, %c0_112, %c0_113] : memref<18x18x16xf32, #tpu.memory_space<vmem>>, vector<16x16x8xf32>
    %c2_114 = arith.constant 2 : index
    %c1_115 = arith.constant 1 : index
    %c0_116 = arith.constant 0 : index
    %71 = vector.load %arg29[%c2_114, %c1_115, %c0_116] : memref<18x18x16xf32, #tpu.memory_space<vmem>>, vector<16x16x8xf32>
    %c2_117 = arith.constant 2 : index
    %c2_118 = arith.constant 2 : index
    %c0_119 = arith.constant 0 : index
    %72 = vector.load %arg29[%c2_117, %c2_118, %c0_119] : memref<18x18x16xf32, #tpu.memory_space<vmem>>, vector<16x16x8xf32>
    %73 = tpu.concatenate %64, %65, %66, %67, %68, %69, %70, %71, %72 in 2 : vector<16x16x8xf32>, vector<16x16x8xf32>, vector<16x16x8xf32>, vector<16x16x8xf32>, vector<16x16x8xf32>, vector<16x16x8xf32>, vector<16x16x8xf32>, vector<16x16x8xf32>, vector<16x16x8xf32> -> vector<16x16x72xf32>
    %74 = vector.shape_cast %73 : vector<16x16x72xf32> to vector<256x72xf32>
    %75 = arith.truncf %74 : vector<256x72xf32> to vector<256x72xbf16>
    %c0_120 = arith.constant 0 : index
    %c0_121 = arith.constant 0 : index
    %76 = vector.load %arg9[%c0_120, %c0_121] : memref<72x16xbf16, #tpu.memory_space<vmem>>, vector<72x16xbf16>
    %cst_122 = arith.constant dense<0.000000e+00> : vector<256x16xf32>
    %77 = tpu.matmul %75, %76, %cst_122 {dimension_numbers = #tpu.dot_dimension_numbers<[1], [0], [0], [1], [0, 0, 1, 1], [], []>} : vector<256x72xbf16>, vector<72x16xbf16>, vector<256x16xf32> -> vector<256x16xf32>
    %c0_123 = arith.constant 0 : index
    %c0_124 = arith.constant 0 : index
    %78 = vector.load %arg8[%c0_123, %c0_124] : memref<1x16xf32, #tpu.memory_space<vmem>>, vector<1x16xf32>
    %79 = vector.broadcast %78 : vector<1x16xf32> to vector<256x16xf32>
    %80 = arith.addf %77, %79 : vector<256x16xf32>
    %cst_125 = arith.constant 1.000000e-01 : f32
    %81 = vector.broadcast %cst_125 : f32 to vector<256x16xf32>
    %82 = arith.mulf %81, %80 : vector<256x16xf32>
    %83 = arith.maximumf %80, %82 : vector<256x16xf32>
    %84 = vector.shape_cast %83 : vector<256x16xf32> to vector<16x16x16xf32>
    %85 = arith.addf %84, %49 : vector<16x16x16xf32>
    %86 = vector.shape_cast %85 : vector<16x16x16xf32> to vector<8x2x8x2x16xf32>
    %cst_126 = arith.constant dense<0xFF800000> : vector<8x2x8x16xf32>
    %87 = vector.multi_reduction <maximumf>, %86, %cst_126 [3] : vector<8x2x8x2x16xf32> to vector<8x2x8x16xf32>
    %cst_127 = arith.constant dense<0xFF800000> : vector<8x8x16xf32>
    %88 = vector.multi_reduction <maximumf>, %87, %cst_127 [1] : vector<8x2x8x16xf32> to vector<8x8x16xf32>
    %89 = vector.shape_cast %88 : vector<8x8x16xf32> to vector<64x16xf32>
    %90 = arith.truncf %89 : vector<64x16xf32> to vector<64x16xbf16>
    %c0_128 = arith.constant 0 : index
    %c0_129 = arith.constant 0 : index
    %91 = vector.load %arg11[%c0_128, %c0_129] : memref<16x8xbf16, #tpu.memory_space<vmem>>, vector<16x8xbf16>
    %cst_130 = arith.constant dense<0.000000e+00> : vector<64x8xf32>
    %92 = tpu.matmul %90, %91, %cst_130 {dimension_numbers = #tpu.dot_dimension_numbers<[1], [0], [0], [1], [0, 0, 1, 1], [], []>} : vector<64x16xbf16>, vector<16x8xbf16>, vector<64x8xf32> -> vector<64x8xf32>
    %c0_131 = arith.constant 0 : index
    %c0_132 = arith.constant 0 : index
    %93 = vector.load %arg10[%c0_131, %c0_132] : memref<1x8xf32, #tpu.memory_space<vmem>>, vector<1x8xf32>
    %94 = vector.broadcast %93 : vector<1x8xf32> to vector<64x8xf32>
    %95 = arith.addf %92, %94 : vector<64x8xf32>
    %cst_133 = arith.constant 0.000000e+00 : f32
    %96 = vector.broadcast %cst_133 : f32 to vector<64x8xf32>
    %97 = arith.maximumf %95, %96 : vector<64x8xf32>
    %98 = vector.shape_cast %97 : vector<64x8xf32> to vector<8x8x8xf32>
    %99 = vector.shape_cast %88 : vector<8x8x16xf32> to vector<64x16xf32>
    %100 = arith.truncf %99 : vector<64x16xf32> to vector<64x16xbf16>
    %c0_134 = arith.constant 0 : index
    %c0_135 = arith.constant 0 : index
    %101 = vector.load %arg13[%c0_134, %c0_135] : memref<16x8xbf16, #tpu.memory_space<vmem>>, vector<16x8xbf16>
    %cst_136 = arith.constant dense<0.000000e+00> : vector<64x8xf32>
    %102 = tpu.matmul %100, %101, %cst_136 {dimension_numbers = #tpu.dot_dimension_numbers<[1], [0], [0], [1], [0, 0, 1, 1], [], []>} : vector<64x16xbf16>, vector<16x8xbf16>, vector<64x8xf32> -> vector<64x8xf32>
    %c0_137 = arith.constant 0 : index
    %c0_138 = arith.constant 0 : index
    %103 = vector.load %arg12[%c0_137, %c0_138] : memref<1x8xf32, #tpu.memory_space<vmem>>, vector<1x8xf32>
    %104 = vector.broadcast %103 : vector<1x8xf32> to vector<64x8xf32>
    %105 = arith.addf %102, %104 : vector<64x8xf32>
    %cst_139 = arith.constant 0.000000e+00 : f32
    %106 = vector.broadcast %cst_139 : f32 to vector<64x8xf32>
    %107 = arith.maximumf %105, %106 : vector<64x8xf32>
    %108 = vector.shape_cast %107 : vector<64x8xf32> to vector<8x8x8xf32>
    %cst_140 = arith.constant 0.000000e+00 : f32
    %109 = vector.broadcast %cst_140 : f32 to vector<18x18x16xf32>
    %c0_141 = arith.constant 0 : index
    %c0_142 = arith.constant 0 : index
    %c0_143 = arith.constant 0 : index
    %110 = vector.load %arg29[%c0_141, %c0_142, %c0_143] : memref<18x18x16xf32, #tpu.memory_space<vmem>>, vector<18x18x16xf32>
    tpu.vector_store %arg29[%c0_141, %c0_142, %c0_143], %109 {strides = array<i32>} : memref<18x18x16xf32, #tpu.memory_space<vmem>>, vector<18x18x16xf32>,
    %c1_144 = arith.constant 1 : index
    %c1_145 = arith.constant 1 : index
    %c0_146 = arith.constant 0 : index
    %111 = vector.load %arg29[%c1_144, %c1_145, %c0_146] : memref<18x18x16xf32, #tpu.memory_space<vmem>>, vector<8x8x8xf32>
    tpu.vector_store %arg29[%c1_144, %c1_145, %c0_146], %108 {strides = array<i32>} : memref<18x18x16xf32, #tpu.memory_space<vmem>>, vector<8x8x8xf32>,
    %c0_147 = arith.constant 0 : index
    %c0_148 = arith.constant 0 : index
    %c0_149 = arith.constant 0 : index
    %112 = vector.load %arg29[%c0_147, %c0_148, %c0_149] : memref<18x18x16xf32, #tpu.memory_space<vmem>>, vector<8x8x8xf32>
    %c0_150 = arith.constant 0 : index
    %c1_151 = arith.constant 1 : index
    %c0_152 = arith.constant 0 : index
    %113 = vector.load %arg29[%c0_150, %c1_151, %c0_152] : memref<18x18x16xf32, #tpu.memory_space<vmem>>, vector<8x8x8xf32>
    %c0_153 = arith.constant 0 : index
    %c2_154 = arith.constant 2 : index
    %c0_155 = arith.constant 0 : index
    %114 = vector.load %arg29[%c0_153, %c2_154, %c0_155] : memref<18x18x16xf32, #tpu.memory_space<vmem>>, vector<8x8x8xf32>
    %c1_156 = arith.constant 1 : index
    %c0_157 = arith.constant 0 : index
    %c0_158 = arith.constant 0 : index
    %115 = vector.load %arg29[%c1_156, %c0_157, %c0_158] : memref<18x18x16xf32, #tpu.memory_space<vmem>>, vector<8x8x8xf32>
    %c1_159 = arith.constant 1 : index
    %c1_160 = arith.constant 1 : index
    %c0_161 = arith.constant 0 : index
    %116 = vector.load %arg29[%c1_159, %c1_160, %c0_161] : memref<18x18x16xf32, #tpu.memory_space<vmem>>, vector<8x8x8xf32>
    %c1_162 = arith.constant 1 : index
    %c2_163 = arith.constant 2 : index
    %c0_164 = arith.constant 0 : index
    %117 = vector.load %arg29[%c1_162, %c2_163, %c0_164] : memref<18x18x16xf32, #tpu.memory_space<vmem>>, vector<8x8x8xf32>
    %c2_165 = arith.constant 2 : index
    %c0_166 = arith.constant 0 : index
    %c0_167 = arith.constant 0 : index
    %118 = vector.load %arg29[%c2_165, %c0_166, %c0_167] : memref<18x18x16xf32, #tpu.memory_space<vmem>>, vector<8x8x8xf32>
    %c2_168 = arith.constant 2 : index
    %c1_169 = arith.constant 1 : index
    %c0_170 = arith.constant 0 : index
    %119 = vector.load %arg29[%c2_168, %c1_169, %c0_170] : memref<18x18x16xf32, #tpu.memory_space<vmem>>, vector<8x8x8xf32>
    %c2_171 = arith.constant 2 : index
    %c2_172 = arith.constant 2 : index
    %c0_173 = arith.constant 0 : index
    %120 = vector.load %arg29[%c2_171, %c2_172, %c0_173] : memref<18x18x16xf32, #tpu.memory_space<vmem>>, vector<8x8x8xf32>
    %121 = tpu.concatenate %112, %113, %114, %115, %116, %117, %118, %119, %120 in 2 : vector<8x8x8xf32>, vector<8x8x8xf32>, vector<8x8x8xf32>, vector<8x8x8xf32>, vector<8x8x8xf32>, vector<8x8x8xf32>, vector<8x8x8xf32>, vector<8x8x8xf32>, vector<8x8x8xf32> -> vector<8x8x72xf32>
    %122 = vector.shape_cast %121 : vector<8x8x72xf32> to vector<64x72xf32>
    %123 = arith.truncf %122 : vector<64x72xf32> to vector<64x72xbf16>
    %c0_174 = arith.constant 0 : index
    %c0_175 = arith.constant 0 : index
    %124 = vector.load %arg15[%c0_174, %c0_175] : memref<72x8xbf16, #tpu.memory_space<vmem>>, vector<72x8xbf16>
    %cst_176 = arith.constant dense<0.000000e+00> : vector<64x8xf32>
    %125 = tpu.matmul %123, %124, %cst_176 {dimension_numbers = #tpu.dot_dimension_numbers<[1], [0], [0], [1], [0, 0, 1, 1], [], []>} : vector<64x72xbf16>, vector<72x8xbf16>, vector<64x8xf32> -> vector<64x8xf32>
    %c0_177 = arith.constant 0 : index
    %c0_178 = arith.constant 0 : index
    %126 = vector.load %arg14[%c0_177, %c0_178] : memref<1x8xf32, #tpu.memory_space<vmem>>, vector<1x8xf32>
    %127 = vector.broadcast %126 : vector<1x8xf32> to vector<64x8xf32>
    %128 = arith.addf %125, %127 : vector<64x8xf32>
    %cst_179 = arith.constant 0.000000e+00 : f32
    %129 = vector.broadcast %cst_179 : f32 to vector<64x8xf32>
    %130 = arith.maximumf %128, %129 : vector<64x8xf32>
    %131 = vector.shape_cast %130 : vector<64x8xf32> to vector<8x8x8xf32>
    %132 = vector.shape_cast %88 : vector<8x8x16xf32> to vector<64x16xf32>
    %133 = arith.truncf %132 : vector<64x16xf32> to vector<64x16xbf16>
    %c0_180 = arith.constant 0 : index
    %c0_181 = arith.constant 0 : index
    %134 = vector.load %arg17[%c0_180, %c0_181] : memref<16x8xbf16, #tpu.memory_space<vmem>>, vector<16x8xbf16>
    %cst_182 = arith.constant dense<0.000000e+00> : vector<64x8xf32>
    %135 = tpu.matmul %133, %134, %cst_182 {dimension_numbers = #tpu.dot_dimension_numbers<[1], [0], [0], [1], [0, 0, 1, 1], [], []>} : vector<64x16xbf16>, vector<16x8xbf16>, vector<64x8xf32> -> vector<64x8xf32>
    %c0_183 = arith.constant 0 : index
    %c0_184 = arith.constant 0 : index
    %136 = vector.load %arg16[%c0_183, %c0_184] : memref<1x8xf32, #tpu.memory_space<vmem>>, vector<1x8xf32>
    %137 = vector.broadcast %136 : vector<1x8xf32> to vector<64x8xf32>
    %138 = arith.addf %135, %137 : vector<64x8xf32>
    %cst_185 = arith.constant 0.000000e+00 : f32
    %139 = vector.broadcast %cst_185 : f32 to vector<64x8xf32>
    %140 = arith.maximumf %138, %139 : vector<64x8xf32>
    %141 = vector.shape_cast %140 : vector<64x8xf32> to vector<8x8x8xf32>
    %cst_186 = arith.constant 0.000000e+00 : f32
    %142 = vector.broadcast %cst_186 : f32 to vector<18x18x16xf32>
    %c0_187 = arith.constant 0 : index
    %c0_188 = arith.constant 0 : index
    %c0_189 = arith.constant 0 : index
    %143 = vector.load %arg29[%c0_187, %c0_188, %c0_189] : memref<18x18x16xf32, #tpu.memory_space<vmem>>, vector<18x18x16xf32>
    tpu.vector_store %arg29[%c0_187, %c0_188, %c0_189], %142 {strides = array<i32>} : memref<18x18x16xf32, #tpu.memory_space<vmem>>, vector<18x18x16xf32>,
    %c2_190 = arith.constant 2 : index
    %c2_191 = arith.constant 2 : index
    %c0_192 = arith.constant 0 : index
    %144 = vector.load %arg29[%c2_190, %c2_191, %c0_192] : memref<18x18x16xf32, #tpu.memory_space<vmem>>, vector<8x8x8xf32>
    tpu.vector_store %arg29[%c2_190, %c2_191, %c0_192], %141 {strides = array<i32>} : memref<18x18x16xf32, #tpu.memory_space<vmem>>, vector<8x8x8xf32>,
    %c0_193 = arith.constant 0 : index
    %c0_194 = arith.constant 0 : index
    %c0_195 = arith.constant 0 : index
    %145 = vector.load %arg29[%c0_193, %c0_194, %c0_195] : memref<18x18x16xf32, #tpu.memory_space<vmem>>, vector<8x8x8xf32>
    %c0_196 = arith.constant 0 : index
    %c2_197 = arith.constant 2 : index
    %c0_198 = arith.constant 0 : index
    %146 = vector.load %arg29[%c0_196, %c2_197, %c0_198] : memref<18x18x16xf32, #tpu.memory_space<vmem>>, vector<8x8x8xf32>
    %c0_199 = arith.constant 0 : index
    %c4 = arith.constant 4 : index
    %c0_200 = arith.constant 0 : index
    %147 = vector.load %arg29[%c0_199, %c4, %c0_200] : memref<18x18x16xf32, #tpu.memory_space<vmem>>, vector<8x8x8xf32>
    %c2_201 = arith.constant 2 : index
    %c0_202 = arith.constant 0 : index
    %c0_203 = arith.constant 0 : index
    %148 = vector.load %arg29[%c2_201, %c0_202, %c0_203] : memref<18x18x16xf32, #tpu.memory_space<vmem>>, vector<8x8x8xf32>
    %c2_204 = arith.constant 2 : index
    %c2_205 = arith.constant 2 : index
    %c0_206 = arith.constant 0 : index
    %149 = vector.load %arg29[%c2_204, %c2_205, %c0_206] : memref<18x18x16xf32, #tpu.memory_space<vmem>>, vector<8x8x8xf32>
    %c2_207 = arith.constant 2 : index
    %c4_208 = arith.constant 4 : index
    %c0_209 = arith.constant 0 : index
    %150 = vector.load %arg29[%c2_207, %c4_208, %c0_209] : memref<18x18x16xf32, #tpu.memory_space<vmem>>, vector<8x8x8xf32>
    %c4_210 = arith.constant 4 : index
    %c0_211 = arith.constant 0 : index
    %c0_212 = arith.constant 0 : index
    %151 = vector.load %arg29[%c4_210, %c0_211, %c0_212] : memref<18x18x16xf32, #tpu.memory_space<vmem>>, vector<8x8x8xf32>
    %c4_213 = arith.constant 4 : index
    %c2_214 = arith.constant 2 : index
    %c0_215 = arith.constant 0 : index
    %152 = vector.load %arg29[%c4_213, %c2_214, %c0_215] : memref<18x18x16xf32, #tpu.memory_space<vmem>>, vector<8x8x8xf32>
    %c4_216 = arith.constant 4 : index
    %c4_217 = arith.constant 4 : index
    %c0_218 = arith.constant 0 : index
    %153 = vector.load %arg29[%c4_216, %c4_217, %c0_218] : memref<18x18x16xf32, #tpu.memory_space<vmem>>, vector<8x8x8xf32>
    %154 = tpu.concatenate %145, %146, %147, %148, %149, %150, %151, %152, %153 in 2 : vector<8x8x8xf32>, vector<8x8x8xf32>, vector<8x8x8xf32>, vector<8x8x8xf32>, vector<8x8x8xf32>, vector<8x8x8xf32>, vector<8x8x8xf32>, vector<8x8x8xf32>, vector<8x8x8xf32> -> vector<8x8x72xf32>
    %155 = vector.shape_cast %154 : vector<8x8x72xf32> to vector<64x72xf32>
    %156 = arith.truncf %155 : vector<64x72xf32> to vector<64x72xbf16>
    %c0_219 = arith.constant 0 : index
    %c0_220 = arith.constant 0 : index
    %157 = vector.load %arg19[%c0_219, %c0_220] : memref<72x8xbf16, #tpu.memory_space<vmem>>, vector<72x8xbf16>
    %cst_221 = arith.constant dense<0.000000e+00> : vector<64x8xf32>
    %158 = tpu.matmul %156, %157, %cst_221 {dimension_numbers = #tpu.dot_dimension_numbers<[1], [0], [0], [1], [0, 0, 1, 1], [], []>} : vector<64x72xbf16>, vector<72x8xbf16>, vector<64x8xf32> -> vector<64x8xf32>
    %c0_222 = arith.constant 0 : index
    %c0_223 = arith.constant 0 : index
    %159 = vector.load %arg18[%c0_222, %c0_223] : memref<1x8xf32, #tpu.memory_space<vmem>>, vector<1x8xf32>
    %160 = vector.broadcast %159 : vector<1x8xf32> to vector<64x8xf32>
    %161 = arith.addf %158, %160 : vector<64x8xf32>
    %cst_224 = arith.constant 0.000000e+00 : f32
    %162 = vector.broadcast %cst_224 : f32 to vector<64x8xf32>
    %163 = arith.maximumf %161, %162 : vector<64x8xf32>
    %164 = vector.shape_cast %163 : vector<64x8xf32> to vector<8x8x8xf32>
    %c0_225 = arith.constant 0 : index
    %c0_226 = arith.constant 0 : index
    %165 = vector.load %arg20[%c0_225, %c0_226] : memref<1x16xf32, #tpu.memory_space<vmem>>, vector<1x16xf32>
    %166 = vector.shape_cast %98 : vector<8x8x8xf32> to vector<64x8xf32>
    %167 = arith.truncf %166 : vector<64x8xf32> to vector<64x8xbf16>
    %c0_227 = arith.constant 0 : index
    %c0_228 = arith.constant 0 : index
    %168 = vector.load %arg21[%c0_227, %c0_228] : memref<24x16xbf16, #tpu.memory_space<vmem>>, vector<8x16xbf16>
    %cst_229 = arith.constant dense<0.000000e+00> : vector<64x16xf32>
    %169 = tpu.matmul %167, %168, %cst_229 {dimension_numbers = #tpu.dot_dimension_numbers<[1], [0], [0], [1], [0, 0, 1, 1], [], []>} : vector<64x8xbf16>, vector<8x16xbf16>, vector<64x16xf32> -> vector<64x16xf32>
    %170 = vector.broadcast %165 : vector<1x16xf32> to vector<64x16xf32>
    %171 = arith.addf %170, %169 : vector<64x16xf32>
    %172 = vector.shape_cast %131 : vector<8x8x8xf32> to vector<64x8xf32>
    %173 = arith.truncf %172 : vector<64x8xf32> to vector<64x8xbf16>
    %c8 = arith.constant 8 : index
    %c0_230 = arith.constant 0 : index
    %174 = vector.load %arg21[%c8, %c0_230] : memref<24x16xbf16, #tpu.memory_space<vmem>>, vector<8x16xbf16>
    %cst_231 = arith.constant dense<0.000000e+00> : vector<64x16xf32>
    %175 = tpu.matmul %173, %174, %cst_231 {dimension_numbers = #tpu.dot_dimension_numbers<[1], [0], [0], [1], [0, 0, 1, 1], [], []>} : vector<64x8xbf16>, vector<8x16xbf16>, vector<64x16xf32> -> vector<64x16xf32>
    %176 = arith.addf %171, %175 : vector<64x16xf32>
    %177 = vector.shape_cast %164 : vector<8x8x8xf32> to vector<64x8xf32>
    %178 = arith.truncf %177 : vector<64x8xf32> to vector<64x8xbf16>
    %c16 = arith.constant 16 : index
    %c0_232 = arith.constant 0 : index
    %179 = vector.load %arg21[%c16, %c0_232] : memref<24x16xbf16, #tpu.memory_space<vmem>>, vector<8x16xbf16>
    %cst_233 = arith.constant dense<0.000000e+00> : vector<64x16xf32>
    %180 = tpu.matmul %178, %179, %cst_233 {dimension_numbers = #tpu.dot_dimension_numbers<[1], [0], [0], [1], [0, 0, 1, 1], [], []>} : vector<64x8xbf16>, vector<8x16xbf16>, vector<64x16xf32> -> vector<64x16xf32>
    %181 = arith.addf %176, %180 : vector<64x16xf32>
    %182 = vector.shape_cast %181 : vector<64x16xf32> to vector<8x8x16xf32>
    %183 = vector.shape_cast %88 : vector<8x8x16xf32> to vector<64x16xf32>
    %184 = arith.truncf %183 : vector<64x16xf32> to vector<64x16xbf16>
    %c0_234 = arith.constant 0 : index
    %c0_235 = arith.constant 0 : index
    %185 = vector.load %arg23[%c0_234, %c0_235] : memref<16x16xbf16, #tpu.memory_space<vmem>>, vector<16x16xbf16>
    %cst_236 = arith.constant dense<0.000000e+00> : vector<64x16xf32>
    %186 = tpu.matmul %184, %185, %cst_236 {dimension_numbers = #tpu.dot_dimension_numbers<[1], [0], [0], [1], [0, 0, 1, 1], [], []>} : vector<64x16xbf16>, vector<16x16xbf16>, vector<64x16xf32> -> vector<64x16xf32>
    %c0_237 = arith.constant 0 : index
    %c0_238 = arith.constant 0 : index
    %187 = vector.load %arg22[%c0_237, %c0_238] : memref<1x16xf32, #tpu.memory_space<vmem>>, vector<1x16xf32>
    %188 = vector.broadcast %187 : vector<1x16xf32> to vector<64x16xf32>
    %189 = arith.addf %186, %188 : vector<64x16xf32>
    %190 = vector.shape_cast %189 : vector<64x16xf32> to vector<8x8x16xf32>
    %cst_239 = arith.constant 1.000000e-01 : f32
    %191 = vector.broadcast %cst_239 : f32 to vector<8x8x16xf32>
    %192 = arith.mulf %191, %182 : vector<8x8x16xf32>
    %193 = arith.addf %192, %190 : vector<8x8x16xf32>
    %cst_240 = arith.constant 0.000000e+00 : f32
    %194 = vector.broadcast %cst_240 : f32 to vector<8x8x16xf32>
    %195 = arith.maximumf %193, %194 : vector<8x8x16xf32>
    %cst_241 = arith.constant 0.000000e+00 : f32
    %196 = vector.broadcast %cst_241 : f32 to vector<18x18x16xf32>
    %c0_242 = arith.constant 0 : index
    %c0_243 = arith.constant 0 : index
    %c0_244 = arith.constant 0 : index
    %197 = vector.load %arg29[%c0_242, %c0_243, %c0_244] : memref<18x18x16xf32, #tpu.memory_space<vmem>>, vector<18x18x16xf32>
    tpu.vector_store %arg29[%c0_242, %c0_243, %c0_244], %196 {strides = array<i32>} : memref<18x18x16xf32, #tpu.memory_space<vmem>>, vector<18x18x16xf32>,
    %c1_245 = arith.constant 1 : index
    %c1_246 = arith.constant 1 : index
    %c0_247 = arith.constant 0 : index
    %198 = vector.load %arg29[%c1_245, %c1_246, %c0_247] : memref<18x18x16xf32, #tpu.memory_space<vmem>>, vector<8x8x16xf32>
    tpu.vector_store %arg29[%c1_245, %c1_246, %c0_247], %195 {strides = array<i32>} : memref<18x18x16xf32, #tpu.memory_space<vmem>>, vector<8x8x16xf32>,
    %c0_248 = arith.constant 0 : index
    %c0_249 = arith.constant 0 : index
    %c0_250 = arith.constant 0 : index
    %199 = vector.load %arg29[%c0_248, %c0_249, %c0_250] : memref<18x18x16xf32, #tpu.memory_space<vmem>>, vector<8x8x16xf32>
    %c0_251 = arith.constant 0 : index
    %c1_252 = arith.constant 1 : index
    %c0_253 = arith.constant 0 : index
    %200 = vector.load %arg29[%c0_251, %c1_252, %c0_253] : memref<18x18x16xf32, #tpu.memory_space<vmem>>, vector<8x8x16xf32>
    %c0_254 = arith.constant 0 : index
    %c2_255 = arith.constant 2 : index
    %c0_256 = arith.constant 0 : index
    %201 = vector.load %arg29[%c0_254, %c2_255, %c0_256] : memref<18x18x16xf32, #tpu.memory_space<vmem>>, vector<8x8x16xf32>
    %c1_257 = arith.constant 1 : index
    %c0_258 = arith.constant 0 : index
    %c0_259 = arith.constant 0 : index
    %202 = vector.load %arg29[%c1_257, %c0_258, %c0_259] : memref<18x18x16xf32, #tpu.memory_space<vmem>>, vector<8x8x16xf32>
    %c1_260 = arith.constant 1 : index
    %c1_261 = arith.constant 1 : index
    %c0_262 = arith.constant 0 : index
    %203 = vector.load %arg29[%c1_260, %c1_261, %c0_262] : memref<18x18x16xf32, #tpu.memory_space<vmem>>, vector<8x8x16xf32>
    %c1_263 = arith.constant 1 : index
    %c2_264 = arith.constant 2 : index
    %c0_265 = arith.constant 0 : index
    %204 = vector.load %arg29[%c1_263, %c2_264, %c0_265] : memref<18x18x16xf32, #tpu.memory_space<vmem>>, vector<8x8x16xf32>
    %c2_266 = arith.constant 2 : index
    %c0_267 = arith.constant 0 : index
    %c0_268 = arith.constant 0 : index
    %205 = vector.load %arg29[%c2_266, %c0_267, %c0_268] : memref<18x18x16xf32, #tpu.memory_space<vmem>>, vector<8x8x16xf32>
    %c2_269 = arith.constant 2 : index
    %c1_270 = arith.constant 1 : index
    %c0_271 = arith.constant 0 : index
    %206 = vector.load %arg29[%c2_269, %c1_270, %c0_271] : memref<18x18x16xf32, #tpu.memory_space<vmem>>, vector<8x8x16xf32>
    %c2_272 = arith.constant 2 : index
    %c2_273 = arith.constant 2 : index
    %c0_274 = arith.constant 0 : index
    %207 = vector.load %arg29[%c2_272, %c2_273, %c0_274] : memref<18x18x16xf32, #tpu.memory_space<vmem>>, vector<8x8x16xf32>
    %208 = tpu.concatenate %199, %200, %201, %202, %203, %204, %205, %206, %207 in 2 : vector<8x8x16xf32>, vector<8x8x16xf32>, vector<8x8x16xf32>, vector<8x8x16xf32>, vector<8x8x16xf32>, vector<8x8x16xf32>, vector<8x8x16xf32>, vector<8x8x16xf32>, vector<8x8x16xf32> -> vector<8x8x144xf32>
    %209 = vector.shape_cast %208 : vector<8x8x144xf32> to vector<64x144xf32>
    %210 = arith.truncf %209 : vector<64x144xf32> to vector<64x144xbf16>
    %c0_275 = arith.constant 0 : index
    %c0_276 = arith.constant 0 : index
    %211 = vector.load %arg25[%c0_275, %c0_276] : memref<144x32xbf16, #tpu.memory_space<vmem>>, vector<144x32xbf16>
    %cst_277 = arith.constant dense<0.000000e+00> : vector<64x32xf32>
    %212 = tpu.matmul %210, %211, %cst_277 {dimension_numbers = #tpu.dot_dimension_numbers<[1], [0], [0], [1], [0, 0, 1, 1], [], []>} : vector<64x144xbf16>, vector<144x32xbf16>, vector<64x32xf32> -> vector<64x32xf32>
    %c0_278 = arith.constant 0 : index
    %c0_279 = arith.constant 0 : index
    %213 = vector.load %arg24[%c0_278, %c0_279] : memref<1x32xf32, #tpu.memory_space<vmem>>, vector<1x32xf32>
    %214 = vector.broadcast %213 : vector<1x32xf32> to vector<64x32xf32>
    %215 = arith.addf %212, %214 : vector<64x32xf32>
    %cst_280 = arith.constant 1.000000e-01 : f32
    %216 = vector.broadcast %cst_280 : f32 to vector<64x32xf32>
    %217 = arith.mulf %216, %215 : vector<64x32xf32>
    %218 = arith.maximumf %215, %217 : vector<64x32xf32>
    %219 = vector.shape_cast %218 : vector<64x32xf32> to vector<8x8x32xf32>
    %220 = vector.shape_cast %219 : vector<8x8x32xf32> to vector<8x1x8x1x32xf32>
    %221 = vector.shape_cast %220 : vector<8x1x8x1x32xf32> to vector<8x1x8x1x32xf32>
    %222 = vector.broadcast %221 : vector<8x1x8x1x32xf32> to vector<8x2x8x2x32xf32>
    %223 = vector.shape_cast %222 : vector<8x2x8x2x32xf32> to vector<16x16x32xf32>
    %224 = tpu.concatenate %223, %85 in 2 : vector<16x16x32xf32>, vector<16x16x16xf32> -> vector<16x16x48xf32>
    %225 = vector.shape_cast %224 : vector<16x16x48xf32> to vector<256x48xf32>
    %226 = arith.truncf %225 : vector<256x48xf32> to vector<256x48xbf16>
    %c0_281 = arith.constant 0 : index
    %c0_282 = arith.constant 0 : index
    %227 = vector.load %arg27[%c0_281, %c0_282] : memref<48x16xbf16, #tpu.memory_space<vmem>>, vector<48x16xbf16>
    %cst_283 = arith.constant dense<0.000000e+00> : vector<256x16xf32>
    %228 = tpu.matmul %226, %227, %cst_283 {dimension_numbers = #tpu.dot_dimension_numbers<[1], [0], [0], [1], [0, 0, 1, 1], [], []>} : vector<256x48xbf16>, vector<48x16xbf16>, vector<256x16xf32> -> vector<256x16xf32>
    %c0_284 = arith.constant 0 : index
    %c0_285 = arith.constant 0 : index
    %229 = vector.load %arg26[%c0_284, %c0_285] : memref<1x16xf32, #tpu.memory_space<vmem>>, vector<1x16xf32>
    %230 = vector.broadcast %229 : vector<1x16xf32> to vector<256x16xf32>
    %231 = arith.addf %228, %230 : vector<256x16xf32>
    %cst_286 = arith.constant 1.000000e-01 : f32
    %232 = vector.broadcast %cst_286 : f32 to vector<256x16xf32>
    %233 = arith.mulf %232, %231 : vector<256x16xf32>
    %234 = arith.maximumf %231, %233 : vector<256x16xf32>
    %235 = vector.shape_cast %234 : vector<256x16xf32> to vector<16x16x16xf32>
    %236 = vector.shape_cast %235 : vector<16x16x16xf32> to vector<1x16x16x16xf32>
    %c0_287 = arith.constant 0 : index
    %c0_288 = arith.constant 0 : index
    %c0_289 = arith.constant 0 : index
    %c0_290 = arith.constant 0 : index
    %237 = vector.load %arg28[%c0_287, %c0_288, %c0_289, %c0_290] : memref<1x16x16x16xf32, #tpu.memory_space<vmem>>, vector<1x16x16x16xf32>
    tpu.vector_store %arg28[%c0_287, %c0_288, %c0_289, %c0_290], %236 {strides = array<i32>} : memref<1x16x16x16xf32, #tpu.memory_space<vmem>>, vector<1x16x16x16xf32>,
    return
  }
  func.func @transform_0(%arg0: i32) -> (i32, i32, i32, i32) {
    %c0_i32 = arith.constant 0 : i32
    %c0_i32_0 = arith.constant 0 : i32
    %c0_i32_1 = arith.constant 0 : i32
    %c0_i32_2 = arith.constant 0 : i32
    return %arg0, %c0_i32, %c0_i32_0, %c0_i32_1 : i32, i32, i32, i32
  }
  func.func @transform_1(%arg0: i32) -> (i32, i32) {
    %c0_i32 = arith.constant 0 : i32
    %c0_i32_0 = arith.constant 0 : i32
    %c0_i32_1 = arith.constant 0 : i32
    return %c0_i32, %c0_i32_0 : i32, i32
  }
  func.func @transform_2(%arg0: i32) -> (i32, i32) {
    %c0_i32 = arith.constant 0 : i32
    %c0_i32_0 = arith.constant 0 : i32
    %c0_i32_1 = arith.constant 0 : i32
    return %c0_i32, %c0_i32_0 : i32, i32
  }
  func.func @transform_3(%arg0: i32) -> (i32, i32) {
    %c0_i32 = arith.constant 0 : i32
    %c0_i32_0 = arith.constant 0 : i32
    %c0_i32_1 = arith.constant 0 : i32
    return %c0_i32, %c0_i32_0 : i32, i32
  }
  func.func @transform_4(%arg0: i32) -> (i32, i32) {
    %c0_i32 = arith.constant 0 : i32
    %c0_i32_0 = arith.constant 0 : i32
    %c0_i32_1 = arith.constant 0 : i32
    return %c0_i32, %c0_i32_0 : i32, i32
  }
  func.func @transform_5(%arg0: i32) -> (i32, i32) {
    %c0_i32 = arith.constant 0 : i32
    %c0_i32_0 = arith.constant 0 : i32
    %c0_i32_1 = arith.constant 0 : i32
    return %c0_i32, %c0_i32_0 : i32, i32
  }
  func.func @transform_6(%arg0: i32) -> (i32, i32) {
    %c0_i32 = arith.constant 0 : i32
    %c0_i32_0 = arith.constant 0 : i32
    %c0_i32_1 = arith.constant 0 : i32
    return %c0_i32, %c0_i32_0 : i32, i32
  }
  func.func @transform_7(%arg0: i32) -> (i32, i32) {
    %c0_i32 = arith.constant 0 : i32
    %c0_i32_0 = arith.constant 0 : i32
    %c0_i32_1 = arith.constant 0 : i32
    return %c0_i32, %c0_i32_0 : i32, i32
  }
  func.func @transform_8(%arg0: i32) -> (i32, i32) {
    %c0_i32 = arith.constant 0 : i32
    %c0_i32_0 = arith.constant 0 : i32
    %c0_i32_1 = arith.constant 0 : i32
    return %c0_i32, %c0_i32_0 : i32, i32
  }
  func.func @transform_9(%arg0: i32) -> (i32, i32) {
    %c0_i32 = arith.constant 0 : i32
    %c0_i32_0 = arith.constant 0 : i32
    %c0_i32_1 = arith.constant 0 : i32
    return %c0_i32, %c0_i32_0 : i32, i32
  }
  func.func @transform_10(%arg0: i32) -> (i32, i32) {
    %c0_i32 = arith.constant 0 : i32
    %c0_i32_0 = arith.constant 0 : i32
    %c0_i32_1 = arith.constant 0 : i32
    return %c0_i32, %c0_i32_0 : i32, i32
  }
  func.func @transform_11(%arg0: i32) -> (i32, i32) {
    %c0_i32 = arith.constant 0 : i32
    %c0_i32_0 = arith.constant 0 : i32
    %c0_i32_1 = arith.constant 0 : i32
    return %c0_i32, %c0_i32_0 : i32, i32
  }
  func.func @transform_12(%arg0: i32) -> (i32, i32) {
    %c0_i32 = arith.constant 0 : i32
    %c0_i32_0 = arith.constant 0 : i32
    %c0_i32_1 = arith.constant 0 : i32
    return %c0_i32, %c0_i32_0 : i32, i32
  }
  func.func @transform_13(%arg0: i32) -> (i32, i32) {
    %c0_i32 = arith.constant 0 : i32
    %c0_i32_0 = arith.constant 0 : i32
    %c0_i32_1 = arith.constant 0 : i32
    return %c0_i32, %c0_i32_0 : i32, i32
  }
  func.func @transform_14(%arg0: i32) -> (i32, i32) {
    %c0_i32 = arith.constant 0 : i32
    %c0_i32_0 = arith.constant 0 : i32
    %c0_i32_1 = arith.constant 0 : i32
    return %c0_i32, %c0_i32_0 : i32, i32
  }
  func.func @transform_15(%arg0: i32) -> (i32, i32) {
    %c0_i32 = arith.constant 0 : i32
    %c0_i32_0 = arith.constant 0 : i32
    %c0_i32_1 = arith.constant 0 : i32
    return %c0_i32, %c0_i32_0 : i32, i32
  }
  func.func @transform_16(%arg0: i32) -> (i32, i32) {
    %c0_i32 = arith.constant 0 : i32
    %c0_i32_0 = arith.constant 0 : i32
    %c0_i32_1 = arith.constant 0 : i32
    return %c0_i32, %c0_i32_0 : i32, i32
  }
  func.func @transform_17(%arg0: i32) -> (i32, i32) {
    %c0_i32 = arith.constant 0 : i32
    %c0_i32_0 = arith.constant 0 : i32
    %c0_i32_1 = arith.constant 0 : i32
    return %c0_i32, %c0_i32_0 : i32, i32
  }
  func.func @transform_18(%arg0: i32) -> (i32, i32) {
    %c0_i32 = arith.constant 0 : i32
    %c0_i32_0 = arith.constant 0 : i32
    %c0_i32_1 = arith.constant 0 : i32
    return %c0_i32, %c0_i32_0 : i32, i32
  }
  func.func @transform_19(%arg0: i32) -> (i32, i32) {
    %c0_i32 = arith.constant 0 : i32
    %c0_i32_0 = arith.constant 0 : i32
    %c0_i32_1 = arith.constant 0 : i32
    return %c0_i32, %c0_i32_0 : i32, i32
  }
  func.func @transform_20(%arg0: i32) -> (i32, i32) {
    %c0_i32 = arith.constant 0 : i32
    %c0_i32_0 = arith.constant 0 : i32
    %c0_i32_1 = arith.constant 0 : i32
    return %c0_i32, %c0_i32_0 : i32, i32
  }
  func.func @transform_21(%arg0: i32) -> (i32, i32) {
    %c0_i32 = arith.constant 0 : i32
    %c0_i32_0 = arith.constant 0 : i32
    %c0_i32_1 = arith.constant 0 : i32
    return %c0_i32, %c0_i32_0 : i32, i32
  }
  func.func @transform_22(%arg0: i32) -> (i32, i32) {
    %c0_i32 = arith.constant 0 : i32
    %c0_i32_0 = arith.constant 0 : i32
    %c0_i32_1 = arith.constant 0 : i32
    return %c0_i32, %c0_i32_0 : i32, i32
  }
  func.func @transform_23(%arg0: i32) -> (i32, i32) {
    %c0_i32 = arith.constant 0 : i32
    %c0_i32_0 = arith.constant 0 : i32
    %c0_i32_1 = arith.constant 0 : i32
    return %c0_i32, %c0_i32_0 : i32, i32
  }
  func.func @transform_24(%arg0: i32) -> (i32, i32) {
    %c0_i32 = arith.constant 0 : i32
    %c0_i32_0 = arith.constant 0 : i32
    %c0_i32_1 = arith.constant 0 : i32
    return %c0_i32, %c0_i32_0 : i32, i32
  }
  func.func @transform_25(%arg0: i32) -> (i32, i32) {
    %c0_i32 = arith.constant 0 : i32
    %c0_i32_0 = arith.constant 0 : i32
    %c0_i32_1 = arith.constant 0 : i32
    return %c0_i32, %c0_i32_0 : i32, i32
  }
  func.func @transform_26(%arg0: i32) -> (i32, i32) {
    %c0_i32 = arith.constant 0 : i32
    %c0_i32_0 = arith.constant 0 : i32
    %c0_i32_1 = arith.constant 0 : i32
    return %c0_i32, %c0_i32_0 : i32, i32
  }
  func.func @transform_27(%arg0: i32) -> (i32, i32, i32, i32) {
    %c0_i32 = arith.constant 0 : i32
    %c0_i32_0 = arith.constant 0 : i32
    %c0_i32_1 = arith.constant 0 : i32
    %c0_i32_2 = arith.constant 0 : i32
    return %arg0, %c0_i32, %c0_i32_0, %c0_i32_1 : i32, i32, i32, i32
  }
}

</mosaic_0001>

<llo_original>
// kernel: tpu_custom_call.1
$region0: #{tpu_custom_call.1}
  #allocation0 [shape = 'u32[]', space=smem, size = 0x4, offset = 0x4, fixed_abs, tag = 'smem constant byte address 0x4 - core index']
  #allocation1 [shape = 'u32[72,128]{1,0:T(1,128)}', space=vmem, size = 0x9000, scoped, tag = 'internal scratch']
  #allocation2 [shape = 'f32[18,18,16]{2,1,0:T(8,128)}', space=vmem, size = 0x36000, scoped, tag = 'scratch operand']
  %s0 = inlined_call_operand.vmem [shape: f32[2,16,16,4], index: 0, kind: input, shape index: {}]
  %s1 = inlined_call_operand.vmem [shape: f32[1,8], index: 1, kind: input, shape index: {}]
  %s2 = inlined_call_operand.vmem [shape: bf16[36,8], index: 2, kind: input, shape index: {}]
  %s3 = inlined_call_operand.vmem [shape: f32[1,16], index: 3, kind: input, shape index: {}]
  %s4 = inlined_call_operand.vmem [shape: bf16[72,16], index: 4, kind: input, shape index: {}]
  %s5 = inlined_call_operand.vmem [shape: f32[1,8], index: 5, kind: input, shape index: {}]
  %s6 = inlined_call_operand.vmem [shape: bf16[16,8], index: 6, kind: input, shape index: {}]
  %s7 = inlined_call_operand.vmem [shape: f32[1,16], index: 7, kind: input, shape index: {}]
  %s8 = inlined_call_operand.vmem [shape: bf16[72,16], index: 8, kind: input, shape index: {}]
  %s9 = inlined_call_operand.vmem [shape: f32[1,8], index: 9, kind: input, shape index: {}]
  %s10 = inlined_call_operand.vmem [shape: bf16[16,8], index: 10, kind: input, shape index: {}]
  %s11 = inlined_call_operand.vmem [shape: f32[1,8], index: 11, kind: input, shape index: {}]
  %s12 = inlined_call_operand.vmem [shape: bf16[16,8], index: 12, kind: input, shape index: {}]
  %s13 = inlined_call_operand.vmem [shape: f32[1,8], index: 13, kind: input, shape index: {}]
  %s14 = inlined_call_operand.vmem [shape: bf16[72,8], index: 14, kind: input, shape index: {}]
  %s15 = inlined_call_operand.vmem [shape: f32[1,8], index: 15, kind: input, shape index: {}]
  %s16 = inlined_call_operand.vmem [shape: bf16[16,8], index: 16, kind: input, shape index: {}]
  %s17 = inlined_call_operand.vmem [shape: f32[1,8], index: 17, kind: input, shape index: {}]
  %s18 = inlined_call_operand.vmem [shape: bf16[72,8], index: 18, kind: input, shape index: {}]
  %s19 = inlined_call_operand.vmem [shape: f32[1,16], index: 19, kind: input, shape index: {}]
  %s20 = inlined_call_operand.vmem [shape: bf16[24,16], index: 20, kind: input, shape index: {}]
  %s21 = inlined_call_operand.vmem [shape: f32[1,16], index: 21, kind: input, shape index: {}]
  %s22 = inlined_call_operand.vmem [shape: bf16[16,16], index: 22, kind: input, shape index: {}]
  %s23 = inlined_call_operand.vmem [shape: f32[1,32], index: 23, kind: input, shape index: {}]
  %s24 = inlined_call_operand.vmem [shape: bf16[144,32], index: 24, kind: input, shape index: {}]
  %s25 = inlined_call_operand.vmem [shape: f32[1,16], index: 25, kind: input, shape index: {}]
  %s26 = inlined_call_operand.vmem [shape: bf16[48,16], index: 26, kind: input, shape index: {}]
  %s27 = inlined_call_operand.hbm [shape: f32[2,16,16,16], index: 27, kind: output, shape index: {}]
  %s28 = sld [smem:[#allocation0]]
  $region141: #{tpu_custom_call.1} parent=0
    _
  %s30 = ssub.s32 1, %s28
  %s31 = scalar_select 0, %s30, %s28
  $region1: #{tpu_custom_call.1} parent=0
    #allocation3 [shape = 'u8[262144]{0}', space=vmem, size = 0x40000, scoped, tag = 'output window, operand 0']
    #allocation4 [shape = 's32[2]{0}', space=sflag, size = 0x8, scoped, tag = 'scoped memory for tpu_custom_call.1']
    %32 = vsyncpa [#allocation4], 0
    %s33 = scalar_lea.sflag [#allocation4], 1
    %34 = vsyncpa %s33, 0
    loop: start=0, step=1, limit=4
    $region2: #{tpu_custom_call.1} parent=1 // loop_pre_header
      _
    $region3: #{tpu_custom_call.1} parent=1 // loop_header
      %s36 = sphi 0, %s40
      %p37 = scmp.ge.s32.totalorder %s36, 4
      %s46 = sphi 0, %s48
      %s49 = sphi 0, %s46
      %s50 = sphi 0, %s49
      %s66 = sphi 0, %s50
      %s70 = sphi 0, %s70
      %s72 = sphi 0, %s70
      %s73 = sphi 0, %s72
      %s87 = sphi 0, %s73
      %s91 = sphi 0, %s91
      %s93 = sphi 0, %s91
      %s94 = sphi 0, %s93
      %s108 = sphi 0, %s94
      %s112 = sphi 0, %s112
      %s114 = sphi 0, %s112
      %s115 = sphi 0, %s114
      %s129 = sphi 0, %s115
      %s133 = sphi 0, %s133
      %s135 = sphi 0, %s133
      %s136 = sphi 0, %s135
      %s150 = sphi 0, %s136
      %s154 = sphi 0, %s154
      %s156 = sphi 0, %s154
      %s157 = sphi 0, %s156
      %s171 = sphi 0, %s157
      %s175 = sphi 0, %s175
      %s177 = sphi 0, %s175
      %s178 = sphi 0, %s177
      %s192 = sphi 0, %s178
      %s196 = sphi 0, %s196
      %s198 = sphi 0, %s196
      %s199 = sphi 0, %s198
      %s213 = sphi 0, %s199
      %s217 = sphi 0, %s217
      %s219 = sphi 0, %s217
      %s220 = sphi 0, %s219
      %s234 = sphi 0, %s220
      %s238 = sphi 0, %s238
      %s240 = sphi 0, %s238
      %s241 = sphi 0, %s240
      %s255 = sphi 0, %s241
      %s259 = sphi 0, %s259
      %s261 = sphi 0, %s259
      %s262 = sphi 0, %s261
      %s276 = sphi 0, %s262
      %s280 = sphi 0, %s280
      %s282 = sphi 0, %s280
      %s283 = sphi 0, %s282
      %s297 = sphi 0, %s283
      %s301 = sphi 0, %s301
      %s303 = sphi 0, %s301
      %s304 = sphi 0, %s303
      %s318 = sphi 0, %s304
      %s322 = sphi 0, %s322
      %s324 = sphi 0, %s322
      %s325 = sphi 0, %s324
      %s339 = sphi 0, %s325
      %s343 = sphi 0, %s343
      %s345 = sphi 0, %s343
      %s346 = sphi 0, %s345
      %s360 = sphi 0, %s346
      %s364 = sphi 0, %s364
      %s366 = sphi 0, %s364
      %s367 = sphi 0, %s366
      %s381 = sphi 0, %s367
      %s385 = sphi 0, %s385
      %s387 = sphi 0, %s385
      %s388 = sphi 0, %s387
      %s402 = sphi 0, %s388
      %s406 = sphi 0, %s406
      %s408 = sphi 0, %s406
      %s409 = sphi 0, %s408
      %s423 = sphi 0, %s409
      %s427 = sphi 0, %s427
      %s429 = sphi 0, %s427
      %s430 = sphi 0, %s429
      %s444 = sphi 0, %s430
      %s448 = sphi 0, %s448
      %s450 = sphi 0, %s448
      %s451 = sphi 0, %s450
      %s465 = sphi 0, %s451
      %s469 = sphi 0, %s469
      %s471 = sphi 0, %s469
      %s472 = sphi 0, %s471
      %s486 = sphi 0, %s472
      %s490 = sphi 0, %s490
      %s492 = sphi 0, %s490
      %s493 = sphi 0, %s492
      %s507 = sphi 0, %s493
      %s511 = sphi 0, %s511
      %s513 = sphi 0, %s511
      %s514 = sphi 0, %s513
      %s528 = sphi 0, %s514
      %s532 = sphi 0, %s532
      %s534 = sphi 0, %s532
      %s535 = sphi 0, %s534
      %s549 = sphi 0, %s535
      %s553 = sphi 0, %s553
      %s555 = sphi 0, %s553
      %s556 = sphi 0, %s555
      %s570 = sphi 0, %s556
      %s574 = sphi 0, %s574
      %s576 = sphi 0, %s574
      %s577 = sphi 0, %s576
      %s591 = sphi 0, %s577
      %s595 = sphi 0, %s595
      %s597 = sphi 0, %s595
      %s598 = sphi 0, %s597
      %s612 = sphi 0, %s598
      %s618 = sphi 0, %s620
      %s621 = sphi 0, %s618
      %s622 = sphi 0, %s621
      %s638 = sphi 0, %s622
    $region4: #{tpu_custom_call.1} parent=1 // loop_header_branch
      %39 = sbr.rel (%p37) target = $region8
    $region5: #{tpu_custom_call.1} parent=1 // loop_body
      %s41 = ssub.s32 %s36, 1
      %s42 = ssub.s32 %s36, 2
      %s43 = sadd.s32 %s36, 1
      %s44 = ssub.s32 %s36, %s43
      %p45 = scmp.eq.s32.totalorder %s44, 0
      %s47 = sadd.s32 %s46, 1
      %s48 = scalar_select %p45, %s46, %s47
      %p51 = pneg %p45
      %p52 = scmp.eq.s32.totalorder %s36, 1
      %p53 = por %p51, %p52
      %p54 = scmp.ne.s32.totalorder %s46, %s49
      %p55 = scmp.eq.s32.totalorder %s36, 0
      %p56 = por %p54, %p55
      %p57 = scmp.ne.s32.totalorder %s46, %s49
      %p58 = scmp.eq.s32.totalorder %s41, 1
      %p59 = por %p57, %p58
      %p60 = scmp.ne.s32.totalorder %s49, %s50
      %p61 = scmp.eq.s32.totalorder %s41, 0
      %p62 = por %p60, %p61
      %p63 = scmp.ne.s32.totalorder %s49, %s50
      %p64 = scmp.eq.s32.totalorder %s42, 1
      %p65 = por %p63, %p64
      %p67 = scmp.ne.s32.totalorder %s50, %s66
      %p68 = scmp.eq.s32.totalorder %s42, 0
      %p69 = por %p67, %p68
      %s71 = sadd.s32 %s70, 1
      %p74 = scmp.eq.s32.totalorder %s36, 1
      %p75 = scmp.ne.s32.totalorder %s70, %s72
      %p76 = scmp.eq.s32.totalorder %s36, 0
      %p77 = por %p75, %p76
      %p78 = scmp.ne.s32.totalorder %s70, %s72
      %p79 = scmp.eq.s32.totalorder %s41, 1
      %p80 = por %p78, %p79
      %p81 = scmp.ne.s32.totalorder %s72, %s73
      %p82 = scmp.eq.s32.totalorder %s41, 0
      %p83 = por %p81, %p82
      %p84 = scmp.ne.s32.totalorder %s72, %s73
      %p85 = scmp.eq.s32.totalorder %s42, 1
      %p86 = por %p84, %p85
      %p88 = scmp.ne.s32.totalorder %s73, %s87
      %p89 = scmp.eq.s32.totalorder %s42, 0
      %p90 = por %p88, %p89
      %s92 = sadd.s32 %s91, 1
      %p95 = scmp.eq.s32.totalorder %s36, 1
      %p96 = scmp.ne.s32.totalorder %s91, %s93
      %p97 = scmp.eq.s32.totalorder %s36, 0
      %p98 = por %p96, %p97
      %p99 = scmp.ne.s32.totalorder %s91, %s93
      %p100 = scmp.eq.s32.totalorder %s41, 1
      %p101 = por %p99, %p100
      %p102 = scmp.ne.s32.totalorder %s93, %s94
      %p103 = scmp.eq.s32.totalorder %s41, 0
      %p104 = por %p102, %p103
      %p105 = scmp.ne.s32.totalorder %s93, %s94
      %p106 = scmp.eq.s32.totalorder %s42, 1
      %p107 = por %p105, %p106
      %p109 = scmp.ne.s32.totalorder %s94, %s108
      %p110 = scmp.eq.s32.totalorder %s42, 0
      %p111 = por %p109, %p110
      %s113 = sadd.s32 %s112, 1
      %p116 = scmp.eq.s32.totalorder %s36, 1
      %p117 = scmp.ne.s32.totalorder %s112, %s114
      %p118 = scmp.eq.s32.totalorder %s36, 0
      %p119 = por %p117, %p118
      %p120 = scmp.ne.s32.totalorder %s112, %s114
      %p121 = scmp.eq.s32.totalorder %s41, 1
      %p122 = por %p120, %p121
      %p123 = scmp.ne.s32.totalorder %s114, %s115
      %p124 = scmp.eq.s32.totalorder %s41, 0
      %p125 = por %p123, %p124
      %p126 = scmp.ne.s32.totalorder %s114, %s115
      %p127 = scmp.eq.s32.totalorder %s42, 1
      %p128 = por %p126, %p127
      %p130 = scmp.ne.s32.totalorder %s115, %s129
      %p131 = scmp.eq.s32.totalorder %s42, 0
      %p132 = por %p130, %p131
      %s134 = sadd.s32 %s133, 1
      %p137 = scmp.eq.s32.totalorder %s36, 1
      %p138 = scmp.ne.s32.totalorder %s133, %s135
      %p139 = scmp.eq.s32.totalorder %s36, 0
      %p140 = por %p138, %p139
      %p141 = scmp.ne.s32.totalorder %s133, %s135
      %p142 = scmp.eq.s32.totalorder %s41, 1
      %p143 = por %p141, %p142
      %p144 = scmp.ne.s32.totalorder %s135, %s136
      %p145 = scmp.eq.s32.totalorder %s41, 0
      %p146 = por %p144, %p145
      %p147 = scmp.ne.s32.totalorder %s135, %s136
      %p148 = scmp.eq.s32.totalorder %s42, 1
      %p149 = por %p147, %p148
      %p151 = scmp.ne.s32.totalorder %s136, %s150
      %p152 = scmp.eq.s32.totalorder %s42, 0
      %p153 = por %p151, %p152
      %s155 = sadd.s32 %s154, 1
      %p158 = scmp.eq.s32.totalorder %s36, 1
      %p159 = scmp.ne.s32.totalorder %s154, %s156
      %p160 = scmp.eq.s32.totalorder %s36, 0
      %p161 = por %p159, %p160
      %p162 = scmp.ne.s32.totalorder %s154, %s156
      %p163 = scmp.eq.s32.totalorder %s41, 1
      %p164 = por %p162, %p163
      %p165 = scmp.ne.s32.totalorder %s156, %s157
      %p166 = scmp.eq.s32.totalorder %s41, 0
      %p167 = por %p165, %p166
      %p168 = scmp.ne.s32.totalorder %s156, %s157
      %p169 = scmp.eq.s32.totalorder %s42, 1
      %p170 = por %p168, %p169
      %p172 = scmp.ne.s32.totalorder %s157, %s171
      %p173 = scmp.eq.s32.totalorder %s42, 0
      %p174 = por %p172, %p173
      %s176 = sadd.s32 %s175, 1
      %p179 = scmp.eq.s32.totalorder %s36, 1
      %p180 = scmp.ne.s32.totalorder %s175, %s177
      %p181 = scmp.eq.s32.totalorder %s36, 0
      %p182 = por %p180, %p181
      %p183 = scmp.ne.s32.totalorder %s175, %s177
      %p184 = scmp.eq.s32.totalorder %s41, 1
      %p185 = por %p183, %p184
      %p186 = scmp.ne.s32.totalorder %s177, %s178
      %p187 = scmp.eq.s32.totalorder %s41, 0
      %p188 = por %p186, %p187
      %p189 = scmp.ne.s32.totalorder %s177, %s178
      %p190 = scmp.eq.s32.totalorder %s42, 1
      %p191 = por %p189, %p190
      %p193 = scmp.ne.s32.totalorder %s178, %s192
      %p194 = scmp.eq.s32.totalorder %s42, 0
      %p195 = por %p193, %p194
      %s197 = sadd.s32 %s196, 1
      %p200 = scmp.eq.s32.totalorder %s36, 1
      %p201 = scmp.ne.s32.totalorder %s196, %s198
      %p202 = scmp.eq.s32.totalorder %s36, 0
      %p203 = por %p201, %p202
      %p204 = scmp.ne.s32.totalorder %s196, %s198
      %p205 = scmp.eq.s32.totalorder %s41, 1
      %p206 = por %p204, %p205
      %p207 = scmp.ne.s32.totalorder %s198, %s199
      %p208 = scmp.eq.s32.totalorder %s41, 0
      %p209 = por %p207, %p208
      %p210 = scmp.ne.s32.totalorder %s198, %s199
      %p211 = scmp.eq.s32.totalorder %s42, 1
      %p212 = por %p210, %p211
      %p214 = scmp.ne.s32.totalorder %s199, %s213
      %p215 = scmp.eq.s32.totalorder %s42, 0
      %p216 = por %p214, %p215
      %s218 = sadd.s32 %s217, 1
      %p221 = scmp.eq.s32.totalorder %s36, 1
      %p222 = scmp.ne.s32.totalorder %s217, %s219
      %p223 = scmp.eq.s32.totalorder %s36, 0
      %p224 = por %p222, %p223
      %p225 = scmp.ne.s32.totalorder %s217, %s219
      %p226 = scmp.eq.s32.totalorder %s41, 1
      %p227 = por %p225, %p226
      %p228 = scmp.ne.s32.totalorder %s219, %s220
      %p229 = scmp.eq.s32.totalorder %s41, 0
      %p230 = por %p228, %p229
      %p231 = scmp.ne.s32.totalorder %s219, %s220
      %p232 = scmp.eq.s32.totalorder %s42, 1
      %p233 = por %p231, %p232
      %p235 = scmp.ne.s32.totalorder %s220, %s234
      %p236 = scmp.eq.s32.totalorder %s42, 0
      %p237 = por %p235, %p236
      %s239 = sadd.s32 %s238, 1
      %p242 = scmp.eq.s32.totalorder %s36, 1
      %p243 = scmp.ne.s32.totalorder %s238, %s240
      %p244 = scmp.eq.s32.totalorder %s36, 0
      %p245 = por %p243, %p244
      %p246 = scmp.ne.s32.totalorder %s238, %s240
      %p247 = scmp.eq.s32.totalorder %s41, 1
      %p248 = por %p246, %p247
      %p249 = scmp.ne.s32.totalorder %s240, %s241
      %p250 = scmp.eq.s32.totalorder %s41, 0
      %p251 = por %p249, %p250
      %p252 = scmp.ne.s32.totalorder %s240, %s241
      %p253 = scmp.eq.s32.totalorder %s42, 1
      %p254 = por %p252, %p253
      %p256 = scmp.ne.s32.totalorder %s241, %s255
      %p257 = scmp.eq.s32.totalorder %s42, 0
      %p258 = por %p256, %p257
      %s260 = sadd.s32 %s259, 1
      %p263 = scmp.eq.s32.totalorder %s36, 1
      %p264 = scmp.ne.s32.totalorder %s259, %s261
      %p265 = scmp.eq.s32.totalorder %s36, 0
      %p266 = por %p264, %p265
      %p267 = scmp.ne.s32.totalorder %s259, %s261
      %p268 = scmp.eq.s32.totalorder %s41, 1
      %p269 = por %p267, %p268
      %p270 = scmp.ne.s32.totalorder %s261, %s262
      %p271 = scmp.eq.s32.totalorder %s41, 0
      %p272 = por %p270, %p271
      %p273 = scmp.ne.s32.totalorder %s261, %s262
      %p274 = scmp.eq.s32.totalorder %s42, 1
      %p275 = por %p273, %p274
      %p277 = scmp.ne.s32.totalorder %s262, %s276
      %p278 = scmp.eq.s32.totalorder %s42, 0
      %p279 = por %p277, %p278
      %s281 = sadd.s32 %s280, 1
      %p284 = scmp.eq.s32.totalorder %s36, 1
      %p285 = scmp.ne.s32.totalorder %s280, %s282
      %p286 = scmp.eq.s32.totalorder %s36, 0
      %p287 = por %p285, %p286
      %p288 = scmp.ne.s32.totalorder %s280, %s282
      %p289 = scmp.eq.s32.totalorder %s41, 1
      %p290 = por %p288, %p289
      %p291 = scmp.ne.s32.totalorder %s282, %s283
      %p292 = scmp.eq.s32.totalorder %s41, 0
      %p293 = por %p291, %p292
      %p294 = scmp.ne.s32.totalorder %s282, %s283
      %p295 = scmp.eq.s32.totalorder %s42, 1
      %p296 = por %p294, %p295
      %p298 = scmp.ne.s32.totalorder %s283, %s297
      %p299 = scmp.eq.s32.totalorder %s42, 0
      %p300 = por %p298, %p299
      %s302 = sadd.s32 %s301, 1
      %p305 = scmp.eq.s32.totalorder %s36, 1
      %p306 = scmp.ne.s32.totalorder %s301, %s303
      %p307 = scmp.eq.s32.totalorder %s36, 0
      %p308 = por %p306, %p307
      %p309 = scmp.ne.s32.totalorder %s301, %s303
      %p310 = scmp.eq.s32.totalorder %s41, 1
      %p311 = por %p309, %p310
      %p312 = scmp.ne.s32.totalorder %s303, %s304
      %p313 = scmp.eq.s32.totalorder %s41, 0
      %p314 = por %p312, %p313
      %p315 = scmp.ne.s32.totalorder %s303, %s304
      %p316 = scmp.eq.s32.totalorder %s42, 1
      %p317 = por %p315, %p316
      %p319 = scmp.ne.s32.totalorder %s304, %s318
      %p320 = scmp.eq.s32.totalorder %s42, 0
      %p321 = por %p319, %p320
      %s323 = sadd.s32 %s322, 1
      %p326 = scmp.eq.s32.totalorder %s36, 1
      %p327 = scmp.ne.s32.totalorder %s322, %s324
      %p328 = scmp.eq.s32.totalorder %s36, 0
      %p329 = por %p327, %p328
      %p330 = scmp.ne.s32.totalorder %s322, %s324
      %p331 = scmp.eq.s32.totalorder %s41, 1
      %p332 = por %p330, %p331
      %p333 = scmp.ne.s32.totalorder %s324, %s325
      %p334 = scmp.eq.s32.totalorder %s41, 0
      %p335 = por %p333, %p334
      %p336 = scmp.ne.s32.totalorder %s324, %s325
      %p337 = scmp.eq.s32.totalorder %s42, 1
      %p338 = por %p336, %p337
      %p340 = scmp.ne.s32.totalorder %s325, %s339
      %p341 = scmp.eq.s32.totalorder %s42, 0
      %p342 = por %p340, %p341
      %s344 = sadd.s32 %s343, 1
      %p347 = scmp.eq.s32.totalorder %s36, 1
      %p348 = scmp.ne.s32.totalorder %s343, %s345
      %p349 = scmp.eq.s32.totalorder %s36, 0
      %p350 = por %p348, %p349
      %p351 = scmp.ne.s32.totalorder %s343, %s345
      %p352 = scmp.eq.s32.totalorder %s41, 1
      %p353 = por %p351, %p352
      %p354 = scmp.ne.s32.totalorder %s345, %s346
      %p355 = scmp.eq.s32.totalorder %s41, 0
      %p356 = por %p354, %p355
      %p357 = scmp.ne.s32.totalorder %s345, %s346
      %p358 = scmp.eq.s32.totalorder %s42, 1
      %p359 = por %p357, %p358
      %p361 = scmp.ne.s32.totalorder %s346, %s360
      %p362 = scmp.eq.s32.totalorder %s42, 0
      %p363 = por %p361, %p362
      %s365 = sadd.s32 %s364, 1
      %p368 = scmp.eq.s32.totalorder %s36, 1
      %p369 = scmp.ne.s32.totalorder %s364, %s366
      %p370 = scmp.eq.s32.totalorder %s36, 0
      %p371 = por %p369, %p370
      %p372 = scmp.ne.s32.totalorder %s364, %s366
      %p373 = scmp.eq.s32.totalorder %s41, 1
      %p374 = por %p372, %p373
      %p375 = scmp.ne.s32.totalorder %s366, %s367
      %p376 = scmp.eq.s32.totalorder %s41, 0
      %p377 = por %p375, %p376
      %p378 = scmp.ne.s32.totalorder %s366, %s367
      %p379 = scmp.eq.s32.totalorder %s42, 1
      %p380 = por %p378, %p379
      %p382 = scmp.ne.s32.totalorder %s367, %s381
      %p383 = scmp.eq.s32.totalorder %s42, 0
      %p384 = por %p382, %p383
      %s386 = sadd.s32 %s385, 1
      %p389 = scmp.eq.s32.totalorder %s36, 1
      %p390 = scmp.ne.s32.totalorder %s385, %s387
      %p391 = scmp.eq.s32.totalorder %s36, 0
      %p392 = por %p390, %p391
      %p393 = scmp.ne.s32.totalorder %s385, %s387
      %p394 = scmp.eq.s32.totalorder %s41, 1
      %p395 = por %p393, %p394
      %p396 = scmp.ne.s32.totalorder %s387, %s388
      %p397 = scmp.eq.s32.totalorder %s41, 0
      %p398 = por %p396, %p397
      %p399 = scmp.ne.s32.totalorder %s387, %s388
      %p400 = scmp.eq.s32.totalorder %s42, 1
      %p401 = por %p399, %p400
      %p403 = scmp.ne.s32.totalorder %s388, %s402
      %p404 = scmp.eq.s32.totalorder %s42, 0
      %p405 = por %p403, %p404
      %s407 = sadd.s32 %s406, 1
      %p410 = scmp.eq.s32.totalorder %s36, 1
      %p411 = scmp.ne.s32.totalorder %s406, %s408
      %p412 = scmp.eq.s32.totalorder %s36, 0
      %p413 = por %p411, %p412
      %p414 = scmp.ne.s32.totalorder %s406, %s408
      %p415 = scmp.eq.s32.totalorder %s41, 1
      %p416 = por %p414, %p415
      %p417 = scmp.ne.s32.totalorder %s408, %s409
      %p418 = scmp.eq.s32.totalorder %s41, 0
      %p419 = por %p417, %p418
      %p420 = scmp.ne.s32.totalorder %s408, %s409
      %p421 = scmp.eq.s32.totalorder %s42, 1
      %p422 = por %p420, %p421
      %p424 = scmp.ne.s32.totalorder %s409, %s423
      %p425 = scmp.eq.s32.totalorder %s42, 0
      %p426 = por %p424, %p425
      %s428 = sadd.s32 %s427, 1
      %p431 = scmp.eq.s32.totalorder %s36, 1
      %p432 = scmp.ne.s32.totalorder %s427, %s429
      %p433 = scmp.eq.s32.totalorder %s36, 0
      %p434 = por %p432, %p433
      %p435 = scmp.ne.s32.totalorder %s427, %s429
      %p436 = scmp.eq.s32.totalorder %s41, 1
      %p437 = por %p435, %p436
      %p438 = scmp.ne.s32.totalorder %s429, %s430
      %p439 = scmp.eq.s32.totalorder %s41, 0
      %p440 = por %p438, %p439
      %p441 = scmp.ne.s32.totalorder %s429, %s430
      %p442 = scmp.eq.s32.totalorder %s42, 1
      %p443 = por %p441, %p442
      %p445 = scmp.ne.s32.totalorder %s430, %s444
      %p446 = scmp.eq.s32.totalorder %s42, 0
      %p447 = por %p445, %p446
      %s449 = sadd.s32 %s448, 1
      %p452 = scmp.eq.s32.totalorder %s36, 1
      %p453 = scmp.ne.s32.totalorder %s448, %s450
      %p454 = scmp.eq.s32.totalorder %s36, 0
      %p455 = por %p453, %p454
      %p456 = scmp.ne.s32.totalorder %s448, %s450
      %p457 = scmp.eq.s32.totalorder %s41, 1
      %p458 = por %p456, %p457
      %p459 = scmp.ne.s32.totalorder %s450, %s451
      %p460 = scmp.eq.s32.totalorder %s41, 0
      %p461 = por %p459, %p460
      %p462 = scmp.ne.s32.totalorder %s450, %s451
      %p463 = scmp.eq.s32.totalorder %s42, 1
      %p464 = por %p462, %p463
      %p466 = scmp.ne.s32.totalorder %s451, %s465
      %p467 = scmp.eq.s32.totalorder %s42, 0
      %p468 = por %p466, %p467
      %s470 = sadd.s32 %s469, 1
      %p473 = scmp.eq.s32.totalorder %s36, 1
      %p474 = scmp.ne.s32.totalorder %s469, %s471
      %p475 = scmp.eq.s32.totalorder %s36, 0
      %p476 = por %p474, %p475
      %p477 = scmp.ne.s32.totalorder %s469, %s471
      %p478 = scmp.eq.s32.totalorder %s41, 1
      %p479 = por %p477, %p478
      %p480 = scmp.ne.s32.totalorder %s471, %s472
      %p481 = scmp.eq.s32.totalorder %s41, 0
      %p482 = por %p480, %p481
      %p483 = scmp.ne.s32.totalorder %s471, %s472
      %p484 = scmp.eq.s32.totalorder %s42, 1
      %p485 = por %p483, %p484
      %p487 = scmp.ne.s32.totalorder %s472, %s486
      %p488 = scmp.eq.s32.totalorder %s42, 0
      %p489 = por %p487, %p488
      %s491 = sadd.s32 %s490, 1
      %p494 = scmp.eq.s32.totalorder %s36, 1
      %p495 = scmp.ne.s32.totalorder %s490, %s492
      %p496 = scmp.eq.s32.totalorder %s36, 0
      %p497 = por %p495, %p496
      %p498 = scmp.ne.s32.totalorder %s490, %s492
      %p499 = scmp.eq.s32.totalorder %s41, 1
      %p500 = por %p498, %p499
      %p501 = scmp.ne.s32.totalorder %s492, %s493
      %p502 = scmp.eq.s32.totalorder %s41, 0
      %p503 = por %p501, %p502
      %p504 = scmp.ne.s32.totalorder %s492, %s493
      %p505 = scmp.eq.s32.totalorder %s42, 1
      %p506 = por %p504, %p505
      %p508 = scmp.ne.s32.totalorder %s493, %s507
      %p509 = scmp.eq.s32.totalorder %s42, 0
      %p510 = por %p508, %p509
      %s512 = sadd.s32 %s511, 1
      %p515 = scmp.eq.s32.totalorder %s36, 1
      %p516 = scmp.ne.s32.totalorder %s511, %s513
      %p517 = scmp.eq.s32.totalorder %s36, 0
      %p518 = por %p516, %p517
      %p519 = scmp.ne.s32.totalorder %s511, %s513
      %p520 = scmp.eq.s32.totalorder %s41, 1
      %p521 = por %p519, %p520
      %p522 = scmp.ne.s32.totalorder %s513, %s514
      %p523 = scmp.eq.s32.totalorder %s41, 0
      %p524 = por %p522, %p523
      %p525 = scmp.ne.s32.totalorder %s513, %s514
      %p526 = scmp.eq.s32.totalorder %s42, 1
      %p527 = por %p525, %p526
      %p529 = scmp.ne.s32.totalorder %s514, %s528
      %p530 = scmp.eq.s32.totalorder %s42, 0
      %p531 = por %p529, %p530
      %s533 = sadd.s32 %s532, 1
      %p536 = scmp.eq.s32.totalorder %s36, 1
      %p537 = scmp.ne.s32.totalorder %s532, %s534
      %p538 = scmp.eq.s32.totalorder %s36, 0
      %p539 = por %p537, %p538
      %p540 = scmp.ne.s32.totalorder %s532, %s534
      %p541 = scmp.eq.s32.totalorder %s41, 1
      %p542 = por %p540, %p541
      %p543 = scmp.ne.s32.totalorder %s534, %s535
      %p544 = scmp.eq.s32.totalorder %s41, 0
      %p545 = por %p543, %p544
      %p546 = scmp.ne.s32.totalorder %s534, %s535
      %p547 = scmp.eq.s32.totalorder %s42, 1
      %p548 = por %p546, %p547
      %p550 = scmp.ne.s32.totalorder %s535, %s549
      %p551 = scmp.eq.s32.totalorder %s42, 0
      %p552 = por %p550, %p551
      %s554 = sadd.s32 %s553, 1
      %p557 = scmp.eq.s32.totalorder %s36, 1
      %p558 = scmp.ne.s32.totalorder %s553, %s555
      %p559 = scmp.eq.s32.totalorder %s36, 0
      %p560 = por %p558, %p559
      %p561 = scmp.ne.s32.totalorder %s553, %s555
      %p562 = scmp.eq.s32.totalorder %s41, 1
      %p563 = por %p561, %p562
      %p564 = scmp.ne.s32.totalorder %s555, %s556
      %p565 = scmp.eq.s32.totalorder %s41, 0
      %p566 = por %p564, %p565
      %p567 = scmp.ne.s32.totalorder %s555, %s556
      %p568 = scmp.eq.s32.totalorder %s42, 1
      %p569 = por %p567, %p568
      %p571 = scmp.ne.s32.totalorder %s556, %s570
      %p572 = scmp.eq.s32.totalorder %s42, 0
      %p573 = por %p571, %p572
      %s575 = sadd.s32 %s574, 1
      %p578 = scmp.eq.s32.totalorder %s36, 1
      %p579 = scmp.ne.s32.totalorder %s574, %s576
      %p580 = scmp.eq.s32.totalorder %s36, 0
      %p581 = por %p579, %p580
      %p582 = scmp.ne.s32.totalorder %s574, %s576
      %p583 = scmp.eq.s32.totalorder %s41, 1
      %p584 = por %p582, %p583
      %p585 = scmp.ne.s32.totalorder %s576, %s577
      %p586 = scmp.eq.s32.totalorder %s41, 0
      %p587 = por %p585, %p586
      %p588 = scmp.ne.s32.totalorder %s576, %s577
      %p589 = scmp.eq.s32.totalorder %s42, 1
      %p590 = por %p588, %p589
      %p592 = scmp.ne.s32.totalorder %s577, %s591
      %p593 = scmp.eq.s32.totalorder %s42, 0
      %p594 = por %p592, %p593
      %s596 = sadd.s32 %s595, 1
      %p599 = scmp.eq.s32.totalorder %s36, 1
      %p600 = scmp.ne.s32.totalorder %s595, %s597
      %p601 = scmp.eq.s32.totalorder %s36, 0
      %p602 = por %p600, %p601
      %p603 = scmp.ne.s32.totalorder %s595, %s597
      %p604 = scmp.eq.s32.totalorder %s41, 1
      %p605 = por %p603, %p604
      %p606 = scmp.ne.s32.totalorder %s597, %s598
      %p607 = scmp.eq.s32.totalorder %s41, 0
      %p608 = por %p606, %p607
      %p609 = scmp.ne.s32.totalorder %s597, %s598
      %p610 = scmp.eq.s32.totalorder %s42, 1
      %p611 = por %p609, %p610
      %p613 = scmp.ne.s32.totalorder %s598, %s612
      %p614 = scmp.eq.s32.totalorder %s42, 0
      %p615 = por %p613, %p614
      %s616 = ssub.s32 %s36, %s43
      %p617 = scmp.eq.s32.totalorder %s616, 0
      %s619 = sadd.s32 %s618, 1
      %s620 = scalar_select %p617, %s618, %s619
      %p623 = pneg %p617
      %p624 = scmp.eq.s32.totalorder %s36, 1
      %p625 = por %p623, %p624
      %p626 = scmp.ne.s32.totalorder %s618, %s621
      %p627 = scmp.eq.s32.totalorder %s36, 0
      %p628 = por %p626, %p627
      %p629 = scmp.ne.s32.totalorder %s618, %s621
      %p630 = scmp.eq.s32.totalorder %s41, 1
      %p631 = por %p629, %p630
      %p632 = scmp.ne.s32.totalorder %s621, %s622
      %p633 = scmp.eq.s32.totalorder %s41, 0
      %p634 = por %p632, %p633
      %p635 = scmp.ne.s32.totalorder %s621, %s622
      %p636 = scmp.eq.s32.totalorder %s42, 1
      %p637 = por %p635, %p636
      %p639 = scmp.ne.s32.totalorder %s622, %s638
      %p640 = scmp.eq.s32.totalorder %s42, 0
      %p641 = por %p639, %p640
      %p642 = scmp.le.s32.totalorder 1, %s36
      %p643 = scmp.lt.s32.totalorder %s36, 3
      %p644 = pnand %p642, %p643
      %p645 = pneg %p644
      // Predicated region
      $region9: #{tpu_custom_call.1} parent=5 // pred_check
        _
      $region10: #{tpu_custom_call.1} parent=5 // pred_check_branch
        %647 = sbr.rel (%p644) target = $region12
      $region11: #{tpu_custom_call.1} parent=5 // pred_region
        %s648 = ssub.s32 %s36, 1
        // Predicated region
        $region13: #{tpu_custom_call.1} parent=11 // pred_check
          %p649 = pneg %p83
        $region14: #{tpu_custom_call.1} parent=11 // pred_check_branch
          %651 = sbr.rel (%p649) target = $region16
        $region15: #{tpu_custom_call.1} parent=11 // pred_region
          _
        $region16: #{tpu_custom_call.1} parent=11 // pred_fallthru
          _
        // Predicated region
        $region17: #{tpu_custom_call.1} parent=11 // pred_check
          %p652 = pneg %p104
        $region18: #{tpu_custom_call.1} parent=11 // pred_check_branch
          %654 = sbr.rel (%p652) target = $region20
        $region19: #{tpu_custom_call.1} parent=11 // pred_region
          _
        $region20: #{tpu_custom_call.1} parent=11 // pred_fallthru
          _
        // Predicated region
        $region21: #{tpu_custom_call.1} parent=11 // pred_check
          %p655 = pneg %p125
        $region22: #{tpu_custom_call.1} parent=11 // pred_check_branch
          %657 = sbr.rel (%p655) target = $region24
        $region23: #{tpu_custom_call.1} parent=11 // pred_region
          _
        $region24: #{tpu_custom_call.1} parent=11 // pred_fallthru
          _
        // Predicated region
        $region25: #{tpu_custom_call.1} parent=11 // pred_check
          %p658 = pneg %p146
        $region26: #{tpu_custom_call.1} parent=11 // pred_check_branch
          %660 = sbr.rel (%p658) target = $region28
        $region27: #{tpu_custom_call.1} parent=11 // pred_region
          _
        $region28: #{tpu_custom_call.1} parent=11 // pred_fallthru
          _
        // Predicated region
        $region29: #{tpu_custom_call.1} parent=11 // pred_check
          %p661 = pneg %p167
        $region30: #{tpu_custom_call.1} parent=11 // pred_check_branch
          %663 = sbr.rel (%p661) target = $region32
        $region31: #{tpu_custom_call.1} parent=11 // pred_region
          _
        $region32: #{tpu_custom_call.1} parent=11 // pred_fallthru
          _
        // Predicated region
        $region33: #{tpu_custom_call.1} parent=11 // pred_check
          %p664 = pneg %p188
        $region34: #{tpu_custom_call.1} parent=11 // pred_check_branch
          %666 = sbr.rel (%p664) target = $region36
        $region35: #{tpu_custom_call.1} parent=11 // pred_region
          _
        $region36: #{tpu_custom_call.1} parent=11 // pred_fallthru
          _
        // Predicated region
        $region37: #{tpu_custom_call.1} parent=11 // pred_check
          %p667 = pneg %p209
        $region38: #{tpu_custom_call.1} parent=11 // pred_check_branch
          %669 = sbr.rel (%p667) target = $region40
        $region39: #{tpu_custom_call.1} parent=11 // pred_region
          _
        $region40: #{tpu_custom_call.1} parent=11 // pred_fallthru
          _
        // Predicated region
        $region41: #{tpu_custom_call.1} parent=11 // pred_check
          %p670 = pneg %p230
        $region42: #{tpu_custom_call.1} parent=11 // pred_check_branch
          %672 = sbr.rel (%p670) target = $region44
        $region43: #{tpu_custom_call.1} parent=11 // pred_region
          _
        $region44: #{tpu_custom_call.1} parent=11 // pred_fallthru
          _
        // Predicated region
        $region45: #{tpu_custom_call.1} parent=11 // pred_check
          %p673 = pneg %p251
        $region46: #{tpu_custom_call.1} parent=11 // pred_check_branch
          %675 = sbr.rel (%p673) target = $region48
        $region47: #{tpu_custom_call.1} parent=11 // pred_region
          _
        $region48: #{tpu_custom_call.1} parent=11 // pred_fallthru
          _
        // Predicated region
        $region49: #{tpu_custom_call.1} parent=11 // pred_check
          %p676 = pneg %p272
        $region50: #{tpu_custom_call.1} parent=11 // pred_check_branch
          %678 = sbr.rel (%p676) target = $region52
        $region51: #{tpu_custom_call.1} parent=11 // pred_region
          _
        $region52: #{tpu_custom_call.1} parent=11 // pred_fallthru
          _
        // Predicated region
        $region53: #{tpu_custom_call.1} parent=11 // pred_check
          %p679 = pneg %p293
        $region54: #{tpu_custom_call.1} parent=11 // pred_check_branch
          %681 = sbr.rel (%p679) target = $region56
        $region55: #{tpu_custom_call.1} parent=11 // pred_region
          _
        $region56: #{tpu_custom_call.1} parent=11 // pred_fallthru
          _
        // Predicated region
        $region57: #{tpu_custom_call.1} parent=11 // pred_check
          %p682 = pneg %p314
        $region58: #{tpu_custom_call.1} parent=11 // pred_check_branch
          %684 = sbr.rel (%p682) target = $region60
        $region59: #{tpu_custom_call.1} parent=11 // pred_region
          _
        $region60: #{tpu_custom_call.1} parent=11 // pred_fallthru
          _
        // Predicated region
        $region61: #{tpu_custom_call.1} parent=11 // pred_check
          %p685 = pneg %p335
        $region62: #{tpu_custom_call.1} parent=11 // pred_check_branch
          %687 = sbr.rel (%p685) target = $region64
        $region63: #{tpu_custom_call.1} parent=11 // pred_region
          _
        $region64: #{tpu_custom_call.1} parent=11 // pred_fallthru
          _
        // Predicated region
        $region65: #{tpu_custom_call.1} parent=11 // pred_check
          %p688 = pneg %p356
        $region66: #{tpu_custom_call.1} parent=11 // pred_check_branch
          %690 = sbr.rel (%p688) target = $region68
        $region67: #{tpu_custom_call.1} parent=11 // pred_region
          _
        $region68: #{tpu_custom_call.1} parent=11 // pred_fallthru
          _
        // Predicated region
        $region69: #{tpu_custom_call.1} parent=11 // pred_check
          %p691 = pneg %p377
        $region70: #{tpu_custom_call.1} parent=11 // pred_check_branch
          %693 = sbr.rel (%p691) target = $region72
        $region71: #{tpu_custom_call.1} parent=11 // pred_region
          _
        $region72: #{tpu_custom_call.1} parent=11 // pred_fallthru
          _
        // Predicated region
        $region73: #{tpu_custom_call.1} parent=11 // pred_check
          %p694 = pneg %p398
        $region74: #{tpu_custom_call.1} parent=11 // pred_check_branch
          %696 = sbr.rel (%p694) target = $region76
        $region75: #{tpu_custom_call.1} parent=11 // pred_region
          _
        $region76: #{tpu_custom_call.1} parent=11 // pred_fallthru
          _
        // Predicated region
        $region77: #{tpu_custom_call.1} parent=11 // pred_check
          %p697 = pneg %p419
        $region78: #{tpu_custom_call.1} parent=11 // pred_check_branch
          %699 = sbr.rel (%p697) target = $region80
        $region79: #{tpu_custom_call.1} parent=11 // pred_region
          _
        $region80: #{tpu_custom_call.1} parent=11 // pred_fallthru
          _
        // Predicated region
        $region81: #{tpu_custom_call.1} parent=11 // pred_check
          %p700 = pneg %p440
        $region82: #{tpu_custom_call.1} parent=11 // pred_check_branch
          %702 = sbr.rel (%p700) target = $region84
        $region83: #{tpu_custom_call.1} parent=11 // pred_region
          _
        $region84: #{tpu_custom_call.1} parent=11 // pred_fallthru
          _
        // Predicated region
        $region85: #{tpu_custom_call.1} parent=11 // pred_check
          %p703 = pneg %p461
        $region86: #{tpu_custom_call.1} parent=11 // pred_check_branch
          %705 = sbr.rel (%p703) target = $region88
        $region87: #{tpu_custom_call.1} parent=11 // pred_region
          _
        $region88: #{tpu_custom_call.1} parent=11 // pred_fallthru
          _
        // Predicated region
        $region89: #{tpu_custom_call.1} parent=11 // pred_check
          %p706 = pneg %p482
        $region90: #{tpu_custom_call.1} parent=11 // pred_check_branch
          %708 = sbr.rel (%p706) target = $region92
        $region91: #{tpu_custom_call.1} parent=11 // pred_region
          _
        $region92: #{tpu_custom_call.1} parent=11 // pred_fallthru
          _
        // Predicated region
        $region93: #{tpu_custom_call.1} parent=11 // pred_check
          %p709 = pneg %p503
        $region94: #{tpu_custom_call.1} parent=11 // pred_check_branch
          %711 = sbr.rel (%p709) target = $region96
        $region95: #{tpu_custom_call.1} parent=11 // pred_region
          _
        $region96: #{tpu_custom_call.1} parent=11 // pred_fallthru
          _
        // Predicated region
        $region97: #{tpu_custom_call.1} parent=11 // pred_check
          %p712 = pneg %p524
        $region98: #{tpu_custom_call.1} parent=11 // pred_check_branch
          %714 = sbr.rel (%p712) target = $region100
        $region99: #{tpu_custom_call.1} parent=11 // pred_region
          _
        $region100: #{tpu_custom_call.1} parent=11 // pred_fallthru
          _
        // Predicated region
        $region101: #{tpu_custom_call.1} parent=11 // pred_check
          %p715 = pneg %p545
        $region102: #{tpu_custom_call.1} parent=11 // pred_check_branch
          %717 = sbr.rel (%p715) target = $region104
        $region103: #{tpu_custom_call.1} parent=11 // pred_region
          _
        $region104: #{tpu_custom_call.1} parent=11 // pred_fallthru
          _
        // Predicated region
        $region105: #{tpu_custom_call.1} parent=11 // pred_check
          %p718 = pneg %p566
        $region106: #{tpu_custom_call.1} parent=11 // pred_check_branch
          %720 = sbr.rel (%p718) target = $region108
        $region107: #{tpu_custom_call.1} parent=11 // pred_region
          _
        $region108: #{tpu_custom_call.1} parent=11 // pred_fallthru
          _
        // Predicated region
        $region109: #{tpu_custom_call.1} parent=11 // pred_check
          %p721 = pneg %p587
        $region110: #{tpu_custom_call.1} parent=11 // pred_check_branch
          %723 = sbr.rel (%p721) target = $region112
        $region111: #{tpu_custom_call.1} parent=11 // pred_region
          _
        $region112: #{tpu_custom_call.1} parent=11 // pred_fallthru
          _
        // Predicated region
        $region113: #{tpu_custom_call.1} parent=11 // pred_check
          %p724 = pneg %p608
        $region114: #{tpu_custom_call.1} parent=11 // pred_check_branch
          %726 = sbr.rel (%p724) target = $region116
        $region115: #{tpu_custom_call.1} parent=11 // pred_region
          _
        $region116: #{tpu_custom_call.1} parent=11 // pred_fallthru
          _
      $region12: #{tpu_custom_call.1} parent=5 // pred_fallthru
        _
      %p727 = scmp.lt.s32.totalorder %s36, 2
      // Predicated region
      $region117: #{tpu_custom_call.1} parent=5 // pred_check
        %p728 = pneg %p727
      $region118: #{tpu_custom_call.1} parent=5 // pred_check_branch
        %730 = sbr.rel (%p728) target = $region120
      $region119: #{tpu_custom_call.1} parent=5 // pred_region
        // Predicated region
        $region121: #{tpu_custom_call.1} parent=119 // pred_check
          %p731 = pneg %p56
        $region122: #{tpu_custom_call.1} parent=119 // pred_check_branch
          %733 = sbr.rel (%p731) target = $region124
        $region123: #{tpu_custom_call.1} parent=119 // pred_region
          %p734 = scmp.lt.s32.totalorder %s36, 1
          %s735 = scalar_select %p734, %s36, 1
          %s736 = smul.addr %s735, 32
          %s737 = smul.addr %s736, 8
          %s738 = scalar_lea.vmem %s0, %s737
        $region124: #{tpu_custom_call.1} parent=119 // pred_fallthru
          _
      $region120: #{tpu_custom_call.1} parent=5 // pred_fallthru
        _
      %p739 = scmp.le.s32.totalorder 1, %s36
      %p740 = scmp.lt.s32.totalorder %s36, 3
      %p741 = pnand %p739, %p740
      %p742 = pneg %p741
      // Predicated region
      $region125: #{tpu_custom_call.1} parent=5 // pred_check
        _
      $region126: #{tpu_custom_call.1} parent=5 // pred_check_branch
        %744 = sbr.rel (%p741) target = $region128
      $region127: #{tpu_custom_call.1} parent=5 // pred_region
        %s745 = ssub.s32 %s36, 1
        %p746 = scmp.lt.s32.totalorder %s41, 1
        %s747 = scalar_select %p746, %s41, 1
        %s748 = smul.addr %s747, 32
        %s749 = smul.addr %s748, 8
        %s750 = scalar_lea.vmem %s0, %s749
        %p751 = pneg %p62
        %p752 = pneg %p59
        %p753 = pneg %p83
        %p754 = pneg %p80
        %p755 = pneg %p104
        %p756 = pneg %p101
        %p757 = pneg %p125
        %p758 = pneg %p122
        %p759 = pneg %p146
        %p760 = pneg %p143
        %p761 = pneg %p167
        %p762 = pneg %p164
        %p763 = pneg %p188
        %p764 = pneg %p185
        %p765 = pneg %p209
        %p766 = pneg %p206
        %p767 = pneg %p230
        %p768 = pneg %p227
        %p769 = pneg %p251
        %p770 = pneg %p248
        %p771 = pneg %p272
        %p772 = pneg %p269
        %p773 = pneg %p293
        %p774 = pneg %p290
        %p775 = pneg %p314
        %p776 = pneg %p311
        %p777 = pneg %p335
        %p778 = pneg %p332
        %p779 = pneg %p356
        %p780 = pneg %p353
        %p781 = pneg %p377
        %p782 = pneg %p374
        %p783 = pneg %p398
        %p784 = pneg %p395
        %p785 = pneg %p419
        %p786 = pneg %p416
        %p787 = pneg %p440
        %p788 = pneg %p437
        %p789 = pneg %p461
        %p790 = pneg %p458
        %p791 = pneg %p482
        %p792 = pneg %p479
        %p793 = pneg %p503
        %p794 = pneg %p500
        %p795 = pneg %p524
        %p796 = pneg %p521
        %p797 = pneg %p545
        %p798 = pneg %p542
        %p799 = pneg %p566
        %p800 = pneg %p563
        %p801 = pneg %p587
        %p802 = pneg %p584
        %p803 = pneg %p608
        %p804 = pneg %p605
        %p805 = pneg %p634
        %p806 = pneg %p631
        %s807 = sand.u32 %s621, 1
        %s808 = scalar_lea.sflag [#allocation4], %s807
        %s809 = sand.u32 %s621, 1
        %s810 = smul.addr %s809, 256
        %s811 = scalar_lea.vmem [#allocation3], %s810
        %p812 = scmp.lt.s32.totalorder %s41, 1
        %s813 = scalar_select %p812, %s41, 1
        %s814 = smul.addr %s813, 32
        %s815 = smul.addr %s814, 8
        %s816 = scalar_lea.vmem %s0, %s815
        %v818 = vld [vmem:[%s816] sm:$0xff]
        %v819 = vld [vmem:[%s816 + $0x8] sm:$0xff]
        %v820 = vld [vmem:[%s816 + $0x10] sm:$0xff]
        %v821 = vld [vmem:[%s816 + $0x18] sm:$0xff]
        %v822 = vld [vmem:[%s816 + $0x20] sm:$0xff]
        %v823 = vld [vmem:[%s816 + $0x28] sm:$0xff]
        %v824 = vld [vmem:[%s816 + $0x30] sm:$0xff]
        %v825 = vld [vmem:[%s816 + $0x38] sm:$0xff]
        %v826 = vld [vmem:[%s816 + $0x40] sm:$0xff]
        %v827 = vld [vmem:[%s816 + $0x48] sm:$0xff]
        %v828 = vld [vmem:[%s816 + $0x50] sm:$0xff]
        %v829 = vld [vmem:[%s816 + $0x58] sm:$0xff]
        %v830 = vld [vmem:[%s816 + $0x60] sm:$0xff]
        %v831 = vld [vmem:[%s816 + $0x68] sm:$0xff]
        %v832 = vld [vmem:[%s816 + $0x70] sm:$0xff]
        %v833 = vld [vmem:[%s816 + $0x78] sm:$0xff]
        %v834 = vld [vmem:[%s816 + $0x80] sm:$0xff]
        %v835 = vld [vmem:[%s816 + $0x88] sm:$0xff]
        %v836 = vld [vmem:[%s816 + $0x90] sm:$0xff]
        %v837 = vld [vmem:[%s816 + $0x98] sm:$0xff]
        %v838 = vld [vmem:[%s816 + $0xa0] sm:$0xff]
        %v839 = vld [vmem:[%s816 + $0xa8] sm:$0xff]
        %v840 = vld [vmem:[%s816 + $0xb0] sm:$0xff]
        %v841 = vld [vmem:[%s816 + $0xb8] sm:$0xff]
        %v842 = vld [vmem:[%s816 + $0xc0] sm:$0xff]
        %v843 = vld [vmem:[%s816 + $0xc8] sm:$0xff]
        %v844 = vld [vmem:[%s816 + $0xd0] sm:$0xff]
        %v845 = vld [vmem:[%s816 + $0xd8] sm:$0xff]
        %v846 = vld [vmem:[%s816 + $0xe0] sm:$0xff]
        %v847 = vld [vmem:[%s816 + $0xe8] sm:$0xff]
        %v848 = vld [vmem:[%s816 + $0xf0] sm:$0xff]
        %v849 = vld [vmem:[%s816 + $0xf8] sm:$0xff]
        %vm850 = vcmask 130048
        %851 = vst.msk [vmem:[#allocation2] sm:$0xff] %vm850, 0.0
        %852 = vst.msk [vmem:[#allocation2 + $0x8] sm:$0xff] %vm850, 0.0
        %vm853 = vcmask 123904
        %854 = vst.msk [vmem:[#allocation2 + $0x10] sm:$0x3] %vm853, 0.0
        %855 = vst.msk [vmem:[#allocation2 + $0x18] sm:$0xff] %vm850, 0.0
        %856 = vst.msk [vmem:[#allocation2 + $0x20] sm:$0xff] %vm850, 0.0
        %857 = vst.msk [vmem:[#allocation2 + $0x28] sm:$0x3] %vm853, 0.0
        %858 = vst.msk [vmem:[#allocation2 + $0x30] sm:$0xff] %vm850, 0.0
        %859 = vst.msk [vmem:[#allocation2 + $0x38] sm:$0xff] %vm850, 0.0
        %860 = vst.msk [vmem:[#allocation2 + $0x40] sm:$0x3] %vm853, 0.0
        %861 = vst.msk [vmem:[#allocation2 + $0x48] sm:$0xff] %vm850, 0.0
        %862 = vst.msk [vmem:[#allocation2 + $0x50] sm:$0xff] %vm850, 0.0
        %863 = vst.msk [vmem:[#allocation2 + $0x58] sm:$0x3] %vm853, 0.0
        %864 = vst.msk [vmem:[#allocation2 + $0x60] sm:$0xff] %vm850, 0.0
        %865 = vst.msk [vmem:[#allocation2 + $0x68] sm:$0xff] %vm850, 0.0
        %866 = vst.msk [vmem:[#allocation2 + $0x70] sm:$0x3] %vm853, 0.0
        %867 = vst.msk [vmem:[#allocation2 + $0x78] sm:$0xff] %vm850, 0.0
        %868 = vst.msk [vmem:[#allocation2 + $0x80] sm:$0xff] %vm850, 0.0
        %869 = vst.msk [vmem:[#allocation2 + $0x88] sm:$0x3] %vm853, 0.0
        %870 = vst.msk [vmem:[#allocation2 + $0x90] sm:$0xff] %vm850, 0.0
        %871 = vst.msk [vmem:[#allocation2 + $0x98] sm:$0xff] %vm850, 0.0
        %872 = vst.msk [vmem:[#allocation2 + $0xa0] sm:$0x3] %vm853, 0.0
        %873 = vst.msk [vmem:[#allocation2 + $0xa8] sm:$0xff] %vm850, 0.0
        %874 = vst.msk [vmem:[#allocation2 + $0xb0] sm:$0xff] %vm850, 0.0
        %875 = vst.msk [vmem:[#allocation2 + $0xb8] sm:$0x3] %vm853, 0.0
        %876 = vst.msk [vmem:[#allocation2 + $0xc0] sm:$0xff] %vm850, 0.0
        %877 = vst.msk [vmem:[#allocation2 + $0xc8] sm:$0xff] %vm850, 0.0
        %878 = vst.msk [vmem:[#allocation2 + $0xd0] sm:$0x3] %vm853, 0.0
        %879 = vst.msk [vmem:[#allocation2 + $0xd8] sm:$0xff] %vm850, 0.0
        %880 = vst.msk [vmem:[#allocation2 + $0xe0] sm:$0xff] %vm850, 0.0
        %881 = vst.msk [vmem:[#allocation2 + $0xe8] sm:$0x3] %vm853, 0.0
        %882 = vst.msk [vmem:[#allocation2 + $0xf0] sm:$0xff] %vm850, 0.0
        %883 = vst.msk [vmem:[#allocation2 + $0xf8] sm:$0xff] %vm850, 0.0
        %884 = vst.msk [vmem:[#allocation2 + $0x100] sm:$0x3] %vm853, 0.0
        %885 = vst.msk [vmem:[#allocation2 + $0x108] sm:$0xff] %vm850, 0.0
        %886 = vst.msk [vmem:[#allocation2 + $0x110] sm:$0xff] %vm850, 0.0
        %887 = vst.msk [vmem:[#allocation2 + $0x118] sm:$0x3] %vm853, 0.0
        %888 = vst.msk [vmem:[#allocation2 + $0x120] sm:$0xff] %vm850, 0.0
        %889 = vst.msk [vmem:[#allocation2 + $0x128] sm:$0xff] %vm850, 0.0
        %890 = vst.msk [vmem:[#allocation2 + $0x130] sm:$0x3] %vm853, 0.0
        %891 = vst.msk [vmem:[#allocation2 + $0x138] sm:$0xff] %vm850, 0.0
        %892 = vst.msk [vmem:[#allocation2 + $0x140] sm:$0xff] %vm850, 0.0
        %893 = vst.msk [vmem:[#allocation2 + $0x148] sm:$0x3] %vm853, 0.0
        %894 = vst.msk [vmem:[#allocation2 + $0x150] sm:$0xff] %vm850, 0.0
        %895 = vst.msk [vmem:[#allocation2 + $0x158] sm:$0xff] %vm850, 0.0
        %896 = vst.msk [vmem:[#allocation2 + $0x160] sm:$0x3] %vm853, 0.0
        %897 = vst.msk [vmem:[#allocation2 + $0x168] sm:$0xff] %vm850, 0.0
        %898 = vst.msk [vmem:[#allocation2 + $0x170] sm:$0xff] %vm850, 0.0
        %899 = vst.msk [vmem:[#allocation2 + $0x178] sm:$0x3] %vm853, 0.0
        %900 = vst.msk [vmem:[#allocation2 + $0x180] sm:$0xff] %vm850, 0.0
        %901 = vst.msk [vmem:[#allocation2 + $0x188] sm:$0xff] %vm850, 0.0
        %902 = vst.msk [vmem:[#allocation2 + $0x190] sm:$0x3] %vm853, 0.0
        %903 = vst.msk [vmem:[#allocation2 + $0x198] sm:$0xff] %vm850, 0.0
        %904 = vst.msk [vmem:[#allocation2 + $0x1a0] sm:$0xff] %vm850, 0.0
        %905 = vst.msk [vmem:[#allocation2 + $0x1a8] sm:$0x3] %vm853, 0.0
        %s906 = scalar_lea.vmem [#allocation2], 24
        %vm907 = vcmask 31744
        %908 = vst.msk [vmem:[%s906 + $0x1] sm:$0xff] %vm907, %v818
        %909 = vst.msk [vmem:[%s906 + $0x9] sm:$0xff] %vm907, %v819
        %910 = vst.msk [vmem:[%s906 + $0x19] sm:$0xff] %vm907, %v820
        %911 = vst.msk [vmem:[%s906 + $0x21] sm:$0xff] %vm907, %v821
        %912 = vst.msk [vmem:[%s906 + $0x31] sm:$0xff] %vm907, %v822
        %913 = vst.msk [vmem:[%s906 + $0x39] sm:$0xff] %vm907, %v823
        %914 = vst.msk [vmem:[%s906 + $0x49] sm:$0xff] %vm907, %v824
        %915 = vst.msk [vmem:[%s906 + $0x51] sm:$0xff] %vm907, %v825
        %916 = vst.msk [vmem:[%s906 + $0x61] sm:$0xff] %vm907, %v826
        %917 = vst.msk [vmem:[%s906 + $0x69] sm:$0xff] %vm907, %v827
        %918 = vst.msk [vmem:[%s906 + $0x79] sm:$0xff] %vm907, %v828
        %919 = vst.msk [vmem:[%s906 + $0x81] sm:$0xff] %vm907, %v829
        %920 = vst.msk [vmem:[%s906 + $0x91] sm:$0xff] %vm907, %v830
        %921 = vst.msk [vmem:[%s906 + $0x99] sm:$0xff] %vm907, %v831
        %922 = vst.msk [vmem:[%s906 + $0xa9] sm:$0xff] %vm907, %v832
        %923 = vst.msk [vmem:[%s906 + $0xb1] sm:$0xff] %vm907, %v833
        %924 = vst.msk [vmem:[%s906 + $0xc1] sm:$0xff] %vm907, %v834
        %925 = vst.msk [vmem:[%s906 + $0xc9] sm:$0xff] %vm907, %v835
        %926 = vst.msk [vmem:[%s906 + $0xd9] sm:$0xff] %vm907, %v836
        %927 = vst.msk [vmem:[%s906 + $0xe1] sm:$0xff] %vm907, %v837
        %928 = vst.msk [vmem:[%s906 + $0xf1] sm:$0xff] %vm907, %v838
        %929 = vst.msk [vmem:[%s906 + $0xf9] sm:$0xff] %vm907, %v839
        %930 = vst.msk [vmem:[%s906 + $0x109] sm:$0xff] %vm907, %v840
        %931 = vst.msk [vmem:[%s906 + $0x111] sm:$0xff] %vm907, %v841
        %932 = vst.msk [vmem:[%s906 + $0x121] sm:$0xff] %vm907, %v842
        %933 = vst.msk [vmem:[%s906 + $0x129] sm:$0xff] %vm907, %v843
        %934 = vst.msk [vmem:[%s906 + $0x139] sm:$0xff] %vm907, %v844
        %935 = vst.msk [vmem:[%s906 + $0x141] sm:$0xff] %vm907, %v845
        %936 = vst.msk [vmem:[%s906 + $0x151] sm:$0xff] %vm907, %v846
        %937 = vst.msk [vmem:[%s906 + $0x159] sm:$0xff] %vm907, %v847
        %938 = vst.msk [vmem:[%s906 + $0x169] sm:$0xff] %vm907, %v848
        %939 = vst.msk [vmem:[%s906 + $0x171] sm:$0xff] %vm907, %v849
        %v940 = vld [vmem:[#allocation2] sm:$0xff]
        %v941 = vld [vmem:[#allocation2 + $0x8] sm:$0xff]
        %v942 = vld [vmem:[#allocation2 + $0x18] sm:$0xff]
        %v943 = vld [vmem:[#allocation2 + $0x20] sm:$0xff]
        %v944 = vld [vmem:[#allocation2 + $0x30] sm:$0xff]
        %v945 = vld [vmem:[#allocation2 + $0x38] sm:$0xff]
        %v946 = vld [vmem:[#allocation2 + $0x48] sm:$0xff]
        %v947 = vld [vmem:[#allocation2 + $0x50] sm:$0xff]
        %v948 = vld [vmem:[#allocation2 + $0x60] sm:$0xff]
        %v949 = vld [vmem:[#allocation2 + $0x68] sm:$0xff]
        %v950 = vld [vmem:[#allocation2 + $0x78] sm:$0xff]
        %v951 = vld [vmem:[#allocation2 + $0x80] sm:$0xff]
        %v952 = vld [vmem:[#allocation2 + $0x90] sm:$0xff]
        %v953 = vld [vmem:[#allocation2 + $0x98] sm:$0xff]
        %v954 = vld [vmem:[#allocation2 + $0xa8] sm:$0xff]
        %v955 = vld [vmem:[#allocation2 + $0xb0] sm:$0xff]
        %v956 = vld [vmem:[#allocation2 + $0xc0] sm:$0xff]
        %v957 = vld [vmem:[#allocation2 + $0xc8] sm:$0xff]
        %v958 = vld [vmem:[#allocation2 + $0xd8] sm:$0xff]
        %v959 = vld [vmem:[#allocation2 + $0xe0] sm:$0xff]
        %v960 = vld [vmem:[#allocation2 + $0xf0] sm:$0xff]
        %v961 = vld [vmem:[#allocation2 + $0xf8] sm:$0xff]
        %v962 = vld [vmem:[#allocation2 + $0x108] sm:$0xff]
        %v963 = vld [vmem:[#allocation2 + $0x110] sm:$0xff]
        %v964 = vld [vmem:[#allocation2 + $0x120] sm:$0xff]
        %v965 = vld [vmem:[#allocation2 + $0x128] sm:$0xff]
        %v966 = vld [vmem:[#allocation2 + $0x138] sm:$0xff]
        %v967 = vld [vmem:[#allocation2 + $0x140] sm:$0xff]
        %v968 = vld [vmem:[#allocation2 + $0x150] sm:$0xff]
        %v969 = vld [vmem:[#allocation2 + $0x158] sm:$0xff]
        %v970 = vld [vmem:[#allocation2 + $0x168] sm:$0xff]
        %v971 = vld [vmem:[#allocation2 + $0x170] sm:$0xff]
        %v972 = vld [vmem:[#allocation2 + $0x1] sm:$0xff]
        %v973 = vld [vmem:[#allocation2 + $0x9] sm:$0xff]
        %v974 = vld [vmem:[#allocation2 + $0x19] sm:$0xff]
        %v975 = vld [vmem:[#allocation2 + $0x21] sm:$0xff]
        %v976 = vld [vmem:[#allocation2 + $0x31] sm:$0xff]
        %v977 = vld [vmem:[#allocation2 + $0x39] sm:$0xff]
        %v978 = vld [vmem:[#allocation2 + $0x49] sm:$0xff]
        %v979 = vld [vmem:[#allocation2 + $0x51] sm:$0xff]
        %v980 = vld [vmem:[#allocation2 + $0x61] sm:$0xff]
        %v981 = vld [vmem:[#allocation2 + $0x69] sm:$0xff]
        %v982 = vld [vmem:[#allocation2 + $0x79] sm:$0xff]
        %v983 = vld [vmem:[#allocation2 + $0x81] sm:$0xff]
        %v984 = vld [vmem:[#allocation2 + $0x91] sm:$0xff]
        %v985 = vld [vmem:[#allocation2 + $0x99] sm:$0xff]
        %v986 = vld [vmem:[#allocation2 + $0xa9] sm:$0xff]
        %v987 = vld [vmem:[#allocation2 + $0xb1] sm:$0xff]
        %v988 = vld [vmem:[#allocation2 + $0xc1] sm:$0xff]
        %v989 = vld [vmem:[#allocation2 + $0xc9] sm:$0xff]
        %v990 = vld [vmem:[#allocation2 + $0xd9] sm:$0xff]
        %v991 = vld [vmem:[#allocation2 + $0xe1] sm:$0xff]
        %v992 = vld [vmem:[#allocation2 + $0xf1] sm:$0xff]
        %v993 = vld [vmem:[#allocation2 + $0xf9] sm:$0xff]
        %v994 = vld [vmem:[#allocation2 + $0x109] sm:$0xff]
        %v995 = vld [vmem:[#allocation2 + $0x111] sm:$0xff]
        %v996 = vld [vmem:[#allocation2 + $0x121] sm:$0xff]
        %v997 = vld [vmem:[#allocation2 + $0x129] sm:$0xff]
        %v998 = vld [vmem:[#allocation2 + $0x139] sm:$0xff]
        %v999 = vld [vmem:[#allocation2 + $0x141] sm:$0xff]
        %v1000 = vld [vmem:[#allocation2 + $0x151] sm:$0xff]
        %v1001 = vld [vmem:[#allocation2 + $0x159] sm:$0xff]
        %v1002 = vld [vmem:[#allocation2 + $0x169] sm:$0xff]
        %v1003 = vld [vmem:[#allocation2 + $0x171] sm:$0xff]
        %v1004 = vld [vmem:[#allocation2 + $0x2] sm:$0xff]
        %v1005 = vld [vmem:[#allocation2 + $0xa] sm:$0xff]
        %v1006 = vld [vmem:[#allocation2 + $0x1a] sm:$0xff]
        %v1007 = vld [vmem:[#allocation2 + $0x22] sm:$0xff]
        %v1008 = vld [vmem:[#allocation2 + $0x32] sm:$0xff]
        %v1009 = vld [vmem:[#allocation2 + $0x3a] sm:$0xff]
        %v1010 = vld [vmem:[#allocation2 + $0x4a] sm:$0xff]
        %v1011 = vld [vmem:[#allocation2 + $0x52] sm:$0xff]
        %v1012 = vld [vmem:[#allocation2 + $0x62] sm:$0xff]
        %v1013 = vld [vmem:[#allocation2 + $0x6a] sm:$0xff]
        %v1014 = vld [vmem:[#allocation2 + $0x7a] sm:$0xff]
        %v1015 = vld [vmem:[#allocation2 + $0x82] sm:$0xff]
        %v1016 = vld [vmem:[#allocation2 + $0x92] sm:$0xff]
        %v1017 = vld [vmem:[#allocation2 + $0x9a] sm:$0xff]
        %v1018 = vld [vmem:[#allocation2 + $0xaa] sm:$0xff]
        %v1019 = vld [vmem:[#allocation2 + $0xb2] sm:$0xff]
        %v1020 = vld [vmem:[#allocation2 + $0xc2] sm:$0xff]
        %v1021 = vld [vmem:[#allocation2 + $0xca] sm:$0xff]
        %v1022 = vld [vmem:[#allocation2 + $0xda] sm:$0xff]
        %v1023 = vld [vmem:[#allocation2 + $0xe2] sm:$0xff]
        %v1024 = vld [vmem:[#allocation2 + $0xf2] sm:$0xff]
        %v1025 = vld [vmem:[#allocation2 + $0xfa] sm:$0xff]
        %v1026 = vld [vmem:[#allocation2 + $0x10a] sm:$0xff]
        %v1027 = vld [vmem:[#allocation2 + $0x112] sm:$0xff]
        %v1028 = vld [vmem:[#allocation2 + $0x122] sm:$0xff]
        %v1029 = vld [vmem:[#allocation2 + $0x12a] sm:$0xff]
        %v1030 = vld [vmem:[#allocation2 + $0x13a] sm:$0xff]
        %v1031 = vld [vmem:[#allocation2 + $0x142] sm:$0xff]
        %v1032 = vld [vmem:[#allocation2 + $0x152] sm:$0xff]
        %v1033 = vld [vmem:[#allocation2 + $0x15a] sm:$0xff]
        %v1034 = vld [vmem:[#allocation2 + $0x16a] sm:$0xff]
        %v1035 = vld [vmem:[#allocation2 + $0x172] sm:$0xff]
        %v1036 = vld [vmem:[%s906] sm:$0xff]
        %v1037 = vld [vmem:[%s906 + $0x8] sm:$0xff]
        %v1038 = vld [vmem:[%s906 + $0x18] sm:$0xff]
        %v1039 = vld [vmem:[%s906 + $0x20] sm:$0xff]
        %v1040 = vld [vmem:[%s906 + $0x30] sm:$0xff]
        %v1041 = vld [vmem:[%s906 + $0x38] sm:$0xff]
        %v1042 = vld [vmem:[%s906 + $0x48] sm:$0xff]
        %v1043 = vld [vmem:[%s906 + $0x50] sm:$0xff]
        %v1044 = vld [vmem:[%s906 + $0x60] sm:$0xff]
        %v1045 = vld [vmem:[%s906 + $0x68] sm:$0xff]
        %v1046 = vld [vmem:[%s906 + $0x78] sm:$0xff]
        %v1047 = vld [vmem:[%s906 + $0x80] sm:$0xff]
        %v1048 = vld [vmem:[%s906 + $0x90] sm:$0xff]
        %v1049 = vld [vmem:[%s906 + $0x98] sm:$0xff]
        %v1050 = vld [vmem:[%s906 + $0xa8] sm:$0xff]
        %v1051 = vld [vmem:[%s906 + $0xb0] sm:$0xff]
        %v1052 = vld [vmem:[%s906 + $0xc0] sm:$0xff]
        %v1053 = vld [vmem:[%s906 + $0xc8] sm:$0xff]
        %v1054 = vld [vmem:[%s906 + $0xd8] sm:$0xff]
        %v1055 = vld [vmem:[%s906 + $0xe0] sm:$0xff]
        %v1056 = vld [vmem:[%s906 + $0xf0] sm:$0xff]
        %v1057 = vld [vmem:[%s906 + $0xf8] sm:$0xff]
        %v1058 = vld [vmem:[%s906 + $0x108] sm:$0xff]
        %v1059 = vld [vmem:[%s906 + $0x110] sm:$0xff]
        %v1060 = vld [vmem:[%s906 + $0x120] sm:$0xff]
        %v1061 = vld [vmem:[%s906 + $0x128] sm:$0xff]
        %v1062 = vld [vmem:[%s906 + $0x138] sm:$0xff]
        %v1063 = vld [vmem:[%s906 + $0x140] sm:$0xff]
        %v1064 = vld [vmem:[%s906 + $0x150] sm:$0xff]
        %v1065 = vld [vmem:[%s906 + $0x158] sm:$0xff]
        %v1066 = vld [vmem:[%s906 + $0x168] sm:$0xff]
        %v1067 = vld [vmem:[%s906 + $0x170] sm:$0xff]
        %v1068 = vld [vmem:[%s906 + $0x1] sm:$0xff]
        %v1069 = vld [vmem:[%s906 + $0x9] sm:$0xff]
        %v1070 = vld [vmem:[%s906 + $0x19] sm:$0xff]
        %v1071 = vld [vmem:[%s906 + $0x21] sm:$0xff]
        %v1072 = vld [vmem:[%s906 + $0x31] sm:$0xff]
        %v1073 = vld [vmem:[%s906 + $0x39] sm:$0xff]
        %v1074 = vld [vmem:[%s906 + $0x49] sm:$0xff]
        %v1075 = vld [vmem:[%s906 + $0x51] sm:$0xff]
        %v1076 = vld [vmem:[%s906 + $0x61] sm:$0xff]
        %v1077 = vld [vmem:[%s906 + $0x69] sm:$0xff]
        %v1078 = vld [vmem:[%s906 + $0x79] sm:$0xff]
        %v1079 = vld [vmem:[%s906 + $0x81] sm:$0xff]
        %v1080 = vld [vmem:[%s906 + $0x91] sm:$0xff]
        %v1081 = vld [vmem:[%s906 + $0x99] sm:$0xff]
        %v1082 = vld [vmem:[%s906 + $0xa9] sm:$0xff]
        %v1083 = vld [vmem:[%s906 + $0xb1] sm:$0xff]
        %v1084 = vld [vmem:[%s906 + $0xc1] sm:$0xff]
        %v1085 = vld [vmem:[%s906 + $0xc9] sm:$0xff]
        %v1086 = vld [vmem:[%s906 + $0xd9] sm:$0xff]
        %v1087 = vld [vmem:[%s906 + $0xe1] sm:$0xff]
        %v1088 = vld [vmem:[%s906 + $0xf1] sm:$0xff]
        %v1089 = vld [vmem:[%s906 + $0xf9] sm:$0xff]
        %v1090 = vld [vmem:[%s906 + $0x109] sm:$0xff]
        %v1091 = vld [vmem:[%s906 + $0x111] sm:$0xff]
        %v1092 = vld [vmem:[%s906 + $0x121] sm:$0xff]
        %v1093 = vld [vmem:[%s906 + $0x129] sm:$0xff]
        %v1094 = vld [vmem:[%s906 + $0x139] sm:$0xff]
        %v1095 = vld [vmem:[%s906 + $0x141] sm:$0xff]
        %v1096 = vld [vmem:[%s906 + $0x151] sm:$0xff]
        %v1097 = vld [vmem:[%s906 + $0x159] sm:$0xff]
        %v1098 = vld [vmem:[%s906 + $0x169] sm:$0xff]
        %v1099 = vld [vmem:[%s906 + $0x171] sm:$0xff]
        %v1100 = vld [vmem:[%s906 + $0x2] sm:$0xff]
        %v1101 = vld [vmem:[%s906 + $0xa] sm:$0xff]
        %v1102 = vld [vmem:[%s906 + $0x1a] sm:$0xff]
        %v1103 = vld [vmem:[%s906 + $0x22] sm:$0xff]
        %v1104 = vld [vmem:[%s906 + $0x32] sm:$0xff]
        %v1105 = vld [vmem:[%s906 + $0x3a] sm:$0xff]
        %v1106 = vld [vmem:[%s906 + $0x4a] sm:$0xff]
        %v1107 = vld [vmem:[%s906 + $0x52] sm:$0xff]
        %v1108 = vld [vmem:[%s906 + $0x62] sm:$0xff]
        %v1109 = vld [vmem:[%s906 + $0x6a] sm:$0xff]
        %v1110 = vld [vmem:[%s906 + $0x7a] sm:$0xff]
        %v1111 = vld [vmem:[%s906 + $0x82] sm:$0xff]
        %v1112 = vld [vmem:[%s906 + $0x92] sm:$0xff]
        %v1113 = vld [vmem:[%s906 + $0x9a] sm:$0xff]
        %v1114 = vld [vmem:[%s906 + $0xaa] sm:$0xff]
        %v1115 = vld [vmem:[%s906 + $0xb2] sm:$0xff]
        %v1116 = vld [vmem:[%s906 + $0xc2] sm:$0xff]
        %v1117 = vld [vmem:[%s906 + $0xca] sm:$0xff]
        %v1118 = vld [vmem:[%s906 + $0xda] sm:$0xff]
        %v1119 = vld [vmem:[%s906 + $0xe2] sm:$0xff]
        %v1120 = vld [vmem:[%s906 + $0xf2] sm:$0xff]
        %v1121 = vld [vmem:[%s906 + $0xfa] sm:$0xff]
        %v1122 = vld [vmem:[%s906 + $0x10a] sm:$0xff]
        %v1123 = vld [vmem:[%s906 + $0x112] sm:$0xff]
        %v1124 = vld [vmem:[%s906 + $0x122] sm:$0xff]
        %v1125 = vld [vmem:[%s906 + $0x12a] sm:$0xff]
        %v1126 = vld [vmem:[%s906 + $0x13a] sm:$0xff]
        %v1127 = vld [vmem:[%s906 + $0x142] sm:$0xff]
        %v1128 = vld [vmem:[%s906 + $0x152] sm:$0xff]
        %v1129 = vld [vmem:[%s906 + $0x15a] sm:$0xff]
        %v1130 = vld [vmem:[%s906 + $0x16a] sm:$0xff]
        %v1131 = vld [vmem:[%s906 + $0x172] sm:$0xff]
        %s1132 = scalar_lea.vmem [#allocation2], 48
        %v1133 = vld [vmem:[%s1132] sm:$0xff]
        %v1134 = vld [vmem:[%s1132 + $0x8] sm:$0xff]
        %v1135 = vld [vmem:[%s1132 + $0x18] sm:$0xff]
        %v1136 = vld [vmem:[%s1132 + $0x20] sm:$0xff]
        %v1137 = vld [vmem:[%s1132 + $0x30] sm:$0xff]
        %v1138 = vld [vmem:[%s1132 + $0x38] sm:$0xff]
        %v1139 = vld [vmem:[%s1132 + $0x48] sm:$0xff]
        %v1140 = vld [vmem:[%s1132 + $0x50] sm:$0xff]
        %v1141 = vld [vmem:[%s1132 + $0x60] sm:$0xff]
        %v1142 = vld [vmem:[%s1132 + $0x68] sm:$0xff]
        %v1143 = vld [vmem:[%s1132 + $0x78] sm:$0xff]
        %v1144 = vld [vmem:[%s1132 + $0x80] sm:$0xff]
        %v1145 = vld [vmem:[%s1132 + $0x90] sm:$0xff]
        %v1146 = vld [vmem:[%s1132 + $0x98] sm:$0xff]
        %v1147 = vld [vmem:[%s1132 + $0xa8] sm:$0xff]
        %v1148 = vld [vmem:[%s1132 + $0xb0] sm:$0xff]
        %v1149 = vld [vmem:[%s1132 + $0xc0] sm:$0xff]
        %v1150 = vld [vmem:[%s1132 + $0xc8] sm:$0xff]
        %v1151 = vld [vmem:[%s1132 + $0xd8] sm:$0xff]
        %v1152 = vld [vmem:[%s1132 + $0xe0] sm:$0xff]
        %v1153 = vld [vmem:[%s1132 + $0xf0] sm:$0xff]
        %v1154 = vld [vmem:[%s1132 + $0xf8] sm:$0xff]
        %v1155 = vld [vmem:[%s1132 + $0x108] sm:$0xff]
        %v1156 = vld [vmem:[%s1132 + $0x110] sm:$0xff]
        %v1157 = vld [vmem:[%s1132 + $0x120] sm:$0xff]
        %v1158 = vld [vmem:[%s1132 + $0x128] sm:$0xff]
        %v1159 = vld [vmem:[%s1132 + $0x138] sm:$0xff]
        %v1160 = vld [vmem:[%s1132 + $0x140] sm:$0xff]
        %v1161 = vld [vmem:[%s1132 + $0x150] sm:$0xff]
        %v1162 = vld [vmem:[%s1132 + $0x158] sm:$0xff]
        %v1163 = vld [vmem:[%s1132 + $0x168] sm:$0xff]
        %v1164 = vld [vmem:[%s1132 + $0x170] sm:$0xff]
        %v1165 = vld [vmem:[%s1132 + $0x1] sm:$0xff]
        %v1166 = vld [vmem:[%s1132 + $0x9] sm:$0xff]
        %v1167 = vld [vmem:[%s1132 + $0x19] sm:$0xff]
        %v1168 = vld [vmem:[%s1132 + $0x21] sm:$0xff]
        %v1169 = vld [vmem:[%s1132 + $0x31] sm:$0xff]
        %v1170 = vld [vmem:[%s1132 + $0x39] sm:$0xff]
        %v1171 = vld [vmem:[%s1132 + $0x49] sm:$0xff]
        %v1172 = vld [vmem:[%s1132 + $0x51] sm:$0xff]
        %v1173 = vld [vmem:[%s1132 + $0x61] sm:$0xff]
        %v1174 = vld [vmem:[%s1132 + $0x69] sm:$0xff]
        %v1175 = vld [vmem:[%s1132 + $0x79] sm:$0xff]
        %v1176 = vld [vmem:[%s1132 + $0x81] sm:$0xff]
        %v1177 = vld [vmem:[%s1132 + $0x91] sm:$0xff]
        %v1178 = vld [vmem:[%s1132 + $0x99] sm:$0xff]
        %v1179 = vld [vmem:[%s1132 + $0xa9] sm:$0xff]
        %v1180 = vld [vmem:[%s1132 + $0xb1] sm:$0xff]
        %v1181 = vld [vmem:[%s1132 + $0xc1] sm:$0xff]
        %v1182 = vld [vmem:[%s1132 + $0xc9] sm:$0xff]
        %v1183 = vld [vmem:[%s1132 + $0xd9] sm:$0xff]
        %v1184 = vld [vmem:[%s1132 + $0xe1] sm:$0xff]
        %v1185 = vld [vmem:[%s1132 + $0xf1] sm:$0xff]
        %v1186 = vld [vmem:[%s1132 + $0xf9] sm:$0xff]
        %v1187 = vld [vmem:[%s1132 + $0x109] sm:$0xff]
        %v1188 = vld [vmem:[%s1132 + $0x111] sm:$0xff]
        %v1189 = vld [vmem:[%s1132 + $0x121] sm:$0xff]
        %v1190 = vld [vmem:[%s1132 + $0x129] sm:$0xff]
        %v1191 = vld [vmem:[%s1132 + $0x139] sm:$0xff]
        %v1192 = vld [vmem:[%s1132 + $0x141] sm:$0xff]
        %v1193 = vld [vmem:[%s1132 + $0x151] sm:$0xff]
        %v1194 = vld [vmem:[%s1132 + $0x159] sm:$0xff]
        %v1195 = vld [vmem:[%s1132 + $0x169] sm:$0xff]
        %v1196 = vld [vmem:[%s1132 + $0x171] sm:$0xff]
        %v1197 = vld [vmem:[%s1132 + $0x2] sm:$0xff]
        %v1198 = vld [vmem:[%s1132 + $0xa] sm:$0xff]
        %v1199 = vld [vmem:[%s1132 + $0x1a] sm:$0xff]
        %v1200 = vld [vmem:[%s1132 + $0x22] sm:$0xff]
        %v1201 = vld [vmem:[%s1132 + $0x32] sm:$0xff]
        %v1202 = vld [vmem:[%s1132 + $0x3a] sm:$0xff]
        %v1203 = vld [vmem:[%s1132 + $0x4a] sm:$0xff]
        %v1204 = vld [vmem:[%s1132 + $0x52] sm:$0xff]
        %v1205 = vld [vmem:[%s1132 + $0x62] sm:$0xff]
        %v1206 = vld [vmem:[%s1132 + $0x6a] sm:$0xff]
        %v1207 = vld [vmem:[%s1132 + $0x7a] sm:$0xff]
        %v1208 = vld [vmem:[%s1132 + $0x82] sm:$0xff]
        %v1209 = vld [vmem:[%s1132 + $0x92] sm:$0xff]
        %v1210 = vld [vmem:[%s1132 + $0x9a] sm:$0xff]
        %v1211 = vld [vmem:[%s1132 + $0xaa] sm:$0xff]
        %v1212 = vld [vmem:[%s1132 + $0xb2] sm:$0xff]
        %v1213 = vld [vmem:[%s1132 + $0xc2] sm:$0xff]
        %v1214 = vld [vmem:[%s1132 + $0xca] sm:$0xff]
        %v1215 = vld [vmem:[%s1132 + $0xda] sm:$0xff]
        %v1216 = vld [vmem:[%s1132 + $0xe2] sm:$0xff]
        %v1217 = vld [vmem:[%s1132 + $0xf2] sm:$0xff]
        %v1218 = vld [vmem:[%s1132 + $0xfa] sm:$0xff]
        %v1219 = vld [vmem:[%s1132 + $0x10a] sm:$0xff]
        %v1220 = vld [vmem:[%s1132 + $0x112] sm:$0xff]
        %v1221 = vld [vmem:[%s1132 + $0x122] sm:$0xff]
        %v1222 = vld [vmem:[%s1132 + $0x12a] sm:$0xff]
        %v1223 = vld [vmem:[%s1132 + $0x13a] sm:$0xff]
        %v1224 = vld [vmem:[%s1132 + $0x142] sm:$0xff]
        %v1225 = vld [vmem:[%s1132 + $0x152] sm:$0xff]
        %v1226 = vld [vmem:[%s1132 + $0x15a] sm:$0xff]
        %v1227 = vld [vmem:[%s1132 + $0x16a] sm:$0xff]
        %v1228 = vld [vmem:[%s1132 + $0x172] sm:$0xff]
        %1261 = vrot.lane.b32.xlu0 %v972, 4
        %v1262 = vpop.permute.xlu0 %1261
        %1263 = vrot.lane.b32.xlu0 %v973, 4
        %v1264 = vpop.permute.xlu0 %1263
        %1265 = vrot.lane.b32.xlu0 %v974, 4
        %v1266 = vpop.permute.xlu0 %1265
        %1267 = vrot.lane.b32.xlu0 %v975, 4
        %v1268 = vpop.permute.xlu0 %1267
        %1269 = vrot.lane.b32.xlu0 %v976, 4
        %v1270 = vpop.permute.xlu0 %1269
        %1271 = vrot.lane.b32.xlu0 %v977, 4
        %v1272 = vpop.permute.xlu0 %1271
        %1273 = vrot.lane.b32.xlu0 %v978, 4
        %v1274 = vpop.permute.xlu0 %1273
        %1275 = vrot.lane.b32.xlu0 %v979, 4
        %v1276 = vpop.permute.xlu0 %1275
        %1277 = vrot.lane.b32.xlu0 %v980, 4
        %v1278 = vpop.permute.xlu0 %1277
        %1279 = vrot.lane.b32.xlu0 %v981, 4
        %v1280 = vpop.permute.xlu0 %1279
        %1281 = vrot.lane.b32.xlu0 %v982, 4
        %v1282 = vpop.permute.xlu0 %1281
        %1283 = vrot.lane.b32.xlu0 %v983, 4
        %v1284 = vpop.permute.xlu0 %1283
        %1285 = vrot.lane.b32.xlu0 %v984, 4
        %v1286 = vpop.permute.xlu0 %1285
        %1287 = vrot.lane.b32.xlu0 %v985, 4
        %v1288 = vpop.permute.xlu0 %1287
        %1289 = vrot.lane.b32.xlu0 %v986, 4
        %v1290 = vpop.permute.xlu0 %1289
        %1291 = vrot.lane.b32.xlu0 %v987, 4
        %v1292 = vpop.permute.xlu0 %1291
        %1293 = vrot.lane.b32.xlu0 %v988, 4
        %v1294 = vpop.permute.xlu0 %1293
        %1295 = vrot.lane.b32.xlu0 %v989, 4
        %v1296 = vpop.permute.xlu0 %1295
        %1297 = vrot.lane.b32.xlu0 %v990, 4
        %v1298 = vpop.permute.xlu0 %1297
        %1299 = vrot.lane.b32.xlu0 %v991, 4
        %v1300 = vpop.permute.xlu0 %1299
        %1301 = vrot.lane.b32.xlu0 %v992, 4
        %v1302 = vpop.permute.xlu0 %1301
        %1303 = vrot.lane.b32.xlu0 %v993, 4
        %v1304 = vpop.permute.xlu0 %1303
        %1305 = vrot.lane.b32.xlu0 %v994, 4
        %v1306 = vpop.permute.xlu0 %1305
        %1307 = vrot.lane.b32.xlu0 %v995, 4
        %v1308 = vpop.permute.xlu0 %1307
        %1309 = vrot.lane.b32.xlu0 %v996, 4
        %v1310 = vpop.permute.xlu0 %1309
        %1311 = vrot.lane.b32.xlu0 %v997, 4
        %v1312 = vpop.permute.xlu0 %1311
        %1313 = vrot.lane.b32.xlu0 %v998, 4
        %v1314 = vpop.permute.xlu0 %1313
        %1315 = vrot.lane.b32.xlu0 %v999, 4
        %v1316 = vpop.permute.xlu0 %1315
        %1317 = vrot.lane.b32.xlu0 %v1000, 4
        %v1318 = vpop.permute.xlu0 %1317
        %1319 = vrot.lane.b32.xlu0 %v1001, 4
        %v1320 = vpop.permute.xlu0 %1319
        %1321 = vrot.lane.b32.xlu0 %v1002, 4
        %v1322 = vpop.permute.xlu0 %1321
        %1323 = vrot.lane.b32.xlu0 %v1003, 4
        %v1324 = vpop.permute.xlu0 %1323
        %1389 = vrot.lane.b32.xlu0 %v1004, 8
        %v1390 = vpop.permute.xlu0 %1389
        %1391 = vrot.lane.b32.xlu0 %v1005, 8
        %v1392 = vpop.permute.xlu0 %1391
        %1393 = vrot.lane.b32.xlu0 %v1006, 8
        %v1394 = vpop.permute.xlu0 %1393
        %1395 = vrot.lane.b32.xlu0 %v1007, 8
        %v1396 = vpop.permute.xlu0 %1395
        %1397 = vrot.lane.b32.xlu0 %v1008, 8
        %v1398 = vpop.permute.xlu0 %1397
        %1399 = vrot.lane.b32.xlu0 %v1009, 8
        %v1400 = vpop.permute.xlu0 %1399
        %1401 = vrot.lane.b32.xlu0 %v1010, 8
        %v1402 = vpop.permute.xlu0 %1401
        %1403 = vrot.lane.b32.xlu0 %v1011, 8
        %v1404 = vpop.permute.xlu0 %1403
        %1405 = vrot.lane.b32.xlu0 %v1012, 8
        %v1406 = vpop.permute.xlu0 %1405
        %1407 = vrot.lane.b32.xlu0 %v1013, 8
        %v1408 = vpop.permute.xlu0 %1407
        %1409 = vrot.lane.b32.xlu0 %v1014, 8
        %v1410 = vpop.permute.xlu0 %1409
        %1411 = vrot.lane.b32.xlu0 %v1015, 8
        %v1412 = vpop.permute.xlu0 %1411
        %1413 = vrot.lane.b32.xlu0 %v1016, 8
        %v1414 = vpop.permute.xlu0 %1413
        %1415 = vrot.lane.b32.xlu0 %v1017, 8
        %v1416 = vpop.permute.xlu0 %1415
        %1417 = vrot.lane.b32.xlu0 %v1018, 8
        %v1418 = vpop.permute.xlu0 %1417
        %1419 = vrot.lane.b32.xlu0 %v1019, 8
        %v1420 = vpop.permute.xlu0 %1419
        %1421 = vrot.lane.b32.xlu0 %v1020, 8
        %v1422 = vpop.permute.xlu0 %1421
        %1423 = vrot.lane.b32.xlu0 %v1021, 8
        %v1424 = vpop.permute.xlu0 %1423
        %1425 = vrot.lane.b32.xlu0 %v1022, 8
        %v1426 = vpop.permute.xlu0 %1425
        %1427 = vrot.lane.b32.xlu0 %v1023, 8
        %v1428 = vpop.permute.xlu0 %1427
        %1429 = vrot.lane.b32.xlu0 %v1024, 8
        %v1430 = vpop.permute.xlu0 %1429
        %1431 = vrot.lane.b32.xlu0 %v1025, 8
        %v1432 = vpop.permute.xlu0 %1431
        %1433 = vrot.lane.b32.xlu0 %v1026, 8
        %v1434 = vpop.permute.xlu0 %1433
        %1435 = vrot.lane.b32.xlu0 %v1027, 8
        %v1436 = vpop.permute.xlu0 %1435
        %1437 = vrot.lane.b32.xlu0 %v1028, 8
        %v1438 = vpop.permute.xlu0 %1437
        %1439 = vrot.lane.b32.xlu0 %v1029, 8
        %v1440 = vpop.permute.xlu0 %1439
        %1441 = vrot.lane.b32.xlu0 %v1030, 8
        %v1442 = vpop.permute.xlu0 %1441
        %1443 = vrot.lane.b32.xlu0 %v1031, 8
        %v1444 = vpop.permute.xlu0 %1443
        %1445 = vrot.lane.b32.xlu0 %v1032, 8
        %v1446 = vpop.permute.xlu0 %1445
        %1447 = vrot.lane.b32.xlu0 %v1033, 8
        %v1448 = vpop.permute.xlu0 %1447
        %1449 = vrot.lane.b32.xlu0 %v1034, 8
        %v1450 = vpop.permute.xlu0 %1449
        %1451 = vrot.lane.b32.xlu0 %v1035, 8
        %v1452 = vpop.permute.xlu0 %1451
        %1517 = vrot.lane.b32.xlu0 %v1036, 12
        %v1518 = vpop.permute.xlu0 %1517
        %1519 = vrot.lane.b32.xlu0 %v1037, 12
        %v1520 = vpop.permute.xlu0 %1519
        %1521 = vrot.lane.b32.xlu0 %v1038, 12
        %v1522 = vpop.permute.xlu0 %1521
        %1523 = vrot.lane.b32.xlu0 %v1039, 12
        %v1524 = vpop.permute.xlu0 %1523
        %1525 = vrot.lane.b32.xlu0 %v1040, 12
        %v1526 = vpop.permute.xlu0 %1525
        %1527 = vrot.lane.b32.xlu0 %v1041, 12
        %v1528 = vpop.permute.xlu0 %1527
        %1529 = vrot.lane.b32.xlu0 %v1042, 12
        %v1530 = vpop.permute.xlu0 %1529
        %1531 = vrot.lane.b32.xlu0 %v1043, 12
        %v1532 = vpop.permute.xlu0 %1531
        %1533 = vrot.lane.b32.xlu0 %v1044, 12
        %v1534 = vpop.permute.xlu0 %1533
        %1535 = vrot.lane.b32.xlu0 %v1045, 12
        %v1536 = vpop.permute.xlu0 %1535
        %1537 = vrot.lane.b32.xlu0 %v1046, 12
        %v1538 = vpop.permute.xlu0 %1537
        %1539 = vrot.lane.b32.xlu0 %v1047, 12
        %v1540 = vpop.permute.xlu0 %1539
        %1541 = vrot.lane.b32.xlu0 %v1048, 12
        %v1542 = vpop.permute.xlu0 %1541
        %1543 = vrot.lane.b32.xlu0 %v1049, 12
        %v1544 = vpop.permute.xlu0 %1543
        %1545 = vrot.lane.b32.xlu0 %v1050, 12
        %v1546 = vpop.permute.xlu0 %1545
        %1547 = vrot.lane.b32.xlu0 %v1051, 12
        %v1548 = vpop.permute.xlu0 %1547
        %1549 = vrot.lane.b32.xlu0 %v1052, 12
        %v1550 = vpop.permute.xlu0 %1549
        %1551 = vrot.lane.b32.xlu0 %v1053, 12
        %v1552 = vpop.permute.xlu0 %1551
        %1553 = vrot.lane.b32.xlu0 %v1054, 12
        %v1554 = vpop.permute.xlu0 %1553
        %1555 = vrot.lane.b32.xlu0 %v1055, 12
        %v1556 = vpop.permute.xlu0 %1555
        %1557 = vrot.lane.b32.xlu0 %v1056, 12
        %v1558 = vpop.permute.xlu0 %1557
        %1559 = vrot.lane.b32.xlu0 %v1057, 12
        %v1560 = vpop.permute.xlu0 %1559
        %1561 = vrot.lane.b32.xlu0 %v1058, 12
        %v1562 = vpop.permute.xlu0 %1561
        %1563 = vrot.lane.b32.xlu0 %v1059, 12
        %v1564 = vpop.permute.xlu0 %1563
        %1565 = vrot.lane.b32.xlu0 %v1060, 12
        %v1566 = vpop.permute.xlu0 %1565
        %1567 = vrot.lane.b32.xlu0 %v1061, 12
        %v1568 = vpop.permute.xlu0 %1567
        %1569 = vrot.lane.b32.xlu0 %v1062, 12
        %v1570 = vpop.permute.xlu0 %1569
        %1571 = vrot.lane.b32.xlu0 %v1063, 12
        %v1572 = vpop.permute.xlu0 %1571
        %1573 = vrot.lane.b32.xlu0 %v1064, 12
        %v1574 = vpop.permute.xlu0 %1573
        %1575 = vrot.lane.b32.xlu0 %v1065, 12
        %v1576 = vpop.permute.xlu0 %1575
        %1577 = vrot.lane.b32.xlu0 %v1066, 12
        %v1578 = vpop.permute.xlu0 %1577
        %1579 = vrot.lane.b32.xlu0 %v1067, 12
        %v1580 = vpop.permute.xlu0 %1579
        %1645 = vrot.lane.b32.xlu0 %v1068, 16
        %v1646 = vpop.permute.xlu0 %1645
        %1647 = vrot.lane.b32.xlu0 %v1069, 16
        %v1648 = vpop.permute.xlu0 %1647
        %1649 = vrot.lane.b32.xlu0 %v1070, 16
        %v1650 = vpop.permute.xlu0 %1649
        %1651 = vrot.lane.b32.xlu0 %v1071, 16
        %v1652 = vpop.permute.xlu0 %1651
        %1653 = vrot.lane.b32.xlu0 %v1072, 16
        %v1654 = vpop.permute.xlu0 %1653
        %1655 = vrot.lane.b32.xlu0 %v1073, 16
        %v1656 = vpop.permute.xlu0 %1655
        %1657 = vrot.lane.b32.xlu0 %v1074, 16
        %v1658 = vpop.permute.xlu0 %1657
        %1659 = vrot.lane.b32.xlu0 %v1075, 16
        %v1660 = vpop.permute.xlu0 %1659
        %1661 = vrot.lane.b32.xlu0 %v1076, 16
        %v1662 = vpop.permute.xlu0 %1661
        %1663 = vrot.lane.b32.xlu0 %v1077, 16
        %v1664 = vpop.permute.xlu0 %1663
        %1665 = vrot.lane.b32.xlu0 %v1078, 16
        %v1666 = vpop.permute.xlu0 %1665
        %1667 = vrot.lane.b32.xlu0 %v1079, 16
        %v1668 = vpop.permute.xlu0 %1667
        %1669 = vrot.lane.b32.xlu0 %v1080, 16
        %v1670 = vpop.permute.xlu0 %1669
        %1671 = vrot.lane.b32.xlu0 %v1081, 16
        %v1672 = vpop.permute.xlu0 %1671
        %1673 = vrot.lane.b32.xlu0 %v1082, 16
        %v1674 = vpop.permute.xlu0 %1673
        %1675 = vrot.lane.b32.xlu0 %v1083, 16
        %v1676 = vpop.permute.xlu0 %1675
        %1677 = vrot.lane.b32.xlu0 %v1084, 16
        %v1678 = vpop.permute.xlu0 %1677
        %1679 = vrot.lane.b32.xlu0 %v1085, 16
        %v1680 = vpop.permute.xlu0 %1679
        %1681 = vrot.lane.b32.xlu0 %v1086, 16
        %v1682 = vpop.permute.xlu0 %1681
        %1683 = vrot.lane.b32.xlu0 %v1087, 16
        %v1684 = vpop.permute.xlu0 %1683
        %1685 = vrot.lane.b32.xlu0 %v1088, 16
        %v1686 = vpop.permute.xlu0 %1685
        %1687 = vrot.lane.b32.xlu0 %v1089, 16
        %v1688 = vpop.permute.xlu0 %1687
        %1689 = vrot.lane.b32.xlu0 %v1090, 16
        %v1690 = vpop.permute.xlu0 %1689
        %1691 = vrot.lane.b32.xlu0 %v1091, 16
        %v1692 = vpop.permute.xlu0 %1691
        %1693 = vrot.lane.b32.xlu0 %v1092, 16
        %v1694 = vpop.permute.xlu0 %1693
        %1695 = vrot.lane.b32.xlu0 %v1093, 16
        %v1696 = vpop.permute.xlu0 %1695
        %1697 = vrot.lane.b32.xlu0 %v1094, 16
        %v1698 = vpop.permute.xlu0 %1697
        %1699 = vrot.lane.b32.xlu0 %v1095, 16
        %v1700 = vpop.permute.xlu0 %1699
        %1701 = vrot.lane.b32.xlu0 %v1096, 16
        %v1702 = vpop.permute.xlu0 %1701
        %1703 = vrot.lane.b32.xlu0 %v1097, 16
        %v1704 = vpop.permute.xlu0 %1703
        %1705 = vrot.lane.b32.xlu0 %v1098, 16
        %v1706 = vpop.permute.xlu0 %1705
        %1707 = vrot.lane.b32.xlu0 %v1099, 16
        %v1708 = vpop.permute.xlu0 %1707
        %1773 = vrot.lane.b32.xlu0 %v1100, 20
        %v1774 = vpop.permute.xlu0 %1773
        %1775 = vrot.lane.b32.xlu0 %v1101, 20
        %v1776 = vpop.permute.xlu0 %1775
        %1777 = vrot.lane.b32.xlu0 %v1102, 20
        %v1778 = vpop.permute.xlu0 %1777
        %1779 = vrot.lane.b32.xlu0 %v1103, 20
        %v1780 = vpop.permute.xlu0 %1779
        %1781 = vrot.lane.b32.xlu0 %v1104, 20
        %v1782 = vpop.permute.xlu0 %1781
        %1783 = vrot.lane.b32.xlu0 %v1105, 20
        %v1784 = vpop.permute.xlu0 %1783
        %1785 = vrot.lane.b32.xlu0 %v1106, 20
        %v1786 = vpop.permute.xlu0 %1785
        %1787 = vrot.lane.b32.xlu0 %v1107, 20
        %v1788 = vpop.permute.xlu0 %1787
        %1789 = vrot.lane.b32.xlu0 %v1108, 20
        %v1790 = vpop.permute.xlu0 %1789
        %1791 = vrot.lane.b32.xlu0 %v1109, 20
        %v1792 = vpop.permute.xlu0 %1791
        %1793 = vrot.lane.b32.xlu0 %v1110, 20
        %v1794 = vpop.permute.xlu0 %1793
        %1795 = vrot.lane.b32.xlu0 %v1111, 20
        %v1796 = vpop.permute.xlu0 %1795
        %1797 = vrot.lane.b32.xlu0 %v1112, 20
        %v1798 = vpop.permute.xlu0 %1797
        %1799 = vrot.lane.b32.xlu0 %v1113, 20
        %v1800 = vpop.permute.xlu0 %1799
        %1801 = vrot.lane.b32.xlu0 %v1114, 20
        %v1802 = vpop.permute.xlu0 %1801
        %1803 = vrot.lane.b32.xlu0 %v1115, 20
        %v1804 = vpop.permute.xlu0 %1803
        %1805 = vrot.lane.b32.xlu0 %v1116, 20
        %v1806 = vpop.permute.xlu0 %1805
        %1807 = vrot.lane.b32.xlu0 %v1117, 20
        %v1808 = vpop.permute.xlu0 %1807
        %1809 = vrot.lane.b32.xlu0 %v1118, 20
        %v1810 = vpop.permute.xlu0 %1809
        %1811 = vrot.lane.b32.xlu0 %v1119, 20
        %v1812 = vpop.permute.xlu0 %1811
        %1813 = vrot.lane.b32.xlu0 %v1120, 20
        %v1814 = vpop.permute.xlu0 %1813
        %1815 = vrot.lane.b32.xlu0 %v1121, 20
        %v1816 = vpop.permute.xlu0 %1815
        %1817 = vrot.lane.b32.xlu0 %v1122, 20
        %v1818 = vpop.permute.xlu0 %1817
        %1819 = vrot.lane.b32.xlu0 %v1123, 20
        %v1820 = vpop.permute.xlu0 %1819
        %1821 = vrot.lane.b32.xlu0 %v1124, 20
        %v1822 = vpop.permute.xlu0 %1821
        %1823 = vrot.lane.b32.xlu0 %v1125, 20
        %v1824 = vpop.permute.xlu0 %1823
        %1825 = vrot.lane.b32.xlu0 %v1126, 20
        %v1826 = vpop.permute.xlu0 %1825
        %1827 = vrot.lane.b32.xlu0 %v1127, 20
        %v1828 = vpop.permute.xlu0 %1827
        %1829 = vrot.lane.b32.xlu0 %v1128, 20
        %v1830 = vpop.permute.xlu0 %1829
        %1831 = vrot.lane.b32.xlu0 %v1129, 20
        %v1832 = vpop.permute.xlu0 %1831
        %1833 = vrot.lane.b32.xlu0 %v1130, 20
        %v1834 = vpop.permute.xlu0 %1833
        %1835 = vrot.lane.b32.xlu0 %v1131, 20
        %v1836 = vpop.permute.xlu0 %1835
        %1901 = vrot.lane.b32.xlu0 %v1133, 24
        %v1902 = vpop.permute.xlu0 %1901
        %1903 = vrot.lane.b32.xlu0 %v1134, 24
        %v1904 = vpop.permute.xlu0 %1903
        %1905 = vrot.lane.b32.xlu0 %v1135, 24
        %v1906 = vpop.permute.xlu0 %1905
        %1907 = vrot.lane.b32.xlu0 %v1136, 24
        %v1908 = vpop.permute.xlu0 %1907
        %1909 = vrot.lane.b32.xlu0 %v1137, 24
        %v1910 = vpop.permute.xlu0 %1909
        %1911 = vrot.lane.b32.xlu0 %v1138, 24
        %v1912 = vpop.permute.xlu0 %1911
        %1913 = vrot.lane.b32.xlu0 %v1139, 24
        %v1914 = vpop.permute.xlu0 %1913
        %1915 = vrot.lane.b32.xlu0 %v1140, 24
        %v1916 = vpop.permute.xlu0 %1915
        %1917 = vrot.lane.b32.xlu0 %v1141, 24
        %v1918 = vpop.permute.xlu0 %1917
        %1919 = vrot.lane.b32.xlu0 %v1142, 24
        %v1920 = vpop.permute.xlu0 %1919
        %1921 = vrot.lane.b32.xlu0 %v1143, 24
        %v1922 = vpop.permute.xlu0 %1921
        %1923 = vrot.lane.b32.xlu0 %v1144, 24
        %v1924 = vpop.permute.xlu0 %1923
        %1925 = vrot.lane.b32.xlu0 %v1145, 24
        %v1926 = vpop.permute.xlu0 %1925
        %1927 = vrot.lane.b32.xlu0 %v1146, 24
        %v1928 = vpop.permute.xlu0 %1927
        %1929 = vrot.lane.b32.xlu0 %v1147, 24
        %v1930 = vpop.permute.xlu0 %1929
        %1931 = vrot.lane.b32.xlu0 %v1148, 24
        %v1932 = vpop.permute.xlu0 %1931
        %1933 = vrot.lane.b32.xlu0 %v1149, 24
        %v1934 = vpop.permute.xlu0 %1933
        %1935 = vrot.lane.b32.xlu0 %v1150, 24
        %v1936 = vpop.permute.xlu0 %1935
        %1937 = vrot.lane.b32.xlu0 %v1151, 24
        %v1938 = vpop.permute.xlu0 %1937
        %1939 = vrot.lane.b32.xlu0 %v1152, 24
        %v1940 = vpop.permute.xlu0 %1939
        %1941 = vrot.lane.b32.xlu0 %v1153, 24
        %v1942 = vpop.permute.xlu0 %1941
        %1943 = vrot.lane.b32.xlu0 %v1154, 24
        %v1944 = vpop.permute.xlu0 %1943
        %1945 = vrot.lane.b32.xlu0 %v1155, 24
        %v1946 = vpop.permute.xlu0 %1945
        %1947 = vrot.lane.b32.xlu0 %v1156, 24
        %v1948 = vpop.permute.xlu0 %1947
        %1949 = vrot.lane.b32.xlu0 %v1157, 24
        %v1950 = vpop.permute.xlu0 %1949
        %1951 = vrot.lane.b32.xlu0 %v1158, 24
        %v1952 = vpop.permute.xlu0 %1951
        %1953 = vrot.lane.b32.xlu0 %v1159, 24
        %v1954 = vpop.permute.xlu0 %1953
        %1955 = vrot.lane.b32.xlu0 %v1160, 24
        %v1956 = vpop.permute.xlu0 %1955
        %1957 = vrot.lane.b32.xlu0 %v1161, 24
        %v1958 = vpop.permute.xlu0 %1957
        %1959 = vrot.lane.b32.xlu0 %v1162, 24
        %v1960 = vpop.permute.xlu0 %1959
        %1961 = vrot.lane.b32.xlu0 %v1163, 24
        %v1962 = vpop.permute.xlu0 %1961
        %1963 = vrot.lane.b32.xlu0 %v1164, 24
        %v1964 = vpop.permute.xlu0 %1963
        %2029 = vrot.lane.b32.xlu0 %v1165, 28
        %v2030 = vpop.permute.xlu0 %2029
        %2031 = vrot.lane.b32.xlu0 %v1166, 28
        %v2032 = vpop.permute.xlu0 %2031
        %2033 = vrot.lane.b32.xlu0 %v1167, 28
        %v2034 = vpop.permute.xlu0 %2033
        %2035 = vrot.lane.b32.xlu0 %v1168, 28
        %v2036 = vpop.permute.xlu0 %2035
        %2037 = vrot.lane.b32.xlu0 %v1169, 28
        %v2038 = vpop.permute.xlu0 %2037
        %2039 = vrot.lane.b32.xlu0 %v1170, 28
        %v2040 = vpop.permute.xlu0 %2039
        %2041 = vrot.lane.b32.xlu0 %v1171, 28
        %v2042 = vpop.permute.xlu0 %2041
        %2043 = vrot.lane.b32.xlu0 %v1172, 28
        %v2044 = vpop.permute.xlu0 %2043
        %2045 = vrot.lane.b32.xlu0 %v1173, 28
        %v2046 = vpop.permute.xlu0 %2045
        %2047 = vrot.lane.b32.xlu0 %v1174, 28
        %v2048 = vpop.permute.xlu0 %2047
        %2049 = vrot.lane.b32.xlu0 %v1175, 28
        %v2050 = vpop.permute.xlu0 %2049
        %2051 = vrot.lane.b32.xlu0 %v1176, 28
        %v2052 = vpop.permute.xlu0 %2051
        %2053 = vrot.lane.b32.xlu0 %v1177, 28
        %v2054 = vpop.permute.xlu0 %2053
        %2055 = vrot.lane.b32.xlu0 %v1178, 28
        %v2056 = vpop.permute.xlu0 %2055
        %2057 = vrot.lane.b32.xlu0 %v1179, 28
        %v2058 = vpop.permute.xlu0 %2057
        %2059 = vrot.lane.b32.xlu0 %v1180, 28
        %v2060 = vpop.permute.xlu0 %2059
        %2061 = vrot.lane.b32.xlu0 %v1181, 28
        %v2062 = vpop.permute.xlu0 %2061
        %2063 = vrot.lane.b32.xlu0 %v1182, 28
        %v2064 = vpop.permute.xlu0 %2063
        %2065 = vrot.lane.b32.xlu0 %v1183, 28
        %v2066 = vpop.permute.xlu0 %2065
        %2067 = vrot.lane.b32.xlu0 %v1184, 28
        %v2068 = vpop.permute.xlu0 %2067
        %2069 = vrot.lane.b32.xlu0 %v1185, 28
        %v2070 = vpop.permute.xlu0 %2069
        %2071 = vrot.lane.b32.xlu0 %v1186, 28
        %v2072 = vpop.permute.xlu0 %2071
        %2073 = vrot.lane.b32.xlu0 %v1187, 28
        %v2074 = vpop.permute.xlu0 %2073
        %2075 = vrot.lane.b32.xlu0 %v1188, 28
        %v2076 = vpop.permute.xlu0 %2075
        %2077 = vrot.lane.b32.xlu0 %v1189, 28
        %v2078 = vpop.permute.xlu0 %2077
        %2079 = vrot.lane.b32.xlu0 %v1190, 28
        %v2080 = vpop.permute.xlu0 %2079
        %2081 = vrot.lane.b32.xlu0 %v1191, 28
        %v2082 = vpop.permute.xlu0 %2081
        %2083 = vrot.lane.b32.xlu0 %v1192, 28
        %v2084 = vpop.permute.xlu0 %2083
        %2085 = vrot.lane.b32.xlu0 %v1193, 28
        %v2086 = vpop.permute.xlu0 %2085
        %2087 = vrot.lane.b32.xlu0 %v1194, 28
        %v2088 = vpop.permute.xlu0 %2087
        %2089 = vrot.lane.b32.xlu0 %v1195, 28
        %v2090 = vpop.permute.xlu0 %2089
        %2091 = vrot.lane.b32.xlu0 %v1196, 28
        %v2092 = vpop.permute.xlu0 %2091
        %2157 = vrot.lane.b32.xlu0 %v1197, 32
        %v2158 = vpop.permute.xlu0 %2157
        %2159 = vrot.lane.b32.xlu0 %v1198, 32
        %v2160 = vpop.permute.xlu0 %2159
        %2161 = vrot.lane.b32.xlu0 %v1199, 32
        %v2162 = vpop.permute.xlu0 %2161
        %2163 = vrot.lane.b32.xlu0 %v1200, 32
        %v2164 = vpop.permute.xlu0 %2163
        %2165 = vrot.lane.b32.xlu0 %v1201, 32
        %v2166 = vpop.permute.xlu0 %2165
        %2167 = vrot.lane.b32.xlu0 %v1202, 32
        %v2168 = vpop.permute.xlu0 %2167
        %2169 = vrot.lane.b32.xlu0 %v1203, 32
        %v2170 = vpop.permute.xlu0 %2169
        %2171 = vrot.lane.b32.xlu0 %v1204, 32
        %v2172 = vpop.permute.xlu0 %2171
        %2173 = vrot.lane.b32.xlu0 %v1205, 32
        %v2174 = vpop.permute.xlu0 %2173
        %2175 = vrot.lane.b32.xlu0 %v1206, 32
        %v2176 = vpop.permute.xlu0 %2175
        %2177 = vrot.lane.b32.xlu0 %v1207, 32
        %v2178 = vpop.permute.xlu0 %2177
        %2179 = vrot.lane.b32.xlu0 %v1208, 32
        %v2180 = vpop.permute.xlu0 %2179
        %2181 = vrot.lane.b32.xlu0 %v1209, 32
        %v2182 = vpop.permute.xlu0 %2181
        %2183 = vrot.lane.b32.xlu0 %v1210, 32
        %v2184 = vpop.permute.xlu0 %2183
        %2185 = vrot.lane.b32.xlu0 %v1211, 32
        %v2186 = vpop.permute.xlu0 %2185
        %2187 = vrot.lane.b32.xlu0 %v1212, 32
        %v2188 = vpop.permute.xlu0 %2187
        %2189 = vrot.lane.b32.xlu0 %v1213, 32
        %v2190 = vpop.permute.xlu0 %2189
        %2191 = vrot.lane.b32.xlu0 %v1214, 32
        %v2192 = vpop.permute.xlu0 %2191
        %2193 = vrot.lane.b32.xlu0 %v1215, 32
        %v2194 = vpop.permute.xlu0 %2193
        %2195 = vrot.lane.b32.xlu0 %v1216, 32
        %v2196 = vpop.permute.xlu0 %2195
        %2197 = vrot.lane.b32.xlu0 %v1217, 32
        %v2198 = vpop.permute.xlu0 %2197
        %2199 = vrot.lane.b32.xlu0 %v1218, 32
        %v2200 = vpop.permute.xlu0 %2199
        %2201 = vrot.lane.b32.xlu0 %v1219, 32
        %v2202 = vpop.permute.xlu0 %2201
        %2203 = vrot.lane.b32.xlu0 %v1220, 32
        %v2204 = vpop.permute.xlu0 %2203
        %2205 = vrot.lane.b32.xlu0 %v1221, 32
        %v2206 = vpop.permute.xlu0 %2205
        %2207 = vrot.lane.b32.xlu0 %v1222, 32
        %v2208 = vpop.permute.xlu0 %2207
        %2209 = vrot.lane.b32.xlu0 %v1223, 32
        %v2210 = vpop.permute.xlu0 %2209
        %2211 = vrot.lane.b32.xlu0 %v1224, 32
        %v2212 = vpop.permute.xlu0 %2211
        %2213 = vrot.lane.b32.xlu0 %v1225, 32
        %v2214 = vpop.permute.xlu0 %2213
        %2215 = vrot.lane.b32.xlu0 %v1226, 32
        %v2216 = vpop.permute.xlu0 %2215
        %2217 = vrot.lane.b32.xlu0 %v1227, 32
        %v2218 = vpop.permute.xlu0 %2217
        %2219 = vrot.lane.b32.xlu0 %v1228, 32
        %v2220 = vpop.permute.xlu0 %2219
        %v2253 = vsel %vm907, %v940, %v1262
        %v2254 = vsel %vm907, %v941, %v1264
        %v2255 = vsel %vm907, %v942, %v1266
        %v2256 = vsel %vm907, %v943, %v1268
        %v2257 = vsel %vm907, %v944, %v1270
        %v2258 = vsel %vm907, %v945, %v1272
        %v2259 = vsel %vm907, %v946, %v1274
        %v2260 = vsel %vm907, %v947, %v1276
        %v2261 = vsel %vm907, %v948, %v1278
        %v2262 = vsel %vm907, %v949, %v1280
        %v2263 = vsel %vm907, %v950, %v1282
        %v2264 = vsel %vm907, %v951, %v1284
        %v2265 = vsel %vm907, %v952, %v1286
        %v2266 = vsel %vm907, %v953, %v1288
        %v2267 = vsel %vm907, %v954, %v1290
        %v2268 = vsel %vm907, %v955, %v1292
        %v2269 = vsel %vm907, %v956, %v1294
        %v2270 = vsel %vm907, %v957, %v1296
        %v2271 = vsel %vm907, %v958, %v1298
        %v2272 = vsel %vm907, %v959, %v1300
        %v2273 = vsel %vm907, %v960, %v1302
        %v2274 = vsel %vm907, %v961, %v1304
        %v2275 = vsel %vm907, %v962, %v1306
        %v2276 = vsel %vm907, %v963, %v1308
        %v2277 = vsel %vm907, %v964, %v1310
        %v2278 = vsel %vm907, %v965, %v1312
        %v2279 = vsel %vm907, %v966, %v1314
        %v2280 = vsel %vm907, %v967, %v1316
        %v2281 = vsel %vm907, %v968, %v1318
        %v2282 = vsel %vm907, %v969, %v1320
        %v2283 = vsel %vm907, %v970, %v1322
        %v2284 = vsel %vm907, %v971, %v1324
        %vm2285 = vcmask 64512
        %v2286 = vsel %vm2285, %v2253, %v1390
        %v2287 = vsel %vm2285, %v2254, %v1392
        %v2288 = vsel %vm2285, %v2255, %v1394
        %v2289 = vsel %vm2285, %v2256, %v1396
        %v2290 = vsel %vm2285, %v2257, %v1398
        %v2291 = vsel %vm2285, %v2258, %v1400
        %v2292 = vsel %vm2285, %v2259, %v1402
        %v2293 = vsel %vm2285, %v2260, %v1404
        %v2294 = vsel %vm2285, %v2261, %v1406
        %v2295 = vsel %vm2285, %v2262, %v1408
        %v2296 = vsel %vm2285, %v2263, %v1410
        %v2297 = vsel %vm2285, %v2264, %v1412
        %v2298 = vsel %vm2285, %v2265, %v1414
        %v2299 = vsel %vm2285, %v2266, %v1416
        %v2300 = vsel %vm2285, %v2267, %v1418
        %v2301 = vsel %vm2285, %v2268, %v1420
        %v2302 = vsel %vm2285, %v2269, %v1422
        %v2303 = vsel %vm2285, %v2270, %v1424
        %v2304 = vsel %vm2285, %v2271, %v1426
        %v2305 = vsel %vm2285, %v2272, %v1428
        %v2306 = vsel %vm2285, %v2273, %v1430
        %v2307 = vsel %vm2285, %v2274, %v1432
        %v2308 = vsel %vm2285, %v2275, %v1434
        %v2309 = vsel %vm2285, %v2276, %v1436
        %v2310 = vsel %vm2285, %v2277, %v1438
        %v2311 = vsel %vm2285, %v2278, %v1440
        %v2312 = vsel %vm2285, %v2279, %v1442
        %v2313 = vsel %vm2285, %v2280, %v1444
        %v2314 = vsel %vm2285, %v2281, %v1446
        %v2315 = vsel %vm2285, %v2282, %v1448
        %v2316 = vsel %vm2285, %v2283, %v1450
        %v2317 = vsel %vm2285, %v2284, %v1452
        %vm2318 = vcmask 97280
        %v2319 = vsel %vm2318, %v2286, %v1518
        %v2320 = vsel %vm2318, %v2287, %v1520
        %v2321 = vsel %vm2318, %v2288, %v1522
        %v2322 = vsel %vm2318, %v2289, %v1524
        %v2323 = vsel %vm2318, %v2290, %v1526
        %v2324 = vsel %vm2318, %v2291, %v1528
        %v2325 = vsel %vm2318, %v2292, %v1530
        %v2326 = vsel %vm2318, %v2293, %v1532
        %v2327 = vsel %vm2318, %v2294, %v1534
        %v2328 = vsel %vm2318, %v2295, %v1536
        %v2329 = vsel %vm2318, %v2296, %v1538
        %v2330 = vsel %vm2318, %v2297, %v1540
        %v2331 = vsel %vm2318, %v2298, %v1542
        %v2332 = vsel %vm2318, %v2299, %v1544
        %v2333 = vsel %vm2318, %v2300, %v1546
        %v2334 = vsel %vm2318, %v2301, %v1548
        %v2335 = vsel %vm2318, %v2302, %v1550
        %v2336 = vsel %vm2318, %v2303, %v1552
        %v2337 = vsel %vm2318, %v2304, %v1554
        %v2338 = vsel %vm2318, %v2305, %v1556
        %v2339 = vsel %vm2318, %v2306, %v1558
        %v2340 = vsel %vm2318, %v2307, %v1560
        %v2341 = vsel %vm2318, %v2308, %v1562
        %v2342 = vsel %vm2318, %v2309, %v1564
        %v2343 = vsel %vm2318, %v2310, %v1566
        %v2344 = vsel %vm2318, %v2311, %v1568
        %v2345 = vsel %vm2318, %v2312, %v1570
        %v2346 = vsel %vm2318, %v2313, %v1572
        %v2347 = vsel %vm2318, %v2314, %v1574
        %v2348 = vsel %vm2318, %v2315, %v1576
        %v2349 = vsel %vm2318, %v2316, %v1578
        %v2350 = vsel %vm2318, %v2317, %v1580
        %v2351 = vsel %vm850, %v2319, %v1646
        %v2352 = vsel %vm850, %v2320, %v1648
        %v2353 = vsel %vm850, %v2321, %v1650
        %v2354 = vsel %vm850, %v2322, %v1652
        %v2355 = vsel %vm850, %v2323, %v1654
        %v2356 = vsel %vm850, %v2324, %v1656
        %v2357 = vsel %vm850, %v2325, %v1658
        %v2358 = vsel %vm850, %v2326, %v1660
        %v2359 = vsel %vm850, %v2327, %v1662
        %v2360 = vsel %vm850, %v2328, %v1664
        %v2361 = vsel %vm850, %v2329, %v1666
        %v2362 = vsel %vm850, %v2330, %v1668
        %v2363 = vsel %vm850, %v2331, %v1670
        %v2364 = vsel %vm850, %v2332, %v1672
        %v2365 = vsel %vm850, %v2333, %v1674
        %v2366 = vsel %vm850, %v2334, %v1676
        %v2367 = vsel %vm850, %v2335, %v1678
        %v2368 = vsel %vm850, %v2336, %v1680
        %v2369 = vsel %vm850, %v2337, %v1682
        %v2370 = vsel %vm850, %v2338, %v1684
        %v2371 = vsel %vm850, %v2339, %v1686
        %v2372 = vsel %vm850, %v2340, %v1688
        %v2373 = vsel %vm850, %v2341, %v1690
        %v2374 = vsel %vm850, %v2342, %v1692
        %v2375 = vsel %vm850, %v2343, %v1694
        %v2376 = vsel %vm850, %v2344, %v1696
        %v2377 = vsel %vm850, %v2345, %v1698
        %v2378 = vsel %vm850, %v2346, %v1700
        %v2379 = vsel %vm850, %v2347, %v1702
        %v2380 = vsel %vm850, %v2348, %v1704
        %v2381 = vsel %vm850, %v2349, %v1706
        %v2382 = vsel %vm850, %v2350, %v1708
        %vm2383 = vcmask 162816
        %v2384 = vsel %vm2383, %v2351, %v1774
        %v2385 = vsel %vm2383, %v2352, %v1776
        %v2386 = vsel %vm2383, %v2353, %v1778
        %v2387 = vsel %vm2383, %v2354, %v1780
        %v2388 = vsel %vm2383, %v2355, %v1782
        %v2389 = vsel %vm2383, %v2356, %v1784
        %v2390 = vsel %vm2383, %v2357, %v1786
        %v2391 = vsel %vm2383, %v2358, %v1788
        %v2392 = vsel %vm2383, %v2359, %v1790
        %v2393 = vsel %vm2383, %v2360, %v1792
        %v2394 = vsel %vm2383, %v2361, %v1794
        %v2395 = vsel %vm2383, %v2362, %v1796
        %v2396 = vsel %vm2383, %v2363, %v1798
        %v2397 = vsel %vm2383, %v2364, %v1800
        %v2398 = vsel %vm2383, %v2365, %v1802
        %v2399 = vsel %vm2383, %v2366, %v1804
        %v2400 = vsel %vm2383, %v2367, %v1806
        %v2401 = vsel %vm2383, %v2368, %v1808
        %v2402 = vsel %vm2383, %v2369, %v1810
        %v2403 = vsel %vm2383, %v2370, %v1812
        %v2404 = vsel %vm2383, %v2371, %v1814
        %v2405 = vsel %vm2383, %v2372, %v1816
        %v2406 = vsel %vm2383, %v2373, %v1818
        %v2407 = vsel %vm2383, %v2374, %v1820
        %v2408 = vsel %vm2383, %v2375, %v1822
        %v2409 = vsel %vm2383, %v2376, %v1824
        %v2410 = vsel %vm2383, %v2377, %v1826
        %v2411 = vsel %vm2383, %v2378, %v1828
        %v2412 = vsel %vm2383, %v2379, %v1830
        %v2413 = vsel %vm2383, %v2380, %v1832
        %v2414 = vsel %vm2383, %v2381, %v1834
        %v2415 = vsel %vm2383, %v2382, %v1836
        %vm2416 = vcmask 195584
        %v2417 = vsel %vm2416, %v2384, %v1902
        %v2418 = vsel %vm2416, %v2385, %v1904
        %v2419 = vsel %vm2416, %v2386, %v1906
        %v2420 = vsel %vm2416, %v2387, %v1908
        %v2421 = vsel %vm2416, %v2388, %v1910
        %v2422 = vsel %vm2416, %v2389, %v1912
        %v2423 = vsel %vm2416, %v2390, %v1914
        %v2424 = vsel %vm2416, %v2391, %v1916
        %v2425 = vsel %vm2416, %v2392, %v1918
        %v2426 = vsel %vm2416, %v2393, %v1920
        %v2427 = vsel %vm2416, %v2394, %v1922
        %v2428 = vsel %vm2416, %v2395, %v1924
        %v2429 = vsel %vm2416, %v2396, %v1926
        %v2430 = vsel %vm2416, %v2397, %v1928
        %v2431 = vsel %vm2416, %v2398, %v1930
        %v2432 = vsel %vm2416, %v2399, %v1932
        %v2433 = vsel %vm2416, %v2400, %v1934
        %v2434 = vsel %vm2416, %v2401, %v1936
        %v2435 = vsel %vm2416, %v2402, %v1938
        %v2436 = vsel %vm2416, %v2403, %v1940
        %v2437 = vsel %vm2416, %v2404, %v1942
        %v2438 = vsel %vm2416, %v2405, %v1944
        %v2439 = vsel %vm2416, %v2406, %v1946
        %v2440 = vsel %vm2416, %v2407, %v1948
        %v2441 = vsel %vm2416, %v2408, %v1950
        %v2442 = vsel %vm2416, %v2409, %v1952
        %v2443 = vsel %vm2416, %v2410, %v1954
        %v2444 = vsel %vm2416, %v2411, %v1956
        %v2445 = vsel %vm2416, %v2412, %v1958
        %v2446 = vsel %vm2416, %v2413, %v1960
        %v2447 = vsel %vm2416, %v2414, %v1962
        %v2448 = vsel %vm2416, %v2415, %v1964
        %vm2449 = vcmask 228352
        %v2450 = vsel %vm2449, %v2417, %v2030
        %v2451 = vsel %vm2449, %v2418, %v2032
        %v2452 = vsel %vm2449, %v2419, %v2034
        %v2453 = vsel %vm2449, %v2420, %v2036
        %v2454 = vsel %vm2449, %v2421, %v2038
        %v2455 = vsel %vm2449, %v2422, %v2040
        %v2456 = vsel %vm2449, %v2423, %v2042
        %v2457 = vsel %vm2449, %v2424, %v2044
        %v2458 = vsel %vm2449, %v2425, %v2046
        %v2459 = vsel %vm2449, %v2426, %v2048
        %v2460 = vsel %vm2449, %v2427, %v2050
        %v2461 = vsel %vm2449, %v2428, %v2052
        %v2462 = vsel %vm2449, %v2429, %v2054
        %v2463 = vsel %vm2449, %v2430, %v2056
        %v2464 = vsel %vm2449, %v2431, %v2058
        %v2465 = vsel %vm2449, %v2432, %v2060
        %v2466 = vsel %vm2449, %v2433, %v2062
        %v2467 = vsel %vm2449, %v2434, %v2064
        %v2468 = vsel %vm2449, %v2435, %v2066
        %v2469 = vsel %vm2449, %v2436, %v2068
        %v2470 = vsel %vm2449, %v2437, %v2070
        %v2471 = vsel %vm2449, %v2438, %v2072
        %v2472 = vsel %vm2449, %v2439, %v2074
        %v2473 = vsel %vm2449, %v2440, %v2076
        %v2474 = vsel %vm2449, %v2441, %v2078
        %v2475 = vsel %vm2449, %v2442, %v2080
        %v2476 = vsel %vm2449, %v2443, %v2082
        %v2477 = vsel %vm2449, %v2444, %v2084
        %v2478 = vsel %vm2449, %v2445, %v2086
        %v2479 = vsel %vm2449, %v2446, %v2088
        %v2480 = vsel %vm2449, %v2447, %v2090
        %v2481 = vsel %vm2449, %v2448, %v2092
        %vm2482 = vcmask 261120
        %v2483 = vsel %vm2482, %v2450, %v2158
        %v2484 = vsel %vm2482, %v2451, %v2160
        %v2485 = vsel %vm2482, %v2452, %v2162
        %v2486 = vsel %vm2482, %v2453, %v2164
        %v2487 = vsel %vm2482, %v2454, %v2166
        %v2488 = vsel %vm2482, %v2455, %v2168
        %v2489 = vsel %vm2482, %v2456, %v2170
        %v2490 = vsel %vm2482, %v2457, %v2172
        %v2491 = vsel %vm2482, %v2458, %v2174
        %v2492 = vsel %vm2482, %v2459, %v2176
        %v2493 = vsel %vm2482, %v2460, %v2178
        %v2494 = vsel %vm2482, %v2461, %v2180
        %v2495 = vsel %vm2482, %v2462, %v2182
        %v2496 = vsel %vm2482, %v2463, %v2184
        %v2497 = vsel %vm2482, %v2464, %v2186
        %v2498 = vsel %vm2482, %v2465, %v2188
        %v2499 = vsel %vm2482, %v2466, %v2190
        %v2500 = vsel %vm2482, %v2467, %v2192
        %v2501 = vsel %vm2482, %v2468, %v2194
        %v2502 = vsel %vm2482, %v2469, %v2196
        %v2503 = vsel %vm2482, %v2470, %v2198
        %v2504 = vsel %vm2482, %v2471, %v2200
        %v2505 = vsel %vm2482, %v2472, %v2202
        %v2506 = vsel %vm2482, %v2473, %v2204
        %v2507 = vsel %vm2482, %v2474, %v2206
        %v2508 = vsel %vm2482, %v2475, %v2208
        %v2509 = vsel %vm2482, %v2476, %v2210
        %v2510 = vsel %vm2482, %v2477, %v2212
        %v2511 = vsel %vm2482, %v2478, %v2214
        %v2512 = vsel %vm2482, %v2479, %v2216
        %v2513 = vsel %vm2482, %v2480, %v2218
        %v2514 = vsel %vm2482, %v2481, %v2220
        %v2515 = vpack.c.bf16 %v2484, %v2483
        %v2516 = vpack.c.bf16 %v2486, %v2485
        %v2517 = vpack.c.bf16 %v2488, %v2487
        %v2518 = vpack.c.bf16 %v2490, %v2489
        %v2519 = vpack.c.bf16 %v2492, %v2491
        %v2520 = vpack.c.bf16 %v2494, %v2493
        %v2521 = vpack.c.bf16 %v2496, %v2495
        %v2522 = vpack.c.bf16 %v2498, %v2497
        %v2523 = vpack.c.bf16 %v2500, %v2499
        %v2524 = vpack.c.bf16 %v2502, %v2501
        %v2525 = vpack.c.bf16 %v2504, %v2503
        %v2526 = vpack.c.bf16 %v2506, %v2505
        %v2527 = vpack.c.bf16 %v2508, %v2507
        %v2528 = vpack.c.bf16 %v2510, %v2509
        %v2529 = vpack.c.bf16 %v2512, %v2511
        %v2530 = vpack.c.bf16 %v2514, %v2513
        %v2531 = vld [vmem:[%s2] sm:$0xf]
        %v2532 = vld [vmem:[%s2 + $0x4] sm:$0xf]
        %v2533 = vld [vmem:[%s2 + $0x8] sm:$0xf]
        %v2534 = vld [vmem:[%s2 + $0xc] sm:$0xf]
        %v2535 = vld [vmem:[%s2 + $0x10] sm:$0x3]
        %v2536 = vld [vmem:[%s1] sm:$0x1]
        %v2538 = vperm.slane %v2536, 0
        %v2545 = vunpack.c.l.b16 %v2531
        %v2546 = vunpack.c.l.b16 %v2532
        %v2547 = vunpack.c.l.b16 %v2533
        %v2548 = vunpack.c.l.b16 %v2534
        %v2549 = vunpack.c.l.b16 %v2535
        %v2550 = vpack.c.b16 %v2546, %v2545
        %v2551 = vpack.c.b16 %v2548, %v2547
        %v2552 = vpack.c.b16 %v2549, %v2549
        %vm2555 = vcmask 293888
        %v2557 = vsel %vm2555, %v2515, 0
        %v2560 = vsel %vm2555, %v2516, 0
        %v2563 = vsel %vm2555, %v2517, 0
        %v2566 = vsel %vm2555, %v2518, 0
        %v2569 = vsel %vm2555, %v2519, 0
        %v2572 = vsel %vm2555, %v2520, 0
        %v2575 = vsel %vm2555, %v2521, 0
        %v2578 = vsel %vm2555, %v2522, 0
        %v2581 = vsel %vm2555, %v2523, 0
        %v2584 = vsel %vm2555, %v2524, 0
        %v2587 = vsel %vm2555, %v2525, 0
        %v2590 = vsel %vm2555, %v2526, 0
        %v2593 = vsel %vm2555, %v2527, 0
        %v2596 = vsel %vm2555, %v2528, 0
        %v2599 = vsel %vm2555, %v2529, 0
        %v2602 = vsel %vm2555, %v2530, 0
        %vm2604 = vcmask 1041408
        %v2606 = vsel %vm2604, %v2552, 0
        %2608 = vmatpush.bf16.msra.mxu0 0
        %2609 = vmatpush.bf16.msra.mxu0 0
        %2610 = vmatpush.bf16.msra.mxu0 0
        %2611 = vmatpush.bf16.msra.mxu0 0
        %2612 = vmatpush.bf16.msra.mxu0 0
        %2613 = vmatpush.bf16.msra.mxu0 %v2606
        %2614 = vmatpush.bf16.msra.mxu0 %v2551
        %2615 = vmatpush.bf16.msra.mxu0 %v2550
        %2616 = vmatmul.bf16.gmra.mxu0 %v2557
        %v2617 = vpop.f32.mrf.mxu0
        %v2618 = vadd.f32 %v2538, %v2617
        %v2619 = vpop.f32.mrf.mxu0
        %v2620 = vadd.f32 %v2538, %v2619
        %2621 = vmatmul.bf16.gmra.mxu0 %v2560
        %v2622 = vpop.f32.mrf.mxu0
        %v2623 = vadd.f32 %v2538, %v2622
        %v2624 = vpop.f32.mrf.mxu0
        %v2625 = vadd.f32 %v2538, %v2624
        %2626 = vmatmul.bf16.gmra.mxu0 %v2563
        %v2627 = vpop.f32.mrf.mxu0
        %v2628 = vadd.f32 %v2538, %v2627
        %v2629 = vpop.f32.mrf.mxu0
        %v2630 = vadd.f32 %v2538, %v2629
        %2631 = vmatmul.bf16.gmra.mxu0 %v2566
        %v2632 = vpop.f32.mrf.mxu0
        %v2633 = vadd.f32 %v2538, %v2632
        %v2634 = vpop.f32.mrf.mxu0
        %v2635 = vadd.f32 %v2538, %v2634
        %2636 = vmatmul.bf16.gmra.mxu0 %v2569
        %v2637 = vpop.f32.mrf.mxu0
        %v2638 = vadd.f32 %v2538, %v2637
        %v2639 = vpop.f32.mrf.mxu0
        %v2640 = vadd.f32 %v2538, %v2639
        %2641 = vmatmul.bf16.gmra.mxu0 %v2572
        %v2642 = vpop.f32.mrf.mxu0
        %v2643 = vadd.f32 %v2538, %v2642
        %v2644 = vpop.f32.mrf.mxu0
        %v2645 = vadd.f32 %v2538, %v2644
        %2646 = vmatmul.bf16.gmra.mxu0 %v2575
        %v2647 = vpop.f32.mrf.mxu0
        %v2648 = vadd.f32 %v2538, %v2647
        %v2649 = vpop.f32.mrf.mxu0
        %v2650 = vadd.f32 %v2538, %v2649
        %2651 = vmatmul.bf16.gmra.mxu0 %v2578
        %v2652 = vpop.f32.mrf.mxu0
        %v2653 = vadd.f32 %v2538, %v2652
        %v2654 = vpop.f32.mrf.mxu0
        %v2655 = vadd.f32 %v2538, %v2654
        %2656 = vmatmul.bf16.gmra.mxu0 %v2581
        %v2657 = vpop.f32.mrf.mxu0
        %v2658 = vadd.f32 %v2538, %v2657
        %v2659 = vpop.f32.mrf.mxu0
        %v2660 = vadd.f32 %v2538, %v2659
        %2661 = vmatmul.bf16.gmra.mxu0 %v2584
        %v2662 = vpop.f32.mrf.mxu0
        %v2663 = vadd.f32 %v2538, %v2662
        %v2664 = vpop.f32.mrf.mxu0
        %v2665 = vadd.f32 %v2538, %v2664
        %2666 = vmatmul.bf16.gmra.mxu0 %v2587
        %v2667 = vpop.f32.mrf.mxu0
        %v2668 = vadd.f32 %v2538, %v2667
        %v2669 = vpop.f32.mrf.mxu0
        %v2670 = vadd.f32 %v2538, %v2669
        %2671 = vmatmul.bf16.gmra.mxu0 %v2590
        %v2672 = vpop.f32.mrf.mxu0
        %v2673 = vadd.f32 %v2538, %v2672
        %v2674 = vpop.f32.mrf.mxu0
        %v2675 = vadd.f32 %v2538, %v2674
        %2676 = vmatmul.bf16.gmra.mxu0 %v2593
        %v2677 = vpop.f32.mrf.mxu0
        %v2678 = vadd.f32 %v2538, %v2677
        %v2679 = vpop.f32.mrf.mxu0
        %v2680 = vadd.f32 %v2538, %v2679
        %2681 = vmatmul.bf16.gmra.mxu0 %v2596
        %v2682 = vpop.f32.mrf.mxu0
        %v2683 = vadd.f32 %v2538, %v2682
        %v2684 = vpop.f32.mrf.mxu0
        %v2685 = vadd.f32 %v2538, %v2684
        %2686 = vmatmul.bf16.gmra.mxu0 %v2599
        %v2687 = vpop.f32.mrf.mxu0
        %v2688 = vadd.f32 %v2538, %v2687
        %v2689 = vpop.f32.mrf.mxu0
        %v2690 = vadd.f32 %v2538, %v2689
        %2691 = vmatmul.bf16.gmra.mxu0 %v2602
        %v2692 = vpop.f32.mrf.mxu0
        %v2693 = vadd.f32 %v2538, %v2692
        %v2694 = vpop.f32.mrf.mxu0
        %v2695 = vadd.f32 %v2538, %v2694
        %2696 = vdwg.mxu0
        %v2697 = vmul.f32 %v2618, 0.1
        %v2698 = vmul.f32 %v2620, 0.1
        %v2699 = vmul.f32 %v2623, 0.1
        %v2700 = vmul.f32 %v2625, 0.1
        %v2701 = vmul.f32 %v2628, 0.1
        %v2702 = vmul.f32 %v2630, 0.1
        %v2703 = vmul.f32 %v2633, 0.1
        %v2704 = vmul.f32 %v2635, 0.1
        %v2705 = vmul.f32 %v2638, 0.1
        %v2706 = vmul.f32 %v2640, 0.1
        %v2707 = vmul.f32 %v2643, 0.1
        %v2708 = vmul.f32 %v2645, 0.1
        %v2709 = vmul.f32 %v2648, 0.1
        %v2710 = vmul.f32 %v2650, 0.1
        %v2711 = vmul.f32 %v2653, 0.1
        %v2712 = vmul.f32 %v2655, 0.1
        %v2713 = vmul.f32 %v2658, 0.1
        %v2714 = vmul.f32 %v2660, 0.1
        %v2715 = vmul.f32 %v2663, 0.1
        %v2716 = vmul.f32 %v2665, 0.1
        %v2717 = vmul.f32 %v2668, 0.1
        %v2718 = vmul.f32 %v2670, 0.1
        %v2719 = vmul.f32 %v2673, 0.1
        %v2720 = vmul.f32 %v2675, 0.1
        %v2721 = vmul.f32 %v2678, 0.1
        %v2722 = vmul.f32 %v2680, 0.1
        %v2723 = vmul.f32 %v2683, 0.1
        %v2724 = vmul.f32 %v2685, 0.1
        %v2725 = vmul.f32 %v2688, 0.1
        %v2726 = vmul.f32 %v2690, 0.1
        %v2727 = vmul.f32 %v2693, 0.1
        %v2728 = vmul.f32 %v2695, 0.1
        %v2729 = vmax.f32 %v2618, %v2697
        %v2730 = vmax.f32 %v2620, %v2698
        %v2731 = vmax.f32 %v2623, %v2699
        %v2732 = vmax.f32 %v2625, %v2700
        %v2733 = vmax.f32 %v2628, %v2701
        %v2734 = vmax.f32 %v2630, %v2702
        %v2735 = vmax.f32 %v2633, %v2703
        %v2736 = vmax.f32 %v2635, %v2704
        %v2737 = vmax.f32 %v2638, %v2705
        %v2738 = vmax.f32 %v2640, %v2706
        %v2739 = vmax.f32 %v2643, %v2707
        %v2740 = vmax.f32 %v2645, %v2708
        %v2741 = vmax.f32 %v2648, %v2709
        %v2742 = vmax.f32 %v2650, %v2710
        %v2743 = vmax.f32 %v2653, %v2711
        %v2744 = vmax.f32 %v2655, %v2712
        %v2745 = vmax.f32 %v2658, %v2713
        %v2746 = vmax.f32 %v2660, %v2714
        %v2747 = vmax.f32 %v2663, %v2715
        %v2748 = vmax.f32 %v2665, %v2716
        %v2749 = vmax.f32 %v2668, %v2717
        %v2750 = vmax.f32 %v2670, %v2718
        %v2751 = vmax.f32 %v2673, %v2719
        %v2752 = vmax.f32 %v2675, %v2720
        %v2753 = vmax.f32 %v2678, %v2721
        %v2754 = vmax.f32 %v2680, %v2722
        %v2755 = vmax.f32 %v2683, %v2723
        %v2756 = vmax.f32 %v2685, %v2724
        %v2757 = vmax.f32 %v2688, %v2725
        %v2758 = vmax.f32 %v2690, %v2726
        %v2759 = vmax.f32 %v2693, %v2727
        %v2760 = vmax.f32 %v2695, %v2728
        %2761 = vst.msk [vmem:[#allocation2] sm:$0xff] %vm850, 0.0
        %2762 = vst.msk [vmem:[#allocation2 + $0x8] sm:$0xff] %vm850, 0.0
        %2763 = vst.msk [vmem:[#allocation2 + $0x10] sm:$0x3] %vm853, 0.0
        %2764 = vst.msk [vmem:[#allocation2 + $0x18] sm:$0xff] %vm850, 0.0
        %2765 = vst.msk [vmem:[#allocation2 + $0x20] sm:$0xff] %vm850, 0.0
        %2766 = vst.msk [vmem:[#allocation2 + $0x28] sm:$0x3] %vm853, 0.0
        %2767 = vst.msk [vmem:[#allocation2 + $0x30] sm:$0xff] %vm850, 0.0
        %2768 = vst.msk [vmem:[#allocation2 + $0x38] sm:$0xff] %vm850, 0.0
        %2769 = vst.msk [vmem:[#allocation2 + $0x40] sm:$0x3] %vm853, 0.0
        %2770 = vst.msk [vmem:[#allocation2 + $0x48] sm:$0xff] %vm850, 0.0
        %2771 = vst.msk [vmem:[#allocation2 + $0x50] sm:$0xff] %vm850, 0.0
        %2772 = vst.msk [vmem:[#allocation2 + $0x58] sm:$0x3] %vm853, 0.0
        %2773 = vst.msk [vmem:[#allocation2 + $0x60] sm:$0xff] %vm850, 0.0
        %2774 = vst.msk [vmem:[#allocation2 + $0x68] sm:$0xff] %vm850, 0.0
        %2775 = vst.msk [vmem:[#allocation2 + $0x70] sm:$0x3] %vm853, 0.0
        %2776 = vst.msk [vmem:[#allocation2 + $0x78] sm:$0xff] %vm850, 0.0
        %2777 = vst.msk [vmem:[#allocation2 + $0x80] sm:$0xff] %vm850, 0.0
        %2778 = vst.msk [vmem:[#allocation2 + $0x88] sm:$0x3] %vm853, 0.0
        %2779 = vst.msk [vmem:[#allocation2 + $0x90] sm:$0xff] %vm850, 0.0
        %2780 = vst.msk [vmem:[#allocation2 + $0x98] sm:$0xff] %vm850, 0.0
        %2781 = vst.msk [vmem:[#allocation2 + $0xa0] sm:$0x3] %vm853, 0.0
        %2782 = vst.msk [vmem:[#allocation2 + $0xa8] sm:$0xff] %vm850, 0.0
        %2783 = vst.msk [vmem:[#allocation2 + $0xb0] sm:$0xff] %vm850, 0.0
        %2784 = vst.msk [vmem:[#allocation2 + $0xb8] sm:$0x3] %vm853, 0.0
        %2785 = vst.msk [vmem:[#allocation2 + $0xc0] sm:$0xff] %vm850, 0.0
        %2786 = vst.msk [vmem:[#allocation2 + $0xc8] sm:$0xff] %vm850, 0.0
        %2787 = vst.msk [vmem:[#allocation2 + $0xd0] sm:$0x3] %vm853, 0.0
        %2788 = vst.msk [vmem:[#allocation2 + $0xd8] sm:$0xff] %vm850, 0.0
        %2789 = vst.msk [vmem:[#allocation2 + $0xe0] sm:$0xff] %vm850, 0.0
        %2790 = vst.msk [vmem:[#allocation2 + $0xe8] sm:$0x3] %vm853, 0.0
        %2791 = vst.msk [vmem:[#allocation2 + $0xf0] sm:$0xff] %vm850, 0.0
        %2792 = vst.msk [vmem:[#allocation2 + $0xf8] sm:$0xff] %vm850, 0.0
        %2793 = vst.msk [vmem:[#allocation2 + $0x100] sm:$0x3] %vm853, 0.0
        %2794 = vst.msk [vmem:[#allocation2 + $0x108] sm:$0xff] %vm850, 0.0
        %2795 = vst.msk [vmem:[#allocation2 + $0x110] sm:$0xff] %vm850, 0.0
        %2796 = vst.msk [vmem:[#allocation2 + $0x118] sm:$0x3] %vm853, 0.0
        %2797 = vst.msk [vmem:[#allocation2 + $0x120] sm:$0xff] %vm850, 0.0
        %2798 = vst.msk [vmem:[#allocation2 + $0x128] sm:$0xff] %vm850, 0.0
        %2799 = vst.msk [vmem:[#allocation2 + $0x130] sm:$0x3] %vm853, 0.0
        %2800 = vst.msk [vmem:[#allocation2 + $0x138] sm:$0xff] %vm850, 0.0
        %2801 = vst.msk [vmem:[#allocation2 + $0x140] sm:$0xff] %vm850, 0.0
        %2802 = vst.msk [vmem:[#allocation2 + $0x148] sm:$0x3] %vm853, 0.0
        %2803 = vst.msk [vmem:[#allocation2 + $0x150] sm:$0xff] %vm850, 0.0
        %2804 = vst.msk [vmem:[#allocation2 + $0x158] sm:$0xff] %vm850, 0.0
        %2805 = vst.msk [vmem:[#allocation2 + $0x160] sm:$0x3] %vm853, 0.0
        %2806 = vst.msk [vmem:[#allocation2 + $0x168] sm:$0xff] %vm850, 0.0
        %2807 = vst.msk [vmem:[#allocation2 + $0x170] sm:$0xff] %vm850, 0.0
        %2808 = vst.msk [vmem:[#allocation2 + $0x178] sm:$0x3] %vm853, 0.0
        %2809 = vst.msk [vmem:[#allocation2 + $0x180] sm:$0xff] %vm850, 0.0
        %2810 = vst.msk [vmem:[#allocation2 + $0x188] sm:$0xff] %vm850, 0.0
        %2811 = vst.msk [vmem:[#allocation2 + $0x190] sm:$0x3] %vm853, 0.0
        %2812 = vst.msk [vmem:[#allocation2 + $0x198] sm:$0xff] %vm850, 0.0
        %2813 = vst.msk [vmem:[#allocation2 + $0x1a0] sm:$0xff] %vm850, 0.0
        %2814 = vst.msk [vmem:[#allocation2 + $0x1a8] sm:$0x3] %vm853, 0.0
        %2815 = vst.msk [vmem:[%s906 + $0x1] sm:$0xff] %vm2285, %v2729
        %2816 = vst.msk [vmem:[%s906 + $0x9] sm:$0xff] %vm2285, %v2730
        %2817 = vst.msk [vmem:[%s906 + $0x19] sm:$0xff] %vm2285, %v2731
        %2818 = vst.msk [vmem:[%s906 + $0x21] sm:$0xff] %vm2285, %v2732
        %2819 = vst.msk [vmem:[%s906 + $0x31] sm:$0xff] %vm2285, %v2733
        %2820 = vst.msk [vmem:[%s906 + $0x39] sm:$0xff] %vm2285, %v2734
        %2821 = vst.msk [vmem:[%s906 + $0x49] sm:$0xff] %vm2285, %v2735
        %2822 = vst.msk [vmem:[%s906 + $0x51] sm:$0xff] %vm2285, %v2736
        %2823 = vst.msk [vmem:[%s906 + $0x61] sm:$0xff] %vm2285, %v2737
        %2824 = vst.msk [vmem:[%s906 + $0x69] sm:$0xff] %vm2285, %v2738
        %2825 = vst.msk [vmem:[%s906 + $0x79] sm:$0xff] %vm2285, %v2739
        %2826 = vst.msk [vmem:[%s906 + $0x81] sm:$0xff] %vm2285, %v2740
        %2827 = vst.msk [vmem:[%s906 + $0x91] sm:$0xff] %vm2285, %v2741
        %2828 = vst.msk [vmem:[%s906 + $0x99] sm:$0xff] %vm2285, %v2742
        %2829 = vst.msk [vmem:[%s906 + $0xa9] sm:$0xff] %vm2285, %v2743
        %2830 = vst.msk [vmem:[%s906 + $0xb1] sm:$0xff] %vm2285, %v2744
        %2831 = vst.msk [vmem:[%s906 + $0xc1] sm:$0xff] %vm2285, %v2745
        %2832 = vst.msk [vmem:[%s906 + $0xc9] sm:$0xff] %vm2285, %v2746
        %2833 = vst.msk [vmem:[%s906 + $0xd9] sm:$0xff] %vm2285, %v2747
        %2834 = vst.msk [vmem:[%s906 + $0xe1] sm:$0xff] %vm2285, %v2748
        %2835 = vst.msk [vmem:[%s906 + $0xf1] sm:$0xff] %vm2285, %v2749
        %2836 = vst.msk [vmem:[%s906 + $0xf9] sm:$0xff] %vm2285, %v2750
        %2837 = vst.msk [vmem:[%s906 + $0x109] sm:$0xff] %vm2285, %v2751
        %2838 = vst.msk [vmem:[%s906 + $0x111] sm:$0xff] %vm2285, %v2752
        %2839 = vst.msk [vmem:[%s906 + $0x121] sm:$0xff] %vm2285, %v2753
        %2840 = vst.msk [vmem:[%s906 + $0x129] sm:$0xff] %vm2285, %v2754
        %2841 = vst.msk [vmem:[%s906 + $0x139] sm:$0xff] %vm2285, %v2755
        %2842 = vst.msk [vmem:[%s906 + $0x141] sm:$0xff] %vm2285, %v2756
        %2843 = vst.msk [vmem:[%s906 + $0x151] sm:$0xff] %vm2285, %v2757
        %2844 = vst.msk [vmem:[%s906 + $0x159] sm:$0xff] %vm2285, %v2758
        %2845 = vst.msk [vmem:[%s906 + $0x169] sm:$0xff] %vm2285, %v2759
        %2846 = vst.msk [vmem:[%s906 + $0x171] sm:$0xff] %vm2285, %v2760
        %v2847 = vld [vmem:[#allocation2] sm:$0xff]
        %v2848 = vld [vmem:[#allocation2 + $0x8] sm:$0xff]
        %v2849 = vld [vmem:[#allocation2 + $0x18] sm:$0xff]
        %v2850 = vld [vmem:[#allocation2 + $0x20] sm:$0xff]
        %v2851 = vld [vmem:[#allocation2 + $0x30] sm:$0xff]
        %v2852 = vld [vmem:[#allocation2 + $0x38] sm:$0xff]
        %v2853 = vld [vmem:[#allocation2 + $0x48] sm:$0xff]
        %v2854 = vld [vmem:[#allocation2 + $0x50] sm:$0xff]
        %v2855 = vld [vmem:[#allocation2 + $0x60] sm:$0xff]
        %v2856 = vld [vmem:[#allocation2 + $0x68] sm:$0xff]
        %v2857 = vld [vmem:[#allocation2 + $0x78] sm:$0xff]
        %v2858 = vld [vmem:[#allocation2 + $0x80] sm:$0xff]
        %v2859 = vld [vmem:[#allocation2 + $0x90] sm:$0xff]
        %v2860 = vld [vmem:[#allocation2 + $0x98] sm:$0xff]
        %v2861 = vld [vmem:[#allocation2 + $0xa8] sm:$0xff]
        %v2862 = vld [vmem:[#allocation2 + $0xb0] sm:$0xff]
        %v2863 = vld [vmem:[#allocation2 + $0xc0] sm:$0xff]
        %v2864 = vld [vmem:[#allocation2 + $0xc8] sm:$0xff]
        %v2865 = vld [vmem:[#allocation2 + $0xd8] sm:$0xff]
        %v2866 = vld [vmem:[#allocation2 + $0xe0] sm:$0xff]
        %v2867 = vld [vmem:[#allocation2 + $0xf0] sm:$0xff]
        %v2868 = vld [vmem:[#allocation2 + $0xf8] sm:$0xff]
        %v2869 = vld [vmem:[#allocation2 + $0x108] sm:$0xff]
        %v2870 = vld [vmem:[#allocation2 + $0x110] sm:$0xff]
        %v2871 = vld [vmem:[#allocation2 + $0x120] sm:$0xff]
        %v2872 = vld [vmem:[#allocation2 + $0x128] sm:$0xff]
        %v2873 = vld [vmem:[#allocation2 + $0x138] sm:$0xff]
        %v2874 = vld [vmem:[#allocation2 + $0x140] sm:$0xff]
        %v2875 = vld [vmem:[#allocation2 + $0x150] sm:$0xff]
        %v2876 = vld [vmem:[#allocation2 + $0x158] sm:$0xff]
        %v2877 = vld [vmem:[#allocation2 + $0x168] sm:$0xff]
        %v2878 = vld [vmem:[#allocation2 + $0x170] sm:$0xff]
        %v2879 = vld [vmem:[#allocation2 + $0x1] sm:$0xff]
        %v2880 = vld [vmem:[#allocation2 + $0x9] sm:$0xff]
        %v2881 = vld [vmem:[#allocation2 + $0x19] sm:$0xff]
        %v2882 = vld [vmem:[#allocation2 + $0x21] sm:$0xff]
        %v2883 = vld [vmem:[#allocation2 + $0x31] sm:$0xff]
        %v2884 = vld [vmem:[#allocation2 + $0x39] sm:$0xff]
        %v2885 = vld [vmem:[#allocation2 + $0x49] sm:$0xff]
        %v2886 = vld [vmem:[#allocation2 + $0x51] sm:$0xff]
        %v2887 = vld [vmem:[#allocation2 + $0x61] sm:$0xff]
        %v2888 = vld [vmem:[#allocation2 + $0x69] sm:$0xff]
        %v2889 = vld [vmem:[#allocation2 + $0x79] sm:$0xff]
        %v2890 = vld [vmem:[#allocation2 + $0x81] sm:$0xff]
        %v2891 = vld [vmem:[#allocation2 + $0x91] sm:$0xff]
        %v2892 = vld [vmem:[#allocation2 + $0x99] sm:$0xff]
        %v2893 = vld [vmem:[#allocation2 + $0xa9] sm:$0xff]
        %v2894 = vld [vmem:[#allocation2 + $0xb1] sm:$0xff]
        %v2895 = vld [vmem:[#allocation2 + $0xc1] sm:$0xff]
        %v2896 = vld [vmem:[#allocation2 + $0xc9] sm:$0xff]
        %v2897 = vld [vmem:[#allocation2 + $0xd9] sm:$0xff]
        %v2898 = vld [vmem:[#allocation2 + $0xe1] sm:$0xff]
        %v2899 = vld [vmem:[#allocation2 + $0xf1] sm:$0xff]
        %v2900 = vld [vmem:[#allocation2 + $0xf9] sm:$0xff]
        %v2901 = vld [vmem:[#allocation2 + $0x109] sm:$0xff]
        %v2902 = vld [vmem:[#allocation2 + $0x111] sm:$0xff]
        %v2903 = vld [vmem:[#allocation2 + $0x121] sm:$0xff]
        %v2904 = vld [vmem:[#allocation2 + $0x129] sm:$0xff]
        %v2905 = vld [vmem:[#allocation2 + $0x139] sm:$0xff]
        %v2906 = vld [vmem:[#allocation2 + $0x141] sm:$0xff]
        %v2907 = vld [vmem:[#allocation2 + $0x151] sm:$0xff]
        %v2908 = vld [vmem:[#allocation2 + $0x159] sm:$0xff]
        %v2909 = vld [vmem:[#allocation2 + $0x169] sm:$0xff]
        %v2910 = vld [vmem:[#allocation2 + $0x171] sm:$0xff]
        %v2911 = vld [vmem:[#allocation2 + $0x2] sm:$0xff]
        %v2912 = vld [vmem:[#allocation2 + $0xa] sm:$0xff]
        %v2913 = vld [vmem:[#allocation2 + $0x1a] sm:$0xff]
        %v2914 = vld [vmem:[#allocation2 + $0x22] sm:$0xff]
        %v2915 = vld [vmem:[#allocation2 + $0x32] sm:$0xff]
        %v2916 = vld [vmem:[#allocation2 + $0x3a] sm:$0xff]
        %v2917 = vld [vmem:[#allocation2 + $0x4a] sm:$0xff]
        %v2918 = vld [vmem:[#allocation2 + $0x52] sm:$0xff]
        %v2919 = vld [vmem:[#allocation2 + $0x62] sm:$0xff]
        %v2920 = vld [vmem:[#allocation2 + $0x6a] sm:$0xff]
        %v2921 = vld [vmem:[#allocation2 + $0x7a] sm:$0xff]
        %v2922 = vld [vmem:[#allocation2 + $0x82] sm:$0xff]
        %v2923 = vld [vmem:[#allocation2 + $0x92] sm:$0xff]
        %v2924 = vld [vmem:[#allocation2 + $0x9a] sm:$0xff]
        %v2925 = vld [vmem:[#allocation2 + $0xaa] sm:$0xff]
        %v2926 = vld [vmem:[#allocation2 + $0xb2] sm:$0xff]
        %v2927 = vld [vmem:[#allocation2 + $0xc2] sm:$0xff]
        %v2928 = vld [vmem:[#allocation2 + $0xca] sm:$0xff]
        %v2929 = vld [vmem:[#allocation2 + $0xda] sm:$0xff]
        %v2930 = vld [vmem:[#allocation2 + $0xe2] sm:$0xff]
        %v2931 = vld [vmem:[#allocation2 + $0xf2] sm:$0xff]
        %v2932 = vld [vmem:[#allocation2 + $0xfa] sm:$0xff]
        %v2933 = vld [vmem:[#allocation2 + $0x10a] sm:$0xff]
        %v2934 = vld [vmem:[#allocation2 + $0x112] sm:$0xff]
        %v2935 = vld [vmem:[#allocation2 + $0x122] sm:$0xff]
        %v2936 = vld [vmem:[#allocation2 + $0x12a] sm:$0xff]
        %v2937 = vld [vmem:[#allocation2 + $0x13a] sm:$0xff]
        %v2938 = vld [vmem:[#allocation2 + $0x142] sm:$0xff]
        %v2939 = vld [vmem:[#allocation2 + $0x152] sm:$0xff]
        %v2940 = vld [vmem:[#allocation2 + $0x15a] sm:$0xff]
        %v2941 = vld [vmem:[#allocation2 + $0x16a] sm:$0xff]
        %v2942 = vld [vmem:[#allocation2 + $0x172] sm:$0xff]
        %v2943 = vld [vmem:[%s906] sm:$0xff]
        %v2944 = vld [vmem:[%s906 + $0x8] sm:$0xff]
        %v2945 = vld [vmem:[%s906 + $0x18] sm:$0xff]
        %v2946 = vld [vmem:[%s906 + $0x20] sm:$0xff]
        %v2947 = vld [vmem:[%s906 + $0x30] sm:$0xff]
        %v2948 = vld [vmem:[%s906 + $0x38] sm:$0xff]
        %v2949 = vld [vmem:[%s906 + $0x48] sm:$0xff]
        %v2950 = vld [vmem:[%s906 + $0x50] sm:$0xff]
        %v2951 = vld [vmem:[%s906 + $0x60] sm:$0xff]
        %v2952 = vld [vmem:[%s906 + $0x68] sm:$0xff]
        %v2953 = vld [vmem:[%s906 + $0x78] sm:$0xff]
        %v2954 = vld [vmem:[%s906 + $0x80] sm:$0xff]
        %v2955 = vld [vmem:[%s906 + $0x90] sm:$0xff]
        %v2956 = vld [vmem:[%s906 + $0x98] sm:$0xff]
        %v2957 = vld [vmem:[%s906 + $0xa8] sm:$0xff]
        %v2958 = vld [vmem:[%s906 + $0xb0] sm:$0xff]
        %v2959 = vld [vmem:[%s906 + $0xc0] sm:$0xff]
        %v2960 = vld [vmem:[%s906 + $0xc8] sm:$0xff]
        %v2961 = vld [vmem:[%s906 + $0xd8] sm:$0xff]
        %v2962 = vld [vmem:[%s906 + $0xe0] sm:$0xff]
        %v2963 = vld [vmem:[%s906 + $0xf0] sm:$0xff]
        %v2964 = vld [vmem:[%s906 + $0xf8] sm:$0xff]
        %v2965 = vld [vmem:[%s906 + $0x108] sm:$0xff]
        %v2966 = vld [vmem:[%s906 + $0x110] sm:$0xff]
        %v2967 = vld [vmem:[%s906 + $0x120] sm:$0xff]
        %v2968 = vld [vmem:[%s906 + $0x128] sm:$0xff]
        %v2969 = vld [vmem:[%s906 + $0x138] sm:$0xff]
        %v2970 = vld [vmem:[%s906 + $0x140] sm:$0xff]
        %v2971 = vld [vmem:[%s906 + $0x150] sm:$0xff]
        %v2972 = vld [vmem:[%s906 + $0x158] sm:$0xff]
        %v2973 = vld [vmem:[%s906 + $0x168] sm:$0xff]
        %v2974 = vld [vmem:[%s906 + $0x170] sm:$0xff]
        %v2975 = vld [vmem:[%s906 + $0x1] sm:$0xff]
        %v2976 = vld [vmem:[%s906 + $0x9] sm:$0xff]
        %v2977 = vld [vmem:[%s906 + $0x19] sm:$0xff]
        %v2978 = vld [vmem:[%s906 + $0x21] sm:$0xff]
        %v2979 = vld [vmem:[%s906 + $0x31] sm:$0xff]
        %v2980 = vld [vmem:[%s906 + $0x39] sm:$0xff]
        %v2981 = vld [vmem:[%s906 + $0x49] sm:$0xff]
        %v2982 = vld [vmem:[%s906 + $0x51] sm:$0xff]
        %v2983 = vld [vmem:[%s906 + $0x61] sm:$0xff]
        %v2984 = vld [vmem:[%s906 + $0x69] sm:$0xff]
        %v2985 = vld [vmem:[%s906 + $0x79] sm:$0xff]
        %v2986 = vld [vmem:[%s906 + $0x81] sm:$0xff]
        %v2987 = vld [vmem:[%s906 + $0x91] sm:$0xff]
        %v2988 = vld [vmem:[%s906 + $0x99] sm:$0xff]
        %v2989 = vld [vmem:[%s906 + $0xa9] sm:$0xff]
        %v2990 = vld [vmem:[%s906 + $0xb1] sm:$0xff]
        %v2991 = vld [vmem:[%s906 + $0xc1] sm:$0xff]
        %v2992 = vld [vmem:[%s906 + $0xc9] sm:$0xff]
        %v2993 = vld [vmem:[%s906 + $0xd9] sm:$0xff]
        %v2994 = vld [vmem:[%s906 + $0xe1] sm:$0xff]
        %v2995 = vld [vmem:[%s906 + $0xf1] sm:$0xff]
        %v2996 = vld [vmem:[%s906 + $0xf9] sm:$0xff]
        %v2997 = vld [vmem:[%s906 + $0x109] sm:$0xff]
        %v2998 = vld [vmem:[%s906 + $0x111] sm:$0xff]
        %v2999 = vld [vmem:[%s906 + $0x121] sm:$0xff]
        %v3000 = vld [vmem:[%s906 + $0x129] sm:$0xff]
        %v3001 = vld [vmem:[%s906 + $0x139] sm:$0xff]
        %v3002 = vld [vmem:[%s906 + $0x141] sm:$0xff]
        %v3003 = vld [vmem:[%s906 + $0x151] sm:$0xff]
        %v3004 = vld [vmem:[%s906 + $0x159] sm:$0xff]
        %v3005 = vld [vmem:[%s906 + $0x169] sm:$0xff]
        %v3006 = vld [vmem:[%s906 + $0x171] sm:$0xff]
        %v3007 = vld [vmem:[%s906 + $0x2] sm:$0xff]
        %v3008 = vld [vmem:[%s906 + $0xa] sm:$0xff]
        %v3009 = vld [vmem:[%s906 + $0x1a] sm:$0xff]
        %v3010 = vld [vmem:[%s906 + $0x22] sm:$0xff]
        %v3011 = vld [vmem:[%s906 + $0x32] sm:$0xff]
        %v3012 = vld [vmem:[%s906 + $0x3a] sm:$0xff]
        %v3013 = vld [vmem:[%s906 + $0x4a] sm:$0xff]
        %v3014 = vld [vmem:[%s906 + $0x52] sm:$0xff]
        %v3015 = vld [vmem:[%s906 + $0x62] sm:$0xff]
        %v3016 = vld [vmem:[%s906 + $0x6a] sm:$0xff]
        %v3017 = vld [vmem:[%s906 + $0x7a] sm:$0xff]
        %v3018 = vld [vmem:[%s906 + $0x82] sm:$0xff]
        %v3019 = vld [vmem:[%s906 + $0x92] sm:$0xff]
        %v3020 = vld [vmem:[%s906 + $0x9a] sm:$0xff]
        %v3021 = vld [vmem:[%s906 + $0xaa] sm:$0xff]
        %v3022 = vld [vmem:[%s906 + $0xb2] sm:$0xff]
        %v3023 = vld [vmem:[%s906 + $0xc2] sm:$0xff]
        %v3024 = vld [vmem:[%s906 + $0xca] sm:$0xff]
        %v3025 = vld [vmem:[%s906 + $0xda] sm:$0xff]
        %v3026 = vld [vmem:[%s906 + $0xe2] sm:$0xff]
        %v3027 = vld [vmem:[%s906 + $0xf2] sm:$0xff]
        %v3028 = vld [vmem:[%s906 + $0xfa] sm:$0xff]
        %v3029 = vld [vmem:[%s906 + $0x10a] sm:$0xff]
        %v3030 = vld [vmem:[%s906 + $0x112] sm:$0xff]
        %v3031 = vld [vmem:[%s906 + $0x122] sm:$0xff]
        %v3032 = vld [vmem:[%s906 + $0x12a] sm:$0xff]
        %v3033 = vld [vmem:[%s906 + $0x13a] sm:$0xff]
        %v3034 = vld [vmem:[%s906 + $0x142] sm:$0xff]
        %v3035 = vld [vmem:[%s906 + $0x152] sm:$0xff]
        %v3036 = vld [vmem:[%s906 + $0x15a] sm:$0xff]
        %v3037 = vld [vmem:[%s906 + $0x16a] sm:$0xff]
        %v3038 = vld [vmem:[%s906 + $0x172] sm:$0xff]
        %v3039 = vld [vmem:[%s1132] sm:$0xff]
        %v3040 = vld [vmem:[%s1132 + $0x8] sm:$0xff]
        %v3041 = vld [vmem:[%s1132 + $0x18] sm:$0xff]
        %v3042 = vld [vmem:[%s1132 + $0x20] sm:$0xff]
        %v3043 = vld [vmem:[%s1132 + $0x30] sm:$0xff]
        %v3044 = vld [vmem:[%s1132 + $0x38] sm:$0xff]
        %v3045 = vld [vmem:[%s1132 + $0x48] sm:$0xff]
        %v3046 = vld [vmem:[%s1132 + $0x50] sm:$0xff]
        %v3047 = vld [vmem:[%s1132 + $0x60] sm:$0xff]
        %v3048 = vld [vmem:[%s1132 + $0x68] sm:$0xff]
        %v3049 = vld [vmem:[%s1132 + $0x78] sm:$0xff]
        %v3050 = vld [vmem:[%s1132 + $0x80] sm:$0xff]
        %v3051 = vld [vmem:[%s1132 + $0x90] sm:$0xff]
        %v3052 = vld [vmem:[%s1132 + $0x98] sm:$0xff]
        %v3053 = vld [vmem:[%s1132 + $0xa8] sm:$0xff]
        %v3054 = vld [vmem:[%s1132 + $0xb0] sm:$0xff]
        %v3055 = vld [vmem:[%s1132 + $0xc0] sm:$0xff]
        %v3056 = vld [vmem:[%s1132 + $0xc8] sm:$0xff]
        %v3057 = vld [vmem:[%s1132 + $0xd8] sm:$0xff]
        %v3058 = vld [vmem:[%s1132 + $0xe0] sm:$0xff]
        %v3059 = vld [vmem:[%s1132 + $0xf0] sm:$0xff]
        %v3060 = vld [vmem:[%s1132 + $0xf8] sm:$0xff]
        %v3061 = vld [vmem:[%s1132 + $0x108] sm:$0xff]
        %v3062 = vld [vmem:[%s1132 + $0x110] sm:$0xff]
        %v3063 = vld [vmem:[%s1132 + $0x120] sm:$0xff]
        %v3064 = vld [vmem:[%s1132 + $0x128] sm:$0xff]
        %v3065 = vld [vmem:[%s1132 + $0x138] sm:$0xff]
        %v3066 = vld [vmem:[%s1132 + $0x140] sm:$0xff]
        %v3067 = vld [vmem:[%s1132 + $0x150] sm:$0xff]
        %v3068 = vld [vmem:[%s1132 + $0x158] sm:$0xff]
        %v3069 = vld [vmem:[%s1132 + $0x168] sm:$0xff]
        %v3070 = vld [vmem:[%s1132 + $0x170] sm:$0xff]
        %v3071 = vld [vmem:[%s1132 + $0x1] sm:$0xff]
        %v3072 = vld [vmem:[%s1132 + $0x9] sm:$0xff]
        %v3073 = vld [vmem:[%s1132 + $0x19] sm:$0xff]
        %v3074 = vld [vmem:[%s1132 + $0x21] sm:$0xff]
        %v3075 = vld [vmem:[%s1132 + $0x31] sm:$0xff]
        %v3076 = vld [vmem:[%s1132 + $0x39] sm:$0xff]
        %v3077 = vld [vmem:[%s1132 + $0x49] sm:$0xff]
        %v3078 = vld [vmem:[%s1132 + $0x51] sm:$0xff]
        %v3079 = vld [vmem:[%s1132 + $0x61] sm:$0xff]
        %v3080 = vld [vmem:[%s1132 + $0x69] sm:$0xff]
        %v3081 = vld [vmem:[%s1132 + $0x79] sm:$0xff]
        %v3082 = vld [vmem:[%s1132 + $0x81] sm:$0xff]
        %v3083 = vld [vmem:[%s1132 + $0x91] sm:$0xff]
        %v3084 = vld [vmem:[%s1132 + $0x99] sm:$0xff]
        %v3085 = vld [vmem:[%s1132 + $0xa9] sm:$0xff]
        %v3086 = vld [vmem:[%s1132 + $0xb1] sm:$0xff]
        %v3087 = vld [vmem:[%s1132 + $0xc1] sm:$0xff]
        %v3088 = vld [vmem:[%s1132 + $0xc9] sm:$0xff]
        %v3089 = vld [vmem:[%s1132 + $0xd9] sm:$0xff]
        %v3090 = vld [vmem:[%s1132 + $0xe1] sm:$0xff]
        %v3091 = vld [vmem:[%s1132 + $0xf1] sm:$0xff]
        %v3092 = vld [vmem:[%s1132 + $0xf9] sm:$0xff]
        %v3093 = vld [vmem:[%s1132 + $0x109] sm:$0xff]
        %v3094 = vld [vmem:[%s1132 + $0x111] sm:$0xff]
        %v3095 = vld [vmem:[%s1132 + $0x121] sm:$0xff]
        %v3096 = vld [vmem:[%s1132 + $0x129] sm:$0xff]
        %v3097 = vld [vmem:[%s1132 + $0x139] sm:$0xff]
        %v3098 = vld [vmem:[%s1132 + $0x141] sm:$0xff]
        %v3099 = vld [vmem:[%s1132 + $0x151] sm:$0xff]
        %v3100 = vld [vmem:[%s1132 + $0x159] sm:$0xff]
        %v3101 = vld [vmem:[%s1132 + $0x169] sm:$0xff]
        %v3102 = vld [vmem:[%s1132 + $0x171] sm:$0xff]
        %v3103 = vld [vmem:[%s1132 + $0x2] sm:$0xff]
        %v3104 = vld [vmem:[%s1132 + $0xa] sm:$0xff]
        %v3105 = vld [vmem:[%s1132 + $0x1a] sm:$0xff]
        %v3106 = vld [vmem:[%s1132 + $0x22] sm:$0xff]
        %v3107 = vld [vmem:[%s1132 + $0x32] sm:$0xff]
        %v3108 = vld [vmem:[%s1132 + $0x3a] sm:$0xff]
        %v3109 = vld [vmem:[%s1132 + $0x4a] sm:$0xff]
        %v3110 = vld [vmem:[%s1132 + $0x52] sm:$0xff]
        %v3111 = vld [vmem:[%s1132 + $0x62] sm:$0xff]
        %v3112 = vld [vmem:[%s1132 + $0x6a] sm:$0xff]
        %v3113 = vld [vmem:[%s1132 + $0x7a] sm:$0xff]
        %v3114 = vld [vmem:[%s1132 + $0x82] sm:$0xff]
        %v3115 = vld [vmem:[%s1132 + $0x92] sm:$0xff]
        %v3116 = vld [vmem:[%s1132 + $0x9a] sm:$0xff]
        %v3117 = vld [vmem:[%s1132 + $0xaa] sm:$0xff]
        %v3118 = vld [vmem:[%s1132 + $0xb2] sm:$0xff]
        %v3119 = vld [vmem:[%s1132 + $0xc2] sm:$0xff]
        %v3120 = vld [vmem:[%s1132 + $0xca] sm:$0xff]
        %v3121 = vld [vmem:[%s1132 + $0xda] sm:$0xff]
        %v3122 = vld [vmem:[%s1132 + $0xe2] sm:$0xff]
        %v3123 = vld [vmem:[%s1132 + $0xf2] sm:$0xff]
        %v3124 = vld [vmem:[%s1132 + $0xfa] sm:$0xff]
        %v3125 = vld [vmem:[%s1132 + $0x10a] sm:$0xff]
        %v3126 = vld [vmem:[%s1132 + $0x112] sm:$0xff]
        %v3127 = vld [vmem:[%s1132 + $0x122] sm:$0xff]
        %v3128 = vld [vmem:[%s1132 + $0x12a] sm:$0xff]
        %v3129 = vld [vmem:[%s1132 + $0x13a] sm:$0xff]
        %v3130 = vld [vmem:[%s1132 + $0x142] sm:$0xff]
        %v3131 = vld [vmem:[%s1132 + $0x152] sm:$0xff]
        %v3132 = vld [vmem:[%s1132 + $0x15a] sm:$0xff]
        %v3133 = vld [vmem:[%s1132 + $0x16a] sm:$0xff]
        %v3134 = vld [vmem:[%s1132 + $0x172] sm:$0xff]
        %3167 = vrot.lane.b32.xlu0 %v2879, 8
        %v3168 = vpop.permute.xlu0 %3167
        %3169 = vrot.lane.b32.xlu0 %v2880, 8
        %v3170 = vpop.permute.xlu0 %3169
        %3171 = vrot.lane.b32.xlu0 %v2881, 8
        %v3172 = vpop.permute.xlu0 %3171
        %3173 = vrot.lane.b32.xlu0 %v2882, 8
        %v3174 = vpop.permute.xlu0 %3173
        %3175 = vrot.lane.b32.xlu0 %v2883, 8
        %v3176 = vpop.permute.xlu0 %3175
        %3177 = vrot.lane.b32.xlu0 %v2884, 8
        %v3178 = vpop.permute.xlu0 %3177
        %3179 = vrot.lane.b32.xlu0 %v2885, 8
        %v3180 = vpop.permute.xlu0 %3179
        %3181 = vrot.lane.b32.xlu0 %v2886, 8
        %v3182 = vpop.permute.xlu0 %3181
        %3183 = vrot.lane.b32.xlu0 %v2887, 8
        %v3184 = vpop.permute.xlu0 %3183
        %3185 = vrot.lane.b32.xlu0 %v2888, 8
        %v3186 = vpop.permute.xlu0 %3185
        %3187 = vrot.lane.b32.xlu0 %v2889, 8
        %v3188 = vpop.permute.xlu0 %3187
        %3189 = vrot.lane.b32.xlu0 %v2890, 8
        %v3190 = vpop.permute.xlu0 %3189
        %3191 = vrot.lane.b32.xlu0 %v2891, 8
        %v3192 = vpop.permute.xlu0 %3191
        %3193 = vrot.lane.b32.xlu0 %v2892, 8
        %v3194 = vpop.permute.xlu0 %3193
        %3195 = vrot.lane.b32.xlu0 %v2893, 8
        %v3196 = vpop.permute.xlu0 %3195
        %3197 = vrot.lane.b32.xlu0 %v2894, 8
        %v3198 = vpop.permute.xlu0 %3197
        %3199 = vrot.lane.b32.xlu0 %v2895, 8
        %v3200 = vpop.permute.xlu0 %3199
        %3201 = vrot.lane.b32.xlu0 %v2896, 8
        %v3202 = vpop.permute.xlu0 %3201
        %3203 = vrot.lane.b32.xlu0 %v2897, 8
        %v3204 = vpop.permute.xlu0 %3203
        %3205 = vrot.lane.b32.xlu0 %v2898, 8
        %v3206 = vpop.permute.xlu0 %3205
        %3207 = vrot.lane.b32.xlu0 %v2899, 8
        %v3208 = vpop.permute.xlu0 %3207
        %3209 = vrot.lane.b32.xlu0 %v2900, 8
        %v3210 = vpop.permute.xlu0 %3209
        %3211 = vrot.lane.b32.xlu0 %v2901, 8
        %v3212 = vpop.permute.xlu0 %3211
        %3213 = vrot.lane.b32.xlu0 %v2902, 8
        %v3214 = vpop.permute.xlu0 %3213
        %3215 = vrot.lane.b32.xlu0 %v2903, 8
        %v3216 = vpop.permute.xlu0 %3215
        %3217 = vrot.lane.b32.xlu0 %v2904, 8
        %v3218 = vpop.permute.xlu0 %3217
        %3219 = vrot.lane.b32.xlu0 %v2905, 8
        %v3220 = vpop.permute.xlu0 %3219
        %3221 = vrot.lane.b32.xlu0 %v2906, 8
        %v3222 = vpop.permute.xlu0 %3221
        %3223 = vrot.lane.b32.xlu0 %v2907, 8
        %v3224 = vpop.permute.xlu0 %3223
        %3225 = vrot.lane.b32.xlu0 %v2908, 8
        %v3226 = vpop.permute.xlu0 %3225
        %3227 = vrot.lane.b32.xlu0 %v2909, 8
        %v3228 = vpop.permute.xlu0 %3227
        %3229 = vrot.lane.b32.xlu0 %v2910, 8
        %v3230 = vpop.permute.xlu0 %3229
        %3295 = vrot.lane.b32.xlu0 %v2911, 16
        %v3296 = vpop.permute.xlu0 %3295
        %3297 = vrot.lane.b32.xlu0 %v2912, 16
        %v3298 = vpop.permute.xlu0 %3297
        %3299 = vrot.lane.b32.xlu0 %v2913, 16
        %v3300 = vpop.permute.xlu0 %3299
        %3301 = vrot.lane.b32.xlu0 %v2914, 16
        %v3302 = vpop.permute.xlu0 %3301
        %3303 = vrot.lane.b32.xlu0 %v2915, 16
        %v3304 = vpop.permute.xlu0 %3303
        %3305 = vrot.lane.b32.xlu0 %v2916, 16
        %v3306 = vpop.permute.xlu0 %3305
        %3307 = vrot.lane.b32.xlu0 %v2917, 16
        %v3308 = vpop.permute.xlu0 %3307
        %3309 = vrot.lane.b32.xlu0 %v2918, 16
        %v3310 = vpop.permute.xlu0 %3309
        %3311 = vrot.lane.b32.xlu0 %v2919, 16
        %v3312 = vpop.permute.xlu0 %3311
        %3313 = vrot.lane.b32.xlu0 %v2920, 16
        %v3314 = vpop.permute.xlu0 %3313
        %3315 = vrot.lane.b32.xlu0 %v2921, 16
        %v3316 = vpop.permute.xlu0 %3315
        %3317 = vrot.lane.b32.xlu0 %v2922, 16
        %v3318 = vpop.permute.xlu0 %3317
        %3319 = vrot.lane.b32.xlu0 %v2923, 16
        %v3320 = vpop.permute.xlu0 %3319
        %3321 = vrot.lane.b32.xlu0 %v2924, 16
        %v3322 = vpop.permute.xlu0 %3321
        %3323 = vrot.lane.b32.xlu0 %v2925, 16
        %v3324 = vpop.permute.xlu0 %3323
        %3325 = vrot.lane.b32.xlu0 %v2926, 16
        %v3326 = vpop.permute.xlu0 %3325
        %3327 = vrot.lane.b32.xlu0 %v2927, 16
        %v3328 = vpop.permute.xlu0 %3327
        %3329 = vrot.lane.b32.xlu0 %v2928, 16
        %v3330 = vpop.permute.xlu0 %3329
        %3331 = vrot.lane.b32.xlu0 %v2929, 16
        %v3332 = vpop.permute.xlu0 %3331
        %3333 = vrot.lane.b32.xlu0 %v2930, 16
        %v3334 = vpop.permute.xlu0 %3333
        %3335 = vrot.lane.b32.xlu0 %v2931, 16
        %v3336 = vpop.permute.xlu0 %3335
        %3337 = vrot.lane.b32.xlu0 %v2932, 16
        %v3338 = vpop.permute.xlu0 %3337
        %3339 = vrot.lane.b32.xlu0 %v2933, 16
        %v3340 = vpop.permute.xlu0 %3339
        %3341 = vrot.lane.b32.xlu0 %v2934, 16
        %v3342 = vpop.permute.xlu0 %3341
        %3343 = vrot.lane.b32.xlu0 %v2935, 16
        %v3344 = vpop.permute.xlu0 %3343
        %3345 = vrot.lane.b32.xlu0 %v2936, 16
        %v3346 = vpop.permute.xlu0 %3345
        %3347 = vrot.lane.b32.xlu0 %v2937, 16
        %v3348 = vpop.permute.xlu0 %3347
        %3349 = vrot.lane.b32.xlu0 %v2938, 16
        %v3350 = vpop.permute.xlu0 %3349
        %3351 = vrot.lane.b32.xlu0 %v2939, 16
        %v3352 = vpop.permute.xlu0 %3351
        %3353 = vrot.lane.b32.xlu0 %v2940, 16
        %v3354 = vpop.permute.xlu0 %3353
        %3355 = vrot.lane.b32.xlu0 %v2941, 16
        %v3356 = vpop.permute.xlu0 %3355
        %3357 = vrot.lane.b32.xlu0 %v2942, 16
        %v3358 = vpop.permute.xlu0 %3357
        %3423 = vrot.lane.b32.xlu0 %v2943, 24
        %v3424 = vpop.permute.xlu0 %3423
        %3425 = vrot.lane.b32.xlu0 %v2944, 24
        %v3426 = vpop.permute.xlu0 %3425
        %3427 = vrot.lane.b32.xlu0 %v2945, 24
        %v3428 = vpop.permute.xlu0 %3427
        %3429 = vrot.lane.b32.xlu0 %v2946, 24
        %v3430 = vpop.permute.xlu0 %3429
        %3431 = vrot.lane.b32.xlu0 %v2947, 24
        %v3432 = vpop.permute.xlu0 %3431
        %3433 = vrot.lane.b32.xlu0 %v2948, 24
        %v3434 = vpop.permute.xlu0 %3433
        %3435 = vrot.lane.b32.xlu0 %v2949, 24
        %v3436 = vpop.permute.xlu0 %3435
        %3437 = vrot.lane.b32.xlu0 %v2950, 24
        %v3438 = vpop.permute.xlu0 %3437
        %3439 = vrot.lane.b32.xlu0 %v2951, 24
        %v3440 = vpop.permute.xlu0 %3439
        %3441 = vrot.lane.b32.xlu0 %v2952, 24
        %v3442 = vpop.permute.xlu0 %3441
        %3443 = vrot.lane.b32.xlu0 %v2953, 24
        %v3444 = vpop.permute.xlu0 %3443
        %3445 = vrot.lane.b32.xlu0 %v2954, 24
        %v3446 = vpop.permute.xlu0 %3445
        %3447 = vrot.lane.b32.xlu0 %v2955, 24
        %v3448 = vpop.permute.xlu0 %3447
        %3449 = vrot.lane.b32.xlu0 %v2956, 24
        %v3450 = vpop.permute.xlu0 %3449
        %3451 = vrot.lane.b32.xlu0 %v2957, 24
        %v3452 = vpop.permute.xlu0 %3451
        %3453 = vrot.lane.b32.xlu0 %v2958, 24
        %v3454 = vpop.permute.xlu0 %3453
        %3455 = vrot.lane.b32.xlu0 %v2959, 24
        %v3456 = vpop.permute.xlu0 %3455
        %3457 = vrot.lane.b32.xlu0 %v2960, 24
        %v3458 = vpop.permute.xlu0 %3457
        %3459 = vrot.lane.b32.xlu0 %v2961, 24
        %v3460 = vpop.permute.xlu0 %3459
        %3461 = vrot.lane.b32.xlu0 %v2962, 24
        %v3462 = vpop.permute.xlu0 %3461
        %3463 = vrot.lane.b32.xlu0 %v2963, 24
        %v3464 = vpop.permute.xlu0 %3463
        %3465 = vrot.lane.b32.xlu0 %v2964, 24
        %v3466 = vpop.permute.xlu0 %3465
        %3467 = vrot.lane.b32.xlu0 %v2965, 24
        %v3468 = vpop.permute.xlu0 %3467
        %3469 = vrot.lane.b32.xlu0 %v2966, 24
        %v3470 = vpop.permute.xlu0 %3469
        %3471 = vrot.lane.b32.xlu0 %v2967, 24
        %v3472 = vpop.permute.xlu0 %3471
        %3473 = vrot.lane.b32.xlu0 %v2968, 24
        %v3474 = vpop.permute.xlu0 %3473
        %3475 = vrot.lane.b32.xlu0 %v2969, 24
        %v3476 = vpop.permute.xlu0 %3475
        %3477 = vrot.lane.b32.xlu0 %v2970, 24
        %v3478 = vpop.permute.xlu0 %3477
        %3479 = vrot.lane.b32.xlu0 %v2971, 24
        %v3480 = vpop.permute.xlu0 %3479
        %3481 = vrot.lane.b32.xlu0 %v2972, 24
        %v3482 = vpop.permute.xlu0 %3481
        %3483 = vrot.lane.b32.xlu0 %v2973, 24
        %v3484 = vpop.permute.xlu0 %3483
        %3485 = vrot.lane.b32.xlu0 %v2974, 24
        %v3486 = vpop.permute.xlu0 %3485
        %3551 = vrot.lane.b32.xlu0 %v2975, 32
        %v3552 = vpop.permute.xlu0 %3551
        %3553 = vrot.lane.b32.xlu0 %v2976, 32
        %v3554 = vpop.permute.xlu0 %3553
        %3555 = vrot.lane.b32.xlu0 %v2977, 32
        %v3556 = vpop.permute.xlu0 %3555
        %3557 = vrot.lane.b32.xlu0 %v2978, 32
        %v3558 = vpop.permute.xlu0 %3557
        %3559 = vrot.lane.b32.xlu0 %v2979, 32
        %v3560 = vpop.permute.xlu0 %3559
        %3561 = vrot.lane.b32.xlu0 %v2980, 32
        %v3562 = vpop.permute.xlu0 %3561
        %3563 = vrot.lane.b32.xlu0 %v2981, 32
        %v3564 = vpop.permute.xlu0 %3563
        %3565 = vrot.lane.b32.xlu0 %v2982, 32
        %v3566 = vpop.permute.xlu0 %3565
        %3567 = vrot.lane.b32.xlu0 %v2983, 32
        %v3568 = vpop.permute.xlu0 %3567
        %3569 = vrot.lane.b32.xlu0 %v2984, 32
        %v3570 = vpop.permute.xlu0 %3569
        %3571 = vrot.lane.b32.xlu0 %v2985, 32
        %v3572 = vpop.permute.xlu0 %3571
        %3573 = vrot.lane.b32.xlu0 %v2986, 32
        %v3574 = vpop.permute.xlu0 %3573
        %3575 = vrot.lane.b32.xlu0 %v2987, 32
        %v3576 = vpop.permute.xlu0 %3575
        %3577 = vrot.lane.b32.xlu0 %v2988, 32
        %v3578 = vpop.permute.xlu0 %3577
        %3579 = vrot.lane.b32.xlu0 %v2989, 32
        %v3580 = vpop.permute.xlu0 %3579
        %3581 = vrot.lane.b32.xlu0 %v2990, 32
        %v3582 = vpop.permute.xlu0 %3581
        %3583 = vrot.lane.b32.xlu0 %v2991, 32
        %v3584 = vpop.permute.xlu0 %3583
        %3585 = vrot.lane.b32.xlu0 %v2992, 32
        %v3586 = vpop.permute.xlu0 %3585
        %3587 = vrot.lane.b32.xlu0 %v2993, 32
        %v3588 = vpop.permute.xlu0 %3587
        %3589 = vrot.lane.b32.xlu0 %v2994, 32
        %v3590 = vpop.permute.xlu0 %3589
        %3591 = vrot.lane.b32.xlu0 %v2995, 32
        %v3592 = vpop.permute.xlu0 %3591
        %3593 = vrot.lane.b32.xlu0 %v2996, 32
        %v3594 = vpop.permute.xlu0 %3593
        %3595 = vrot.lane.b32.xlu0 %v2997, 32
        %v3596 = vpop.permute.xlu0 %3595
        %3597 = vrot.lane.b32.xlu0 %v2998, 32
        %v3598 = vpop.permute.xlu0 %3597
        %3599 = vrot.lane.b32.xlu0 %v2999, 32
        %v3600 = vpop.permute.xlu0 %3599
        %3601 = vrot.lane.b32.xlu0 %v3000, 32
        %v3602 = vpop.permute.xlu0 %3601
        %3603 = vrot.lane.b32.xlu0 %v3001, 32
        %v3604 = vpop.permute.xlu0 %3603
        %3605 = vrot.lane.b32.xlu0 %v3002, 32
        %v3606 = vpop.permute.xlu0 %3605
        %3607 = vrot.lane.b32.xlu0 %v3003, 32
        %v3608 = vpop.permute.xlu0 %3607
        %3609 = vrot.lane.b32.xlu0 %v3004, 32
        %v3610 = vpop.permute.xlu0 %3609
        %3611 = vrot.lane.b32.xlu0 %v3005, 32
        %v3612 = vpop.permute.xlu0 %3611
        %3613 = vrot.lane.b32.xlu0 %v3006, 32
        %v3614 = vpop.permute.xlu0 %3613
        %3679 = vrot.lane.b32.xlu0 %v3007, 40
        %v3680 = vpop.permute.xlu0 %3679
        %3681 = vrot.lane.b32.xlu0 %v3008, 40
        %v3682 = vpop.permute.xlu0 %3681
        %3683 = vrot.lane.b32.xlu0 %v3009, 40
        %v3684 = vpop.permute.xlu0 %3683
        %3685 = vrot.lane.b32.xlu0 %v3010, 40
        %v3686 = vpop.permute.xlu0 %3685
        %3687 = vrot.lane.b32.xlu0 %v3011, 40
        %v3688 = vpop.permute.xlu0 %3687
        %3689 = vrot.lane.b32.xlu0 %v3012, 40
        %v3690 = vpop.permute.xlu0 %3689
        %3691 = vrot.lane.b32.xlu0 %v3013, 40
        %v3692 = vpop.permute.xlu0 %3691
        %3693 = vrot.lane.b32.xlu0 %v3014, 40
        %v3694 = vpop.permute.xlu0 %3693
        %3695 = vrot.lane.b32.xlu0 %v3015, 40
        %v3696 = vpop.permute.xlu0 %3695
        %3697 = vrot.lane.b32.xlu0 %v3016, 40
        %v3698 = vpop.permute.xlu0 %3697
        %3699 = vrot.lane.b32.xlu0 %v3017, 40
        %v3700 = vpop.permute.xlu0 %3699
        %3701 = vrot.lane.b32.xlu0 %v3018, 40
        %v3702 = vpop.permute.xlu0 %3701
        %3703 = vrot.lane.b32.xlu0 %v3019, 40
        %v3704 = vpop.permute.xlu0 %3703
        %3705 = vrot.lane.b32.xlu0 %v3020, 40
        %v3706 = vpop.permute.xlu0 %3705
        %3707 = vrot.lane.b32.xlu0 %v3021, 40
        %v3708 = vpop.permute.xlu0 %3707
        %3709 = vrot.lane.b32.xlu0 %v3022, 40
        %v3710 = vpop.permute.xlu0 %3709
        %3711 = vrot.lane.b32.xlu0 %v3023, 40
        %v3712 = vpop.permute.xlu0 %3711
        %3713 = vrot.lane.b32.xlu0 %v3024, 40
        %v3714 = vpop.permute.xlu0 %3713
        %3715 = vrot.lane.b32.xlu0 %v3025, 40
        %v3716 = vpop.permute.xlu0 %3715
        %3717 = vrot.lane.b32.xlu0 %v3026, 40
        %v3718 = vpop.permute.xlu0 %3717
        %3719 = vrot.lane.b32.xlu0 %v3027, 40
        %v3720 = vpop.permute.xlu0 %3719
        %3721 = vrot.lane.b32.xlu0 %v3028, 40
        %v3722 = vpop.permute.xlu0 %3721
        %3723 = vrot.lane.b32.xlu0 %v3029, 40
        %v3724 = vpop.permute.xlu0 %3723
        %3725 = vrot.lane.b32.xlu0 %v3030, 40
        %v3726 = vpop.permute.xlu0 %3725
        %3727 = vrot.lane.b32.xlu0 %v3031, 40
        %v3728 = vpop.permute.xlu0 %3727
        %3729 = vrot.lane.b32.xlu0 %v3032, 40
        %v3730 = vpop.permute.xlu0 %3729
        %3731 = vrot.lane.b32.xlu0 %v3033, 40
        %v3732 = vpop.permute.xlu0 %3731
        %3733 = vrot.lane.b32.xlu0 %v3034, 40
        %v3734 = vpop.permute.xlu0 %3733
        %3735 = vrot.lane.b32.xlu0 %v3035, 40
        %v3736 = vpop.permute.xlu0 %3735
        %3737 = vrot.lane.b32.xlu0 %v3036, 40
        %v3738 = vpop.permute.xlu0 %3737
        %3739 = vrot.lane.b32.xlu0 %v3037, 40
        %v3740 = vpop.permute.xlu0 %3739
        %3741 = vrot.lane.b32.xlu0 %v3038, 40
        %v3742 = vpop.permute.xlu0 %3741
        %3807 = vrot.lane.b32.xlu0 %v3039, 48
        %v3808 = vpop.permute.xlu0 %3807
        %3809 = vrot.lane.b32.xlu0 %v3040, 48
        %v3810 = vpop.permute.xlu0 %3809
        %3811 = vrot.lane.b32.xlu0 %v3041, 48
        %v3812 = vpop.permute.xlu0 %3811
        %3813 = vrot.lane.b32.xlu0 %v3042, 48
        %v3814 = vpop.permute.xlu0 %3813
        %3815 = vrot.lane.b32.xlu0 %v3043, 48
        %v3816 = vpop.permute.xlu0 %3815
        %3817 = vrot.lane.b32.xlu0 %v3044, 48
        %v3818 = vpop.permute.xlu0 %3817
        %3819 = vrot.lane.b32.xlu0 %v3045, 48
        %v3820 = vpop.permute.xlu0 %3819
        %3821 = vrot.lane.b32.xlu0 %v3046, 48
        %v3822 = vpop.permute.xlu0 %3821
        %3823 = vrot.lane.b32.xlu0 %v3047, 48
        %v3824 = vpop.permute.xlu0 %3823
        %3825 = vrot.lane.b32.xlu0 %v3048, 48
        %v3826 = vpop.permute.xlu0 %3825
        %3827 = vrot.lane.b32.xlu0 %v3049, 48
        %v3828 = vpop.permute.xlu0 %3827
        %3829 = vrot.lane.b32.xlu0 %v3050, 48
        %v3830 = vpop.permute.xlu0 %3829
        %3831 = vrot.lane.b32.xlu0 %v3051, 48
        %v3832 = vpop.permute.xlu0 %3831
        %3833 = vrot.lane.b32.xlu0 %v3052, 48
        %v3834 = vpop.permute.xlu0 %3833
        %3835 = vrot.lane.b32.xlu0 %v3053, 48
        %v3836 = vpop.permute.xlu0 %3835
        %3837 = vrot.lane.b32.xlu0 %v3054, 48
        %v3838 = vpop.permute.xlu0 %3837
        %3839 = vrot.lane.b32.xlu0 %v3055, 48
        %v3840 = vpop.permute.xlu0 %3839
        %3841 = vrot.lane.b32.xlu0 %v3056, 48
        %v3842 = vpop.permute.xlu0 %3841
        %3843 = vrot.lane.b32.xlu0 %v3057, 48
        %v3844 = vpop.permute.xlu0 %3843
        %3845 = vrot.lane.b32.xlu0 %v3058, 48
        %v3846 = vpop.permute.xlu0 %3845
        %3847 = vrot.lane.b32.xlu0 %v3059, 48
        %v3848 = vpop.permute.xlu0 %3847
        %3849 = vrot.lane.b32.xlu0 %v3060, 48
        %v3850 = vpop.permute.xlu0 %3849
        %3851 = vrot.lane.b32.xlu0 %v3061, 48
        %v3852 = vpop.permute.xlu0 %3851
        %3853 = vrot.lane.b32.xlu0 %v3062, 48
        %v3854 = vpop.permute.xlu0 %3853
        %3855 = vrot.lane.b32.xlu0 %v3063, 48
        %v3856 = vpop.permute.xlu0 %3855
        %3857 = vrot.lane.b32.xlu0 %v3064, 48
        %v3858 = vpop.permute.xlu0 %3857
        %3859 = vrot.lane.b32.xlu0 %v3065, 48
        %v3860 = vpop.permute.xlu0 %3859
        %3861 = vrot.lane.b32.xlu0 %v3066, 48
        %v3862 = vpop.permute.xlu0 %3861
        %3863 = vrot.lane.b32.xlu0 %v3067, 48
        %v3864 = vpop.permute.xlu0 %3863
        %3865 = vrot.lane.b32.xlu0 %v3068, 48
        %v3866 = vpop.permute.xlu0 %3865
        %3867 = vrot.lane.b32.xlu0 %v3069, 48
        %v3868 = vpop.permute.xlu0 %3867
        %3869 = vrot.lane.b32.xlu0 %v3070, 48
        %v3870 = vpop.permute.xlu0 %3869
        %3935 = vrot.lane.b32.xlu0 %v3071, 56
        %v3936 = vpop.permute.xlu0 %3935
        %3937 = vrot.lane.b32.xlu0 %v3072, 56
        %v3938 = vpop.permute.xlu0 %3937
        %3939 = vrot.lane.b32.xlu0 %v3073, 56
        %v3940 = vpop.permute.xlu0 %3939
        %3941 = vrot.lane.b32.xlu0 %v3074, 56
        %v3942 = vpop.permute.xlu0 %3941
        %3943 = vrot.lane.b32.xlu0 %v3075, 56
        %v3944 = vpop.permute.xlu0 %3943
        %3945 = vrot.lane.b32.xlu0 %v3076, 56
        %v3946 = vpop.permute.xlu0 %3945
        %3947 = vrot.lane.b32.xlu0 %v3077, 56
        %v3948 = vpop.permute.xlu0 %3947
        %3949 = vrot.lane.b32.xlu0 %v3078, 56
        %v3950 = vpop.permute.xlu0 %3949
        %3951 = vrot.lane.b32.xlu0 %v3079, 56
        %v3952 = vpop.permute.xlu0 %3951
        %3953 = vrot.lane.b32.xlu0 %v3080, 56
        %v3954 = vpop.permute.xlu0 %3953
        %3955 = vrot.lane.b32.xlu0 %v3081, 56
        %v3956 = vpop.permute.xlu0 %3955
        %3957 = vrot.lane.b32.xlu0 %v3082, 56
        %v3958 = vpop.permute.xlu0 %3957
        %3959 = vrot.lane.b32.xlu0 %v3083, 56
        %v3960 = vpop.permute.xlu0 %3959
        %3961 = vrot.lane.b32.xlu0 %v3084, 56
        %v3962 = vpop.permute.xlu0 %3961
        %3963 = vrot.lane.b32.xlu0 %v3085, 56
        %v3964 = vpop.permute.xlu0 %3963
        %3965 = vrot.lane.b32.xlu0 %v3086, 56
        %v3966 = vpop.permute.xlu0 %3965
        %3967 = vrot.lane.b32.xlu0 %v3087, 56
        %v3968 = vpop.permute.xlu0 %3967
        %3969 = vrot.lane.b32.xlu0 %v3088, 56
        %v3970 = vpop.permute.xlu0 %3969
        %3971 = vrot.lane.b32.xlu0 %v3089, 56
        %v3972 = vpop.permute.xlu0 %3971
        %3973 = vrot.lane.b32.xlu0 %v3090, 56
        %v3974 = vpop.permute.xlu0 %3973
        %3975 = vrot.lane.b32.xlu0 %v3091, 56
        %v3976 = vpop.permute.xlu0 %3975
        %3977 = vrot.lane.b32.xlu0 %v3092, 56
        %v3978 = vpop.permute.xlu0 %3977
        %3979 = vrot.lane.b32.xlu0 %v3093, 56
        %v3980 = vpop.permute.xlu0 %3979
        %3981 = vrot.lane.b32.xlu0 %v3094, 56
        %v3982 = vpop.permute.xlu0 %3981
        %3983 = vrot.lane.b32.xlu0 %v3095, 56
        %v3984 = vpop.permute.xlu0 %3983
        %3985 = vrot.lane.b32.xlu0 %v3096, 56
        %v3986 = vpop.permute.xlu0 %3985
        %3987 = vrot.lane.b32.xlu0 %v3097, 56
        %v3988 = vpop.permute.xlu0 %3987
        %3989 = vrot.lane.b32.xlu0 %v3098, 56
        %v3990 = vpop.permute.xlu0 %3989
        %3991 = vrot.lane.b32.xlu0 %v3099, 56
        %v3992 = vpop.permute.xlu0 %3991
        %3993 = vrot.lane.b32.xlu0 %v3100, 56
        %v3994 = vpop.permute.xlu0 %3993
        %3995 = vrot.lane.b32.xlu0 %v3101, 56
        %v3996 = vpop.permute.xlu0 %3995
        %3997 = vrot.lane.b32.xlu0 %v3102, 56
        %v3998 = vpop.permute.xlu0 %3997
        %4063 = vrot.lane.b32.xlu0 %v3103, 64
        %v4064 = vpop.permute.xlu0 %4063
        %4065 = vrot.lane.b32.xlu0 %v3104, 64
        %v4066 = vpop.permute.xlu0 %4065
        %4067 = vrot.lane.b32.xlu0 %v3105, 64
        %v4068 = vpop.permute.xlu0 %4067
        %4069 = vrot.lane.b32.xlu0 %v3106, 64
        %v4070 = vpop.permute.xlu0 %4069
        %4071 = vrot.lane.b32.xlu0 %v3107, 64
        %v4072 = vpop.permute.xlu0 %4071
        %4073 = vrot.lane.b32.xlu0 %v3108, 64
        %v4074 = vpop.permute.xlu0 %4073
        %4075 = vrot.lane.b32.xlu0 %v3109, 64
        %v4076 = vpop.permute.xlu0 %4075
        %4077 = vrot.lane.b32.xlu0 %v3110, 64
        %v4078 = vpop.permute.xlu0 %4077
        %4079 = vrot.lane.b32.xlu0 %v3111, 64
        %v4080 = vpop.permute.xlu0 %4079
        %4081 = vrot.lane.b32.xlu0 %v3112, 64
        %v4082 = vpop.permute.xlu0 %4081
        %4083 = vrot.lane.b32.xlu0 %v3113, 64
        %v4084 = vpop.permute.xlu0 %4083
        %4085 = vrot.lane.b32.xlu0 %v3114, 64
        %v4086 = vpop.permute.xlu0 %4085
        %4087 = vrot.lane.b32.xlu0 %v3115, 64
        %v4088 = vpop.permute.xlu0 %4087
        %4089 = vrot.lane.b32.xlu0 %v3116, 64
        %v4090 = vpop.permute.xlu0 %4089
        %4091 = vrot.lane.b32.xlu0 %v3117, 64
        %v4092 = vpop.permute.xlu0 %4091
        %4093 = vrot.lane.b32.xlu0 %v3118, 64
        %v4094 = vpop.permute.xlu0 %4093
        %4095 = vrot.lane.b32.xlu0 %v3119, 64
        %v4096 = vpop.permute.xlu0 %4095
        %4097 = vrot.lane.b32.xlu0 %v3120, 64
        %v4098 = vpop.permute.xlu0 %4097
        %4099 = vrot.lane.b32.xlu0 %v3121, 64
        %v4100 = vpop.permute.xlu0 %4099
        %4101 = vrot.lane.b32.xlu0 %v3122, 64
        %v4102 = vpop.permute.xlu0 %4101
        %4103 = vrot.lane.b32.xlu0 %v3123, 64
        %v4104 = vpop.permute.xlu0 %4103
        %4105 = vrot.lane.b32.xlu0 %v3124, 64
        %v4106 = vpop.permute.xlu0 %4105
        %4107 = vrot.lane.b32.xlu0 %v3125, 64
        %v4108 = vpop.permute.xlu0 %4107
        %4109 = vrot.lane.b32.xlu0 %v3126, 64
        %v4110 = vpop.permute.xlu0 %4109
        %4111 = vrot.lane.b32.xlu0 %v3127, 64
        %v4112 = vpop.permute.xlu0 %4111
        %4113 = vrot.lane.b32.xlu0 %v3128, 64
        %v4114 = vpop.permute.xlu0 %4113
        %4115 = vrot.lane.b32.xlu0 %v3129, 64
        %v4116 = vpop.permute.xlu0 %4115
        %4117 = vrot.lane.b32.xlu0 %v3130, 64
        %v4118 = vpop.permute.xlu0 %4117
        %4119 = vrot.lane.b32.xlu0 %v3131, 64
        %v4120 = vpop.permute.xlu0 %4119
        %4121 = vrot.lane.b32.xlu0 %v3132, 64
        %v4122 = vpop.permute.xlu0 %4121
        %4123 = vrot.lane.b32.xlu0 %v3133, 64
        %v4124 = vpop.permute.xlu0 %4123
        %4125 = vrot.lane.b32.xlu0 %v3134, 64
        %v4126 = vpop.permute.xlu0 %4125
        %v4159 = vsel %vm2285, %v2847, %v3168
        %v4160 = vsel %vm2285, %v2848, %v3170
        %v4161 = vsel %vm2285, %v2849, %v3172
        %v4162 = vsel %vm2285, %v2850, %v3174
        %v4163 = vsel %vm2285, %v2851, %v3176
        %v4164 = vsel %vm2285, %v2852, %v3178
        %v4165 = vsel %vm2285, %v2853, %v3180
        %v4166 = vsel %vm2285, %v2854, %v3182
        %v4167 = vsel %vm2285, %v2855, %v3184
        %v4168 = vsel %vm2285, %v2856, %v3186
        %v4169 = vsel %vm2285, %v2857, %v3188
        %v4170 = vsel %vm2285, %v2858, %v3190
        %v4171 = vsel %vm2285, %v2859, %v3192
        %v4172 = vsel %vm2285, %v2860, %v3194
        %v4173 = vsel %vm2285, %v2861, %v3196
        %v4174 = vsel %vm2285, %v2862, %v3198
        %v4175 = vsel %vm2285, %v2863, %v3200
        %v4176 = vsel %vm2285, %v2864, %v3202
        %v4177 = vsel %vm2285, %v2865, %v3204
        %v4178 = vsel %vm2285, %v2866, %v3206
        %v4179 = vsel %vm2285, %v2867, %v3208
        %v4180 = vsel %vm2285, %v2868, %v3210
        %v4181 = vsel %vm2285, %v2869, %v3212
        %v4182 = vsel %vm2285, %v2870, %v3214
        %v4183 = vsel %vm2285, %v2871, %v3216
        %v4184 = vsel %vm2285, %v2872, %v3218
        %v4185 = vsel %vm2285, %v2873, %v3220
        %v4186 = vsel %vm2285, %v2874, %v3222
        %v4187 = vsel %vm2285, %v2875, %v3224
        %v4188 = vsel %vm2285, %v2876, %v3226
        %v4189 = vsel %vm2285, %v2877, %v3228
        %v4190 = vsel %vm2285, %v2878, %v3230
        %v4191 = vsel %vm850, %v4159, %v3296
        %v4192 = vsel %vm850, %v4160, %v3298
        %v4193 = vsel %vm850, %v4161, %v3300
        %v4194 = vsel %vm850, %v4162, %v3302
        %v4195 = vsel %vm850, %v4163, %v3304
        %v4196 = vsel %vm850, %v4164, %v3306
        %v4197 = vsel %vm850, %v4165, %v3308
        %v4198 = vsel %vm850, %v4166, %v3310
        %v4199 = vsel %vm850, %v4167, %v3312
        %v4200 = vsel %vm850, %v4168, %v3314
        %v4201 = vsel %vm850, %v4169, %v3316
        %v4202 = vsel %vm850, %v4170, %v3318
        %v4203 = vsel %vm850, %v4171, %v3320
        %v4204 = vsel %vm850, %v4172, %v3322
        %v4205 = vsel %vm850, %v4173, %v3324
        %v4206 = vsel %vm850, %v4174, %v3326
        %v4207 = vsel %vm850, %v4175, %v3328
        %v4208 = vsel %vm850, %v4176, %v3330
        %v4209 = vsel %vm850, %v4177, %v3332
        %v4210 = vsel %vm850, %v4178, %v3334
        %v4211 = vsel %vm850, %v4179, %v3336
        %v4212 = vsel %vm850, %v4180, %v3338
        %v4213 = vsel %vm850, %v4181, %v3340
        %v4214 = vsel %vm850, %v4182, %v3342
        %v4215 = vsel %vm850, %v4183, %v3344
        %v4216 = vsel %vm850, %v4184, %v3346
        %v4217 = vsel %vm850, %v4185, %v3348
        %v4218 = vsel %vm850, %v4186, %v3350
        %v4219 = vsel %vm850, %v4187, %v3352
        %v4220 = vsel %vm850, %v4188, %v3354
        %v4221 = vsel %vm850, %v4189, %v3356
        %v4222 = vsel %vm850, %v4190, %v3358
        %v4223 = vsel %vm2416, %v4191, %v3424
        %v4224 = vsel %vm2416, %v4192, %v3426
        %v4225 = vsel %vm2416, %v4193, %v3428
        %v4226 = vsel %vm2416, %v4194, %v3430
        %v4227 = vsel %vm2416, %v4195, %v3432
        %v4228 = vsel %vm2416, %v4196, %v3434
        %v4229 = vsel %vm2416, %v4197, %v3436
        %v4230 = vsel %vm2416, %v4198, %v3438
        %v4231 = vsel %vm2416, %v4199, %v3440
        %v4232 = vsel %vm2416, %v4200, %v3442
        %v4233 = vsel %vm2416, %v4201, %v3444
        %v4234 = vsel %vm2416, %v4202, %v3446
        %v4235 = vsel %vm2416, %v4203, %v3448
        %v4236 = vsel %vm2416, %v4204, %v3450
        %v4237 = vsel %vm2416, %v4205, %v3452
        %v4238 = vsel %vm2416, %v4206, %v3454
        %v4239 = vsel %vm2416, %v4207, %v3456
        %v4240 = vsel %vm2416, %v4208, %v3458
        %v4241 = vsel %vm2416, %v4209, %v3460
        %v4242 = vsel %vm2416, %v4210, %v3462
        %v4243 = vsel %vm2416, %v4211, %v3464
        %v4244 = vsel %vm2416, %v4212, %v3466
        %v4245 = vsel %vm2416, %v4213, %v3468
        %v4246 = vsel %vm2416, %v4214, %v3470
        %v4247 = vsel %vm2416, %v4215, %v3472
        %v4248 = vsel %vm2416, %v4216, %v3474
        %v4249 = vsel %vm2416, %v4217, %v3476
        %v4250 = vsel %vm2416, %v4218, %v3478
        %v4251 = vsel %vm2416, %v4219, %v3480
        %v4252 = vsel %vm2416, %v4220, %v3482
        %v4253 = vsel %vm2416, %v4221, %v3484
        %v4254 = vsel %vm2416, %v4222, %v3486
        %v4255 = vsel %vm2482, %v4223, %v3552
        %v4256 = vsel %vm2482, %v4224, %v3554
        %v4257 = vsel %vm2482, %v4225, %v3556
        %v4258 = vsel %vm2482, %v4226, %v3558
        %v4259 = vsel %vm2482, %v4227, %v3560
        %v4260 = vsel %vm2482, %v4228, %v3562
        %v4261 = vsel %vm2482, %v4229, %v3564
        %v4262 = vsel %vm2482, %v4230, %v3566
        %v4263 = vsel %vm2482, %v4231, %v3568
        %v4264 = vsel %vm2482, %v4232, %v3570
        %v4265 = vsel %vm2482, %v4233, %v3572
        %v4266 = vsel %vm2482, %v4234, %v3574
        %v4267 = vsel %vm2482, %v4235, %v3576
        %v4268 = vsel %vm2482, %v4236, %v3578
        %v4269 = vsel %vm2482, %v4237, %v3580
        %v4270 = vsel %vm2482, %v4238, %v3582
        %v4271 = vsel %vm2482, %v4239, %v3584
        %v4272 = vsel %vm2482, %v4240, %v3586
        %v4273 = vsel %vm2482, %v4241, %v3588
        %v4274 = vsel %vm2482, %v4242, %v3590
        %v4275 = vsel %vm2482, %v4243, %v3592
        %v4276 = vsel %vm2482, %v4244, %v3594
        %v4277 = vsel %vm2482, %v4245, %v3596
        %v4278 = vsel %vm2482, %v4246, %v3598
        %v4279 = vsel %vm2482, %v4247, %v3600
        %v4280 = vsel %vm2482, %v4248, %v3602
        %v4281 = vsel %vm2482, %v4249, %v3604
        %v4282 = vsel %vm2482, %v4250, %v3606
        %v4283 = vsel %vm2482, %v4251, %v3608
        %v4284 = vsel %vm2482, %v4252, %v3610
        %v4285 = vsel %vm2482, %v4253, %v3612
        %v4286 = vsel %vm2482, %v4254, %v3614
        %vm4287 = vcmask 326656
        %v4288 = vsel %vm4287, %v4255, %v3680
        %v4289 = vsel %vm4287, %v4256, %v3682
        %v4290 = vsel %vm4287, %v4257, %v3684
        %v4291 = vsel %vm4287, %v4258, %v3686
        %v4292 = vsel %vm4287, %v4259, %v3688
        %v4293 = vsel %vm4287, %v4260, %v3690
        %v4294 = vsel %vm4287, %v4261, %v3692
        %v4295 = vsel %vm4287, %v4262, %v3694
        %v4296 = vsel %vm4287, %v4263, %v3696
        %v4297 = vsel %vm4287, %v4264, %v3698
        %v4298 = vsel %vm4287, %v4265, %v3700
        %v4299 = vsel %vm4287, %v4266, %v3702
        %v4300 = vsel %vm4287, %v4267, %v3704
        %v4301 = vsel %vm4287, %v4268, %v3706
        %v4302 = vsel %vm4287, %v4269, %v3708
        %v4303 = vsel %vm4287, %v4270, %v3710
        %v4304 = vsel %vm4287, %v4271, %v3712
        %v4305 = vsel %vm4287, %v4272, %v3714
        %v4306 = vsel %vm4287, %v4273, %v3716
        %v4307 = vsel %vm4287, %v4274, %v3718
        %v4308 = vsel %vm4287, %v4275, %v3720
        %v4309 = vsel %vm4287, %v4276, %v3722
        %v4310 = vsel %vm4287, %v4277, %v3724
        %v4311 = vsel %vm4287, %v4278, %v3726
        %v4312 = vsel %vm4287, %v4279, %v3728
        %v4313 = vsel %vm4287, %v4280, %v3730
        %v4314 = vsel %vm4287, %v4281, %v3732
        %v4315 = vsel %vm4287, %v4282, %v3734
        %v4316 = vsel %vm4287, %v4283, %v3736
        %v4317 = vsel %vm4287, %v4284, %v3738
        %v4318 = vsel %vm4287, %v4285, %v3740
        %v4319 = vsel %vm4287, %v4286, %v3742
        %vm4320 = vcmask 392192
        %v4321 = vsel %vm4320, %v4288, %v3808
        %v4322 = vsel %vm4320, %v4289, %v3810
        %v4323 = vsel %vm4320, %v4290, %v3812
        %v4324 = vsel %vm4320, %v4291, %v3814
        %v4325 = vsel %vm4320, %v4292, %v3816
        %v4326 = vsel %vm4320, %v4293, %v3818
        %v4327 = vsel %vm4320, %v4294, %v3820
        %v4328 = vsel %vm4320, %v4295, %v3822
        %v4329 = vsel %vm4320, %v4296, %v3824
        %v4330 = vsel %vm4320, %v4297, %v3826
        %v4331 = vsel %vm4320, %v4298, %v3828
        %v4332 = vsel %vm4320, %v4299, %v3830
        %v4333 = vsel %vm4320, %v4300, %v3832
        %v4334 = vsel %vm4320, %v4301, %v3834
        %v4335 = vsel %vm4320, %v4302, %v3836
        %v4336 = vsel %vm4320, %v4303, %v3838
        %v4337 = vsel %vm4320, %v4304, %v3840
        %v4338 = vsel %vm4320, %v4305, %v3842
        %v4339 = vsel %vm4320, %v4306, %v3844
        %v4340 = vsel %vm4320, %v4307, %v3846
        %v4341 = vsel %vm4320, %v4308, %v3848
        %v4342 = vsel %vm4320, %v4309, %v3850
        %v4343 = vsel %vm4320, %v4310, %v3852
        %v4344 = vsel %vm4320, %v4311, %v3854
        %v4345 = vsel %vm4320, %v4312, %v3856
        %v4346 = vsel %vm4320, %v4313, %v3858
        %v4347 = vsel %vm4320, %v4314, %v3860
        %v4348 = vsel %vm4320, %v4315, %v3862
        %v4349 = vsel %vm4320, %v4316, %v3864
        %v4350 = vsel %vm4320, %v4317, %v3866
        %v4351 = vsel %vm4320, %v4318, %v3868
        %v4352 = vsel %vm4320, %v4319, %v3870
        %vm4353 = vcmask 457728
        %v4354 = vsel %vm4353, %v4321, %v3936
        %v4355 = vsel %vm4353, %v4322, %v3938
        %v4356 = vsel %vm4353, %v4323, %v3940
        %v4357 = vsel %vm4353, %v4324, %v3942
        %v4358 = vsel %vm4353, %v4325, %v3944
        %v4359 = vsel %vm4353, %v4326, %v3946
        %v4360 = vsel %vm4353, %v4327, %v3948
        %v4361 = vsel %vm4353, %v4328, %v3950
        %v4362 = vsel %vm4353, %v4329, %v3952
        %v4363 = vsel %vm4353, %v4330, %v3954
        %v4364 = vsel %vm4353, %v4331, %v3956
        %v4365 = vsel %vm4353, %v4332, %v3958
        %v4366 = vsel %vm4353, %v4333, %v3960
        %v4367 = vsel %vm4353, %v4334, %v3962
        %v4368 = vsel %vm4353, %v4335, %v3964
        %v4369 = vsel %vm4353, %v4336, %v3966
        %v4370 = vsel %vm4353, %v4337, %v3968
        %v4371 = vsel %vm4353, %v4338, %v3970
        %v4372 = vsel %vm4353, %v4339, %v3972
        %v4373 = vsel %vm4353, %v4340, %v3974
        %v4374 = vsel %vm4353, %v4341, %v3976
        %v4375 = vsel %vm4353, %v4342, %v3978
        %v4376 = vsel %vm4353, %v4343, %v3980
        %v4377 = vsel %vm4353, %v4344, %v3982
        %v4378 = vsel %vm4353, %v4345, %v3984
        %v4379 = vsel %vm4353, %v4346, %v3986
        %v4380 = vsel %vm4353, %v4347, %v3988
        %v4381 = vsel %vm4353, %v4348, %v3990
        %v4382 = vsel %vm4353, %v4349, %v3992
        %v4383 = vsel %vm4353, %v4350, %v3994
        %v4384 = vsel %vm4353, %v4351, %v3996
        %v4385 = vsel %vm4353, %v4352, %v3998
        %vm4386 = vcmask 523264
        %v4387 = vsel %vm4386, %v4354, %v4064
        %v4388 = vsel %vm4386, %v4355, %v4066
        %v4389 = vsel %vm4386, %v4356, %v4068
        %v4390 = vsel %vm4386, %v4357, %v4070
        %v4391 = vsel %vm4386, %v4358, %v4072
        %v4392 = vsel %vm4386, %v4359, %v4074
        %v4393 = vsel %vm4386, %v4360, %v4076
        %v4394 = vsel %vm4386, %v4361, %v4078
        %v4395 = vsel %vm4386, %v4362, %v4080
        %v4396 = vsel %vm4386, %v4363, %v4082
        %v4397 = vsel %vm4386, %v4364, %v4084
        %v4398 = vsel %vm4386, %v4365, %v4086
        %v4399 = vsel %vm4386, %v4366, %v4088
        %v4400 = vsel %vm4386, %v4367, %v4090
        %v4401 = vsel %vm4386, %v4368, %v4092
        %v4402 = vsel %vm4386, %v4369, %v4094
        %v4403 = vsel %vm4386, %v4370, %v4096
        %v4404 = vsel %vm4386, %v4371, %v4098
        %v4405 = vsel %vm4386, %v4372, %v4100
        %v4406 = vsel %vm4386, %v4373, %v4102
        %v4407 = vsel %vm4386, %v4374, %v4104
        %v4408 = vsel %vm4386, %v4375, %v4106
        %v4409 = vsel %vm4386, %v4376, %v4108
        %v4410 = vsel %vm4386, %v4377, %v4110
        %v4411 = vsel %vm4386, %v4378, %v4112
        %v4412 = vsel %vm4386, %v4379, %v4114
        %v4413 = vsel %vm4386, %v4380, %v4116
        %v4414 = vsel %vm4386, %v4381, %v4118
        %v4415 = vsel %vm4386, %v4382, %v4120
        %v4416 = vsel %vm4386, %v4383, %v4122
        %v4417 = vsel %vm4386, %v4384, %v4124
        %v4418 = vsel %vm4386, %v4385, %v4126
        %v4419 = vpack.c.bf16 %v4388, %v4387
        %v4420 = vpack.c.bf16 %v4390, %v4389
        %v4421 = vpack.c.bf16 %v4392, %v4391
        %v4422 = vpack.c.bf16 %v4394, %v4393
        %v4423 = vpack.c.bf16 %v4396, %v4395
        %v4424 = vpack.c.bf16 %v4398, %v4397
        %v4425 = vpack.c.bf16 %v4400, %v4399
        %v4426 = vpack.c.bf16 %v4402, %v4401
        %v4427 = vpack.c.bf16 %v4404, %v4403
        %v4428 = vpack.c.bf16 %v4406, %v4405
        %v4429 = vpack.c.bf16 %v4408, %v4407
        %v4430 = vpack.c.bf16 %v4410, %v4409
        %v4431 = vpack.c.bf16 %v4412, %v4411
        %v4432 = vpack.c.bf16 %v4414, %v4413
        %v4433 = vpack.c.bf16 %v4416, %v4415
        %v4434 = vpack.c.bf16 %v4418, %v4417
        %v4435 = vld [vmem:[%s4] sm:$0xf]
        %v4436 = vld [vmem:[%s4 + $0x4] sm:$0xf]
        %v4437 = vld [vmem:[%s4 + $0x8] sm:$0xf]
        %v4438 = vld [vmem:[%s4 + $0xc] sm:$0xf]
        %v4439 = vld [vmem:[%s4 + $0x10] sm:$0xf]
        %v4440 = vld [vmem:[%s4 + $0x14] sm:$0xf]
        %v4441 = vld [vmem:[%s4 + $0x18] sm:$0xf]
        %v4442 = vld [vmem:[%s4 + $0x1c] sm:$0xf]
        %v4443 = vld [vmem:[%s4 + $0x20] sm:$0xf]
        %v4444 = vld [vmem:[%s3] sm:$0x1]
        %v4446 = vperm.slane %v4444, 0
        %v4457 = vunpack.c.l.b16 %v4435
        %v4458 = vunpack.c.l.b16 %v4436
        %v4459 = vunpack.c.l.b16 %v4437
        %v4460 = vunpack.c.l.b16 %v4438
        %v4461 = vunpack.c.l.b16 %v4439
        %v4462 = vunpack.c.l.b16 %v4440
        %v4463 = vunpack.c.l.b16 %v4441
        %v4464 = vunpack.c.l.b16 %v4442
        %v4465 = vunpack.c.l.b16 %v4443
        %v4466 = vpack.c.b16 %v4458, %v4457
        %v4467 = vpack.c.b16 %v4460, %v4459
        %v4468 = vpack.c.b16 %v4462, %v4461
        %v4469 = vpack.c.b16 %v4464, %v4463
        %v4470 = vpack.c.b16 %v4465, %v4465
        %vm4475 = vcmask 588800
        %v4477 = vsel %vm4475, %v4419, 0
        %v4480 = vsel %vm4475, %v4420, 0
        %v4483 = vsel %vm4475, %v4421, 0
        %v4486 = vsel %vm4475, %v4422, 0
        %v4489 = vsel %vm4475, %v4423, 0
        %v4492 = vsel %vm4475, %v4424, 0
        %v4495 = vsel %vm4475, %v4425, 0
        %v4498 = vsel %vm4475, %v4426, 0
        %v4501 = vsel %vm4475, %v4427, 0
        %v4504 = vsel %vm4475, %v4428, 0
        %v4507 = vsel %vm4475, %v4429, 0
        %v4510 = vsel %vm4475, %v4430, 0
        %v4513 = vsel %vm4475, %v4431, 0
        %v4516 = vsel %vm4475, %v4432, 0
        %v4519 = vsel %vm4475, %v4433, 0
        %v4522 = vsel %vm4475, %v4434, 0
        %vm4524 = vcmask 1043456
        %v4526 = vsel %vm4524, %v4470, 0
        %4528 = vmatpush.bf16.msra.mxu0 0
        %4529 = vmatpush.bf16.msra.mxu0 0
        %4530 = vmatpush.bf16.msra.mxu0 0
        %4531 = vmatpush.bf16.msra.mxu0 %v4526
        %4532 = vmatpush.bf16.msra.mxu0 %v4469
        %4533 = vmatpush.bf16.msra.mxu0 %v4468
        %4534 = vmatpush.bf16.msra.mxu0 %v4467
        %4535 = vmatpush.bf16.msra.mxu0 %v4466
        %4536 = vmatmul.bf16.gmra.mxu0 %v4477
        %v4537 = vpop.f32.mrf.mxu0
        %v4538 = vadd.f32 %v4446, %v4537
        %v4539 = vpop.f32.mrf.mxu0
        %v4540 = vadd.f32 %v4446, %v4539
        %4541 = vmatmul.bf16.gmra.mxu0 %v4480
        %v4542 = vpop.f32.mrf.mxu0
        %v4543 = vadd.f32 %v4446, %v4542
        %v4544 = vpop.f32.mrf.mxu0
        %v4545 = vadd.f32 %v4446, %v4544
        %4546 = vmatmul.bf16.gmra.mxu0 %v4483
        %v4547 = vpop.f32.mrf.mxu0
        %v4548 = vadd.f32 %v4446, %v4547
        %v4549 = vpop.f32.mrf.mxu0
        %v4550 = vadd.f32 %v4446, %v4549
        %4551 = vmatmul.bf16.gmra.mxu0 %v4486
        %v4552 = vpop.f32.mrf.mxu0
        %v4553 = vadd.f32 %v4446, %v4552
        %v4554 = vpop.f32.mrf.mxu0
        %v4555 = vadd.f32 %v4446, %v4554
        %4556 = vmatmul.bf16.gmra.mxu0 %v4489
        %v4557 = vpop.f32.mrf.mxu0
        %v4558 = vadd.f32 %v4446, %v4557
        %v4559 = vpop.f32.mrf.mxu0
        %v4560 = vadd.f32 %v4446, %v4559
        %4561 = vmatmul.bf16.gmra.mxu0 %v4492
        %v4562 = vpop.f32.mrf.mxu0
        %v4563 = vadd.f32 %v4446, %v4562
        %v4564 = vpop.f32.mrf.mxu0
        %v4565 = vadd.f32 %v4446, %v4564
        %4566 = vmatmul.bf16.gmra.mxu0 %v4495
        %v4567 = vpop.f32.mrf.mxu0
        %v4568 = vadd.f32 %v4446, %v4567
        %v4569 = vpop.f32.mrf.mxu0
        %v4570 = vadd.f32 %v4446, %v4569
        %4571 = vmatmul.bf16.gmra.mxu0 %v4498
        %v4572 = vpop.f32.mrf.mxu0
        %v4573 = vadd.f32 %v4446, %v4572
        %v4574 = vpop.f32.mrf.mxu0
        %v4575 = vadd.f32 %v4446, %v4574
        %4576 = vmatmul.bf16.gmra.mxu0 %v4501
        %v4577 = vpop.f32.mrf.mxu0
        %v4578 = vadd.f32 %v4446, %v4577
        %v4579 = vpop.f32.mrf.mxu0
        %v4580 = vadd.f32 %v4446, %v4579
        %4581 = vmatmul.bf16.gmra.mxu0 %v4504
        %v4582 = vpop.f32.mrf.mxu0
        %v4583 = vadd.f32 %v4446, %v4582
        %v4584 = vpop.f32.mrf.mxu0
        %v4585 = vadd.f32 %v4446, %v4584
        %4586 = vmatmul.bf16.gmra.mxu0 %v4507
        %v4587 = vpop.f32.mrf.mxu0
        %v4588 = vadd.f32 %v4446, %v4587
        %v4589 = vpop.f32.mrf.mxu0
        %v4590 = vadd.f32 %v4446, %v4589
        %4591 = vmatmul.bf16.gmra.mxu0 %v4510
        %v4592 = vpop.f32.mrf.mxu0
        %v4593 = vadd.f32 %v4446, %v4592
        %v4594 = vpop.f32.mrf.mxu0
        %v4595 = vadd.f32 %v4446, %v4594
        %4596 = vmatmul.bf16.gmra.mxu0 %v4513
        %v4597 = vpop.f32.mrf.mxu0
        %v4598 = vadd.f32 %v4446, %v4597
        %v4599 = vpop.f32.mrf.mxu0
        %v4600 = vadd.f32 %v4446, %v4599
        %4601 = vmatmul.bf16.gmra.mxu0 %v4516
        %v4602 = vpop.f32.mrf.mxu0
        %v4603 = vadd.f32 %v4446, %v4602
        %v4604 = vpop.f32.mrf.mxu0
        %v4605 = vadd.f32 %v4446, %v4604
        %4606 = vmatmul.bf16.gmra.mxu0 %v4519
        %v4607 = vpop.f32.mrf.mxu0
        %v4608 = vadd.f32 %v4446, %v4607
        %v4609 = vpop.f32.mrf.mxu0
        %v4610 = vadd.f32 %v4446, %v4609
        %4611 = vmatmul.bf16.gmra.mxu0 %v4522
        %v4612 = vpop.f32.mrf.mxu0
        %v4613 = vadd.f32 %v4446, %v4612
        %v4614 = vpop.f32.mrf.mxu0
        %v4615 = vadd.f32 %v4446, %v4614
        %4616 = vdwg.mxu0
        %v4617 = vmul.f32 %v4538, 0.1
        %v4618 = vmul.f32 %v4540, 0.1
        %v4619 = vmul.f32 %v4543, 0.1
        %v4620 = vmul.f32 %v4545, 0.1
        %v4621 = vmul.f32 %v4548, 0.1
        %v4622 = vmul.f32 %v4550, 0.1
        %v4623 = vmul.f32 %v4553, 0.1
        %v4624 = vmul.f32 %v4555, 0.1
        %v4625 = vmul.f32 %v4558, 0.1
        %v4626 = vmul.f32 %v4560, 0.1
        %v4627 = vmul.f32 %v4563, 0.1
        %v4628 = vmul.f32 %v4565, 0.1
        %v4629 = vmul.f32 %v4568, 0.1
        %v4630 = vmul.f32 %v4570, 0.1
        %v4631 = vmul.f32 %v4573, 0.1
        %v4632 = vmul.f32 %v4575, 0.1
        %v4633 = vmul.f32 %v4578, 0.1
        %v4634 = vmul.f32 %v4580, 0.1
        %v4635 = vmul.f32 %v4583, 0.1
        %v4636 = vmul.f32 %v4585, 0.1
        %v4637 = vmul.f32 %v4588, 0.1
        %v4638 = vmul.f32 %v4590, 0.1
        %v4639 = vmul.f32 %v4593, 0.1
        %v4640 = vmul.f32 %v4595, 0.1
        %v4641 = vmul.f32 %v4598, 0.1
        %v4642 = vmul.f32 %v4600, 0.1
        %v4643 = vmul.f32 %v4603, 0.1
        %v4644 = vmul.f32 %v4605, 0.1
        %v4645 = vmul.f32 %v4608, 0.1
        %v4646 = vmul.f32 %v4610, 0.1
        %v4647 = vmul.f32 %v4613, 0.1
        %v4648 = vmul.f32 %v4615, 0.1
        %v4649 = vmax.f32 %v4538, %v4617
        %v4650 = vmax.f32 %v4540, %v4618
        %v4651 = vmax.f32 %v4543, %v4619
        %v4652 = vmax.f32 %v4545, %v4620
        %v4653 = vmax.f32 %v4548, %v4621
        %v4654 = vmax.f32 %v4550, %v4622
        %v4655 = vmax.f32 %v4553, %v4623
        %v4656 = vmax.f32 %v4555, %v4624
        %v4657 = vmax.f32 %v4558, %v4625
        %v4658 = vmax.f32 %v4560, %v4626
        %v4659 = vmax.f32 %v4563, %v4627
        %v4660 = vmax.f32 %v4565, %v4628
        %v4661 = vmax.f32 %v4568, %v4629
        %v4662 = vmax.f32 %v4570, %v4630
        %v4663 = vmax.f32 %v4573, %v4631
        %v4664 = vmax.f32 %v4575, %v4632
        %v4665 = vmax.f32 %v4578, %v4633
        %v4666 = vmax.f32 %v4580, %v4634
        %v4667 = vmax.f32 %v4583, %v4635
        %v4668 = vmax.f32 %v4585, %v4636
        %v4669 = vmax.f32 %v4588, %v4637
        %v4670 = vmax.f32 %v4590, %v4638
        %v4671 = vmax.f32 %v4593, %v4639
        %v4672 = vmax.f32 %v4595, %v4640
        %v4673 = vmax.f32 %v4598, %v4641
        %v4674 = vmax.f32 %v4600, %v4642
        %v4675 = vmax.f32 %v4603, %v4643
        %v4676 = vmax.f32 %v4605, %v4644
        %v4677 = vmax.f32 %v4608, %v4645
        %v4678 = vmax.f32 %v4610, %v4646
        %v4679 = vmax.f32 %v4613, %v4647
        %v4680 = vmax.f32 %v4615, %v4648
        %v4681 = vpack.c.bf16 %v4650, %v4649
        %v4682 = vpack.c.bf16 %v4652, %v4651
        %v4683 = vpack.c.bf16 %v4654, %v4653
        %v4684 = vpack.c.bf16 %v4656, %v4655
        %v4685 = vpack.c.bf16 %v4658, %v4657
        %v4686 = vpack.c.bf16 %v4660, %v4659
        %v4687 = vpack.c.bf16 %v4662, %v4661
        %v4688 = vpack.c.bf16 %v4664, %v4663
        %v4689 = vpack.c.bf16 %v4666, %v4665
        %v4690 = vpack.c.bf16 %v4668, %v4667
        %v4691 = vpack.c.bf16 %v4670, %v4669
        %v4692 = vpack.c.bf16 %v4672, %v4671
        %v4693 = vpack.c.bf16 %v4674, %v4673
        %v4694 = vpack.c.bf16 %v4676, %v4675
        %v4695 = vpack.c.bf16 %v4678, %v4677
        %v4696 = vpack.c.bf16 %v4680, %v4679
        %v4697 = vld [vmem:[%s6] sm:$0xf]
        %v4698 = vld [vmem:[%s6 + $0x4] sm:$0xf]
        %v4699 = vld [vmem:[%s5] sm:$0x1]
        %v4701 = vperm.slane %v4699, 0
        %v4705 = vunpack.c.l.b16 %v4697
        %v4706 = vunpack.c.l.b16 %v4698
        %v4707 = vpack.c.b16 %v4706, %v4705
        %v4710 = vsel %vm850, %v4681, 0
        %v4713 = vsel %vm850, %v4682, 0
        %v4716 = vsel %vm850, %v4683, 0
        %v4719 = vsel %vm850, %v4684, 0
        %v4722 = vsel %vm850, %v4685, 0
        %v4725 = vsel %vm850, %v4686, 0
        %v4728 = vsel %vm850, %v4687, 0
        %v4731 = vsel %vm850, %v4688, 0
        %v4734 = vsel %vm850, %v4689, 0
        %v4737 = vsel %vm850, %v4690, 0
        %v4740 = vsel %vm850, %v4691, 0
        %v4743 = vsel %vm850, %v4692, 0
        %v4746 = vsel %vm850, %v4693, 0
        %v4749 = vsel %vm850, %v4694, 0
        %v4752 = vsel %vm850, %v4695, 0
        %v4755 = vsel %vm850, %v4696, 0
        %4757 = vmatpush.bf16.msra.mxu0 0
        %4758 = vmatpush.bf16.msra.mxu0 0
        %4759 = vmatpush.bf16.msra.mxu0 0
        %4760 = vmatpush.bf16.msra.mxu0 0
        %4761 = vmatpush.bf16.msra.mxu0 0
        %4762 = vmatpush.bf16.msra.mxu0 0
        %4763 = vmatpush.bf16.msra.mxu0 0
        %4764 = vmatpush.bf16.msra.mxu0 %v4707
        %4765 = vmatmul.bf16.gmra.mxu0 %v4710
        %v4766 = vpop.f32.mrf.mxu0
        %v4767 = vadd.f32 %v4701, %v4766
        %v4768 = vpop.f32.mrf.mxu0
        %v4769 = vadd.f32 %v4701, %v4768
        %4770 = vmatmul.bf16.gmra.mxu0 %v4713
        %v4771 = vpop.f32.mrf.mxu0
        %v4772 = vadd.f32 %v4701, %v4771
        %v4773 = vpop.f32.mrf.mxu0
        %v4774 = vadd.f32 %v4701, %v4773
        %4775 = vmatmul.bf16.gmra.mxu0 %v4716
        %v4776 = vpop.f32.mrf.mxu0
        %v4777 = vadd.f32 %v4701, %v4776
        %v4778 = vpop.f32.mrf.mxu0
        %v4779 = vadd.f32 %v4701, %v4778
        %4780 = vmatmul.bf16.gmra.mxu0 %v4719
        %v4781 = vpop.f32.mrf.mxu0
        %v4782 = vadd.f32 %v4701, %v4781
        %v4783 = vpop.f32.mrf.mxu0
        %v4784 = vadd.f32 %v4701, %v4783
        %4785 = vmatmul.bf16.gmra.mxu0 %v4722
        %v4786 = vpop.f32.mrf.mxu0
        %v4787 = vadd.f32 %v4701, %v4786
        %v4788 = vpop.f32.mrf.mxu0
        %v4789 = vadd.f32 %v4701, %v4788
        %4790 = vmatmul.bf16.gmra.mxu0 %v4725
        %v4791 = vpop.f32.mrf.mxu0
        %v4792 = vadd.f32 %v4701, %v4791
        %v4793 = vpop.f32.mrf.mxu0
        %v4794 = vadd.f32 %v4701, %v4793
        %4795 = vmatmul.bf16.gmra.mxu0 %v4728
        %v4796 = vpop.f32.mrf.mxu0
        %v4797 = vadd.f32 %v4701, %v4796
        %v4798 = vpop.f32.mrf.mxu0
        %v4799 = vadd.f32 %v4701, %v4798
        %4800 = vmatmul.bf16.gmra.mxu0 %v4731
        %v4801 = vpop.f32.mrf.mxu0
        %v4802 = vadd.f32 %v4701, %v4801
        %v4803 = vpop.f32.mrf.mxu0
        %v4804 = vadd.f32 %v4701, %v4803
        %4805 = vmatmul.bf16.gmra.mxu0 %v4734
        %v4806 = vpop.f32.mrf.mxu0
        %v4807 = vadd.f32 %v4701, %v4806
        %v4808 = vpop.f32.mrf.mxu0
        %v4809 = vadd.f32 %v4701, %v4808
        %4810 = vmatmul.bf16.gmra.mxu0 %v4737
        %v4811 = vpop.f32.mrf.mxu0
        %v4812 = vadd.f32 %v4701, %v4811
        %v4813 = vpop.f32.mrf.mxu0
        %v4814 = vadd.f32 %v4701, %v4813
        %4815 = vmatmul.bf16.gmra.mxu0 %v4740
        %v4816 = vpop.f32.mrf.mxu0
        %v4817 = vadd.f32 %v4701, %v4816
        %v4818 = vpop.f32.mrf.mxu0
        %v4819 = vadd.f32 %v4701, %v4818
        %4820 = vmatmul.bf16.gmra.mxu0 %v4743
        %v4821 = vpop.f32.mrf.mxu0
        %v4822 = vadd.f32 %v4701, %v4821
        %v4823 = vpop.f32.mrf.mxu0
        %v4824 = vadd.f32 %v4701, %v4823
        %4825 = vmatmul.bf16.gmra.mxu0 %v4746
        %v4826 = vpop.f32.mrf.mxu0
        %v4827 = vadd.f32 %v4701, %v4826
        %v4828 = vpop.f32.mrf.mxu0
        %v4829 = vadd.f32 %v4701, %v4828
        %4830 = vmatmul.bf16.gmra.mxu0 %v4749
        %v4831 = vpop.f32.mrf.mxu0
        %v4832 = vadd.f32 %v4701, %v4831
        %v4833 = vpop.f32.mrf.mxu0
        %v4834 = vadd.f32 %v4701, %v4833
        %4835 = vmatmul.bf16.gmra.mxu0 %v4752
        %v4836 = vpop.f32.mrf.mxu0
        %v4837 = vadd.f32 %v4701, %v4836
        %v4838 = vpop.f32.mrf.mxu0
        %v4839 = vadd.f32 %v4701, %v4838
        %4840 = vmatmul.bf16.gmra.mxu0 %v4755
        %v4841 = vpop.f32.mrf.mxu0
        %v4842 = vadd.f32 %v4701, %v4841
        %v4843 = vpop.f32.mrf.mxu0
        %v4844 = vadd.f32 %v4701, %v4843
        %4845 = vdwg.mxu0
        %v4846 = vmul.f32 %v4767, 0.1
        %v4847 = vmul.f32 %v4769, 0.1
        %v4848 = vmul.f32 %v4772, 0.1
        %v4849 = vmul.f32 %v4774, 0.1
        %v4850 = vmul.f32 %v4777, 0.1
        %v4851 = vmul.f32 %v4779, 0.1
        %v4852 = vmul.f32 %v4782, 0.1
        %v4853 = vmul.f32 %v4784, 0.1
        %v4854 = vmul.f32 %v4787, 0.1
        %v4855 = vmul.f32 %v4789, 0.1
        %v4856 = vmul.f32 %v4792, 0.1
        %v4857 = vmul.f32 %v4794, 0.1
        %v4858 = vmul.f32 %v4797, 0.1
        %v4859 = vmul.f32 %v4799, 0.1
        %v4860 = vmul.f32 %v4802, 0.1
        %v4861 = vmul.f32 %v4804, 0.1
        %v4862 = vmul.f32 %v4807, 0.1
        %v4863 = vmul.f32 %v4809, 0.1
        %v4864 = vmul.f32 %v4812, 0.1
        %v4865 = vmul.f32 %v4814, 0.1
        %v4866 = vmul.f32 %v4817, 0.1
        %v4867 = vmul.f32 %v4819, 0.1
        %v4868 = vmul.f32 %v4822, 0.1
        %v4869 = vmul.f32 %v4824, 0.1
        %v4870 = vmul.f32 %v4827, 0.1
        %v4871 = vmul.f32 %v4829, 0.1
        %v4872 = vmul.f32 %v4832, 0.1
        %v4873 = vmul.f32 %v4834, 0.1
        %v4874 = vmul.f32 %v4837, 0.1
        %v4875 = vmul.f32 %v4839, 0.1
        %v4876 = vmul.f32 %v4842, 0.1
        %v4877 = vmul.f32 %v4844, 0.1
        %v4878 = vmax.f32 %v4767, %v4846
        %v4879 = vmax.f32 %v4769, %v4847
        %v4880 = vmax.f32 %v4772, %v4848
        %v4881 = vmax.f32 %v4774, %v4849
        %v4882 = vmax.f32 %v4777, %v4850
        %v4883 = vmax.f32 %v4779, %v4851
        %v4884 = vmax.f32 %v4782, %v4852
        %v4885 = vmax.f32 %v4784, %v4853
        %v4886 = vmax.f32 %v4787, %v4854
        %v4887 = vmax.f32 %v4789, %v4855
        %v4888 = vmax.f32 %v4792, %v4856
        %v4889 = vmax.f32 %v4794, %v4857
        %v4890 = vmax.f32 %v4797, %v4858
        %v4891 = vmax.f32 %v4799, %v4859
        %v4892 = vmax.f32 %v4802, %v4860
        %v4893 = vmax.f32 %v4804, %v4861
        %v4894 = vmax.f32 %v4807, %v4862
        %v4895 = vmax.f32 %v4809, %v4863
        %v4896 = vmax.f32 %v4812, %v4864
        %v4897 = vmax.f32 %v4814, %v4865
        %v4898 = vmax.f32 %v4817, %v4866
        %v4899 = vmax.f32 %v4819, %v4867
        %v4900 = vmax.f32 %v4822, %v4868
        %v4901 = vmax.f32 %v4824, %v4869
        %v4902 = vmax.f32 %v4827, %v4870
        %v4903 = vmax.f32 %v4829, %v4871
        %v4904 = vmax.f32 %v4832, %v4872
        %v4905 = vmax.f32 %v4834, %v4873
        %v4906 = vmax.f32 %v4837, %v4874
        %v4907 = vmax.f32 %v4839, %v4875
        %v4908 = vmax.f32 %v4842, %v4876
        %v4909 = vmax.f32 %v4844, %v4877
        %4910 = vst.msk [vmem:[#allocation2] sm:$0xff] %vm850, 0.0
        %4911 = vst.msk [vmem:[#allocation2 + $0x8] sm:$0xff] %vm850, 0.0
        %4912 = vst.msk [vmem:[#allocation2 + $0x10] sm:$0x3] %vm853, 0.0
        %4913 = vst.msk [vmem:[#allocation2 + $0x18] sm:$0xff] %vm850, 0.0
        %4914 = vst.msk [vmem:[#allocation2 + $0x20] sm:$0xff] %vm850, 0.0
        %4915 = vst.msk [vmem:[#allocation2 + $0x28] sm:$0x3] %vm853, 0.0
        %4916 = vst.msk [vmem:[#allocation2 + $0x30] sm:$0xff] %vm850, 0.0
        %4917 = vst.msk [vmem:[#allocation2 + $0x38] sm:$0xff] %vm850, 0.0
        %4918 = vst.msk [vmem:[#allocation2 + $0x40] sm:$0x3] %vm853, 0.0
        %4919 = vst.msk [vmem:[#allocation2 + $0x48] sm:$0xff] %vm850, 0.0
        %4920 = vst.msk [vmem:[#allocation2 + $0x50] sm:$0xff] %vm850, 0.0
        %4921 = vst.msk [vmem:[#allocation2 + $0x58] sm:$0x3] %vm853, 0.0
        %4922 = vst.msk [vmem:[#allocation2 + $0x60] sm:$0xff] %vm850, 0.0
        %4923 = vst.msk [vmem:[#allocation2 + $0x68] sm:$0xff] %vm850, 0.0
        %4924 = vst.msk [vmem:[#allocation2 + $0x70] sm:$0x3] %vm853, 0.0
        %4925 = vst.msk [vmem:[#allocation2 + $0x78] sm:$0xff] %vm850, 0.0
        %4926 = vst.msk [vmem:[#allocation2 + $0x80] sm:$0xff] %vm850, 0.0
        %4927 = vst.msk [vmem:[#allocation2 + $0x88] sm:$0x3] %vm853, 0.0
        %4928 = vst.msk [vmem:[#allocation2 + $0x90] sm:$0xff] %vm850, 0.0
        %4929 = vst.msk [vmem:[#allocation2 + $0x98] sm:$0xff] %vm850, 0.0
        %4930 = vst.msk [vmem:[#allocation2 + $0xa0] sm:$0x3] %vm853, 0.0
        %4931 = vst.msk [vmem:[#allocation2 + $0xa8] sm:$0xff] %vm850, 0.0
        %4932 = vst.msk [vmem:[#allocation2 + $0xb0] sm:$0xff] %vm850, 0.0
        %4933 = vst.msk [vmem:[#allocation2 + $0xb8] sm:$0x3] %vm853, 0.0
        %4934 = vst.msk [vmem:[#allocation2 + $0xc0] sm:$0xff] %vm850, 0.0
        %4935 = vst.msk [vmem:[#allocation2 + $0xc8] sm:$0xff] %vm850, 0.0
        %4936 = vst.msk [vmem:[#allocation2 + $0xd0] sm:$0x3] %vm853, 0.0
        %4937 = vst.msk [vmem:[#allocation2 + $0xd8] sm:$0xff] %vm850, 0.0
        %4938 = vst.msk [vmem:[#allocation2 + $0xe0] sm:$0xff] %vm850, 0.0
        %4939 = vst.msk [vmem:[#allocation2 + $0xe8] sm:$0x3] %vm853, 0.0
        %4940 = vst.msk [vmem:[#allocation2 + $0xf0] sm:$0xff] %vm850, 0.0
        %4941 = vst.msk [vmem:[#allocation2 + $0xf8] sm:$0xff] %vm850, 0.0
        %4942 = vst.msk [vmem:[#allocation2 + $0x100] sm:$0x3] %vm853, 0.0
        %4943 = vst.msk [vmem:[#allocation2 + $0x108] sm:$0xff] %vm850, 0.0
        %4944 = vst.msk [vmem:[#allocation2 + $0x110] sm:$0xff] %vm850, 0.0
        %4945 = vst.msk [vmem:[#allocation2 + $0x118] sm:$0x3] %vm853, 0.0
        %4946 = vst.msk [vmem:[#allocation2 + $0x120] sm:$0xff] %vm850, 0.0
        %4947 = vst.msk [vmem:[#allocation2 + $0x128] sm:$0xff] %vm850, 0.0
        %4948 = vst.msk [vmem:[#allocation2 + $0x130] sm:$0x3] %vm853, 0.0
        %4949 = vst.msk [vmem:[#allocation2 + $0x138] sm:$0xff] %vm850, 0.0
        %4950 = vst.msk [vmem:[#allocation2 + $0x140] sm:$0xff] %vm850, 0.0
        %4951 = vst.msk [vmem:[#allocation2 + $0x148] sm:$0x3] %vm853, 0.0
        %4952 = vst.msk [vmem:[#allocation2 + $0x150] sm:$0xff] %vm850, 0.0
        %4953 = vst.msk [vmem:[#allocation2 + $0x158] sm:$0xff] %vm850, 0.0
        %4954 = vst.msk [vmem:[#allocation2 + $0x160] sm:$0x3] %vm853, 0.0
        %4955 = vst.msk [vmem:[#allocation2 + $0x168] sm:$0xff] %vm850, 0.0
        %4956 = vst.msk [vmem:[#allocation2 + $0x170] sm:$0xff] %vm850, 0.0
        %4957 = vst.msk [vmem:[#allocation2 + $0x178] sm:$0x3] %vm853, 0.0
        %4958 = vst.msk [vmem:[#allocation2 + $0x180] sm:$0xff] %vm850, 0.0
        %4959 = vst.msk [vmem:[#allocation2 + $0x188] sm:$0xff] %vm850, 0.0
        %4960 = vst.msk [vmem:[#allocation2 + $0x190] sm:$0x3] %vm853, 0.0
        %4961 = vst.msk [vmem:[#allocation2 + $0x198] sm:$0xff] %vm850, 0.0
        %4962 = vst.msk [vmem:[#allocation2 + $0x1a0] sm:$0xff] %vm850, 0.0
        %4963 = vst.msk [vmem:[#allocation2 + $0x1a8] sm:$0x3] %vm853, 0.0
        %4964 = vst.msk [vmem:[%s906 + $0x1] sm:$0xff] %vm2285, %v4878
        %4965 = vst.msk [vmem:[%s906 + $0x9] sm:$0xff] %vm2285, %v4879
        %4966 = vst.msk [vmem:[%s906 + $0x19] sm:$0xff] %vm2285, %v4880
        %4967 = vst.msk [vmem:[%s906 + $0x21] sm:$0xff] %vm2285, %v4881
        %4968 = vst.msk [vmem:[%s906 + $0x31] sm:$0xff] %vm2285, %v4882
        %4969 = vst.msk [vmem:[%s906 + $0x39] sm:$0xff] %vm2285, %v4883
        %4970 = vst.msk [vmem:[%s906 + $0x49] sm:$0xff] %vm2285, %v4884
        %4971 = vst.msk [vmem:[%s906 + $0x51] sm:$0xff] %vm2285, %v4885
        %4972 = vst.msk [vmem:[%s906 + $0x61] sm:$0xff] %vm2285, %v4886
        %4973 = vst.msk [vmem:[%s906 + $0x69] sm:$0xff] %vm2285, %v4887
        %4974 = vst.msk [vmem:[%s906 + $0x79] sm:$0xff] %vm2285, %v4888
        %4975 = vst.msk [vmem:[%s906 + $0x81] sm:$0xff] %vm2285, %v4889
        %4976 = vst.msk [vmem:[%s906 + $0x91] sm:$0xff] %vm2285, %v4890
        %4977 = vst.msk [vmem:[%s906 + $0x99] sm:$0xff] %vm2285, %v4891
        %4978 = vst.msk [vmem:[%s906 + $0xa9] sm:$0xff] %vm2285, %v4892
        %4979 = vst.msk [vmem:[%s906 + $0xb1] sm:$0xff] %vm2285, %v4893
        %4980 = vst.msk [vmem:[%s906 + $0xc1] sm:$0xff] %vm2285, %v4894
        %4981 = vst.msk [vmem:[%s906 + $0xc9] sm:$0xff] %vm2285, %v4895
        %4982 = vst.msk [vmem:[%s906 + $0xd9] sm:$0xff] %vm2285, %v4896
        %4983 = vst.msk [vmem:[%s906 + $0xe1] sm:$0xff] %vm2285, %v4897
        %4984 = vst.msk [vmem:[%s906 + $0xf1] sm:$0xff] %vm2285, %v4898
        %4985 = vst.msk [vmem:[%s906 + $0xf9] sm:$0xff] %vm2285, %v4899
        %4986 = vst.msk [vmem:[%s906 + $0x109] sm:$0xff] %vm2285, %v4900
        %4987 = vst.msk [vmem:[%s906 + $0x111] sm:$0xff] %vm2285, %v4901
        %4988 = vst.msk [vmem:[%s906 + $0x121] sm:$0xff] %vm2285, %v4902
        %4989 = vst.msk [vmem:[%s906 + $0x129] sm:$0xff] %vm2285, %v4903
        %4990 = vst.msk [vmem:[%s906 + $0x139] sm:$0xff] %vm2285, %v4904
        %4991 = vst.msk [vmem:[%s906 + $0x141] sm:$0xff] %vm2285, %v4905
        %4992 = vst.msk [vmem:[%s906 + $0x151] sm:$0xff] %vm2285, %v4906
        %4993 = vst.msk [vmem:[%s906 + $0x159] sm:$0xff] %vm2285, %v4907
        %4994 = vst.msk [vmem:[%s906 + $0x169] sm:$0xff] %vm2285, %v4908
        %4995 = vst.msk [vmem:[%s906 + $0x171] sm:$0xff] %vm2285, %v4909
        %v4996 = vld [vmem:[#allocation2] sm:$0xff]
        %v4997 = vld [vmem:[#allocation2 + $0x8] sm:$0xff]
        %v4998 = vld [vmem:[#allocation2 + $0x18] sm:$0xff]
        %v4999 = vld [vmem:[#allocation2 + $0x20] sm:$0xff]
        %v5000 = vld [vmem:[#allocation2 + $0x30] sm:$0xff]
        %v5001 = vld [vmem:[#allocation2 + $0x38] sm:$0xff]
        %v5002 = vld [vmem:[#allocation2 + $0x48] sm:$0xff]
        %v5003 = vld [vmem:[#allocation2 + $0x50] sm:$0xff]
        %v5004 = vld [vmem:[#allocation2 + $0x60] sm:$0xff]
        %v5005 = vld [vmem:[#allocation2 + $0x68] sm:$0xff]
        %v5006 = vld [vmem:[#allocation2 + $0x78] sm:$0xff]
        %v5007 = vld [vmem:[#allocation2 + $0x80] sm:$0xff]
        %v5008 = vld [vmem:[#allocation2 + $0x90] sm:$0xff]
        %v5009 = vld [vmem:[#allocation2 + $0x98] sm:$0xff]
        %v5010 = vld [vmem:[#allocation2 + $0xa8] sm:$0xff]
        %v5011 = vld [vmem:[#allocation2 + $0xb0] sm:$0xff]
        %v5012 = vld [vmem:[#allocation2 + $0xc0] sm:$0xff]
        %v5013 = vld [vmem:[#allocation2 + $0xc8] sm:$0xff]
        %v5014 = vld [vmem:[#allocation2 + $0xd8] sm:$0xff]
        %v5015 = vld [vmem:[#allocation2 + $0xe0] sm:$0xff]
        %v5016 = vld [vmem:[#allocation2 + $0xf0] sm:$0xff]
        %v5017 = vld [vmem:[#allocation2 + $0xf8] sm:$0xff]
        %v5018 = vld [vmem:[#allocation2 + $0x108] sm:$0xff]
        %v5019 = vld [vmem:[#allocation2 + $0x110] sm:$0xff]
        %v5020 = vld [vmem:[#allocation2 + $0x120] sm:$0xff]
        %v5021 = vld [vmem:[#allocation2 + $0x128] sm:$0xff]
        %v5022 = vld [vmem:[#allocation2 + $0x138] sm:$0xff]
        %v5023 = vld [vmem:[#allocation2 + $0x140] sm:$0xff]
        %v5024 = vld [vmem:[#allocation2 + $0x150] sm:$0xff]
        %v5025 = vld [vmem:[#allocation2 + $0x158] sm:$0xff]
        %v5026 = vld [vmem:[#allocation2 + $0x168] sm:$0xff]
        %v5027 = vld [vmem:[#allocation2 + $0x170] sm:$0xff]
        %v5028 = vld [vmem:[#allocation2 + $0x1] sm:$0xff]
        %v5029 = vld [vmem:[#allocation2 + $0x9] sm:$0xff]
        %v5030 = vld [vmem:[#allocation2 + $0x19] sm:$0xff]
        %v5031 = vld [vmem:[#allocation2 + $0x21] sm:$0xff]
        %v5032 = vld [vmem:[#allocation2 + $0x31] sm:$0xff]
        %v5033 = vld [vmem:[#allocation2 + $0x39] sm:$0xff]
        %v5034 = vld [vmem:[#allocation2 + $0x49] sm:$0xff]
        %v5035 = vld [vmem:[#allocation2 + $0x51] sm:$0xff]
        %v5036 = vld [vmem:[#allocation2 + $0x61] sm:$0xff]
        %v5037 = vld [vmem:[#allocation2 + $0x69] sm:$0xff]
        %v5038 = vld [vmem:[#allocation2 + $0x79] sm:$0xff]
        %v5039 = vld [vmem:[#allocation2 + $0x81] sm:$0xff]
        %v5040 = vld [vmem:[#allocation2 + $0x91] sm:$0xff]
        %v5041 = vld [vmem:[#allocation2 + $0x99] sm:$0xff]
        %v5042 = vld [vmem:[#allocation2 + $0xa9] sm:$0xff]
        %v5043 = vld [vmem:[#allocation2 + $0xb1] sm:$0xff]
        %v5044 = vld [vmem:[#allocation2 + $0xc1] sm:$0xff]
        %v5045 = vld [vmem:[#allocation2 + $0xc9] sm:$0xff]
        %v5046 = vld [vmem:[#allocation2 + $0xd9] sm:$0xff]
        %v5047 = vld [vmem:[#allocation2 + $0xe1] sm:$0xff]
        %v5048 = vld [vmem:[#allocation2 + $0xf1] sm:$0xff]
        %v5049 = vld [vmem:[#allocation2 + $0xf9] sm:$0xff]
        %v5050 = vld [vmem:[#allocation2 + $0x109] sm:$0xff]
        %v5051 = vld [vmem:[#allocation2 + $0x111] sm:$0xff]
        %v5052 = vld [vmem:[#allocation2 + $0x121] sm:$0xff]
        %v5053 = vld [vmem:[#allocation2 + $0x129] sm:$0xff]
        %v5054 = vld [vmem:[#allocation2 + $0x139] sm:$0xff]
        %v5055 = vld [vmem:[#allocation2 + $0x141] sm:$0xff]
        %v5056 = vld [vmem:[#allocation2 + $0x151] sm:$0xff]
        %v5057 = vld [vmem:[#allocation2 + $0x159] sm:$0xff]
        %v5058 = vld [vmem:[#allocation2 + $0x169] sm:$0xff]
        %v5059 = vld [vmem:[#allocation2 + $0x171] sm:$0xff]
        %v5060 = vld [vmem:[#allocation2 + $0x2] sm:$0xff]
        %v5061 = vld [vmem:[#allocation2 + $0xa] sm:$0xff]
        %v5062 = vld [vmem:[#allocation2 + $0x1a] sm:$0xff]
        %v5063 = vld [vmem:[#allocation2 + $0x22] sm:$0xff]
        %v5064 = vld [vmem:[#allocation2 + $0x32] sm:$0xff]
        %v5065 = vld [vmem:[#allocation2 + $0x3a] sm:$0xff]
        %v5066 = vld [vmem:[#allocation2 + $0x4a] sm:$0xff]
        %v5067 = vld [vmem:[#allocation2 + $0x52] sm:$0xff]
        %v5068 = vld [vmem:[#allocation2 + $0x62] sm:$0xff]
        %v5069 = vld [vmem:[#allocation2 + $0x6a] sm:$0xff]
        %v5070 = vld [vmem:[#allocation2 + $0x7a] sm:$0xff]
        %v5071 = vld [vmem:[#allocation2 + $0x82] sm:$0xff]
        %v5072 = vld [vmem:[#allocation2 + $0x92] sm:$0xff]
        %v5073 = vld [vmem:[#allocation2 + $0x9a] sm:$0xff]
        %v5074 = vld [vmem:[#allocation2 + $0xaa] sm:$0xff]
        %v5075 = vld [vmem:[#allocation2 + $0xb2] sm:$0xff]
        %v5076 = vld [vmem:[#allocation2 + $0xc2] sm:$0xff]
        %v5077 = vld [vmem:[#allocation2 + $0xca] sm:$0xff]
        %v5078 = vld [vmem:[#allocation2 + $0xda] sm:$0xff]
        %v5079 = vld [vmem:[#allocation2 + $0xe2] sm:$0xff]
        %v5080 = vld [vmem:[#allocation2 + $0xf2] sm:$0xff]
        %v5081 = vld [vmem:[#allocation2 + $0xfa] sm:$0xff]
        %v5082 = vld [vmem:[#allocation2 + $0x10a] sm:$0xff]
        %v5083 = vld [vmem:[#allocation2 + $0x112] sm:$0xff]
        %v5084 = vld [vmem:[#allocation2 + $0x122] sm:$0xff]
        %v5085 = vld [vmem:[#allocation2 + $0x12a] sm:$0xff]
        %v5086 = vld [vmem:[#allocation2 + $0x13a] sm:$0xff]
        %v5087 = vld [vmem:[#allocation2 + $0x142] sm:$0xff]
        %v5088 = vld [vmem:[#allocation2 + $0x152] sm:$0xff]
        %v5089 = vld [vmem:[#allocation2 + $0x15a] sm:$0xff]
        %v5090 = vld [vmem:[#allocation2 + $0x16a] sm:$0xff]
        %v5091 = vld [vmem:[#allocation2 + $0x172] sm:$0xff]
        %v5092 = vld [vmem:[%s906] sm:$0xff]
        %v5093 = vld [vmem:[%s906 + $0x8] sm:$0xff]
        %v5094 = vld [vmem:[%s906 + $0x18] sm:$0xff]
        %v5095 = vld [vmem:[%s906 + $0x20] sm:$0xff]
        %v5096 = vld [vmem:[%s906 + $0x30] sm:$0xff]
        %v5097 = vld [vmem:[%s906 + $0x38] sm:$0xff]
        %v5098 = vld [vmem:[%s906 + $0x48] sm:$0xff]
        %v5099 = vld [vmem:[%s906 + $0x50] sm:$0xff]
        %v5100 = vld [vmem:[%s906 + $0x60] sm:$0xff]
        %v5101 = vld [vmem:[%s906 + $0x68] sm:$0xff]
        %v5102 = vld [vmem:[%s906 + $0x78] sm:$0xff]
        %v5103 = vld [vmem:[%s906 + $0x80] sm:$0xff]
        %v5104 = vld [vmem:[%s906 + $0x90] sm:$0xff]
        %v5105 = vld [vmem:[%s906 + $0x98] sm:$0xff]
        %v5106 = vld [vmem:[%s906 + $0xa8] sm:$0xff]
        %v5107 = vld [vmem:[%s906 + $0xb0] sm:$0xff]
        %v5108 = vld [vmem:[%s906 + $0xc0] sm:$0xff]
        %v5109 = vld [vmem:[%s906 + $0xc8] sm:$0xff]
        %v5110 = vld [vmem:[%s906 + $0xd8] sm:$0xff]
        %v5111 = vld [vmem:[%s906 + $0xe0] sm:$0xff]
        %v5112 = vld [vmem:[%s906 + $0xf0] sm:$0xff]
        %v5113 = vld [vmem:[%s906 + $0xf8] sm:$0xff]
        %v5114 = vld [vmem:[%s906 + $0x108] sm:$0xff]
        %v5115 = vld [vmem:[%s906 + $0x110] sm:$0xff]
        %v5116 = vld [vmem:[%s906 + $0x120] sm:$0xff]
        %v5117 = vld [vmem:[%s906 + $0x128] sm:$0xff]
        %v5118 = vld [vmem:[%s906 + $0x138] sm:$0xff]
        %v5119 = vld [vmem:[%s906 + $0x140] sm:$0xff]
        %v5120 = vld [vmem:[%s906 + $0x150] sm:$0xff]
        %v5121 = vld [vmem:[%s906 + $0x158] sm:$0xff]
        %v5122 = vld [vmem:[%s906 + $0x168] sm:$0xff]
        %v5123 = vld [vmem:[%s906 + $0x170] sm:$0xff]
        %v5124 = vld [vmem:[%s906 + $0x1] sm:$0xff]
        %v5125 = vld [vmem:[%s906 + $0x9] sm:$0xff]
        %v5126 = vld [vmem:[%s906 + $0x19] sm:$0xff]
        %v5127 = vld [vmem:[%s906 + $0x21] sm:$0xff]
        %v5128 = vld [vmem:[%s906 + $0x31] sm:$0xff]
        %v5129 = vld [vmem:[%s906 + $0x39] sm:$0xff]
        %v5130 = vld [vmem:[%s906 + $0x49] sm:$0xff]
        %v5131 = vld [vmem:[%s906 + $0x51] sm:$0xff]
        %v5132 = vld [vmem:[%s906 + $0x61] sm:$0xff]
        %v5133 = vld [vmem:[%s906 + $0x69] sm:$0xff]
        %v5134 = vld [vmem:[%s906 + $0x79] sm:$0xff]
        %v5135 = vld [vmem:[%s906 + $0x81] sm:$0xff]
        %v5136 = vld [vmem:[%s906 + $0x91] sm:$0xff]
        %v5137 = vld [vmem:[%s906 + $0x99] sm:$0xff]
        %v5138 = vld [vmem:[%s906 + $0xa9] sm:$0xff]
        %v5139 = vld [vmem:[%s906 + $0xb1] sm:$0xff]
        %v5140 = vld [vmem:[%s906 + $0xc1] sm:$0xff]
        %v5141 = vld [vmem:[%s906 + $0xc9] sm:$0xff]
        %v5142 = vld [vmem:[%s906 + $0xd9] sm:$0xff]
        %v5143 = vld [vmem:[%s906 + $0xe1] sm:$0xff]
        %v5144 = vld [vmem:[%s906 + $0xf1] sm:$0xff]
        %v5145 = vld [vmem:[%s906 + $0xf9] sm:$0xff]
        %v5146 = vld [vmem:[%s906 + $0x109] sm:$0xff]
        %v5147 = vld [vmem:[%s906 + $0x111] sm:$0xff]
        %v5148 = vld [vmem:[%s906 + $0x121] sm:$0xff]
        %v5149 = vld [vmem:[%s906 + $0x129] sm:$0xff]
        %v5150 = vld [vmem:[%s906 + $0x139] sm:$0xff]
        %v5151 = vld [vmem:[%s906 + $0x141] sm:$0xff]
        %v5152 = vld [vmem:[%s906 + $0x151] sm:$0xff]
        %v5153 = vld [vmem:[%s906 + $0x159] sm:$0xff]
        %v5154 = vld [vmem:[%s906 + $0x169] sm:$0xff]
        %v5155 = vld [vmem:[%s906 + $0x171] sm:$0xff]
        %v5156 = vld [vmem:[%s906 + $0x2] sm:$0xff]
        %v5157 = vld [vmem:[%s906 + $0xa] sm:$0xff]
        %v5158 = vld [vmem:[%s906 + $0x1a] sm:$0xff]
        %v5159 = vld [vmem:[%s906 + $0x22] sm:$0xff]
        %v5160 = vld [vmem:[%s906 + $0x32] sm:$0xff]
        %v5161 = vld [vmem:[%s906 + $0x3a] sm:$0xff]
        %v5162 = vld [vmem:[%s906 + $0x4a] sm:$0xff]
        %v5163 = vld [vmem:[%s906 + $0x52] sm:$0xff]
        %v5164 = vld [vmem:[%s906 + $0x62] sm:$0xff]
        %v5165 = vld [vmem:[%s906 + $0x6a] sm:$0xff]
        %v5166 = vld [vmem:[%s906 + $0x7a] sm:$0xff]
        %v5167 = vld [vmem:[%s906 + $0x82] sm:$0xff]
        %v5168 = vld [vmem:[%s906 + $0x92] sm:$0xff]
        %v5169 = vld [vmem:[%s906 + $0x9a] sm:$0xff]
        %v5170 = vld [vmem:[%s906 + $0xaa] sm:$0xff]
        %v5171 = vld [vmem:[%s906 + $0xb2] sm:$0xff]
        %v5172 = vld [vmem:[%s906 + $0xc2] sm:$0xff]
        %v5173 = vld [vmem:[%s906 + $0xca] sm:$0xff]
        %v5174 = vld [vmem:[%s906 + $0xda] sm:$0xff]
        %v5175 = vld [vmem:[%s906 + $0xe2] sm:$0xff]
        %v5176 = vld [vmem:[%s906 + $0xf2] sm:$0xff]
        %v5177 = vld [vmem:[%s906 + $0xfa] sm:$0xff]
        %v5178 = vld [vmem:[%s906 + $0x10a] sm:$0xff]
        %v5179 = vld [vmem:[%s906 + $0x112] sm:$0xff]
        %v5180 = vld [vmem:[%s906 + $0x122] sm:$0xff]
        %v5181 = vld [vmem:[%s906 + $0x12a] sm:$0xff]
        %v5182 = vld [vmem:[%s906 + $0x13a] sm:$0xff]
        %v5183 = vld [vmem:[%s906 + $0x142] sm:$0xff]
        %v5184 = vld [vmem:[%s906 + $0x152] sm:$0xff]
        %v5185 = vld [vmem:[%s906 + $0x15a] sm:$0xff]
        %v5186 = vld [vmem:[%s906 + $0x16a] sm:$0xff]
        %v5187 = vld [vmem:[%s906 + $0x172] sm:$0xff]
        %v5188 = vld [vmem:[%s1132] sm:$0xff]
        %v5189 = vld [vmem:[%s1132 + $0x8] sm:$0xff]
        %v5190 = vld [vmem:[%s1132 + $0x18] sm:$0xff]
        %v5191 = vld [vmem:[%s1132 + $0x20] sm:$0xff]
        %v5192 = vld [vmem:[%s1132 + $0x30] sm:$0xff]
        %v5193 = vld [vmem:[%s1132 + $0x38] sm:$0xff]
        %v5194 = vld [vmem:[%s1132 + $0x48] sm:$0xff]
        %v5195 = vld [vmem:[%s1132 + $0x50] sm:$0xff]
        %v5196 = vld [vmem:[%s1132 + $0x60] sm:$0xff]
        %v5197 = vld [vmem:[%s1132 + $0x68] sm:$0xff]
        %v5198 = vld [vmem:[%s1132 + $0x78] sm:$0xff]
        %v5199 = vld [vmem:[%s1132 + $0x80] sm:$0xff]
        %v5200 = vld [vmem:[%s1132 + $0x90] sm:$0xff]
        %v5201 = vld [vmem:[%s1132 + $0x98] sm:$0xff]
        %v5202 = vld [vmem:[%s1132 + $0xa8] sm:$0xff]
        %v5203 = vld [vmem:[%s1132 + $0xb0] sm:$0xff]
        %v5204 = vld [vmem:[%s1132 + $0xc0] sm:$0xff]
        %v5205 = vld [vmem:[%s1132 + $0xc8] sm:$0xff]
        %v5206 = vld [vmem:[%s1132 + $0xd8] sm:$0xff]
        %v5207 = vld [vmem:[%s1132 + $0xe0] sm:$0xff]
        %v5208 = vld [vmem:[%s1132 + $0xf0] sm:$0xff]
        %v5209 = vld [vmem:[%s1132 + $0xf8] sm:$0xff]
        %v5210 = vld [vmem:[%s1132 + $0x108] sm:$0xff]
        %v5211 = vld [vmem:[%s1132 + $0x110] sm:$0xff]
        %v5212 = vld [vmem:[%s1132 + $0x120] sm:$0xff]
        %v5213 = vld [vmem:[%s1132 + $0x128] sm:$0xff]
        %v5214 = vld [vmem:[%s1132 + $0x138] sm:$0xff]
        %v5215 = vld [vmem:[%s1132 + $0x140] sm:$0xff]
        %v5216 = vld [vmem:[%s1132 + $0x150] sm:$0xff]
        %v5217 = vld [vmem:[%s1132 + $0x158] sm:$0xff]
        %v5218 = vld [vmem:[%s1132 + $0x168] sm:$0xff]
        %v5219 = vld [vmem:[%s1132 + $0x170] sm:$0xff]
        %v5220 = vld [vmem:[%s1132 + $0x1] sm:$0xff]
        %v5221 = vld [vmem:[%s1132 + $0x9] sm:$0xff]
        %v5222 = vld [vmem:[%s1132 + $0x19] sm:$0xff]
        %v5223 = vld [vmem:[%s1132 + $0x21] sm:$0xff]
        %v5224 = vld [vmem:[%s1132 + $0x31] sm:$0xff]
        %v5225 = vld [vmem:[%s1132 + $0x39] sm:$0xff]
        %v5226 = vld [vmem:[%s1132 + $0x49] sm:$0xff]
        %v5227 = vld [vmem:[%s1132 + $0x51] sm:$0xff]
        %v5228 = vld [vmem:[%s1132 + $0x61] sm:$0xff]
        %v5229 = vld [vmem:[%s1132 + $0x69] sm:$0xff]
        %v5230 = vld [vmem:[%s1132 + $0x79] sm:$0xff]
        %v5231 = vld [vmem:[%s1132 + $0x81] sm:$0xff]
        %v5232 = vld [vmem:[%s1132 + $0x91] sm:$0xff]
        %v5233 = vld [vmem:[%s1132 + $0x99] sm:$0xff]
        %v5234 = vld [vmem:[%s1132 + $0xa9] sm:$0xff]
        %v5235 = vld [vmem:[%s1132 + $0xb1] sm:$0xff]
        %v5236 = vld [vmem:[%s1132 + $0xc1] sm:$0xff]
        %v5237 = vld [vmem:[%s1132 + $0xc9] sm:$0xff]
        %v5238 = vld [vmem:[%s1132 + $0xd9] sm:$0xff]
        %v5239 = vld [vmem:[%s1132 + $0xe1] sm:$0xff]
        %v5240 = vld [vmem:[%s1132 + $0xf1] sm:$0xff]
        %v5241 = vld [vmem:[%s1132 + $0xf9] sm:$0xff]
        %v5242 = vld [vmem:[%s1132 + $0x109] sm:$0xff]
        %v5243 = vld [vmem:[%s1132 + $0x111] sm:$0xff]
        %v5244 = vld [vmem:[%s1132 + $0x121] sm:$0xff]
        %v5245 = vld [vmem:[%s1132 + $0x129] sm:$0xff]
        %v5246 = vld [vmem:[%s1132 + $0x139] sm:$0xff]
        %v5247 = vld [vmem:[%s1132 + $0x141] sm:$0xff]
        %v5248 = vld [vmem:[%s1132 + $0x151] sm:$0xff]
        %v5249 = vld [vmem:[%s1132 + $0x159] sm:$0xff]
        %v5250 = vld [vmem:[%s1132 + $0x169] sm:$0xff]
        %v5251 = vld [vmem:[%s1132 + $0x171] sm:$0xff]
        %v5252 = vld [vmem:[%s1132 + $0x2] sm:$0xff]
        %v5253 = vld [vmem:[%s1132 + $0xa] sm:$0xff]
        %v5254 = vld [vmem:[%s1132 + $0x1a] sm:$0xff]
        %v5255 = vld [vmem:[%s1132 + $0x22] sm:$0xff]
        %v5256 = vld [vmem:[%s1132 + $0x32] sm:$0xff]
        %v5257 = vld [vmem:[%s1132 + $0x3a] sm:$0xff]
        %v5258 = vld [vmem:[%s1132 + $0x4a] sm:$0xff]
        %v5259 = vld [vmem:[%s1132 + $0x52] sm:$0xff]
        %v5260 = vld [vmem:[%s1132 + $0x62] sm:$0xff]
        %v5261 = vld [vmem:[%s1132 + $0x6a] sm:$0xff]
        %v5262 = vld [vmem:[%s1132 + $0x7a] sm:$0xff]
        %v5263 = vld [vmem:[%s1132 + $0x82] sm:$0xff]
        %v5264 = vld [vmem:[%s1132 + $0x92] sm:$0xff]
        %v5265 = vld [vmem:[%s1132 + $0x9a] sm:$0xff]
        %v5266 = vld [vmem:[%s1132 + $0xaa] sm:$0xff]
        %v5267 = vld [vmem:[%s1132 + $0xb2] sm:$0xff]
        %v5268 = vld [vmem:[%s1132 + $0xc2] sm:$0xff]
        %v5269 = vld [vmem:[%s1132 + $0xca] sm:$0xff]
        %v5270 = vld [vmem:[%s1132 + $0xda] sm:$0xff]
        %v5271 = vld [vmem:[%s1132 + $0xe2] sm:$0xff]
        %v5272 = vld [vmem:[%s1132 + $0xf2] sm:$0xff]
        %v5273 = vld [vmem:[%s1132 + $0xfa] sm:$0xff]
        %v5274 = vld [vmem:[%s1132 + $0x10a] sm:$0xff]
        %v5275 = vld [vmem:[%s1132 + $0x112] sm:$0xff]
        %v5276 = vld [vmem:[%s1132 + $0x122] sm:$0xff]
        %v5277 = vld [vmem:[%s1132 + $0x12a] sm:$0xff]
        %v5278 = vld [vmem:[%s1132 + $0x13a] sm:$0xff]
        %v5279 = vld [vmem:[%s1132 + $0x142] sm:$0xff]
        %v5280 = vld [vmem:[%s1132 + $0x152] sm:$0xff]
        %v5281 = vld [vmem:[%s1132 + $0x15a] sm:$0xff]
        %v5282 = vld [vmem:[%s1132 + $0x16a] sm:$0xff]
        %v5283 = vld [vmem:[%s1132 + $0x172] sm:$0xff]
        %5316 = vrot.lane.b32.xlu0 %v5028, 8
        %v5317 = vpop.permute.xlu0 %5316
        %5318 = vrot.lane.b32.xlu0 %v5029, 8
        %v5319 = vpop.permute.xlu0 %5318
        %5320 = vrot.lane.b32.xlu0 %v5030, 8
        %v5321 = vpop.permute.xlu0 %5320
        %5322 = vrot.lane.b32.xlu0 %v5031, 8
        %v5323 = vpop.permute.xlu0 %5322
        %5324 = vrot.lane.b32.xlu0 %v5032, 8
        %v5325 = vpop.permute.xlu0 %5324
        %5326 = vrot.lane.b32.xlu0 %v5033, 8
        %v5327 = vpop.permute.xlu0 %5326
        %5328 = vrot.lane.b32.xlu0 %v5034, 8
        %v5329 = vpop.permute.xlu0 %5328
        %5330 = vrot.lane.b32.xlu0 %v5035, 8
        %v5331 = vpop.permute.xlu0 %5330
        %5332 = vrot.lane.b32.xlu0 %v5036, 8
        %v5333 = vpop.permute.xlu0 %5332
        %5334 = vrot.lane.b32.xlu0 %v5037, 8
        %v5335 = vpop.permute.xlu0 %5334
        %5336 = vrot.lane.b32.xlu0 %v5038, 8
        %v5337 = vpop.permute.xlu0 %5336
        %5338 = vrot.lane.b32.xlu0 %v5039, 8
        %v5339 = vpop.permute.xlu0 %5338
        %5340 = vrot.lane.b32.xlu0 %v5040, 8
        %v5341 = vpop.permute.xlu0 %5340
        %5342 = vrot.lane.b32.xlu0 %v5041, 8
        %v5343 = vpop.permute.xlu0 %5342
        %5344 = vrot.lane.b32.xlu0 %v5042, 8
        %v5345 = vpop.permute.xlu0 %5344
        %5346 = vrot.lane.b32.xlu0 %v5043, 8
        %v5347 = vpop.permute.xlu0 %5346
        %5348 = vrot.lane.b32.xlu0 %v5044, 8
        %v5349 = vpop.permute.xlu0 %5348
        %5350 = vrot.lane.b32.xlu0 %v5045, 8
        %v5351 = vpop.permute.xlu0 %5350
        %5352 = vrot.lane.b32.xlu0 %v5046, 8
        %v5353 = vpop.permute.xlu0 %5352
        %5354 = vrot.lane.b32.xlu0 %v5047, 8
        %v5355 = vpop.permute.xlu0 %5354
        %5356 = vrot.lane.b32.xlu0 %v5048, 8
        %v5357 = vpop.permute.xlu0 %5356
        %5358 = vrot.lane.b32.xlu0 %v5049, 8
        %v5359 = vpop.permute.xlu0 %5358
        %5360 = vrot.lane.b32.xlu0 %v5050, 8
        %v5361 = vpop.permute.xlu0 %5360
        %5362 = vrot.lane.b32.xlu0 %v5051, 8
        %v5363 = vpop.permute.xlu0 %5362
        %5364 = vrot.lane.b32.xlu0 %v5052, 8
        %v5365 = vpop.permute.xlu0 %5364
        %5366 = vrot.lane.b32.xlu0 %v5053, 8
        %v5367 = vpop.permute.xlu0 %5366
        %5368 = vrot.lane.b32.xlu0 %v5054, 8
        %v5369 = vpop.permute.xlu0 %5368
        %5370 = vrot.lane.b32.xlu0 %v5055, 8
        %v5371 = vpop.permute.xlu0 %5370
        %5372 = vrot.lane.b32.xlu0 %v5056, 8
        %v5373 = vpop.permute.xlu0 %5372
        %5374 = vrot.lane.b32.xlu0 %v5057, 8
        %v5375 = vpop.permute.xlu0 %5374
        %5376 = vrot.lane.b32.xlu0 %v5058, 8
        %v5377 = vpop.permute.xlu0 %5376
        %5378 = vrot.lane.b32.xlu0 %v5059, 8
        %v5379 = vpop.permute.xlu0 %5378
        %5444 = vrot.lane.b32.xlu0 %v5060, 16
        %v5445 = vpop.permute.xlu0 %5444
        %5446 = vrot.lane.b32.xlu0 %v5061, 16
        %v5447 = vpop.permute.xlu0 %5446
        %5448 = vrot.lane.b32.xlu0 %v5062, 16
        %v5449 = vpop.permute.xlu0 %5448
        %5450 = vrot.lane.b32.xlu0 %v5063, 16
        %v5451 = vpop.permute.xlu0 %5450
        %5452 = vrot.lane.b32.xlu0 %v5064, 16
        %v5453 = vpop.permute.xlu0 %5452
        %5454 = vrot.lane.b32.xlu0 %v5065, 16
        %v5455 = vpop.permute.xlu0 %5454
        %5456 = vrot.lane.b32.xlu0 %v5066, 16
        %v5457 = vpop.permute.xlu0 %5456
        %5458 = vrot.lane.b32.xlu0 %v5067, 16
        %v5459 = vpop.permute.xlu0 %5458
        %5460 = vrot.lane.b32.xlu0 %v5068, 16
        %v5461 = vpop.permute.xlu0 %5460
        %5462 = vrot.lane.b32.xlu0 %v5069, 16
        %v5463 = vpop.permute.xlu0 %5462
        %5464 = vrot.lane.b32.xlu0 %v5070, 16
        %v5465 = vpop.permute.xlu0 %5464
        %5466 = vrot.lane.b32.xlu0 %v5071, 16
        %v5467 = vpop.permute.xlu0 %5466
        %5468 = vrot.lane.b32.xlu0 %v5072, 16
        %v5469 = vpop.permute.xlu0 %5468
        %5470 = vrot.lane.b32.xlu0 %v5073, 16
        %v5471 = vpop.permute.xlu0 %5470
        %5472 = vrot.lane.b32.xlu0 %v5074, 16
        %v5473 = vpop.permute.xlu0 %5472
        %5474 = vrot.lane.b32.xlu0 %v5075, 16
        %v5475 = vpop.permute.xlu0 %5474
        %5476 = vrot.lane.b32.xlu0 %v5076, 16
        %v5477 = vpop.permute.xlu0 %5476
        %5478 = vrot.lane.b32.xlu0 %v5077, 16
        %v5479 = vpop.permute.xlu0 %5478
        %5480 = vrot.lane.b32.xlu0 %v5078, 16
        %v5481 = vpop.permute.xlu0 %5480
        %5482 = vrot.lane.b32.xlu0 %v5079, 16
        %v5483 = vpop.permute.xlu0 %5482
        %5484 = vrot.lane.b32.xlu0 %v5080, 16
        %v5485 = vpop.permute.xlu0 %5484
        %5486 = vrot.lane.b32.xlu0 %v5081, 16
        %v5487 = vpop.permute.xlu0 %5486
        %5488 = vrot.lane.b32.xlu0 %v5082, 16
        %v5489 = vpop.permute.xlu0 %5488
        %5490 = vrot.lane.b32.xlu0 %v5083, 16
        %v5491 = vpop.permute.xlu0 %5490
        %5492 = vrot.lane.b32.xlu0 %v5084, 16
        %v5493 = vpop.permute.xlu0 %5492
        %5494 = vrot.lane.b32.xlu0 %v5085, 16
        %v5495 = vpop.permute.xlu0 %5494
        %5496 = vrot.lane.b32.xlu0 %v5086, 16
        %v5497 = vpop.permute.xlu0 %5496
        %5498 = vrot.lane.b32.xlu0 %v5087, 16
        %v5499 = vpop.permute.xlu0 %5498
        %5500 = vrot.lane.b32.xlu0 %v5088, 16
        %v5501 = vpop.permute.xlu0 %5500
        %5502 = vrot.lane.b32.xlu0 %v5089, 16
        %v5503 = vpop.permute.xlu0 %5502
        %5504 = vrot.lane.b32.xlu0 %v5090, 16
        %v5505 = vpop.permute.xlu0 %5504
        %5506 = vrot.lane.b32.xlu0 %v5091, 16
        %v5507 = vpop.permute.xlu0 %5506
        %5572 = vrot.lane.b32.xlu0 %v5092, 24
        %v5573 = vpop.permute.xlu0 %5572
        %5574 = vrot.lane.b32.xlu0 %v5093, 24
        %v5575 = vpop.permute.xlu0 %5574
        %5576 = vrot.lane.b32.xlu0 %v5094, 24
        %v5577 = vpop.permute.xlu0 %5576
        %5578 = vrot.lane.b32.xlu0 %v5095, 24
        %v5579 = vpop.permute.xlu0 %5578
        %5580 = vrot.lane.b32.xlu0 %v5096, 24
        %v5581 = vpop.permute.xlu0 %5580
        %5582 = vrot.lane.b32.xlu0 %v5097, 24
        %v5583 = vpop.permute.xlu0 %5582
        %5584 = vrot.lane.b32.xlu0 %v5098, 24
        %v5585 = vpop.permute.xlu0 %5584
        %5586 = vrot.lane.b32.xlu0 %v5099, 24
        %v5587 = vpop.permute.xlu0 %5586
        %5588 = vrot.lane.b32.xlu0 %v5100, 24
        %v5589 = vpop.permute.xlu0 %5588
        %5590 = vrot.lane.b32.xlu0 %v5101, 24
        %v5591 = vpop.permute.xlu0 %5590
        %5592 = vrot.lane.b32.xlu0 %v5102, 24
        %v5593 = vpop.permute.xlu0 %5592
        %5594 = vrot.lane.b32.xlu0 %v5103, 24
        %v5595 = vpop.permute.xlu0 %5594
        %5596 = vrot.lane.b32.xlu0 %v5104, 24
        %v5597 = vpop.permute.xlu0 %5596
        %5598 = vrot.lane.b32.xlu0 %v5105, 24
        %v5599 = vpop.permute.xlu0 %5598
        %5600 = vrot.lane.b32.xlu0 %v5106, 24
        %v5601 = vpop.permute.xlu0 %5600
        %5602 = vrot.lane.b32.xlu0 %v5107, 24
        %v5603 = vpop.permute.xlu0 %5602
        %5604 = vrot.lane.b32.xlu0 %v5108, 24
        %v5605 = vpop.permute.xlu0 %5604
        %5606 = vrot.lane.b32.xlu0 %v5109, 24
        %v5607 = vpop.permute.xlu0 %5606
        %5608 = vrot.lane.b32.xlu0 %v5110, 24
        %v5609 = vpop.permute.xlu0 %5608
        %5610 = vrot.lane.b32.xlu0 %v5111, 24
        %v5611 = vpop.permute.xlu0 %5610
        %5612 = vrot.lane.b32.xlu0 %v5112, 24
        %v5613 = vpop.permute.xlu0 %5612
        %5614 = vrot.lane.b32.xlu0 %v5113, 24
        %v5615 = vpop.permute.xlu0 %5614
        %5616 = vrot.lane.b32.xlu0 %v5114, 24
        %v5617 = vpop.permute.xlu0 %5616
        %5618 = vrot.lane.b32.xlu0 %v5115, 24
        %v5619 = vpop.permute.xlu0 %5618
        %5620 = vrot.lane.b32.xlu0 %v5116, 24
        %v5621 = vpop.permute.xlu0 %5620
        %5622 = vrot.lane.b32.xlu0 %v5117, 24
        %v5623 = vpop.permute.xlu0 %5622
        %5624 = vrot.lane.b32.xlu0 %v5118, 24
        %v5625 = vpop.permute.xlu0 %5624
        %5626 = vrot.lane.b32.xlu0 %v5119, 24
        %v5627 = vpop.permute.xlu0 %5626
        %5628 = vrot.lane.b32.xlu0 %v5120, 24
        %v5629 = vpop.permute.xlu0 %5628
        %5630 = vrot.lane.b32.xlu0 %v5121, 24
        %v5631 = vpop.permute.xlu0 %5630
        %5632 = vrot.lane.b32.xlu0 %v5122, 24
        %v5633 = vpop.permute.xlu0 %5632
        %5634 = vrot.lane.b32.xlu0 %v5123, 24
        %v5635 = vpop.permute.xlu0 %5634
        %5700 = vrot.lane.b32.xlu0 %v5124, 32
        %v5701 = vpop.permute.xlu0 %5700
        %5702 = vrot.lane.b32.xlu0 %v5125, 32
        %v5703 = vpop.permute.xlu0 %5702
        %5704 = vrot.lane.b32.xlu0 %v5126, 32
        %v5705 = vpop.permute.xlu0 %5704
        %5706 = vrot.lane.b32.xlu0 %v5127, 32
        %v5707 = vpop.permute.xlu0 %5706
        %5708 = vrot.lane.b32.xlu0 %v5128, 32
        %v5709 = vpop.permute.xlu0 %5708
        %5710 = vrot.lane.b32.xlu0 %v5129, 32
        %v5711 = vpop.permute.xlu0 %5710
        %5712 = vrot.lane.b32.xlu0 %v5130, 32
        %v5713 = vpop.permute.xlu0 %5712
        %5714 = vrot.lane.b32.xlu0 %v5131, 32
        %v5715 = vpop.permute.xlu0 %5714
        %5716 = vrot.lane.b32.xlu0 %v5132, 32
        %v5717 = vpop.permute.xlu0 %5716
        %5718 = vrot.lane.b32.xlu0 %v5133, 32
        %v5719 = vpop.permute.xlu0 %5718
        %5720 = vrot.lane.b32.xlu0 %v5134, 32
        %v5721 = vpop.permute.xlu0 %5720
        %5722 = vrot.lane.b32.xlu0 %v5135, 32
        %v5723 = vpop.permute.xlu0 %5722
        %5724 = vrot.lane.b32.xlu0 %v5136, 32
        %v5725 = vpop.permute.xlu0 %5724
        %5726 = vrot.lane.b32.xlu0 %v5137, 32
        %v5727 = vpop.permute.xlu0 %5726
        %5728 = vrot.lane.b32.xlu0 %v5138, 32
        %v5729 = vpop.permute.xlu0 %5728
        %5730 = vrot.lane.b32.xlu0 %v5139, 32
        %v5731 = vpop.permute.xlu0 %5730
        %5732 = vrot.lane.b32.xlu0 %v5140, 32
        %v5733 = vpop.permute.xlu0 %5732
        %5734 = vrot.lane.b32.xlu0 %v5141, 32
        %v5735 = vpop.permute.xlu0 %5734
        %5736 = vrot.lane.b32.xlu0 %v5142, 32
        %v5737 = vpop.permute.xlu0 %5736
        %5738 = vrot.lane.b32.xlu0 %v5143, 32
        %v5739 = vpop.permute.xlu0 %5738
        %5740 = vrot.lane.b32.xlu0 %v5144, 32
        %v5741 = vpop.permute.xlu0 %5740
        %5742 = vrot.lane.b32.xlu0 %v5145, 32
        %v5743 = vpop.permute.xlu0 %5742
        %5744 = vrot.lane.b32.xlu0 %v5146, 32
        %v5745 = vpop.permute.xlu0 %5744
        %5746 = vrot.lane.b32.xlu0 %v5147, 32
        %v5747 = vpop.permute.xlu0 %5746
        %5748 = vrot.lane.b32.xlu0 %v5148, 32
        %v5749 = vpop.permute.xlu0 %5748
        %5750 = vrot.lane.b32.xlu0 %v5149, 32
        %v5751 = vpop.permute.xlu0 %5750
        %5752 = vrot.lane.b32.xlu0 %v5150, 32
        %v5753 = vpop.permute.xlu0 %5752
        %5754 = vrot.lane.b32.xlu0 %v5151, 32
        %v5755 = vpop.permute.xlu0 %5754
        %5756 = vrot.lane.b32.xlu0 %v5152, 32
        %v5757 = vpop.permute.xlu0 %5756
        %5758 = vrot.lane.b32.xlu0 %v5153, 32
        %v5759 = vpop.permute.xlu0 %5758
        %5760 = vrot.lane.b32.xlu0 %v5154, 32
        %v5761 = vpop.permute.xlu0 %5760
        %5762 = vrot.lane.b32.xlu0 %v5155, 32
        %v5763 = vpop.permute.xlu0 %5762
        %5828 = vrot.lane.b32.xlu0 %v5156, 40
        %v5829 = vpop.permute.xlu0 %5828
        %5830 = vrot.lane.b32.xlu0 %v5157, 40
        %v5831 = vpop.permute.xlu0 %5830
        %5832 = vrot.lane.b32.xlu0 %v5158, 40
        %v5833 = vpop.permute.xlu0 %5832
        %5834 = vrot.lane.b32.xlu0 %v5159, 40
        %v5835 = vpop.permute.xlu0 %5834
        %5836 = vrot.lane.b32.xlu0 %v5160, 40
        %v5837 = vpop.permute.xlu0 %5836
        %5838 = vrot.lane.b32.xlu0 %v5161, 40
        %v5839 = vpop.permute.xlu0 %5838
        %5840 = vrot.lane.b32.xlu0 %v5162, 40
        %v5841 = vpop.permute.xlu0 %5840
        %5842 = vrot.lane.b32.xlu0 %v5163, 40
        %v5843 = vpop.permute.xlu0 %5842
        %5844 = vrot.lane.b32.xlu0 %v5164, 40
        %v5845 = vpop.permute.xlu0 %5844
        %5846 = vrot.lane.b32.xlu0 %v5165, 40
        %v5847 = vpop.permute.xlu0 %5846
        %5848 = vrot.lane.b32.xlu0 %v5166, 40
        %v5849 = vpop.permute.xlu0 %5848
        %5850 = vrot.lane.b32.xlu0 %v5167, 40
        %v5851 = vpop.permute.xlu0 %5850
        %5852 = vrot.lane.b32.xlu0 %v5168, 40
        %v5853 = vpop.permute.xlu0 %5852
        %5854 = vrot.lane.b32.xlu0 %v5169, 40
        %v5855 = vpop.permute.xlu0 %5854
        %5856 = vrot.lane.b32.xlu0 %v5170, 40
        %v5857 = vpop.permute.xlu0 %5856
        %5858 = vrot.lane.b32.xlu0 %v5171, 40
        %v5859 = vpop.permute.xlu0 %5858
        %5860 = vrot.lane.b32.xlu0 %v5172, 40
        %v5861 = vpop.permute.xlu0 %5860
        %5862 = vrot.lane.b32.xlu0 %v5173, 40
        %v5863 = vpop.permute.xlu0 %5862
        %5864 = vrot.lane.b32.xlu0 %v5174, 40
        %v5865 = vpop.permute.xlu0 %5864
        %5866 = vrot.lane.b32.xlu0 %v5175, 40
        %v5867 = vpop.permute.xlu0 %5866
        %5868 = vrot.lane.b32.xlu0 %v5176, 40
        %v5869 = vpop.permute.xlu0 %5868
        %5870 = vrot.lane.b32.xlu0 %v5177, 40
        %v5871 = vpop.permute.xlu0 %5870
        %5872 = vrot.lane.b32.xlu0 %v5178, 40
        %v5873 = vpop.permute.xlu0 %5872
        %5874 = vrot.lane.b32.xlu0 %v5179, 40
        %v5875 = vpop.permute.xlu0 %5874
        %5876 = vrot.lane.b32.xlu0 %v5180, 40
        %v5877 = vpop.permute.xlu0 %5876
        %5878 = vrot.lane.b32.xlu0 %v5181, 40
        %v5879 = vpop.permute.xlu0 %5878
        %5880 = vrot.lane.b32.xlu0 %v5182, 40
        %v5881 = vpop.permute.xlu0 %5880
        %5882 = vrot.lane.b32.xlu0 %v5183, 40
        %v5883 = vpop.permute.xlu0 %5882
        %5884 = vrot.lane.b32.xlu0 %v5184, 40
        %v5885 = vpop.permute.xlu0 %5884
        %5886 = vrot.lane.b32.xlu0 %v5185, 40
        %v5887 = vpop.permute.xlu0 %5886
        %5888 = vrot.lane.b32.xlu0 %v5186, 40
        %v5889 = vpop.permute.xlu0 %5888
        %5890 = vrot.lane.b32.xlu0 %v5187, 40
        %v5891 = vpop.permute.xlu0 %5890
        %5956 = vrot.lane.b32.xlu0 %v5188, 48
        %v5957 = vpop.permute.xlu0 %5956
        %5958 = vrot.lane.b32.xlu0 %v5189, 48
        %v5959 = vpop.permute.xlu0 %5958
        %5960 = vrot.lane.b32.xlu0 %v5190, 48
        %v5961 = vpop.permute.xlu0 %5960
        %5962 = vrot.lane.b32.xlu0 %v5191, 48
        %v5963 = vpop.permute.xlu0 %5962
        %5964 = vrot.lane.b32.xlu0 %v5192, 48
        %v5965 = vpop.permute.xlu0 %5964
        %5966 = vrot.lane.b32.xlu0 %v5193, 48
        %v5967 = vpop.permute.xlu0 %5966
        %5968 = vrot.lane.b32.xlu0 %v5194, 48
        %v5969 = vpop.permute.xlu0 %5968
        %5970 = vrot.lane.b32.xlu0 %v5195, 48
        %v5971 = vpop.permute.xlu0 %5970
        %5972 = vrot.lane.b32.xlu0 %v5196, 48
        %v5973 = vpop.permute.xlu0 %5972
        %5974 = vrot.lane.b32.xlu0 %v5197, 48
        %v5975 = vpop.permute.xlu0 %5974
        %5976 = vrot.lane.b32.xlu0 %v5198, 48
        %v5977 = vpop.permute.xlu0 %5976
        %5978 = vrot.lane.b32.xlu0 %v5199, 48
        %v5979 = vpop.permute.xlu0 %5978
        %5980 = vrot.lane.b32.xlu0 %v5200, 48
        %v5981 = vpop.permute.xlu0 %5980
        %5982 = vrot.lane.b32.xlu0 %v5201, 48
        %v5983 = vpop.permute.xlu0 %5982
        %5984 = vrot.lane.b32.xlu0 %v5202, 48
        %v5985 = vpop.permute.xlu0 %5984
        %5986 = vrot.lane.b32.xlu0 %v5203, 48
        %v5987 = vpop.permute.xlu0 %5986
        %5988 = vrot.lane.b32.xlu0 %v5204, 48
        %v5989 = vpop.permute.xlu0 %5988
        %5990 = vrot.lane.b32.xlu0 %v5205, 48
        %v5991 = vpop.permute.xlu0 %5990
        %5992 = vrot.lane.b32.xlu0 %v5206, 48
        %v5993 = vpop.permute.xlu0 %5992
        %5994 = vrot.lane.b32.xlu0 %v5207, 48
        %v5995 = vpop.permute.xlu0 %5994
        %5996 = vrot.lane.b32.xlu0 %v5208, 48
        %v5997 = vpop.permute.xlu0 %5996
        %5998 = vrot.lane.b32.xlu0 %v5209, 48
        %v5999 = vpop.permute.xlu0 %5998
        %6000 = vrot.lane.b32.xlu0 %v5210, 48
        %v6001 = vpop.permute.xlu0 %6000
        %6002 = vrot.lane.b32.xlu0 %v5211, 48
        %v6003 = vpop.permute.xlu0 %6002
        %6004 = vrot.lane.b32.xlu0 %v5212, 48
        %v6005 = vpop.permute.xlu0 %6004
        %6006 = vrot.lane.b32.xlu0 %v5213, 48
        %v6007 = vpop.permute.xlu0 %6006
        %6008 = vrot.lane.b32.xlu0 %v5214, 48
        %v6009 = vpop.permute.xlu0 %6008
        %6010 = vrot.lane.b32.xlu0 %v5215, 48
        %v6011 = vpop.permute.xlu0 %6010
        %6012 = vrot.lane.b32.xlu0 %v5216, 48
        %v6013 = vpop.permute.xlu0 %6012
        %6014 = vrot.lane.b32.xlu0 %v5217, 48
        %v6015 = vpop.permute.xlu0 %6014
        %6016 = vrot.lane.b32.xlu0 %v5218, 48
        %v6017 = vpop.permute.xlu0 %6016
        %6018 = vrot.lane.b32.xlu0 %v5219, 48
        %v6019 = vpop.permute.xlu0 %6018
        %6084 = vrot.lane.b32.xlu0 %v5220, 56
        %v6085 = vpop.permute.xlu0 %6084
        %6086 = vrot.lane.b32.xlu0 %v5221, 56
        %v6087 = vpop.permute.xlu0 %6086
        %6088 = vrot.lane.b32.xlu0 %v5222, 56
        %v6089 = vpop.permute.xlu0 %6088
        %6090 = vrot.lane.b32.xlu0 %v5223, 56
        %v6091 = vpop.permute.xlu0 %6090
        %6092 = vrot.lane.b32.xlu0 %v5224, 56
        %v6093 = vpop.permute.xlu0 %6092
        %6094 = vrot.lane.b32.xlu0 %v5225, 56
        %v6095 = vpop.permute.xlu0 %6094
        %6096 = vrot.lane.b32.xlu0 %v5226, 56
        %v6097 = vpop.permute.xlu0 %6096
        %6098 = vrot.lane.b32.xlu0 %v5227, 56
        %v6099 = vpop.permute.xlu0 %6098
        %6100 = vrot.lane.b32.xlu0 %v5228, 56
        %v6101 = vpop.permute.xlu0 %6100
        %6102 = vrot.lane.b32.xlu0 %v5229, 56
        %v6103 = vpop.permute.xlu0 %6102
        %6104 = vrot.lane.b32.xlu0 %v5230, 56
        %v6105 = vpop.permute.xlu0 %6104
        %6106 = vrot.lane.b32.xlu0 %v5231, 56
        %v6107 = vpop.permute.xlu0 %6106
        %6108 = vrot.lane.b32.xlu0 %v5232, 56
        %v6109 = vpop.permute.xlu0 %6108
        %6110 = vrot.lane.b32.xlu0 %v5233, 56
        %v6111 = vpop.permute.xlu0 %6110
        %6112 = vrot.lane.b32.xlu0 %v5234, 56
        %v6113 = vpop.permute.xlu0 %6112
        %6114 = vrot.lane.b32.xlu0 %v5235, 56
        %v6115 = vpop.permute.xlu0 %6114
        %6116 = vrot.lane.b32.xlu0 %v5236, 56
        %v6117 = vpop.permute.xlu0 %6116
        %6118 = vrot.lane.b32.xlu0 %v5237, 56
        %v6119 = vpop.permute.xlu0 %6118
        %6120 = vrot.lane.b32.xlu0 %v5238, 56
        %v6121 = vpop.permute.xlu0 %6120
        %6122 = vrot.lane.b32.xlu0 %v5239, 56
        %v6123 = vpop.permute.xlu0 %6122
        %6124 = vrot.lane.b32.xlu0 %v5240, 56
        %v6125 = vpop.permute.xlu0 %6124
        %6126 = vrot.lane.b32.xlu0 %v5241, 56
        %v6127 = vpop.permute.xlu0 %6126
        %6128 = vrot.lane.b32.xlu0 %v5242, 56
        %v6129 = vpop.permute.xlu0 %6128
        %6130 = vrot.lane.b32.xlu0 %v5243, 56
        %v6131 = vpop.permute.xlu0 %6130
        %6132 = vrot.lane.b32.xlu0 %v5244, 56
        %v6133 = vpop.permute.xlu0 %6132
        %6134 = vrot.lane.b32.xlu0 %v5245, 56
        %v6135 = vpop.permute.xlu0 %6134
        %6136 = vrot.lane.b32.xlu0 %v5246, 56
        %v6137 = vpop.permute.xlu0 %6136
        %6138 = vrot.lane.b32.xlu0 %v5247, 56
        %v6139 = vpop.permute.xlu0 %6138
        %6140 = vrot.lane.b32.xlu0 %v5248, 56
        %v6141 = vpop.permute.xlu0 %6140
        %6142 = vrot.lane.b32.xlu0 %v5249, 56
        %v6143 = vpop.permute.xlu0 %6142
        %6144 = vrot.lane.b32.xlu0 %v5250, 56
        %v6145 = vpop.permute.xlu0 %6144
        %6146 = vrot.lane.b32.xlu0 %v5251, 56
        %v6147 = vpop.permute.xlu0 %6146
        %6212 = vrot.lane.b32.xlu0 %v5252, 64
        %v6213 = vpop.permute.xlu0 %6212
        %6214 = vrot.lane.b32.xlu0 %v5253, 64
        %v6215 = vpop.permute.xlu0 %6214
        %6216 = vrot.lane.b32.xlu0 %v5254, 64
        %v6217 = vpop.permute.xlu0 %6216
        %6218 = vrot.lane.b32.xlu0 %v5255, 64
        %v6219 = vpop.permute.xlu0 %6218
        %6220 = vrot.lane.b32.xlu0 %v5256, 64
        %v6221 = vpop.permute.xlu0 %6220
        %6222 = vrot.lane.b32.xlu0 %v5257, 64
        %v6223 = vpop.permute.xlu0 %6222
        %6224 = vrot.lane.b32.xlu0 %v5258, 64
        %v6225 = vpop.permute.xlu0 %6224
        %6226 = vrot.lane.b32.xlu0 %v5259, 64
        %v6227 = vpop.permute.xlu0 %6226
        %6228 = vrot.lane.b32.xlu0 %v5260, 64
        %v6229 = vpop.permute.xlu0 %6228
        %6230 = vrot.lane.b32.xlu0 %v5261, 64
        %v6231 = vpop.permute.xlu0 %6230
        %6232 = vrot.lane.b32.xlu0 %v5262, 64
        %v6233 = vpop.permute.xlu0 %6232
        %6234 = vrot.lane.b32.xlu0 %v5263, 64
        %v6235 = vpop.permute.xlu0 %6234
        %6236 = vrot.lane.b32.xlu0 %v5264, 64
        %v6237 = vpop.permute.xlu0 %6236
        %6238 = vrot.lane.b32.xlu0 %v5265, 64
        %v6239 = vpop.permute.xlu0 %6238
        %6240 = vrot.lane.b32.xlu0 %v5266, 64
        %v6241 = vpop.permute.xlu0 %6240
        %6242 = vrot.lane.b32.xlu0 %v5267, 64
        %v6243 = vpop.permute.xlu0 %6242
        %6244 = vrot.lane.b32.xlu0 %v5268, 64
        %v6245 = vpop.permute.xlu0 %6244
        %6246 = vrot.lane.b32.xlu0 %v5269, 64
        %v6247 = vpop.permute.xlu0 %6246
        %6248 = vrot.lane.b32.xlu0 %v5270, 64
        %v6249 = vpop.permute.xlu0 %6248
        %6250 = vrot.lane.b32.xlu0 %v5271, 64
        %v6251 = vpop.permute.xlu0 %6250
        %6252 = vrot.lane.b32.xlu0 %v5272, 64
        %v6253 = vpop.permute.xlu0 %6252
        %6254 = vrot.lane.b32.xlu0 %v5273, 64
        %v6255 = vpop.permute.xlu0 %6254
        %6256 = vrot.lane.b32.xlu0 %v5274, 64
        %v6257 = vpop.permute.xlu0 %6256
        %6258 = vrot.lane.b32.xlu0 %v5275, 64
        %v6259 = vpop.permute.xlu0 %6258
        %6260 = vrot.lane.b32.xlu0 %v5276, 64
        %v6261 = vpop.permute.xlu0 %6260
        %6262 = vrot.lane.b32.xlu0 %v5277, 64
        %v6263 = vpop.permute.xlu0 %6262
        %6264 = vrot.lane.b32.xlu0 %v5278, 64
        %v6265 = vpop.permute.xlu0 %6264
        %6266 = vrot.lane.b32.xlu0 %v5279, 64
        %v6267 = vpop.permute.xlu0 %6266
        %6268 = vrot.lane.b32.xlu0 %v5280, 64
        %v6269 = vpop.permute.xlu0 %6268
        %6270 = vrot.lane.b32.xlu0 %v5281, 64
        %v6271 = vpop.permute.xlu0 %6270
        %6272 = vrot.lane.b32.xlu0 %v5282, 64
        %v6273 = vpop.permute.xlu0 %6272
        %6274 = vrot.lane.b32.xlu0 %v5283, 64
        %v6275 = vpop.permute.xlu0 %6274
        %v6308 = vsel %vm2285, %v4996, %v5317
        %v6309 = vsel %vm2285, %v4997, %v5319
        %v6310 = vsel %vm2285, %v4998, %v5321
        %v6311 = vsel %vm2285, %v4999, %v5323
        %v6312 = vsel %vm2285, %v5000, %v5325
        %v6313 = vsel %vm2285, %v5001, %v5327
        %v6314 = vsel %vm2285, %v5002, %v5329
        %v6315 = vsel %vm2285, %v5003, %v5331
        %v6316 = vsel %vm2285, %v5004, %v5333
        %v6317 = vsel %vm2285, %v5005, %v5335
        %v6318 = vsel %vm2285, %v5006, %v5337
        %v6319 = vsel %vm2285, %v5007, %v5339
        %v6320 = vsel %vm2285, %v5008, %v5341
        %v6321 = vsel %vm2285, %v5009, %v5343
        %v6322 = vsel %vm2285, %v5010, %v5345
        %v6323 = vsel %vm2285, %v5011, %v5347
        %v6324 = vsel %vm2285, %v5012, %v5349
        %v6325 = vsel %vm2285, %v5013, %v5351
        %v6326 = vsel %vm2285, %v5014, %v5353
        %v6327 = vsel %vm2285, %v5015, %v5355
        %v6328 = vsel %vm2285, %v5016, %v5357
        %v6329 = vsel %vm2285, %v5017, %v5359
        %v6330 = vsel %vm2285, %v5018, %v5361
        %v6331 = vsel %vm2285, %v5019, %v5363
        %v6332 = vsel %vm2285, %v5020, %v5365
        %v6333 = vsel %vm2285, %v5021, %v5367
        %v6334 = vsel %vm2285, %v5022, %v5369
        %v6335 = vsel %vm2285, %v5023, %v5371
        %v6336 = vsel %vm2285, %v5024, %v5373
        %v6337 = vsel %vm2285, %v5025, %v5375
        %v6338 = vsel %vm2285, %v5026, %v5377
        %v6339 = vsel %vm2285, %v5027, %v5379
        %v6340 = vsel %vm850, %v6308, %v5445
        %v6341 = vsel %vm850, %v6309, %v5447
        %v6342 = vsel %vm850, %v6310, %v5449
        %v6343 = vsel %vm850, %v6311, %v5451
        %v6344 = vsel %vm850, %v6312, %v5453
        %v6345 = vsel %vm850, %v6313, %v5455
        %v6346 = vsel %vm850, %v6314, %v5457
        %v6347 = vsel %vm850, %v6315, %v5459
        %v6348 = vsel %vm850, %v6316, %v5461
        %v6349 = vsel %vm850, %v6317, %v5463
        %v6350 = vsel %vm850, %v6318, %v5465
        %v6351 = vsel %vm850, %v6319, %v5467
        %v6352 = vsel %vm850, %v6320, %v5469
        %v6353 = vsel %vm850, %v6321, %v5471
        %v6354 = vsel %vm850, %v6322, %v5473
        %v6355 = vsel %vm850, %v6323, %v5475
        %v6356 = vsel %vm850, %v6324, %v5477
        %v6357 = vsel %vm850, %v6325, %v5479
        %v6358 = vsel %vm850, %v6326, %v5481
        %v6359 = vsel %vm850, %v6327, %v5483
        %v6360 = vsel %vm850, %v6328, %v5485
        %v6361 = vsel %vm850, %v6329, %v5487
        %v6362 = vsel %vm850, %v6330, %v5489
        %v6363 = vsel %vm850, %v6331, %v5491
        %v6364 = vsel %vm850, %v6332, %v5493
        %v6365 = vsel %vm850, %v6333, %v5495
        %v6366 = vsel %vm850, %v6334, %v5497
        %v6367 = vsel %vm850, %v6335, %v5499
        %v6368 = vsel %vm850, %v6336, %v5501
        %v6369 = vsel %vm850, %v6337, %v5503
        %v6370 = vsel %vm850, %v6338, %v5505
        %v6371 = vsel %vm850, %v6339, %v5507
        %v6372 = vsel %vm2416, %v6340, %v5573
        %v6373 = vsel %vm2416, %v6341, %v5575
        %v6374 = vsel %vm2416, %v6342, %v5577
        %v6375 = vsel %vm2416, %v6343, %v5579
        %v6376 = vsel %vm2416, %v6344, %v5581
        %v6377 = vsel %vm2416, %v6345, %v5583
        %v6378 = vsel %vm2416, %v6346, %v5585
        %v6379 = vsel %vm2416, %v6347, %v5587
        %v6380 = vsel %vm2416, %v6348, %v5589
        %v6381 = vsel %vm2416, %v6349, %v5591
        %v6382 = vsel %vm2416, %v6350, %v5593
        %v6383 = vsel %vm2416, %v6351, %v5595
        %v6384 = vsel %vm2416, %v6352, %v5597
        %v6385 = vsel %vm2416, %v6353, %v5599
        %v6386 = vsel %vm2416, %v6354, %v5601
        %v6387 = vsel %vm2416, %v6355, %v5603
        %v6388 = vsel %vm2416, %v6356, %v5605
        %v6389 = vsel %vm2416, %v6357, %v5607
        %v6390 = vsel %vm2416, %v6358, %v5609
        %v6391 = vsel %vm2416, %v6359, %v5611
        %v6392 = vsel %vm2416, %v6360, %v5613
        %v6393 = vsel %vm2416, %v6361, %v5615
        %v6394 = vsel %vm2416, %v6362, %v5617
        %v6395 = vsel %vm2416, %v6363, %v5619
        %v6396 = vsel %vm2416, %v6364, %v5621
        %v6397 = vsel %vm2416, %v6365, %v5623
        %v6398 = vsel %vm2416, %v6366, %v5625
        %v6399 = vsel %vm2416, %v6367, %v5627
        %v6400 = vsel %vm2416, %v6368, %v5629
        %v6401 = vsel %vm2416, %v6369, %v5631
        %v6402 = vsel %vm2416, %v6370, %v5633
        %v6403 = vsel %vm2416, %v6371, %v5635
        %v6404 = vsel %vm2482, %v6372, %v5701
        %v6405 = vsel %vm2482, %v6373, %v5703
        %v6406 = vsel %vm2482, %v6374, %v5705
        %v6407 = vsel %vm2482, %v6375, %v5707
        %v6408 = vsel %vm2482, %v6376, %v5709
        %v6409 = vsel %vm2482, %v6377, %v5711
        %v6410 = vsel %vm2482, %v6378, %v5713
        %v6411 = vsel %vm2482, %v6379, %v5715
        %v6412 = vsel %vm2482, %v6380, %v5717
        %v6413 = vsel %vm2482, %v6381, %v5719
        %v6414 = vsel %vm2482, %v6382, %v5721
        %v6415 = vsel %vm2482, %v6383, %v5723
        %v6416 = vsel %vm2482, %v6384, %v5725
        %v6417 = vsel %vm2482, %v6385, %v5727
        %v6418 = vsel %vm2482, %v6386, %v5729
        %v6419 = vsel %vm2482, %v6387, %v5731
        %v6420 = vsel %vm2482, %v6388, %v5733
        %v6421 = vsel %vm2482, %v6389, %v5735
        %v6422 = vsel %vm2482, %v6390, %v5737
        %v6423 = vsel %vm2482, %v6391, %v5739
        %v6424 = vsel %vm2482, %v6392, %v5741
        %v6425 = vsel %vm2482, %v6393, %v5743
        %v6426 = vsel %vm2482, %v6394, %v5745
        %v6427 = vsel %vm2482, %v6395, %v5747
        %v6428 = vsel %vm2482, %v6396, %v5749
        %v6429 = vsel %vm2482, %v6397, %v5751
        %v6430 = vsel %vm2482, %v6398, %v5753
        %v6431 = vsel %vm2482, %v6399, %v5755
        %v6432 = vsel %vm2482, %v6400, %v5757
        %v6433 = vsel %vm2482, %v6401, %v5759
        %v6434 = vsel %vm2482, %v6402, %v5761
        %v6435 = vsel %vm2482, %v6403, %v5763
        %v6436 = vsel %vm4287, %v6404, %v5829
        %v6437 = vsel %vm4287, %v6405, %v5831
        %v6438 = vsel %vm4287, %v6406, %v5833
        %v6439 = vsel %vm4287, %v6407, %v5835
        %v6440 = vsel %vm4287, %v6408, %v5837
        %v6441 = vsel %vm4287, %v6409, %v5839
        %v6442 = vsel %vm4287, %v6410, %v5841
        %v6443 = vsel %vm4287, %v6411, %v5843
        %v6444 = vsel %vm4287, %v6412, %v5845
        %v6445 = vsel %vm4287, %v6413, %v5847
        %v6446 = vsel %vm4287, %v6414, %v5849
        %v6447 = vsel %vm4287, %v6415, %v5851
        %v6448 = vsel %vm4287, %v6416, %v5853
        %v6449 = vsel %vm4287, %v6417, %v5855
        %v6450 = vsel %vm4287, %v6418, %v5857
        %v6451 = vsel %vm4287, %v6419, %v5859
        %v6452 = vsel %vm4287, %v6420, %v5861
        %v6453 = vsel %vm4287, %v6421, %v5863
        %v6454 = vsel %vm4287, %v6422, %v5865
        %v6455 = vsel %vm4287, %v6423, %v5867
        %v6456 = vsel %vm4287, %v6424, %v5869
        %v6457 = vsel %vm4287, %v6425, %v5871
        %v6458 = vsel %vm4287, %v6426, %v5873
        %v6459 = vsel %vm4287, %v6427, %v5875
        %v6460 = vsel %vm4287, %v6428, %v5877
        %v6461 = vsel %vm4287, %v6429, %v5879
        %v6462 = vsel %vm4287, %v6430, %v5881
        %v6463 = vsel %vm4287, %v6431, %v5883
        %v6464 = vsel %vm4287, %v6432, %v5885
        %v6465 = vsel %vm4287, %v6433, %v5887
        %v6466 = vsel %vm4287, %v6434, %v5889
        %v6467 = vsel %vm4287, %v6435, %v5891
        %v6468 = vsel %vm4320, %v6436, %v5957
        %v6469 = vsel %vm4320, %v6437, %v5959
        %v6470 = vsel %vm4320, %v6438, %v5961
        %v6471 = vsel %vm4320, %v6439, %v5963
        %v6472 = vsel %vm4320, %v6440, %v5965
        %v6473 = vsel %vm4320, %v6441, %v5967
        %v6474 = vsel %vm4320, %v6442, %v5969
        %v6475 = vsel %vm4320, %v6443, %v5971
        %v6476 = vsel %vm4320, %v6444, %v5973
        %v6477 = vsel %vm4320, %v6445, %v5975
        %v6478 = vsel %vm4320, %v6446, %v5977
        %v6479 = vsel %vm4320, %v6447, %v5979
        %v6480 = vsel %vm4320, %v6448, %v5981
        %v6481 = vsel %vm4320, %v6449, %v5983
        %v6482 = vsel %vm4320, %v6450, %v5985
        %v6483 = vsel %vm4320, %v6451, %v5987
        %v6484 = vsel %vm4320, %v6452, %v5989
        %v6485 = vsel %vm4320, %v6453, %v5991
        %v6486 = vsel %vm4320, %v6454, %v5993
        %v6487 = vsel %vm4320, %v6455, %v5995
        %v6488 = vsel %vm4320, %v6456, %v5997
        %v6489 = vsel %vm4320, %v6457, %v5999
        %v6490 = vsel %vm4320, %v6458, %v6001
        %v6491 = vsel %vm4320, %v6459, %v6003
        %v6492 = vsel %vm4320, %v6460, %v6005
        %v6493 = vsel %vm4320, %v6461, %v6007
        %v6494 = vsel %vm4320, %v6462, %v6009
        %v6495 = vsel %vm4320, %v6463, %v6011
        %v6496 = vsel %vm4320, %v6464, %v6013
        %v6497 = vsel %vm4320, %v6465, %v6015
        %v6498 = vsel %vm4320, %v6466, %v6017
        %v6499 = vsel %vm4320, %v6467, %v6019
        %v6500 = vsel %vm4353, %v6468, %v6085
        %v6501 = vsel %vm4353, %v6469, %v6087
        %v6502 = vsel %vm4353, %v6470, %v6089
        %v6503 = vsel %vm4353, %v6471, %v6091
        %v6504 = vsel %vm4353, %v6472, %v6093
        %v6505 = vsel %vm4353, %v6473, %v6095
        %v6506 = vsel %vm4353, %v6474, %v6097
        %v6507 = vsel %vm4353, %v6475, %v6099
        %v6508 = vsel %vm4353, %v6476, %v6101
        %v6509 = vsel %vm4353, %v6477, %v6103
        %v6510 = vsel %vm4353, %v6478, %v6105
        %v6511 = vsel %vm4353, %v6479, %v6107
        %v6512 = vsel %vm4353, %v6480, %v6109
        %v6513 = vsel %vm4353, %v6481, %v6111
        %v6514 = vsel %vm4353, %v6482, %v6113
        %v6515 = vsel %vm4353, %v6483, %v6115
        %v6516 = vsel %vm4353, %v6484, %v6117
        %v6517 = vsel %vm4353, %v6485, %v6119
        %v6518 = vsel %vm4353, %v6486, %v6121
        %v6519 = vsel %vm4353, %v6487, %v6123
        %v6520 = vsel %vm4353, %v6488, %v6125
        %v6521 = vsel %vm4353, %v6489, %v6127
        %v6522 = vsel %vm4353, %v6490, %v6129
        %v6523 = vsel %vm4353, %v6491, %v6131
        %v6524 = vsel %vm4353, %v6492, %v6133
        %v6525 = vsel %vm4353, %v6493, %v6135
        %v6526 = vsel %vm4353, %v6494, %v6137
        %v6527 = vsel %vm4353, %v6495, %v6139
        %v6528 = vsel %vm4353, %v6496, %v6141
        %v6529 = vsel %vm4353, %v6497, %v6143
        %v6530 = vsel %vm4353, %v6498, %v6145
        %v6531 = vsel %vm4353, %v6499, %v6147
        %v6532 = vsel %vm4386, %v6500, %v6213
        %v6533 = vsel %vm4386, %v6501, %v6215
        %v6534 = vsel %vm4386, %v6502, %v6217
        %v6535 = vsel %vm4386, %v6503, %v6219
        %v6536 = vsel %vm4386, %v6504, %v6221
        %v6537 = vsel %vm4386, %v6505, %v6223
        %v6538 = vsel %vm4386, %v6506, %v6225
        %v6539 = vsel %vm4386, %v6507, %v6227
        %v6540 = vsel %vm4386, %v6508, %v6229
        %v6541 = vsel %vm4386, %v6509, %v6231
        %v6542 = vsel %vm4386, %v6510, %v6233
        %v6543 = vsel %vm4386, %v6511, %v6235
        %v6544 = vsel %vm4386, %v6512, %v6237
        %v6545 = vsel %vm4386, %v6513, %v6239
        %v6546 = vsel %vm4386, %v6514, %v6241
        %v6547 = vsel %vm4386, %v6515, %v6243
        %v6548 = vsel %vm4386, %v6516, %v6245
        %v6549 = vsel %vm4386, %v6517, %v6247
        %v6550 = vsel %vm4386, %v6518, %v6249
        %v6551 = vsel %vm4386, %v6519, %v6251
        %v6552 = vsel %vm4386, %v6520, %v6253
        %v6553 = vsel %vm4386, %v6521, %v6255
        %v6554 = vsel %vm4386, %v6522, %v6257
        %v6555 = vsel %vm4386, %v6523, %v6259
        %v6556 = vsel %vm4386, %v6524, %v6261
        %v6557 = vsel %vm4386, %v6525, %v6263
        %v6558 = vsel %vm4386, %v6526, %v6265
        %v6559 = vsel %vm4386, %v6527, %v6267
        %v6560 = vsel %vm4386, %v6528, %v6269
        %v6561 = vsel %vm4386, %v6529, %v6271
        %v6562 = vsel %vm4386, %v6530, %v6273
        %v6563 = vsel %vm4386, %v6531, %v6275
        %v6564 = vpack.c.bf16 %v6533, %v6532
        %v6565 = vpack.c.bf16 %v6535, %v6534
        %v6566 = vpack.c.bf16 %v6537, %v6536
        %v6567 = vpack.c.bf16 %v6539, %v6538
        %v6568 = vpack.c.bf16 %v6541, %v6540
        %v6569 = vpack.c.bf16 %v6543, %v6542
        %v6570 = vpack.c.bf16 %v6545, %v6544
        %v6571 = vpack.c.bf16 %v6547, %v6546
        %v6572 = vpack.c.bf16 %v6549, %v6548
        %v6573 = vpack.c.bf16 %v6551, %v6550
        %v6574 = vpack.c.bf16 %v6553, %v6552
        %v6575 = vpack.c.bf16 %v6555, %v6554
        %v6576 = vpack.c.bf16 %v6557, %v6556
        %v6577 = vpack.c.bf16 %v6559, %v6558
        %v6578 = vpack.c.bf16 %v6561, %v6560
        %v6579 = vpack.c.bf16 %v6563, %v6562
        %v6580 = vld [vmem:[%s8] sm:$0xf]
        %v6581 = vld [vmem:[%s8 + $0x4] sm:$0xf]
        %v6582 = vld [vmem:[%s8 + $0x8] sm:$0xf]
        %v6583 = vld [vmem:[%s8 + $0xc] sm:$0xf]
        %v6584 = vld [vmem:[%s8 + $0x10] sm:$0xf]
        %v6585 = vld [vmem:[%s8 + $0x14] sm:$0xf]
        %v6586 = vld [vmem:[%s8 + $0x18] sm:$0xf]
        %v6587 = vld [vmem:[%s8 + $0x1c] sm:$0xf]
        %v6588 = vld [vmem:[%s8 + $0x20] sm:$0xf]
        %v6589 = vld [vmem:[%s7] sm:$0x1]
        %v6591 = vperm.slane %v6589, 0
        %v6602 = vunpack.c.l.b16 %v6580
        %v6603 = vunpack.c.l.b16 %v6581
        %v6604 = vunpack.c.l.b16 %v6582
        %v6605 = vunpack.c.l.b16 %v6583
        %v6606 = vunpack.c.l.b16 %v6584
        %v6607 = vunpack.c.l.b16 %v6585
        %v6608 = vunpack.c.l.b16 %v6586
        %v6609 = vunpack.c.l.b16 %v6587
        %v6610 = vunpack.c.l.b16 %v6588
        %v6611 = vpack.c.b16 %v6603, %v6602
        %v6612 = vpack.c.b16 %v6605, %v6604
        %v6613 = vpack.c.b16 %v6607, %v6606
        %v6614 = vpack.c.b16 %v6609, %v6608
        %v6615 = vpack.c.b16 %v6610, %v6610
        %v6621 = vsel %vm4475, %v6564, 0
        %v6624 = vsel %vm4475, %v6565, 0
        %v6627 = vsel %vm4475, %v6566, 0
        %v6630 = vsel %vm4475, %v6567, 0
        %v6633 = vsel %vm4475, %v6568, 0
        %v6636 = vsel %vm4475, %v6569, 0
        %v6639 = vsel %vm4475, %v6570, 0
        %v6642 = vsel %vm4475, %v6571, 0
        %v6645 = vsel %vm4475, %v6572, 0
        %v6648 = vsel %vm4475, %v6573, 0
        %v6651 = vsel %vm4475, %v6574, 0
        %v6654 = vsel %vm4475, %v6575, 0
        %v6657 = vsel %vm4475, %v6576, 0
        %v6660 = vsel %vm4475, %v6577, 0
        %v6663 = vsel %vm4475, %v6578, 0
        %v6666 = vsel %vm4475, %v6579, 0
        %v6669 = vsel %vm4524, %v6615, 0
        %6671 = vmatpush.bf16.msra.mxu0 0
        %6672 = vmatpush.bf16.msra.mxu0 0
        %6673 = vmatpush.bf16.msra.mxu0 0
        %6674 = vmatpush.bf16.msra.mxu0 %v6669
        %6675 = vmatpush.bf16.msra.mxu0 %v6614
        %6676 = vmatpush.bf16.msra.mxu0 %v6613
        %6677 = vmatpush.bf16.msra.mxu0 %v6612
        %6678 = vmatpush.bf16.msra.mxu0 %v6611
        %6679 = vmatmul.bf16.gmra.mxu0 %v6621
        %v6680 = vpop.f32.mrf.mxu0
        %v6681 = vadd.f32 %v6591, %v6680
        %v6682 = vpop.f32.mrf.mxu0
        %v6683 = vadd.f32 %v6591, %v6682
        %6684 = vmatmul.bf16.gmra.mxu0 %v6624
        %v6685 = vpop.f32.mrf.mxu0
        %v6686 = vadd.f32 %v6591, %v6685
        %v6687 = vpop.f32.mrf.mxu0
        %v6688 = vadd.f32 %v6591, %v6687
        %6689 = vmatmul.bf16.gmra.mxu0 %v6627
        %v6690 = vpop.f32.mrf.mxu0
        %v6691 = vadd.f32 %v6591, %v6690
        %v6692 = vpop.f32.mrf.mxu0
        %v6693 = vadd.f32 %v6591, %v6692
        %6694 = vmatmul.bf16.gmra.mxu0 %v6630
        %v6695 = vpop.f32.mrf.mxu0
        %v6696 = vadd.f32 %v6591, %v6695
        %v6697 = vpop.f32.mrf.mxu0
        %v6698 = vadd.f32 %v6591, %v6697
        %6699 = vmatmul.bf16.gmra.mxu0 %v6633
        %v6700 = vpop.f32.mrf.mxu0
        %v6701 = vadd.f32 %v6591, %v6700
        %v6702 = vpop.f32.mrf.mxu0
        %v6703 = vadd.f32 %v6591, %v6702
        %6704 = vmatmul.bf16.gmra.mxu0 %v6636
        %v6705 = vpop.f32.mrf.mxu0
        %v6706 = vadd.f32 %v6591, %v6705
        %v6707 = vpop.f32.mrf.mxu0
        %v6708 = vadd.f32 %v6591, %v6707
        %6709 = vmatmul.bf16.gmra.mxu0 %v6639
        %v6710 = vpop.f32.mrf.mxu0
        %v6711 = vadd.f32 %v6591, %v6710
        %v6712 = vpop.f32.mrf.mxu0
        %v6713 = vadd.f32 %v6591, %v6712
        %6714 = vmatmul.bf16.gmra.mxu0 %v6642
        %v6715 = vpop.f32.mrf.mxu0
        %v6716 = vadd.f32 %v6591, %v6715
        %v6717 = vpop.f32.mrf.mxu0
        %v6718 = vadd.f32 %v6591, %v6717
        %6719 = vmatmul.bf16.gmra.mxu0 %v6645
        %v6720 = vpop.f32.mrf.mxu0
        %v6721 = vadd.f32 %v6591, %v6720
        %v6722 = vpop.f32.mrf.mxu0
        %v6723 = vadd.f32 %v6591, %v6722
        %6724 = vmatmul.bf16.gmra.mxu0 %v6648
        %v6725 = vpop.f32.mrf.mxu0
        %v6726 = vadd.f32 %v6591, %v6725
        %v6727 = vpop.f32.mrf.mxu0
        %v6728 = vadd.f32 %v6591, %v6727
        %6729 = vmatmul.bf16.gmra.mxu0 %v6651
        %v6730 = vpop.f32.mrf.mxu0
        %v6731 = vadd.f32 %v6591, %v6730
        %v6732 = vpop.f32.mrf.mxu0
        %v6733 = vadd.f32 %v6591, %v6732
        %6734 = vmatmul.bf16.gmra.mxu0 %v6654
        %v6735 = vpop.f32.mrf.mxu0
        %v6736 = vadd.f32 %v6591, %v6735
        %v6737 = vpop.f32.mrf.mxu0
        %v6738 = vadd.f32 %v6591, %v6737
        %6739 = vmatmul.bf16.gmra.mxu0 %v6657
        %v6740 = vpop.f32.mrf.mxu0
        %v6741 = vadd.f32 %v6591, %v6740
        %v6742 = vpop.f32.mrf.mxu0
        %v6743 = vadd.f32 %v6591, %v6742
        %6744 = vmatmul.bf16.gmra.mxu0 %v6660
        %v6745 = vpop.f32.mrf.mxu0
        %v6746 = vadd.f32 %v6591, %v6745
        %v6747 = vpop.f32.mrf.mxu0
        %v6748 = vadd.f32 %v6591, %v6747
        %6749 = vmatmul.bf16.gmra.mxu0 %v6663
        %v6750 = vpop.f32.mrf.mxu0
        %v6751 = vadd.f32 %v6591, %v6750
        %v6752 = vpop.f32.mrf.mxu0
        %v6753 = vadd.f32 %v6591, %v6752
        %6754 = vmatmul.bf16.gmra.mxu0 %v6666
        %v6755 = vpop.f32.mrf.mxu0
        %v6756 = vadd.f32 %v6591, %v6755
        %v6757 = vpop.f32.mrf.mxu0
        %v6758 = vadd.f32 %v6591, %v6757
        %6759 = vdwg.mxu0
        %v6760 = vmul.f32 %v6681, 0.1
        %v6761 = vmul.f32 %v6683, 0.1
        %v6762 = vmul.f32 %v6686, 0.1
        %v6763 = vmul.f32 %v6688, 0.1
        %v6764 = vmul.f32 %v6691, 0.1
        %v6765 = vmul.f32 %v6693, 0.1
        %v6766 = vmul.f32 %v6696, 0.1
        %v6767 = vmul.f32 %v6698, 0.1
        %v6768 = vmul.f32 %v6701, 0.1
        %v6769 = vmul.f32 %v6703, 0.1
        %v6770 = vmul.f32 %v6706, 0.1
        %v6771 = vmul.f32 %v6708, 0.1
        %v6772 = vmul.f32 %v6711, 0.1
        %v6773 = vmul.f32 %v6713, 0.1
        %v6774 = vmul.f32 %v6716, 0.1
        %v6775 = vmul.f32 %v6718, 0.1
        %v6776 = vmul.f32 %v6721, 0.1
        %v6777 = vmul.f32 %v6723, 0.1
        %v6778 = vmul.f32 %v6726, 0.1
        %v6779 = vmul.f32 %v6728, 0.1
        %v6780 = vmul.f32 %v6731, 0.1
        %v6781 = vmul.f32 %v6733, 0.1
        %v6782 = vmul.f32 %v6736, 0.1
        %v6783 = vmul.f32 %v6738, 0.1
        %v6784 = vmul.f32 %v6741, 0.1
        %v6785 = vmul.f32 %v6743, 0.1
        %v6786 = vmul.f32 %v6746, 0.1
        %v6787 = vmul.f32 %v6748, 0.1
        %v6788 = vmul.f32 %v6751, 0.1
        %v6789 = vmul.f32 %v6753, 0.1
        %v6790 = vmul.f32 %v6756, 0.1
        %v6791 = vmul.f32 %v6758, 0.1
        %v6792 = vmax.f32 %v6681, %v6760
        %v6793 = vmax.f32 %v6683, %v6761
        %v6794 = vmax.f32 %v6686, %v6762
        %v6795 = vmax.f32 %v6688, %v6763
        %v6796 = vmax.f32 %v6691, %v6764
        %v6797 = vmax.f32 %v6693, %v6765
        %v6798 = vmax.f32 %v6696, %v6766
        %v6799 = vmax.f32 %v6698, %v6767
        %v6800 = vmax.f32 %v6701, %v6768
        %v6801 = vmax.f32 %v6703, %v6769
        %v6802 = vmax.f32 %v6706, %v6770
        %v6803 = vmax.f32 %v6708, %v6771
        %v6804 = vmax.f32 %v6711, %v6772
        %v6805 = vmax.f32 %v6713, %v6773
        %v6806 = vmax.f32 %v6716, %v6774
        %v6807 = vmax.f32 %v6718, %v6775
        %v6808 = vmax.f32 %v6721, %v6776
        %v6809 = vmax.f32 %v6723, %v6777
        %v6810 = vmax.f32 %v6726, %v6778
        %v6811 = vmax.f32 %v6728, %v6779
        %v6812 = vmax.f32 %v6731, %v6780
        %v6813 = vmax.f32 %v6733, %v6781
        %v6814 = vmax.f32 %v6736, %v6782
        %v6815 = vmax.f32 %v6738, %v6783
        %v6816 = vmax.f32 %v6741, %v6784
        %v6817 = vmax.f32 %v6743, %v6785
        %v6818 = vmax.f32 %v6746, %v6786
        %v6819 = vmax.f32 %v6748, %v6787
        %v6820 = vmax.f32 %v6751, %v6788
        %v6821 = vmax.f32 %v6753, %v6789
        %v6822 = vmax.f32 %v6756, %v6790
        %v6823 = vmax.f32 %v6758, %v6791
        %v6824 = vadd.f32 %v6792, %v4649
        %v6825 = vadd.f32 %v6793, %v4650
        %v6826 = vadd.f32 %v6794, %v4651
        %v6827 = vadd.f32 %v6795, %v4652
        %v6828 = vadd.f32 %v6796, %v4653
        %v6829 = vadd.f32 %v6797, %v4654
        %v6830 = vadd.f32 %v6798, %v4655
        %v6831 = vadd.f32 %v6799, %v4656
        %v6832 = vadd.f32 %v6800, %v4657
        %v6833 = vadd.f32 %v6801, %v4658
        %v6834 = vadd.f32 %v6802, %v4659
        %v6835 = vadd.f32 %v6803, %v4660
        %v6836 = vadd.f32 %v6804, %v4661
        %v6837 = vadd.f32 %v6805, %v4662
        %v6838 = vadd.f32 %v6806, %v4663
        %v6839 = vadd.f32 %v6807, %v4664
        %v6840 = vadd.f32 %v6808, %v4665
        %v6841 = vadd.f32 %v6809, %v4666
        %v6842 = vadd.f32 %v6810, %v4667
        %v6843 = vadd.f32 %v6811, %v4668
        %v6844 = vadd.f32 %v6812, %v4669
        %v6845 = vadd.f32 %v6813, %v4670
        %v6846 = vadd.f32 %v6814, %v4671
        %v6847 = vadd.f32 %v6815, %v4672
        %v6848 = vadd.f32 %v6816, %v4673
        %v6849 = vadd.f32 %v6817, %v4674
        %v6850 = vadd.f32 %v6818, %v4675
        %v6851 = vadd.f32 %v6819, %v4676
        %v6852 = vadd.f32 %v6820, %v4677
        %v6853 = vadd.f32 %v6821, %v4678
        %v6854 = vadd.f32 %v6822, %v4679
        %v6855 = vadd.f32 %v6823, %v4680
        %v6888 = vrot.slane %v6824, 2
        %v6889 = vrot.slane %v6824, 4
        %v6890 = vrot.slane %v6824, 6
        %v6891 = vrot.slane %v6825, 2
        %v6892 = vrot.slane %v6825, 4
        %v6893 = vrot.slane %v6825, 6
        %v6894 = vrot.slane %v6826, 2
        %v6895 = vrot.slane %v6826, 4
        %v6896 = vrot.slane %v6826, 6
        %v6897 = vrot.slane %v6827, 2
        %v6898 = vrot.slane %v6827, 4
        %v6899 = vrot.slane %v6827, 6
        %v6900 = vrot.slane %v6828, 2
        %v6901 = vrot.slane %v6828, 4
        %v6902 = vrot.slane %v6828, 6
        %v6903 = vrot.slane %v6829, 2
        %v6904 = vrot.slane %v6829, 4
        %v6905 = vrot.slane %v6829, 6
        %v6906 = vrot.slane %v6830, 2
        %v6907 = vrot.slane %v6830, 4
        %v6908 = vrot.slane %v6830, 6
        %v6909 = vrot.slane %v6831, 2
        %v6910 = vrot.slane %v6831, 4
        %v6911 = vrot.slane %v6831, 6
        %v6912 = vrot.slane %v6832, 2
        %v6913 = vrot.slane %v6832, 4
        %v6914 = vrot.slane %v6832, 6
        %v6915 = vrot.slane %v6833, 2
        %v6916 = vrot.slane %v6833, 4
        %v6917 = vrot.slane %v6833, 6
        %v6918 = vrot.slane %v6834, 2
        %v6919 = vrot.slane %v6834, 4
        %v6920 = vrot.slane %v6834, 6
        %v6921 = vrot.slane %v6835, 2
        %v6922 = vrot.slane %v6835, 4
        %v6923 = vrot.slane %v6835, 6
        %v6924 = vrot.slane %v6836, 2
        %v6925 = vrot.slane %v6836, 4
        %v6926 = vrot.slane %v6836, 6
        %v6927 = vrot.slane %v6837, 2
        %v6928 = vrot.slane %v6837, 4
        %v6929 = vrot.slane %v6837, 6
        %v6930 = vrot.slane %v6838, 2
        %v6931 = vrot.slane %v6838, 4
        %v6932 = vrot.slane %v6838, 6
        %v6933 = vrot.slane %v6839, 2
        %v6934 = vrot.slane %v6839, 4
        %v6935 = vrot.slane %v6839, 6
        %v6936 = vrot.slane %v6840, 2
        %v6937 = vrot.slane %v6840, 4
        %v6938 = vrot.slane %v6840, 6
        %v6939 = vrot.slane %v6841, 2
        %v6940 = vrot.slane %v6841, 4
        %v6941 = vrot.slane %v6841, 6
        %v6942 = vrot.slane %v6842, 2
        %v6943 = vrot.slane %v6842, 4
        %v6944 = vrot.slane %v6842, 6
        %v6945 = vrot.slane %v6843, 2
        %v6946 = vrot.slane %v6843, 4
        %v6947 = vrot.slane %v6843, 6
        %v6948 = vrot.slane %v6844, 2
        %v6949 = vrot.slane %v6844, 4
        %v6950 = vrot.slane %v6844, 6
        %v6951 = vrot.slane %v6845, 2
        %v6952 = vrot.slane %v6845, 4
        %v6953 = vrot.slane %v6845, 6
        %v6954 = vrot.slane %v6846, 2
        %v6955 = vrot.slane %v6846, 4
        %v6956 = vrot.slane %v6846, 6
        %v6957 = vrot.slane %v6847, 2
        %v6958 = vrot.slane %v6847, 4
        %v6959 = vrot.slane %v6847, 6
        %v6960 = vrot.slane %v6848, 2
        %v6961 = vrot.slane %v6848, 4
        %v6962 = vrot.slane %v6848, 6
        %v6963 = vrot.slane %v6849, 2
        %v6964 = vrot.slane %v6849, 4
        %v6965 = vrot.slane %v6849, 6
        %v6966 = vrot.slane %v6850, 2
        %v6967 = vrot.slane %v6850, 4
        %v6968 = vrot.slane %v6850, 6
        %v6969 = vrot.slane %v6851, 2
        %v6970 = vrot.slane %v6851, 4
        %v6971 = vrot.slane %v6851, 6
        %v6972 = vrot.slane %v6852, 2
        %v6973 = vrot.slane %v6852, 4
        %v6974 = vrot.slane %v6852, 6
        %v6975 = vrot.slane %v6853, 2
        %v6976 = vrot.slane %v6853, 4
        %v6977 = vrot.slane %v6853, 6
        %v6978 = vrot.slane %v6854, 2
        %v6979 = vrot.slane %v6854, 4
        %v6980 = vrot.slane %v6854, 6
        %v6981 = vrot.slane %v6855, 2
        %v6982 = vrot.slane %v6855, 4
        %v6983 = vrot.slane %v6855, 6
        %v7080 = vsel %vm853, %v6824, -inf
        %v7081 = vrot.slane %v7080, 4
        %v7082 = vmax.f32 %v7080, %v7081
        %v7083 = vrot.slane %v7082, 2
        %v7084 = vmax.f32 %v7082, %v7083
        %v7085 = vrot.slane %v7084, 1
        %v7086 = vmax.f32 %v7084, %v7085
        %v7087 = vsel %vm853, %v6888, -inf
        %v7088 = vrot.slane %v7087, 4
        %v7089 = vmax.f32 %v7087, %v7088
        %v7090 = vrot.slane %v7089, 2
        %v7091 = vmax.f32 %v7089, %v7090
        %v7092 = vrot.slane %v7091, 1
        %v7093 = vmax.f32 %v7091, %v7092
        %v7094 = vsel %vm853, %v6889, -inf
        %v7095 = vrot.slane %v7094, 4
        %v7096 = vmax.f32 %v7094, %v7095
        %v7097 = vrot.slane %v7096, 2
        %v7098 = vmax.f32 %v7096, %v7097
        %v7099 = vrot.slane %v7098, 1
        %v7100 = vmax.f32 %v7098, %v7099
        %v7101 = vsel %vm853, %v6890, -inf
        %v7102 = vrot.slane %v7101, 4
        %v7103 = vmax.f32 %v7101, %v7102
        %v7104 = vrot.slane %v7103, 2
        %v7105 = vmax.f32 %v7103, %v7104
        %v7106 = vrot.slane %v7105, 1
        %v7107 = vmax.f32 %v7105, %v7106
        %v7108 = vsel %vm853, %v6825, -inf
        %v7109 = vrot.slane %v7108, 4
        %v7110 = vmax.f32 %v7108, %v7109
        %v7111 = vrot.slane %v7110, 2
        %v7112 = vmax.f32 %v7110, %v7111
        %v7113 = vrot.slane %v7112, 1
        %v7114 = vmax.f32 %v7112, %v7113
        %v7115 = vsel %vm853, %v6891, -inf
        %v7116 = vrot.slane %v7115, 4
        %v7117 = vmax.f32 %v7115, %v7116
        %v7118 = vrot.slane %v7117, 2
        %v7119 = vmax.f32 %v7117, %v7118
        %v7120 = vrot.slane %v7119, 1
        %v7121 = vmax.f32 %v7119, %v7120
        %v7122 = vsel %vm853, %v6892, -inf
        %v7123 = vrot.slane %v7122, 4
        %v7124 = vmax.f32 %v7122, %v7123
        %v7125 = vrot.slane %v7124, 2
        %v7126 = vmax.f32 %v7124, %v7125
        %v7127 = vrot.slane %v7126, 1
        %v7128 = vmax.f32 %v7126, %v7127
        %v7129 = vsel %vm853, %v6893, -inf
        %v7130 = vrot.slane %v7129, 4
        %v7131 = vmax.f32 %v7129, %v7130
        %v7132 = vrot.slane %v7131, 2
        %v7133 = vmax.f32 %v7131, %v7132
        %v7134 = vrot.slane %v7133, 1
        %v7135 = vmax.f32 %v7133, %v7134
        %v7136 = vsel %vm853, %v6826, -inf
        %v7137 = vrot.slane %v7136, 4
        %v7138 = vmax.f32 %v7136, %v7137
        %v7139 = vrot.slane %v7138, 2
        %v7140 = vmax.f32 %v7138, %v7139
        %v7141 = vrot.slane %v7140, 1
        %v7142 = vmax.f32 %v7140, %v7141
        %v7143 = vsel %vm853, %v6894, -inf
        %v7144 = vrot.slane %v7143, 4
        %v7145 = vmax.f32 %v7143, %v7144
        %v7146 = vrot.slane %v7145, 2
        %v7147 = vmax.f32 %v7145, %v7146
        %v7148 = vrot.slane %v7147, 1
        %v7149 = vmax.f32 %v7147, %v7148
        %v7150 = vsel %vm853, %v6895, -inf
        %v7151 = vrot.slane %v7150, 4
        %v7152 = vmax.f32 %v7150, %v7151
        %v7153 = vrot.slane %v7152, 2
        %v7154 = vmax.f32 %v7152, %v7153
        %v7155 = vrot.slane %v7154, 1
        %v7156 = vmax.f32 %v7154, %v7155
        %v7157 = vsel %vm853, %v6896, -inf
        %v7158 = vrot.slane %v7157, 4
        %v7159 = vmax.f32 %v7157, %v7158
        %v7160 = vrot.slane %v7159, 2
        %v7161 = vmax.f32 %v7159, %v7160
        %v7162 = vrot.slane %v7161, 1
        %v7163 = vmax.f32 %v7161, %v7162
        %v7164 = vsel %vm853, %v6827, -inf
        %v7165 = vrot.slane %v7164, 4
        %v7166 = vmax.f32 %v7164, %v7165
        %v7167 = vrot.slane %v7166, 2
        %v7168 = vmax.f32 %v7166, %v7167
        %v7169 = vrot.slane %v7168, 1
        %v7170 = vmax.f32 %v7168, %v7169
        %v7171 = vsel %vm853, %v6897, -inf
        %v7172 = vrot.slane %v7171, 4
        %v7173 = vmax.f32 %v7171, %v7172
        %v7174 = vrot.slane %v7173, 2
        %v7175 = vmax.f32 %v7173, %v7174
        %v7176 = vrot.slane %v7175, 1
        %v7177 = vmax.f32 %v7175, %v7176
        %v7178 = vsel %vm853, %v6898, -inf
        %v7179 = vrot.slane %v7178, 4
        %v7180 = vmax.f32 %v7178, %v7179
        %v7181 = vrot.slane %v7180, 2
        %v7182 = vmax.f32 %v7180, %v7181
        %v7183 = vrot.slane %v7182, 1
        %v7184 = vmax.f32 %v7182, %v7183
        %v7185 = vsel %vm853, %v6899, -inf
        %v7186 = vrot.slane %v7185, 4
        %v7187 = vmax.f32 %v7185, %v7186
        %v7188 = vrot.slane %v7187, 2
        %v7189 = vmax.f32 %v7187, %v7188
        %v7190 = vrot.slane %v7189, 1
        %v7191 = vmax.f32 %v7189, %v7190
        %v7192 = vsel %vm853, %v6828, -inf
        %v7193 = vrot.slane %v7192, 4
        %v7194 = vmax.f32 %v7192, %v7193
        %v7195 = vrot.slane %v7194, 2
        %v7196 = vmax.f32 %v7194, %v7195
        %v7197 = vrot.slane %v7196, 1
        %v7198 = vmax.f32 %v7196, %v7197
        %v7199 = vsel %vm853, %v6900, -inf
        %v7200 = vrot.slane %v7199, 4
        %v7201 = vmax.f32 %v7199, %v7200
        %v7202 = vrot.slane %v7201, 2
        %v7203 = vmax.f32 %v7201, %v7202
        %v7204 = vrot.slane %v7203, 1
        %v7205 = vmax.f32 %v7203, %v7204
        %v7206 = vsel %vm853, %v6901, -inf
        %v7207 = vrot.slane %v7206, 4
        %v7208 = vmax.f32 %v7206, %v7207
        %v7209 = vrot.slane %v7208, 2
        %v7210 = vmax.f32 %v7208, %v7209
        %v7211 = vrot.slane %v7210, 1
        %v7212 = vmax.f32 %v7210, %v7211
        %v7213 = vsel %vm853, %v6902, -inf
        %v7214 = vrot.slane %v7213, 4
        %v7215 = vmax.f32 %v7213, %v7214
        %v7216 = vrot.slane %v7215, 2
        %v7217 = vmax.f32 %v7215, %v7216
        %v7218 = vrot.slane %v7217, 1
        %v7219 = vmax.f32 %v7217, %v7218
        %v7220 = vsel %vm853, %v6829, -inf
        %v7221 = vrot.slane %v7220, 4
        %v7222 = vmax.f32 %v7220, %v7221
        %v7223 = vrot.slane %v7222, 2
        %v7224 = vmax.f32 %v7222, %v7223
        %v7225 = vrot.slane %v7224, 1
        %v7226 = vmax.f32 %v7224, %v7225
        %v7227 = vsel %vm853, %v6903, -inf
        %v7228 = vrot.slane %v7227, 4
        %v7229 = vmax.f32 %v7227, %v7228
        %v7230 = vrot.slane %v7229, 2
        %v7231 = vmax.f32 %v7229, %v7230
        %v7232 = vrot.slane %v7231, 1
        %v7233 = vmax.f32 %v7231, %v7232
        %v7234 = vsel %vm853, %v6904, -inf
        %v7235 = vrot.slane %v7234, 4
        %v7236 = vmax.f32 %v7234, %v7235
        %v7237 = vrot.slane %v7236, 2
        %v7238 = vmax.f32 %v7236, %v7237
        %v7239 = vrot.slane %v7238, 1
        %v7240 = vmax.f32 %v7238, %v7239
        %v7241 = vsel %vm853, %v6905, -inf
        %v7242 = vrot.slane %v7241, 4
        %v7243 = vmax.f32 %v7241, %v7242
        %v7244 = vrot.slane %v7243, 2
        %v7245 = vmax.f32 %v7243, %v7244
        %v7246 = vrot.slane %v7245, 1
        %v7247 = vmax.f32 %v7245, %v7246
        %v7248 = vsel %vm853, %v6830, -inf
        %v7249 = vrot.slane %v7248, 4
        %v7250 = vmax.f32 %v7248, %v7249
        %v7251 = vrot.slane %v7250, 2
        %v7252 = vmax.f32 %v7250, %v7251
        %v7253 = vrot.slane %v7252, 1
        %v7254 = vmax.f32 %v7252, %v7253
        %v7255 = vsel %vm853, %v6906, -inf
        %v7256 = vrot.slane %v7255, 4
        %v7257 = vmax.f32 %v7255, %v7256
        %v7258 = vrot.slane %v7257, 2
        %v7259 = vmax.f32 %v7257, %v7258
        %v7260 = vrot.slane %v7259, 1
        %v7261 = vmax.f32 %v7259, %v7260
        %v7262 = vsel %vm853, %v6907, -inf
        %v7263 = vrot.slane %v7262, 4
        %v7264 = vmax.f32 %v7262, %v7263
        %v7265 = vrot.slane %v7264, 2
        %v7266 = vmax.f32 %v7264, %v7265
        %v7267 = vrot.slane %v7266, 1
        %v7268 = vmax.f32 %v7266, %v7267
        %v7269 = vsel %vm853, %v6908, -inf
        %v7270 = vrot.slane %v7269, 4
        %v7271 = vmax.f32 %v7269, %v7270
        %v7272 = vrot.slane %v7271, 2
        %v7273 = vmax.f32 %v7271, %v7272
        %v7274 = vrot.slane %v7273, 1
        %v7275 = vmax.f32 %v7273, %v7274
        %v7276 = vsel %vm853, %v6831, -inf
        %v7277 = vrot.slane %v7276, 4
        %v7278 = vmax.f32 %v7276, %v7277
        %v7279 = vrot.slane %v7278, 2
        %v7280 = vmax.f32 %v7278, %v7279
        %v7281 = vrot.slane %v7280, 1
        %v7282 = vmax.f32 %v7280, %v7281
        %v7283 = vsel %vm853, %v6909, -inf
        %v7284 = vrot.slane %v7283, 4
        %v7285 = vmax.f32 %v7283, %v7284
        %v7286 = vrot.slane %v7285, 2
        %v7287 = vmax.f32 %v7285, %v7286
        %v7288 = vrot.slane %v7287, 1
        %v7289 = vmax.f32 %v7287, %v7288
        %v7290 = vsel %vm853, %v6910, -inf
        %v7291 = vrot.slane %v7290, 4
        %v7292 = vmax.f32 %v7290, %v7291
        %v7293 = vrot.slane %v7292, 2
        %v7294 = vmax.f32 %v7292, %v7293
        %v7295 = vrot.slane %v7294, 1
        %v7296 = vmax.f32 %v7294, %v7295
        %v7297 = vsel %vm853, %v6911, -inf
        %v7298 = vrot.slane %v7297, 4
        %v7299 = vmax.f32 %v7297, %v7298
        %v7300 = vrot.slane %v7299, 2
        %v7301 = vmax.f32 %v7299, %v7300
        %v7302 = vrot.slane %v7301, 1
        %v7303 = vmax.f32 %v7301, %v7302
        %v7304 = vsel %vm853, %v6832, -inf
        %v7305 = vrot.slane %v7304, 4
        %v7306 = vmax.f32 %v7304, %v7305
        %v7307 = vrot.slane %v7306, 2
        %v7308 = vmax.f32 %v7306, %v7307
        %v7309 = vrot.slane %v7308, 1
        %v7310 = vmax.f32 %v7308, %v7309
        %v7311 = vsel %vm853, %v6912, -inf
        %v7312 = vrot.slane %v7311, 4
        %v7313 = vmax.f32 %v7311, %v7312
        %v7314 = vrot.slane %v7313, 2
        %v7315 = vmax.f32 %v7313, %v7314
        %v7316 = vrot.slane %v7315, 1
        %v7317 = vmax.f32 %v7315, %v7316
        %v7318 = vsel %vm853, %v6913, -inf
        %v7319 = vrot.slane %v7318, 4
        %v7320 = vmax.f32 %v7318, %v7319
        %v7321 = vrot.slane %v7320, 2
        %v7322 = vmax.f32 %v7320, %v7321
        %v7323 = vrot.slane %v7322, 1
        %v7324 = vmax.f32 %v7322, %v7323
        %v7325 = vsel %vm853, %v6914, -inf
        %v7326 = vrot.slane %v7325, 4
        %v7327 = vmax.f32 %v7325, %v7326
        %v7328 = vrot.slane %v7327, 2
        %v7329 = vmax.f32 %v7327, %v7328
        %v7330 = vrot.slane %v7329, 1
        %v7331 = vmax.f32 %v7329, %v7330
        %v7332 = vsel %vm853, %v6833, -inf
        %v7333 = vrot.slane %v7332, 4
        %v7334 = vmax.f32 %v7332, %v7333
        %v7335 = vrot.slane %v7334, 2
        %v7336 = vmax.f32 %v7334, %v7335
        %v7337 = vrot.slane %v7336, 1
        %v7338 = vmax.f32 %v7336, %v7337
        %v7339 = vsel %vm853, %v6915, -inf
        %v7340 = vrot.slane %v7339, 4
        %v7341 = vmax.f32 %v7339, %v7340
        %v7342 = vrot.slane %v7341, 2
        %v7343 = vmax.f32 %v7341, %v7342
        %v7344 = vrot.slane %v7343, 1
        %v7345 = vmax.f32 %v7343, %v7344
        %v7346 = vsel %vm853, %v6916, -inf
        %v7347 = vrot.slane %v7346, 4
        %v7348 = vmax.f32 %v7346, %v7347
        %v7349 = vrot.slane %v7348, 2
        %v7350 = vmax.f32 %v7348, %v7349
        %v7351 = vrot.slane %v7350, 1
        %v7352 = vmax.f32 %v7350, %v7351
        %v7353 = vsel %vm853, %v6917, -inf
        %v7354 = vrot.slane %v7353, 4
        %v7355 = vmax.f32 %v7353, %v7354
        %v7356 = vrot.slane %v7355, 2
        %v7357 = vmax.f32 %v7355, %v7356
        %v7358 = vrot.slane %v7357, 1
        %v7359 = vmax.f32 %v7357, %v7358
        %v7360 = vsel %vm853, %v6834, -inf
        %v7361 = vrot.slane %v7360, 4
        %v7362 = vmax.f32 %v7360, %v7361
        %v7363 = vrot.slane %v7362, 2
        %v7364 = vmax.f32 %v7362, %v7363
        %v7365 = vrot.slane %v7364, 1
        %v7366 = vmax.f32 %v7364, %v7365
        %v7367 = vsel %vm853, %v6918, -inf
        %v7368 = vrot.slane %v7367, 4
        %v7369 = vmax.f32 %v7367, %v7368
        %v7370 = vrot.slane %v7369, 2
        %v7371 = vmax.f32 %v7369, %v7370
        %v7372 = vrot.slane %v7371, 1
        %v7373 = vmax.f32 %v7371, %v7372
        %v7374 = vsel %vm853, %v6919, -inf
        %v7375 = vrot.slane %v7374, 4
        %v7376 = vmax.f32 %v7374, %v7375
        %v7377 = vrot.slane %v7376, 2
        %v7378 = vmax.f32 %v7376, %v7377
        %v7379 = vrot.slane %v7378, 1
        %v7380 = vmax.f32 %v7378, %v7379
        %v7381 = vsel %vm853, %v6920, -inf
        %v7382 = vrot.slane %v7381, 4
        %v7383 = vmax.f32 %v7381, %v7382
        %v7384 = vrot.slane %v7383, 2
        %v7385 = vmax.f32 %v7383, %v7384
        %v7386 = vrot.slane %v7385, 1
        %v7387 = vmax.f32 %v7385, %v7386
        %v7388 = vsel %vm853, %v6835, -inf
        %v7389 = vrot.slane %v7388, 4
        %v7390 = vmax.f32 %v7388, %v7389
        %v7391 = vrot.slane %v7390, 2
        %v7392 = vmax.f32 %v7390, %v7391
        %v7393 = vrot.slane %v7392, 1
        %v7394 = vmax.f32 %v7392, %v7393
        %v7395 = vsel %vm853, %v6921, -inf
        %v7396 = vrot.slane %v7395, 4
        %v7397 = vmax.f32 %v7395, %v7396
        %v7398 = vrot.slane %v7397, 2
        %v7399 = vmax.f32 %v7397, %v7398
        %v7400 = vrot.slane %v7399, 1
        %v7401 = vmax.f32 %v7399, %v7400
        %v7402 = vsel %vm853, %v6922, -inf
        %v7403 = vrot.slane %v7402, 4
        %v7404 = vmax.f32 %v7402, %v7403
        %v7405 = vrot.slane %v7404, 2
        %v7406 = vmax.f32 %v7404, %v7405
        %v7407 = vrot.slane %v7406, 1
        %v7408 = vmax.f32 %v7406, %v7407
        %v7409 = vsel %vm853, %v6923, -inf
        %v7410 = vrot.slane %v7409, 4
        %v7411 = vmax.f32 %v7409, %v7410
        %v7412 = vrot.slane %v7411, 2
        %v7413 = vmax.f32 %v7411, %v7412
        %v7414 = vrot.slane %v7413, 1
        %v7415 = vmax.f32 %v7413, %v7414
        %v7416 = vsel %vm853, %v6836, -inf
        %v7417 = vrot.slane %v7416, 4
        %v7418 = vmax.f32 %v7416, %v7417
        %v7419 = vrot.slane %v7418, 2
        %v7420 = vmax.f32 %v7418, %v7419
        %v7421 = vrot.slane %v7420, 1
        %v7422 = vmax.f32 %v7420, %v7421
        %v7423 = vsel %vm853, %v6924, -inf
        %v7424 = vrot.slane %v7423, 4
        %v7425 = vmax.f32 %v7423, %v7424
        %v7426 = vrot.slane %v7425, 2
        %v7427 = vmax.f32 %v7425, %v7426
        %v7428 = vrot.slane %v7427, 1
        %v7429 = vmax.f32 %v7427, %v7428
        %v7430 = vsel %vm853, %v6925, -inf
        %v7431 = vrot.slane %v7430, 4
        %v7432 = vmax.f32 %v7430, %v7431
        %v7433 = vrot.slane %v7432, 2
        %v7434 = vmax.f32 %v7432, %v7433
        %v7435 = vrot.slane %v7434, 1
        %v7436 = vmax.f32 %v7434, %v7435
        %v7437 = vsel %vm853, %v6926, -inf
        %v7438 = vrot.slane %v7437, 4
        %v7439 = vmax.f32 %v7437, %v7438
        %v7440 = vrot.slane %v7439, 2
        %v7441 = vmax.f32 %v7439, %v7440
        %v7442 = vrot.slane %v7441, 1
        %v7443 = vmax.f32 %v7441, %v7442
        %v7444 = vsel %vm853, %v6837, -inf
        %v7445 = vrot.slane %v7444, 4
        %v7446 = vmax.f32 %v7444, %v7445
        %v7447 = vrot.slane %v7446, 2
        %v7448 = vmax.f32 %v7446, %v7447
        %v7449 = vrot.slane %v7448, 1
        %v7450 = vmax.f32 %v7448, %v7449
        %v7451 = vsel %vm853, %v6927, -inf
        %v7452 = vrot.slane %v7451, 4
        %v7453 = vmax.f32 %v7451, %v7452
        %v7454 = vrot.slane %v7453, 2
        %v7455 = vmax.f32 %v7453, %v7454
        %v7456 = vrot.slane %v7455, 1
        %v7457 = vmax.f32 %v7455, %v7456
        %v7458 = vsel %vm853, %v6928, -inf
        %v7459 = vrot.slane %v7458, 4
        %v7460 = vmax.f32 %v7458, %v7459
        %v7461 = vrot.slane %v7460, 2
        %v7462 = vmax.f32 %v7460, %v7461
        %v7463 = vrot.slane %v7462, 1
        %v7464 = vmax.f32 %v7462, %v7463
        %v7465 = vsel %vm853, %v6929, -inf
        %v7466 = vrot.slane %v7465, 4
        %v7467 = vmax.f32 %v7465, %v7466
        %v7468 = vrot.slane %v7467, 2
        %v7469 = vmax.f32 %v7467, %v7468
        %v7470 = vrot.slane %v7469, 1
        %v7471 = vmax.f32 %v7469, %v7470
        %v7472 = vsel %vm853, %v6838, -inf
        %v7473 = vrot.slane %v7472, 4
        %v7474 = vmax.f32 %v7472, %v7473
        %v7475 = vrot.slane %v7474, 2
        %v7476 = vmax.f32 %v7474, %v7475
        %v7477 = vrot.slane %v7476, 1
        %v7478 = vmax.f32 %v7476, %v7477
        %v7479 = vsel %vm853, %v6930, -inf
        %v7480 = vrot.slane %v7479, 4
        %v7481 = vmax.f32 %v7479, %v7480
        %v7482 = vrot.slane %v7481, 2
        %v7483 = vmax.f32 %v7481, %v7482
        %v7484 = vrot.slane %v7483, 1
        %v7485 = vmax.f32 %v7483, %v7484
        %v7486 = vsel %vm853, %v6931, -inf
        %v7487 = vrot.slane %v7486, 4
        %v7488 = vmax.f32 %v7486, %v7487
        %v7489 = vrot.slane %v7488, 2
        %v7490 = vmax.f32 %v7488, %v7489
        %v7491 = vrot.slane %v7490, 1
        %v7492 = vmax.f32 %v7490, %v7491
        %v7493 = vsel %vm853, %v6932, -inf
        %v7494 = vrot.slane %v7493, 4
        %v7495 = vmax.f32 %v7493, %v7494
        %v7496 = vrot.slane %v7495, 2
        %v7497 = vmax.f32 %v7495, %v7496
        %v7498 = vrot.slane %v7497, 1
        %v7499 = vmax.f32 %v7497, %v7498
        %v7500 = vsel %vm853, %v6839, -inf
        %v7501 = vrot.slane %v7500, 4
        %v7502 = vmax.f32 %v7500, %v7501
        %v7503 = vrot.slane %v7502, 2
        %v7504 = vmax.f32 %v7502, %v7503
        %v7505 = vrot.slane %v7504, 1
        %v7506 = vmax.f32 %v7504, %v7505
        %v7507 = vsel %vm853, %v6933, -inf
        %v7508 = vrot.slane %v7507, 4
        %v7509 = vmax.f32 %v7507, %v7508
        %v7510 = vrot.slane %v7509, 2
        %v7511 = vmax.f32 %v7509, %v7510
        %v7512 = vrot.slane %v7511, 1
        %v7513 = vmax.f32 %v7511, %v7512
        %v7514 = vsel %vm853, %v6934, -inf
        %v7515 = vrot.slane %v7514, 4
        %v7516 = vmax.f32 %v7514, %v7515
        %v7517 = vrot.slane %v7516, 2
        %v7518 = vmax.f32 %v7516, %v7517
        %v7519 = vrot.slane %v7518, 1
        %v7520 = vmax.f32 %v7518, %v7519
        %v7521 = vsel %vm853, %v6935, -inf
        %v7522 = vrot.slane %v7521, 4
        %v7523 = vmax.f32 %v7521, %v7522
        %v7524 = vrot.slane %v7523, 2
        %v7525 = vmax.f32 %v7523, %v7524
        %v7526 = vrot.slane %v7525, 1
        %v7527 = vmax.f32 %v7525, %v7526
        %v7528 = vsel %vm853, %v6840, -inf
        %v7529 = vrot.slane %v7528, 4
        %v7530 = vmax.f32 %v7528, %v7529
        %v7531 = vrot.slane %v7530, 2
        %v7532 = vmax.f32 %v7530, %v7531
        %v7533 = vrot.slane %v7532, 1
        %v7534 = vmax.f32 %v7532, %v7533
        %v7535 = vsel %vm853, %v6936, -inf
        %v7536 = vrot.slane %v7535, 4
        %v7537 = vmax.f32 %v7535, %v7536
        %v7538 = vrot.slane %v7537, 2
        %v7539 = vmax.f32 %v7537, %v7538
        %v7540 = vrot.slane %v7539, 1
        %v7541 = vmax.f32 %v7539, %v7540
        %v7542 = vsel %vm853, %v6937, -inf
        %v7543 = vrot.slane %v7542, 4
        %v7544 = vmax.f32 %v7542, %v7543
        %v7545 = vrot.slane %v7544, 2
        %v7546 = vmax.f32 %v7544, %v7545
        %v7547 = vrot.slane %v7546, 1
        %v7548 = vmax.f32 %v7546, %v7547
        %v7549 = vsel %vm853, %v6938, -inf
        %v7550 = vrot.slane %v7549, 4
        %v7551 = vmax.f32 %v7549, %v7550
        %v7552 = vrot.slane %v7551, 2
        %v7553 = vmax.f32 %v7551, %v7552
        %v7554 = vrot.slane %v7553, 1
        %v7555 = vmax.f32 %v7553, %v7554
        %v7556 = vsel %vm853, %v6841, -inf
        %v7557 = vrot.slane %v7556, 4
        %v7558 = vmax.f32 %v7556, %v7557
        %v7559 = vrot.slane %v7558, 2
        %v7560 = vmax.f32 %v7558, %v7559
        %v7561 = vrot.slane %v7560, 1
        %v7562 = vmax.f32 %v7560, %v7561
        %v7563 = vsel %vm853, %v6939, -inf
        %v7564 = vrot.slane %v7563, 4
        %v7565 = vmax.f32 %v7563, %v7564
        %v7566 = vrot.slane %v7565, 2
        %v7567 = vmax.f32 %v7565, %v7566
        %v7568 = vrot.slane %v7567, 1
        %v7569 = vmax.f32 %v7567, %v7568
        %v7570 = vsel %vm853, %v6940, -inf
        %v7571 = vrot.slane %v7570, 4
        %v7572 = vmax.f32 %v7570, %v7571
        %v7573 = vrot.slane %v7572, 2
        %v7574 = vmax.f32 %v7572, %v7573
        %v7575 = vrot.slane %v7574, 1
        %v7576 = vmax.f32 %v7574, %v7575
        %v7577 = vsel %vm853, %v6941, -inf
        %v7578 = vrot.slane %v7577, 4
        %v7579 = vmax.f32 %v7577, %v7578
        %v7580 = vrot.slane %v7579, 2
        %v7581 = vmax.f32 %v7579, %v7580
        %v7582 = vrot.slane %v7581, 1
        %v7583 = vmax.f32 %v7581, %v7582
        %v7584 = vsel %vm853, %v6842, -inf
        %v7585 = vrot.slane %v7584, 4
        %v7586 = vmax.f32 %v7584, %v7585
        %v7587 = vrot.slane %v7586, 2
        %v7588 = vmax.f32 %v7586, %v7587
        %v7589 = vrot.slane %v7588, 1
        %v7590 = vmax.f32 %v7588, %v7589
        %v7591 = vsel %vm853, %v6942, -inf
        %v7592 = vrot.slane %v7591, 4
        %v7593 = vmax.f32 %v7591, %v7592
        %v7594 = vrot.slane %v7593, 2
        %v7595 = vmax.f32 %v7593, %v7594
        %v7596 = vrot.slane %v7595, 1
        %v7597 = vmax.f32 %v7595, %v7596
        %v7598 = vsel %vm853, %v6943, -inf
        %v7599 = vrot.slane %v7598, 4
        %v7600 = vmax.f32 %v7598, %v7599
        %v7601 = vrot.slane %v7600, 2
        %v7602 = vmax.f32 %v7600, %v7601
        %v7603 = vrot.slane %v7602, 1
        %v7604 = vmax.f32 %v7602, %v7603
        %v7605 = vsel %vm853, %v6944, -inf
        %v7606 = vrot.slane %v7605, 4
        %v7607 = vmax.f32 %v7605, %v7606
        %v7608 = vrot.slane %v7607, 2
        %v7609 = vmax.f32 %v7607, %v7608
        %v7610 = vrot.slane %v7609, 1
        %v7611 = vmax.f32 %v7609, %v7610
        %v7612 = vsel %vm853, %v6843, -inf
        %v7613 = vrot.slane %v7612, 4
        %v7614 = vmax.f32 %v7612, %v7613
        %v7615 = vrot.slane %v7614, 2
        %v7616 = vmax.f32 %v7614, %v7615
        %v7617 = vrot.slane %v7616, 1
        %v7618 = vmax.f32 %v7616, %v7617
        %v7619 = vsel %vm853, %v6945, -inf
        %v7620 = vrot.slane %v7619, 4
        %v7621 = vmax.f32 %v7619, %v7620
        %v7622 = vrot.slane %v7621, 2
        %v7623 = vmax.f32 %v7621, %v7622
        %v7624 = vrot.slane %v7623, 1
        %v7625 = vmax.f32 %v7623, %v7624
        %v7626 = vsel %vm853, %v6946, -inf
        %v7627 = vrot.slane %v7626, 4
        %v7628 = vmax.f32 %v7626, %v7627
        %v7629 = vrot.slane %v7628, 2
        %v7630 = vmax.f32 %v7628, %v7629
        %v7631 = vrot.slane %v7630, 1
        %v7632 = vmax.f32 %v7630, %v7631
        %v7633 = vsel %vm853, %v6947, -inf
        %v7634 = vrot.slane %v7633, 4
        %v7635 = vmax.f32 %v7633, %v7634
        %v7636 = vrot.slane %v7635, 2
        %v7637 = vmax.f32 %v7635, %v7636
        %v7638 = vrot.slane %v7637, 1
        %v7639 = vmax.f32 %v7637, %v7638
        %v7640 = vsel %vm853, %v6844, -inf
        %v7641 = vrot.slane %v7640, 4
        %v7642 = vmax.f32 %v7640, %v7641
        %v7643 = vrot.slane %v7642, 2
        %v7644 = vmax.f32 %v7642, %v7643
        %v7645 = vrot.slane %v7644, 1
        %v7646 = vmax.f32 %v7644, %v7645
        %v7647 = vsel %vm853, %v6948, -inf
        %v7648 = vrot.slane %v7647, 4
        %v7649 = vmax.f32 %v7647, %v7648
        %v7650 = vrot.slane %v7649, 2
        %v7651 = vmax.f32 %v7649, %v7650
        %v7652 = vrot.slane %v7651, 1
        %v7653 = vmax.f32 %v7651, %v7652
        %v7654 = vsel %vm853, %v6949, -inf
        %v7655 = vrot.slane %v7654, 4
        %v7656 = vmax.f32 %v7654, %v7655
        %v7657 = vrot.slane %v7656, 2
        %v7658 = vmax.f32 %v7656, %v7657
        %v7659 = vrot.slane %v7658, 1
        %v7660 = vmax.f32 %v7658, %v7659
        %v7661 = vsel %vm853, %v6950, -inf
        %v7662 = vrot.slane %v7661, 4
        %v7663 = vmax.f32 %v7661, %v7662
        %v7664 = vrot.slane %v7663, 2
        %v7665 = vmax.f32 %v7663, %v7664
        %v7666 = vrot.slane %v7665, 1
        %v7667 = vmax.f32 %v7665, %v7666
        %v7668 = vsel %vm853, %v6845, -inf
        %v7669 = vrot.slane %v7668, 4
        %v7670 = vmax.f32 %v7668, %v7669
        %v7671 = vrot.slane %v7670, 2
        %v7672 = vmax.f32 %v7670, %v7671
        %v7673 = vrot.slane %v7672, 1
        %v7674 = vmax.f32 %v7672, %v7673
        %v7675 = vsel %vm853, %v6951, -inf
        %v7676 = vrot.slane %v7675, 4
        %v7677 = vmax.f32 %v7675, %v7676
        %v7678 = vrot.slane %v7677, 2
        %v7679 = vmax.f32 %v7677, %v7678
        %v7680 = vrot.slane %v7679, 1
        %v7681 = vmax.f32 %v7679, %v7680
        %v7682 = vsel %vm853, %v6952, -inf
        %v7683 = vrot.slane %v7682, 4
        %v7684 = vmax.f32 %v7682, %v7683
        %v7685 = vrot.slane %v7684, 2
        %v7686 = vmax.f32 %v7684, %v7685
        %v7687 = vrot.slane %v7686, 1
        %v7688 = vmax.f32 %v7686, %v7687
        %v7689 = vsel %vm853, %v6953, -inf
        %v7690 = vrot.slane %v7689, 4
        %v7691 = vmax.f32 %v7689, %v7690
        %v7692 = vrot.slane %v7691, 2
        %v7693 = vmax.f32 %v7691, %v7692
        %v7694 = vrot.slane %v7693, 1
        %v7695 = vmax.f32 %v7693, %v7694
        %v7696 = vsel %vm853, %v6846, -inf
        %v7697 = vrot.slane %v7696, 4
        %v7698 = vmax.f32 %v7696, %v7697
        %v7699 = vrot.slane %v7698, 2
        %v7700 = vmax.f32 %v7698, %v7699
        %v7701 = vrot.slane %v7700, 1
        %v7702 = vmax.f32 %v7700, %v7701
        %v7703 = vsel %vm853, %v6954, -inf
        %v7704 = vrot.slane %v7703, 4
        %v7705 = vmax.f32 %v7703, %v7704
        %v7706 = vrot.slane %v7705, 2
        %v7707 = vmax.f32 %v7705, %v7706
        %v7708 = vrot.slane %v7707, 1
        %v7709 = vmax.f32 %v7707, %v7708
        %v7710 = vsel %vm853, %v6955, -inf
        %v7711 = vrot.slane %v7710, 4
        %v7712 = vmax.f32 %v7710, %v7711
        %v7713 = vrot.slane %v7712, 2
        %v7714 = vmax.f32 %v7712, %v7713
        %v7715 = vrot.slane %v7714, 1
        %v7716 = vmax.f32 %v7714, %v7715
        %v7717 = vsel %vm853, %v6956, -inf
        %v7718 = vrot.slane %v7717, 4
        %v7719 = vmax.f32 %v7717, %v7718
        %v7720 = vrot.slane %v7719, 2
        %v7721 = vmax.f32 %v7719, %v7720
        %v7722 = vrot.slane %v7721, 1
        %v7723 = vmax.f32 %v7721, %v7722
        %v7724 = vsel %vm853, %v6847, -inf
        %v7725 = vrot.slane %v7724, 4
        %v7726 = vmax.f32 %v7724, %v7725
        %v7727 = vrot.slane %v7726, 2
        %v7728 = vmax.f32 %v7726, %v7727
        %v7729 = vrot.slane %v7728, 1
        %v7730 = vmax.f32 %v7728, %v7729
        %v7731 = vsel %vm853, %v6957, -inf
        %v7732 = vrot.slane %v7731, 4
        %v7733 = vmax.f32 %v7731, %v7732
        %v7734 = vrot.slane %v7733, 2
        %v7735 = vmax.f32 %v7733, %v7734
        %v7736 = vrot.slane %v7735, 1
        %v7737 = vmax.f32 %v7735, %v7736
        %v7738 = vsel %vm853, %v6958, -inf
        %v7739 = vrot.slane %v7738, 4
        %v7740 = vmax.f32 %v7738, %v7739
        %v7741 = vrot.slane %v7740, 2
        %v7742 = vmax.f32 %v7740, %v7741
        %v7743 = vrot.slane %v7742, 1
        %v7744 = vmax.f32 %v7742, %v7743
        %v7745 = vsel %vm853, %v6959, -inf
        %v7746 = vrot.slane %v7745, 4
        %v7747 = vmax.f32 %v7745, %v7746
        %v7748 = vrot.slane %v7747, 2
        %v7749 = vmax.f32 %v7747, %v7748
        %v7750 = vrot.slane %v7749, 1
        %v7751 = vmax.f32 %v7749, %v7750
        %v7752 = vsel %vm853, %v6848, -inf
        %v7753 = vrot.slane %v7752, 4
        %v7754 = vmax.f32 %v7752, %v7753
        %v7755 = vrot.slane %v7754, 2
        %v7756 = vmax.f32 %v7754, %v7755
        %v7757 = vrot.slane %v7756, 1
        %v7758 = vmax.f32 %v7756, %v7757
        %v7759 = vsel %vm853, %v6960, -inf
        %v7760 = vrot.slane %v7759, 4
        %v7761 = vmax.f32 %v7759, %v7760
        %v7762 = vrot.slane %v7761, 2
        %v7763 = vmax.f32 %v7761, %v7762
        %v7764 = vrot.slane %v7763, 1
        %v7765 = vmax.f32 %v7763, %v7764
        %v7766 = vsel %vm853, %v6961, -inf
        %v7767 = vrot.slane %v7766, 4
        %v7768 = vmax.f32 %v7766, %v7767
        %v7769 = vrot.slane %v7768, 2
        %v7770 = vmax.f32 %v7768, %v7769
        %v7771 = vrot.slane %v7770, 1
        %v7772 = vmax.f32 %v7770, %v7771
        %v7773 = vsel %vm853, %v6962, -inf
        %v7774 = vrot.slane %v7773, 4
        %v7775 = vmax.f32 %v7773, %v7774
        %v7776 = vrot.slane %v7775, 2
        %v7777 = vmax.f32 %v7775, %v7776
        %v7778 = vrot.slane %v7777, 1
        %v7779 = vmax.f32 %v7777, %v7778
        %v7780 = vsel %vm853, %v6849, -inf
        %v7781 = vrot.slane %v7780, 4
        %v7782 = vmax.f32 %v7780, %v7781
        %v7783 = vrot.slane %v7782, 2
        %v7784 = vmax.f32 %v7782, %v7783
        %v7785 = vrot.slane %v7784, 1
        %v7786 = vmax.f32 %v7784, %v7785
        %v7787 = vsel %vm853, %v6963, -inf
        %v7788 = vrot.slane %v7787, 4
        %v7789 = vmax.f32 %v7787, %v7788
        %v7790 = vrot.slane %v7789, 2
        %v7791 = vmax.f32 %v7789, %v7790
        %v7792 = vrot.slane %v7791, 1
        %v7793 = vmax.f32 %v7791, %v7792
        %v7794 = vsel %vm853, %v6964, -inf
        %v7795 = vrot.slane %v7794, 4
        %v7796 = vmax.f32 %v7794, %v7795
        %v7797 = vrot.slane %v7796, 2
        %v7798 = vmax.f32 %v7796, %v7797
        %v7799 = vrot.slane %v7798, 1
        %v7800 = vmax.f32 %v7798, %v7799
        %v7801 = vsel %vm853, %v6965, -inf
        %v7802 = vrot.slane %v7801, 4
        %v7803 = vmax.f32 %v7801, %v7802
        %v7804 = vrot.slane %v7803, 2
        %v7805 = vmax.f32 %v7803, %v7804
        %v7806 = vrot.slane %v7805, 1
        %v7807 = vmax.f32 %v7805, %v7806
        %v7808 = vsel %vm853, %v6850, -inf
        %v7809 = vrot.slane %v7808, 4
        %v7810 = vmax.f32 %v7808, %v7809
        %v7811 = vrot.slane %v7810, 2
        %v7812 = vmax.f32 %v7810, %v7811
        %v7813 = vrot.slane %v7812, 1
        %v7814 = vmax.f32 %v7812, %v7813
        %v7815 = vsel %vm853, %v6966, -inf
        %v7816 = vrot.slane %v7815, 4
        %v7817 = vmax.f32 %v7815, %v7816
        %v7818 = vrot.slane %v7817, 2
        %v7819 = vmax.f32 %v7817, %v7818
        %v7820 = vrot.slane %v7819, 1
        %v7821 = vmax.f32 %v7819, %v7820
        %v7822 = vsel %vm853, %v6967, -inf
        %v7823 = vrot.slane %v7822, 4
        %v7824 = vmax.f32 %v7822, %v7823
        %v7825 = vrot.slane %v7824, 2
        %v7826 = vmax.f32 %v7824, %v7825
        %v7827 = vrot.slane %v7826, 1
        %v7828 = vmax.f32 %v7826, %v7827
        %v7829 = vsel %vm853, %v6968, -inf
        %v7830 = vrot.slane %v7829, 4
        %v7831 = vmax.f32 %v7829, %v7830
        %v7832 = vrot.slane %v7831, 2
        %v7833 = vmax.f32 %v7831, %v7832
        %v7834 = vrot.slane %v7833, 1
        %v7835 = vmax.f32 %v7833, %v7834
        %v7836 = vsel %vm853, %v6851, -inf
        %v7837 = vrot.slane %v7836, 4
        %v7838 = vmax.f32 %v7836, %v7837
        %v7839 = vrot.slane %v7838, 2
        %v7840 = vmax.f32 %v7838, %v7839
        %v7841 = vrot.slane %v7840, 1
        %v7842 = vmax.f32 %v7840, %v7841
        %v7843 = vsel %vm853, %v6969, -inf
        %v7844 = vrot.slane %v7843, 4
        %v7845 = vmax.f32 %v7843, %v7844
        %v7846 = vrot.slane %v7845, 2
        %v7847 = vmax.f32 %v7845, %v7846
        %v7848 = vrot.slane %v7847, 1
        %v7849 = vmax.f32 %v7847, %v7848
        %v7850 = vsel %vm853, %v6970, -inf
        %v7851 = vrot.slane %v7850, 4
        %v7852 = vmax.f32 %v7850, %v7851
        %v7853 = vrot.slane %v7852, 2
        %v7854 = vmax.f32 %v7852, %v7853
        %v7855 = vrot.slane %v7854, 1
        %v7856 = vmax.f32 %v7854, %v7855
        %v7857 = vsel %vm853, %v6971, -inf
        %v7858 = vrot.slane %v7857, 4
        %v7859 = vmax.f32 %v7857, %v7858
        %v7860 = vrot.slane %v7859, 2
        %v7861 = vmax.f32 %v7859, %v7860
        %v7862 = vrot.slane %v7861, 1
        %v7863 = vmax.f32 %v7861, %v7862
        %v7864 = vsel %vm853, %v6852, -inf
        %v7865 = vrot.slane %v7864, 4
        %v7866 = vmax.f32 %v7864, %v7865
        %v7867 = vrot.slane %v7866, 2
        %v7868 = vmax.f32 %v7866, %v7867
        %v7869 = vrot.slane %v7868, 1
        %v7870 = vmax.f32 %v7868, %v7869
        %v7871 = vsel %vm853, %v6972, -inf
        %v7872 = vrot.slane %v7871, 4
        %v7873 = vmax.f32 %v7871, %v7872
        %v7874 = vrot.slane %v7873, 2
        %v7875 = vmax.f32 %v7873, %v7874
        %v7876 = vrot.slane %v7875, 1
        %v7877 = vmax.f32 %v7875, %v7876
        %v7878 = vsel %vm853, %v6973, -inf
        %v7879 = vrot.slane %v7878, 4
        %v7880 = vmax.f32 %v7878, %v7879
        %v7881 = vrot.slane %v7880, 2
        %v7882 = vmax.f32 %v7880, %v7881
        %v7883 = vrot.slane %v7882, 1
        %v7884 = vmax.f32 %v7882, %v7883
        %v7885 = vsel %vm853, %v6974, -inf
        %v7886 = vrot.slane %v7885, 4
        %v7887 = vmax.f32 %v7885, %v7886
        %v7888 = vrot.slane %v7887, 2
        %v7889 = vmax.f32 %v7887, %v7888
        %v7890 = vrot.slane %v7889, 1
        %v7891 = vmax.f32 %v7889, %v7890
        %v7892 = vsel %vm853, %v6853, -inf
        %v7893 = vrot.slane %v7892, 4
        %v7894 = vmax.f32 %v7892, %v7893
        %v7895 = vrot.slane %v7894, 2
        %v7896 = vmax.f32 %v7894, %v7895
        %v7897 = vrot.slane %v7896, 1
        %v7898 = vmax.f32 %v7896, %v7897
        %v7899 = vsel %vm853, %v6975, -inf
        %v7900 = vrot.slane %v7899, 4
        %v7901 = vmax.f32 %v7899, %v7900
        %v7902 = vrot.slane %v7901, 2
        %v7903 = vmax.f32 %v7901, %v7902
        %v7904 = vrot.slane %v7903, 1
        %v7905 = vmax.f32 %v7903, %v7904
        %v7906 = vsel %vm853, %v6976, -inf
        %v7907 = vrot.slane %v7906, 4
        %v7908 = vmax.f32 %v7906, %v7907
        %v7909 = vrot.slane %v7908, 2
        %v7910 = vmax.f32 %v7908, %v7909
        %v7911 = vrot.slane %v7910, 1
        %v7912 = vmax.f32 %v7910, %v7911
        %v7913 = vsel %vm853, %v6977, -inf
        %v7914 = vrot.slane %v7913, 4
        %v7915 = vmax.f32 %v7913, %v7914
        %v7916 = vrot.slane %v7915, 2
        %v7917 = vmax.f32 %v7915, %v7916
        %v7918 = vrot.slane %v7917, 1
        %v7919 = vmax.f32 %v7917, %v7918
        %v7920 = vsel %vm853, %v6854, -inf
        %v7921 = vrot.slane %v7920, 4
        %v7922 = vmax.f32 %v7920, %v7921
        %v7923 = vrot.slane %v7922, 2
        %v7924 = vmax.f32 %v7922, %v7923
        %v7925 = vrot.slane %v7924, 1
        %v7926 = vmax.f32 %v7924, %v7925
        %v7927 = vsel %vm853, %v6978, -inf
        %v7928 = vrot.slane %v7927, 4
        %v7929 = vmax.f32 %v7927, %v7928
        %v7930 = vrot.slane %v7929, 2
        %v7931 = vmax.f32 %v7929, %v7930
        %v7932 = vrot.slane %v7931, 1
        %v7933 = vmax.f32 %v7931, %v7932
        %v7934 = vsel %vm853, %v6979, -inf
        %v7935 = vrot.slane %v7934, 4
        %v7936 = vmax.f32 %v7934, %v7935
        %v7937 = vrot.slane %v7936, 2
        %v7938 = vmax.f32 %v7936, %v7937
        %v7939 = vrot.slane %v7938, 1
        %v7940 = vmax.f32 %v7938, %v7939
        %v7941 = vsel %vm853, %v6980, -inf
        %v7942 = vrot.slane %v7941, 4
        %v7943 = vmax.f32 %v7941, %v7942
        %v7944 = vrot.slane %v7943, 2
        %v7945 = vmax.f32 %v7943, %v7944
        %v7946 = vrot.slane %v7945, 1
        %v7947 = vmax.f32 %v7945, %v7946
        %v7948 = vsel %vm853, %v6855, -inf
        %v7949 = vrot.slane %v7948, 4
        %v7950 = vmax.f32 %v7948, %v7949
        %v7951 = vrot.slane %v7950, 2
        %v7952 = vmax.f32 %v7950, %v7951
        %v7953 = vrot.slane %v7952, 1
        %v7954 = vmax.f32 %v7952, %v7953
        %v7955 = vsel %vm853, %v6981, -inf
        %v7956 = vrot.slane %v7955, 4
        %v7957 = vmax.f32 %v7955, %v7956
        %v7958 = vrot.slane %v7957, 2
        %v7959 = vmax.f32 %v7957, %v7958
        %v7960 = vrot.slane %v7959, 1
        %v7961 = vmax.f32 %v7959, %v7960
        %v7962 = vsel %vm853, %v6982, -inf
        %v7963 = vrot.slane %v7962, 4
        %v7964 = vmax.f32 %v7962, %v7963
        %v7965 = vrot.slane %v7964, 2
        %v7966 = vmax.f32 %v7964, %v7965
        %v7967 = vrot.slane %v7966, 1
        %v7968 = vmax.f32 %v7966, %v7967
        %v7969 = vsel %vm853, %v6983, -inf
        %v7970 = vrot.slane %v7969, 4
        %v7971 = vmax.f32 %v7969, %v7970
        %v7972 = vrot.slane %v7971, 2
        %v7973 = vmax.f32 %v7971, %v7972
        %v7974 = vrot.slane %v7973, 1
        %v7975 = vmax.f32 %v7973, %v7974
        %v7976 = vsel %vm850, %v7086, -inf
        %v7977 = vsel %vm850, %v7142, -inf
        %v7978 = vmax.f32 %v7976, %v7977
        %v7979 = vsel %vm850, %v7093, -inf
        %v7980 = vsel %vm850, %v7149, -inf
        %v7981 = vmax.f32 %v7979, %v7980
        %v7982 = vsel %vm850, %v7100, -inf
        %v7983 = vsel %vm850, %v7156, -inf
        %v7984 = vmax.f32 %v7982, %v7983
        %v7985 = vsel %vm850, %v7107, -inf
        %v7986 = vsel %vm850, %v7163, -inf
        %v7987 = vmax.f32 %v7985, %v7986
        %v7988 = vsel %vm850, %v7114, -inf
        %v7989 = vsel %vm850, %v7170, -inf
        %v7990 = vmax.f32 %v7988, %v7989
        %v7991 = vsel %vm850, %v7121, -inf
        %v7992 = vsel %vm850, %v7177, -inf
        %v7993 = vmax.f32 %v7991, %v7992
        %v7994 = vsel %vm850, %v7128, -inf
        %v7995 = vsel %vm850, %v7184, -inf
        %v7996 = vmax.f32 %v7994, %v7995
        %v7997 = vsel %vm850, %v7135, -inf
        %v7998 = vsel %vm850, %v7191, -inf
        %v7999 = vmax.f32 %v7997, %v7998
        %v8000 = vsel %vm850, %v7198, -inf
        %v8001 = vsel %vm850, %v7254, -inf
        %v8002 = vmax.f32 %v8000, %v8001
        %v8003 = vsel %vm850, %v7205, -inf
        %v8004 = vsel %vm850, %v7261, -inf
        %v8005 = vmax.f32 %v8003, %v8004
        %v8006 = vsel %vm850, %v7212, -inf
        %v8007 = vsel %vm850, %v7268, -inf
        %v8008 = vmax.f32 %v8006, %v8007
        %v8009 = vsel %vm850, %v7219, -inf
        %v8010 = vsel %vm850, %v7275, -inf
        %v8011 = vmax.f32 %v8009, %v8010
        %v8012 = vsel %vm850, %v7226, -inf
        %v8013 = vsel %vm850, %v7282, -inf
        %v8014 = vmax.f32 %v8012, %v8013
        %v8015 = vsel %vm850, %v7233, -inf
        %v8016 = vsel %vm850, %v7289, -inf
        %v8017 = vmax.f32 %v8015, %v8016
        %v8018 = vsel %vm850, %v7240, -inf
        %v8019 = vsel %vm850, %v7296, -inf
        %v8020 = vmax.f32 %v8018, %v8019
        %v8021 = vsel %vm850, %v7247, -inf
        %v8022 = vsel %vm850, %v7303, -inf
        %v8023 = vmax.f32 %v8021, %v8022
        %v8024 = vsel %vm850, %v7310, -inf
        %v8025 = vsel %vm850, %v7366, -inf
        %v8026 = vmax.f32 %v8024, %v8025
        %v8027 = vsel %vm850, %v7317, -inf
        %v8028 = vsel %vm850, %v7373, -inf
        %v8029 = vmax.f32 %v8027, %v8028
        %v8030 = vsel %vm850, %v7324, -inf
        %v8031 = vsel %vm850, %v7380, -inf
        %v8032 = vmax.f32 %v8030, %v8031
        %v8033 = vsel %vm850, %v7331, -inf
        %v8034 = vsel %vm850, %v7387, -inf
        %v8035 = vmax.f32 %v8033, %v8034
        %v8036 = vsel %vm850, %v7338, -inf
        %v8037 = vsel %vm850, %v7394, -inf
        %v8038 = vmax.f32 %v8036, %v8037
        %v8039 = vsel %vm850, %v7345, -inf
        %v8040 = vsel %vm850, %v7401, -inf
        %v8041 = vmax.f32 %v8039, %v8040
        %v8042 = vsel %vm850, %v7352, -inf
        %v8043 = vsel %vm850, %v7408, -inf
        %v8044 = vmax.f32 %v8042, %v8043
        %v8045 = vsel %vm850, %v7359, -inf
        %v8046 = vsel %vm850, %v7415, -inf
        %v8047 = vmax.f32 %v8045, %v8046
        %v8048 = vsel %vm850, %v7422, -inf
        %v8049 = vsel %vm850, %v7478, -inf
        %v8050 = vmax.f32 %v8048, %v8049
        %v8051 = vsel %vm850, %v7429, -inf
        %v8052 = vsel %vm850, %v7485, -inf
        %v8053 = vmax.f32 %v8051, %v8052
        %v8054 = vsel %vm850, %v7436, -inf
        %v8055 = vsel %vm850, %v7492, -inf
        %v8056 = vmax.f32 %v8054, %v8055
        %v8057 = vsel %vm850, %v7443, -inf
        %v8058 = vsel %vm850, %v7499, -inf
        %v8059 = vmax.f32 %v8057, %v8058
        %v8060 = vsel %vm850, %v7450, -inf
        %v8061 = vsel %vm850, %v7506, -inf
        %v8062 = vmax.f32 %v8060, %v8061
        %v8063 = vsel %vm850, %v7457, -inf
        %v8064 = vsel %vm850, %v7513, -inf
        %v8065 = vmax.f32 %v8063, %v8064
        %v8066 = vsel %vm850, %v7464, -inf
        %v8067 = vsel %vm850, %v7520, -inf
        %v8068 = vmax.f32 %v8066, %v8067
        %v8069 = vsel %vm850, %v7471, -inf
        %v8070 = vsel %vm850, %v7527, -inf
        %v8071 = vmax.f32 %v8069, %v8070
        %v8072 = vsel %vm850, %v7534, -inf
        %v8073 = vsel %vm850, %v7590, -inf
        %v8074 = vmax.f32 %v8072, %v8073
        %v8075 = vsel %vm850, %v7541, -inf
        %v8076 = vsel %vm850, %v7597, -inf
        %v8077 = vmax.f32 %v8075, %v8076
        %v8078 = vsel %vm850, %v7548, -inf
        %v8079 = vsel %vm850, %v7604, -inf
        %v8080 = vmax.f32 %v8078, %v8079
        %v8081 = vsel %vm850, %v7555, -inf
        %v8082 = vsel %vm850, %v7611, -inf
        %v8083 = vmax.f32 %v8081, %v8082
        %v8084 = vsel %vm850, %v7562, -inf
        %v8085 = vsel %vm850, %v7618, -inf
        %v8086 = vmax.f32 %v8084, %v8085
        %v8087 = vsel %vm850, %v7569, -inf
        %v8088 = vsel %vm850, %v7625, -inf
        %v8089 = vmax.f32 %v8087, %v8088
        %v8090 = vsel %vm850, %v7576, -inf
        %v8091 = vsel %vm850, %v7632, -inf
        %v8092 = vmax.f32 %v8090, %v8091
        %v8093 = vsel %vm850, %v7583, -inf
        %v8094 = vsel %vm850, %v7639, -inf
        %v8095 = vmax.f32 %v8093, %v8094
        %v8096 = vsel %vm850, %v7646, -inf
        %v8097 = vsel %vm850, %v7702, -inf
        %v8098 = vmax.f32 %v8096, %v8097
        %v8099 = vsel %vm850, %v7653, -inf
        %v8100 = vsel %vm850, %v7709, -inf
        %v8101 = vmax.f32 %v8099, %v8100
        %v8102 = vsel %vm850, %v7660, -inf
        %v8103 = vsel %vm850, %v7716, -inf
        %v8104 = vmax.f32 %v8102, %v8103
        %v8105 = vsel %vm850, %v7667, -inf
        %v8106 = vsel %vm850, %v7723, -inf
        %v8107 = vmax.f32 %v8105, %v8106
        %v8108 = vsel %vm850, %v7674, -inf
        %v8109 = vsel %vm850, %v7730, -inf
        %v8110 = vmax.f32 %v8108, %v8109
        %v8111 = vsel %vm850, %v7681, -inf
        %v8112 = vsel %vm850, %v7737, -inf
        %v8113 = vmax.f32 %v8111, %v8112
        %v8114 = vsel %vm850, %v7688, -inf
        %v8115 = vsel %vm850, %v7744, -inf
        %v8116 = vmax.f32 %v8114, %v8115
        %v8117 = vsel %vm850, %v7695, -inf
        %v8118 = vsel %vm850, %v7751, -inf
        %v8119 = vmax.f32 %v8117, %v8118
        %v8120 = vsel %vm850, %v7758, -inf
        %v8121 = vsel %vm850, %v7814, -inf
        %v8122 = vmax.f32 %v8120, %v8121
        %v8123 = vsel %vm850, %v7765, -inf
        %v8124 = vsel %vm850, %v7821, -inf
        %v8125 = vmax.f32 %v8123, %v8124
        %v8126 = vsel %vm850, %v7772, -inf
        %v8127 = vsel %vm850, %v7828, -inf
        %v8128 = vmax.f32 %v8126, %v8127
        %v8129 = vsel %vm850, %v7779, -inf
        %v8130 = vsel %vm850, %v7835, -inf
        %v8131 = vmax.f32 %v8129, %v8130
        %v8132 = vsel %vm850, %v7786, -inf
        %v8133 = vsel %vm850, %v7842, -inf
        %v8134 = vmax.f32 %v8132, %v8133
        %v8135 = vsel %vm850, %v7793, -inf
        %v8136 = vsel %vm850, %v7849, -inf
        %v8137 = vmax.f32 %v8135, %v8136
        %v8138 = vsel %vm850, %v7800, -inf
        %v8139 = vsel %vm850, %v7856, -inf
        %v8140 = vmax.f32 %v8138, %v8139
        %v8141 = vsel %vm850, %v7807, -inf
        %v8142 = vsel %vm850, %v7863, -inf
        %v8143 = vmax.f32 %v8141, %v8142
        %v8144 = vsel %vm850, %v7870, -inf
        %v8145 = vsel %vm850, %v7926, -inf
        %v8146 = vmax.f32 %v8144, %v8145
        %v8147 = vsel %vm850, %v7877, -inf
        %v8148 = vsel %vm850, %v7933, -inf
        %v8149 = vmax.f32 %v8147, %v8148
        %v8150 = vsel %vm850, %v7884, -inf
        %v8151 = vsel %vm850, %v7940, -inf
        %v8152 = vmax.f32 %v8150, %v8151
        %v8153 = vsel %vm850, %v7891, -inf
        %v8154 = vsel %vm850, %v7947, -inf
        %v8155 = vmax.f32 %v8153, %v8154
        %v8156 = vsel %vm850, %v7898, -inf
        %v8157 = vsel %vm850, %v7954, -inf
        %v8158 = vmax.f32 %v8156, %v8157
        %v8159 = vsel %vm850, %v7905, -inf
        %v8160 = vsel %vm850, %v7961, -inf
        %v8161 = vmax.f32 %v8159, %v8160
        %v8162 = vsel %vm850, %v7912, -inf
        %v8163 = vsel %vm850, %v7968, -inf
        %v8164 = vmax.f32 %v8162, %v8163
        %v8165 = vsel %vm850, %v7919, -inf
        %v8166 = vsel %vm850, %v7975, -inf
        %v8167 = vmax.f32 %v8165, %v8166
        %v8168 = vpack.c.bf16 %v7978, %v7978
        %v8169 = vpack.c.bf16 %v7981, %v7981
        %v8170 = vpack.c.bf16 %v7984, %v7984
        %v8171 = vpack.c.bf16 %v7987, %v7987
        %v8172 = vpack.c.bf16 %v7990, %v7990
        %v8173 = vpack.c.bf16 %v7993, %v7993
        %v8174 = vpack.c.bf16 %v7996, %v7996
        %v8175 = vpack.c.bf16 %v7999, %v7999
        %v8176 = vpack.c.bf16 %v8002, %v8002
        %v8177 = vpack.c.bf16 %v8005, %v8005
        %v8178 = vpack.c.bf16 %v8008, %v8008
        %v8179 = vpack.c.bf16 %v8011, %v8011
        %v8180 = vpack.c.bf16 %v8014, %v8014
        %v8181 = vpack.c.bf16 %v8017, %v8017
        %v8182 = vpack.c.bf16 %v8020, %v8020
        %v8183 = vpack.c.bf16 %v8023, %v8023
        %v8184 = vpack.c.bf16 %v8026, %v8026
        %v8185 = vpack.c.bf16 %v8029, %v8029
        %v8186 = vpack.c.bf16 %v8032, %v8032
        %v8187 = vpack.c.bf16 %v8035, %v8035
        %v8188 = vpack.c.bf16 %v8038, %v8038
        %v8189 = vpack.c.bf16 %v8041, %v8041
        %v8190 = vpack.c.bf16 %v8044, %v8044
        %v8191 = vpack.c.bf16 %v8047, %v8047
        %v8192 = vpack.c.bf16 %v8050, %v8050
        %v8193 = vpack.c.bf16 %v8053, %v8053
        %v8194 = vpack.c.bf16 %v8056, %v8056
        %v8195 = vpack.c.bf16 %v8059, %v8059
        %v8196 = vpack.c.bf16 %v8062, %v8062
        %v8197 = vpack.c.bf16 %v8065, %v8065
        %v8198 = vpack.c.bf16 %v8068, %v8068
        %v8199 = vpack.c.bf16 %v8071, %v8071
        %v8200 = vpack.c.bf16 %v8074, %v8074
        %v8201 = vpack.c.bf16 %v8077, %v8077
        %v8202 = vpack.c.bf16 %v8080, %v8080
        %v8203 = vpack.c.bf16 %v8083, %v8083
        %v8204 = vpack.c.bf16 %v8086, %v8086
        %v8205 = vpack.c.bf16 %v8089, %v8089
        %v8206 = vpack.c.bf16 %v8092, %v8092
        %v8207 = vpack.c.bf16 %v8095, %v8095
        %v8208 = vpack.c.bf16 %v8098, %v8098
        %v8209 = vpack.c.bf16 %v8101, %v8101
        %v8210 = vpack.c.bf16 %v8104, %v8104
        %v8211 = vpack.c.bf16 %v8107, %v8107
        %v8212 = vpack.c.bf16 %v8110, %v8110
        %v8213 = vpack.c.bf16 %v8113, %v8113
        %v8214 = vpack.c.bf16 %v8116, %v8116
        %v8215 = vpack.c.bf16 %v8119, %v8119
        %v8216 = vpack.c.bf16 %v8122, %v8122
        %v8217 = vpack.c.bf16 %v8125, %v8125
        %v8218 = vpack.c.bf16 %v8128, %v8128
        %v8219 = vpack.c.bf16 %v8131, %v8131
        %v8220 = vpack.c.bf16 %v8134, %v8134
        %v8221 = vpack.c.bf16 %v8137, %v8137
        %v8222 = vpack.c.bf16 %v8140, %v8140
        %v8223 = vpack.c.bf16 %v8143, %v8143
        %v8224 = vpack.c.bf16 %v8146, %v8146
        %v8225 = vpack.c.bf16 %v8149, %v8149
        %v8226 = vpack.c.bf16 %v8152, %v8152
        %v8227 = vpack.c.bf16 %v8155, %v8155
        %v8228 = vpack.c.bf16 %v8158, %v8158
        %v8229 = vpack.c.bf16 %v8161, %v8161
        %v8230 = vpack.c.bf16 %v8164, %v8164
        %v8231 = vpack.c.bf16 %v8167, %v8167
        %v8232 = vld [vmem:[%s10] sm:$0xf]
        %v8233 = vld [vmem:[%s10 + $0x4] sm:$0xf]
        %v8234 = vld [vmem:[%s9] sm:$0x1]
        %v8236 = vperm.slane %v8234, 0
        %v8302 = vunpack.c.l.b16 %v8168
        %v8303 = vunpack.c.l.b16 %v8169
        %v8304 = vunpack.c.l.b16 %v8170
        %v8305 = vunpack.c.l.b16 %v8171
        %v8306 = vunpack.c.l.b16 %v8172
        %v8307 = vunpack.c.l.b16 %v8173
        %v8308 = vunpack.c.l.b16 %v8174
        %v8309 = vunpack.c.l.b16 %v8175
        %v8310 = vunpack.c.l.b16 %v8176
        %v8311 = vunpack.c.l.b16 %v8177
        %v8312 = vunpack.c.l.b16 %v8178
        %v8313 = vunpack.c.l.b16 %v8179
        %v8314 = vunpack.c.l.b16 %v8180
        %v8315 = vunpack.c.l.b16 %v8181
        %v8316 = vunpack.c.l.b16 %v8182
        %v8317 = vunpack.c.l.b16 %v8183
        %v8318 = vunpack.c.l.b16 %v8184
        %v8319 = vunpack.c.l.b16 %v8185
        %v8320 = vunpack.c.l.b16 %v8186
        %v8321 = vunpack.c.l.b16 %v8187
        %v8322 = vunpack.c.l.b16 %v8188
        %v8323 = vunpack.c.l.b16 %v8189
        %v8324 = vunpack.c.l.b16 %v8190
        %v8325 = vunpack.c.l.b16 %v8191
        %v8326 = vunpack.c.l.b16 %v8192
        %v8327 = vunpack.c.l.b16 %v8193
        %v8328 = vunpack.c.l.b16 %v8194
        %v8329 = vunpack.c.l.b16 %v8195
        %v8330 = vunpack.c.l.b16 %v8196
        %v8331 = vunpack.c.l.b16 %v8197
        %v8332 = vunpack.c.l.b16 %v8198
        %v8333 = vunpack.c.l.b16 %v8199
        %v8334 = vunpack.c.l.b16 %v8200
        %v8335 = vunpack.c.l.b16 %v8201
        %v8336 = vunpack.c.l.b16 %v8202
        %v8337 = vunpack.c.l.b16 %v8203
        %v8338 = vunpack.c.l.b16 %v8204
        %v8339 = vunpack.c.l.b16 %v8205
        %v8340 = vunpack.c.l.b16 %v8206
        %v8341 = vunpack.c.l.b16 %v8207
        %v8342 = vunpack.c.l.b16 %v8208
        %v8343 = vunpack.c.l.b16 %v8209
        %v8344 = vunpack.c.l.b16 %v8210
        %v8345 = vunpack.c.l.b16 %v8211
        %v8346 = vunpack.c.l.b16 %v8212
        %v8347 = vunpack.c.l.b16 %v8213
        %v8348 = vunpack.c.l.b16 %v8214
        %v8349 = vunpack.c.l.b16 %v8215
        %v8350 = vunpack.c.l.b16 %v8216
        %v8351 = vunpack.c.l.b16 %v8217
        %v8352 = vunpack.c.l.b16 %v8218
        %v8353 = vunpack.c.l.b16 %v8219
        %v8354 = vunpack.c.l.b16 %v8220
        %v8355 = vunpack.c.l.b16 %v8221
        %v8356 = vunpack.c.l.b16 %v8222
        %v8357 = vunpack.c.l.b16 %v8223
        %v8358 = vunpack.c.l.b16 %v8224
        %v8359 = vunpack.c.l.b16 %v8225
        %v8360 = vunpack.c.l.b16 %v8226
        %v8361 = vunpack.c.l.b16 %v8227
        %v8362 = vunpack.c.l.b16 %v8228
        %v8363 = vunpack.c.l.b16 %v8229
        %v8364 = vunpack.c.l.b16 %v8230
        %v8365 = vunpack.c.l.b16 %v8231
        %vm8366 = vcmask 1041409
        %v8367 = vsel %vm8366, %v8303, %v8302
        %vm8368 = vcmask 1042434
        %v8369 = vsel %vm8368, %v8304, %v8367
        %vm8370 = vcmask 1043459
        %v8371 = vsel %vm8370, %v8305, %v8369
        %vm8372 = vcmask 1044484
        %v8373 = vsel %vm8372, %v8306, %v8371
        %vm8374 = vcmask 1045509
        %v8375 = vsel %vm8374, %v8307, %v8373
        %vm8376 = vcmask 1046534
        %v8377 = vsel %vm8376, %v8308, %v8375
        %vm8378 = vcmask 1047559
        %v8379 = vsel %vm8378, %v8309, %v8377
        %v8380 = vsel %vm8366, %v8311, %v8310
        %v8381 = vsel %vm8368, %v8312, %v8380
        %v8382 = vsel %vm8370, %v8313, %v8381
        %v8383 = vsel %vm8372, %v8314, %v8382
        %v8384 = vsel %vm8374, %v8315, %v8383
        %v8385 = vsel %vm8376, %v8316, %v8384
        %v8386 = vsel %vm8378, %v8317, %v8385
        %v8387 = vsel %vm8366, %v8319, %v8318
        %v8388 = vsel %vm8368, %v8320, %v8387
        %v8389 = vsel %vm8370, %v8321, %v8388
        %v8390 = vsel %vm8372, %v8322, %v8389
        %v8391 = vsel %vm8374, %v8323, %v8390
        %v8392 = vsel %vm8376, %v8324, %v8391
        %v8393 = vsel %vm8378, %v8325, %v8392
        %v8394 = vsel %vm8366, %v8327, %v8326
        %v8395 = vsel %vm8368, %v8328, %v8394
        %v8396 = vsel %vm8370, %v8329, %v8395
        %v8397 = vsel %vm8372, %v8330, %v8396
        %v8398 = vsel %vm8374, %v8331, %v8397
        %v8399 = vsel %vm8376, %v8332, %v8398
        %v8400 = vsel %vm8378, %v8333, %v8399
        %v8401 = vsel %vm8366, %v8335, %v8334
        %v8402 = vsel %vm8368, %v8336, %v8401
        %v8403 = vsel %vm8370, %v8337, %v8402
        %v8404 = vsel %vm8372, %v8338, %v8403
        %v8405 = vsel %vm8374, %v8339, %v8404
        %v8406 = vsel %vm8376, %v8340, %v8405
        %v8407 = vsel %vm8378, %v8341, %v8406
        %v8408 = vsel %vm8366, %v8343, %v8342
        %v8409 = vsel %vm8368, %v8344, %v8408
        %v8410 = vsel %vm8370, %v8345, %v8409
        %v8411 = vsel %vm8372, %v8346, %v8410
        %v8412 = vsel %vm8374, %v8347, %v8411
        %v8413 = vsel %vm8376, %v8348, %v8412
        %v8414 = vsel %vm8378, %v8349, %v8413
        %v8415 = vsel %vm8366, %v8351, %v8350
        %v8416 = vsel %vm8368, %v8352, %v8415
        %v8417 = vsel %vm8370, %v8353, %v8416
        %v8418 = vsel %vm8372, %v8354, %v8417
        %v8419 = vsel %vm8374, %v8355, %v8418
        %v8420 = vsel %vm8376, %v8356, %v8419
        %v8421 = vsel %vm8378, %v8357, %v8420
        %v8422 = vsel %vm8366, %v8359, %v8358
        %v8423 = vsel %vm8368, %v8360, %v8422
        %v8424 = vsel %vm8370, %v8361, %v8423
        %v8425 = vsel %vm8372, %v8362, %v8424
        %v8426 = vsel %vm8374, %v8363, %v8425
        %v8427 = vsel %vm8376, %v8364, %v8426
        %v8428 = vsel %vm8378, %v8365, %v8427
        %v8429 = vpack.c.b16 %v8386, %v8379
        %v8430 = vpack.c.b16 %v8400, %v8393
        %v8431 = vpack.c.b16 %v8414, %v8407
        %v8432 = vpack.c.b16 %v8428, %v8421
        %v8435 = vunpack.c.l.b16 %v8232
        %v8436 = vunpack.c.l.b16 %v8233
        %v8437 = vpack.c.b16 %v8436, %v8435
        %v8440 = vsel %vm850, %v8429, 0
        %v8443 = vsel %vm850, %v8430, 0
        %v8446 = vsel %vm850, %v8431, 0
        %v8449 = vsel %vm850, %v8432, 0
        %8451 = vmatpush.bf16.msra.mxu0 0
        %8452 = vmatpush.bf16.msra.mxu0 0
        %8453 = vmatpush.bf16.msra.mxu0 0
        %8454 = vmatpush.bf16.msra.mxu0 0
        %8455 = vmatpush.bf16.msra.mxu0 0
        %8456 = vmatpush.bf16.msra.mxu0 0
        %8457 = vmatpush.bf16.msra.mxu0 0
        %8458 = vmatpush.bf16.msra.mxu0 %v8437
        %8459 = vmatmul.bf16.gmra.mxu0 %v8440
        %v8460 = vpop.f32.mrf.mxu0
        %v8461 = vadd.f32 %v8236, %v8460
        %v8462 = vpop.f32.mrf.mxu0
        %v8463 = vadd.f32 %v8236, %v8462
        %8464 = vmatmul.bf16.gmra.mxu0 %v8443
        %v8465 = vpop.f32.mrf.mxu0
        %v8466 = vadd.f32 %v8236, %v8465
        %v8467 = vpop.f32.mrf.mxu0
        %v8468 = vadd.f32 %v8236, %v8467
        %8469 = vmatmul.bf16.gmra.mxu0 %v8446
        %v8470 = vpop.f32.mrf.mxu0
        %v8471 = vadd.f32 %v8236, %v8470
        %v8472 = vpop.f32.mrf.mxu0
        %v8473 = vadd.f32 %v8236, %v8472
        %8474 = vmatmul.bf16.gmra.mxu0 %v8449
        %v8475 = vpop.f32.mrf.mxu0
        %v8476 = vadd.f32 %v8236, %v8475
        %v8477 = vpop.f32.mrf.mxu0
        %v8478 = vadd.f32 %v8236, %v8477
        %8479 = vdwg.mxu0
        %v8480 = vmax.f32 %v8461, 0.0
        %v8481 = vmax.f32 %v8463, 0.0
        %v8482 = vmax.f32 %v8466, 0.0
        %v8483 = vmax.f32 %v8468, 0.0
        %v8484 = vmax.f32 %v8471, 0.0
        %v8485 = vmax.f32 %v8473, 0.0
        %v8486 = vmax.f32 %v8476, 0.0
        %v8487 = vmax.f32 %v8478, 0.0
        %v8488 = vld [vmem:[%s12] sm:$0xf]
        %v8489 = vld [vmem:[%s12 + $0x4] sm:$0xf]
        %v8490 = vld [vmem:[%s11] sm:$0x1]
        %v8492 = vperm.slane %v8490, 0
        %v8496 = vunpack.c.l.b16 %v8488
        %v8497 = vunpack.c.l.b16 %v8489
        %v8498 = vpack.c.b16 %v8497, %v8496
        %8500 = vmatpush.bf16.msra.mxu0 0
        %8501 = vmatpush.bf16.msra.mxu0 0
        %8502 = vmatpush.bf16.msra.mxu0 0
        %8503 = vmatpush.bf16.msra.mxu0 0
        %8504 = vmatpush.bf16.msra.mxu0 0
        %8505 = vmatpush.bf16.msra.mxu0 0
        %8506 = vmatpush.bf16.msra.mxu0 0
        %8507 = vmatpush.bf16.msra.mxu0 %v8498
        %8508 = vmatmul.bf16.gmra.mxu0 %v8440
        %v8509 = vpop.f32.mrf.mxu0
        %v8510 = vadd.f32 %v8492, %v8509
        %v8511 = vpop.f32.mrf.mxu0
        %v8512 = vadd.f32 %v8492, %v8511
        %8513 = vmatmul.bf16.gmra.mxu0 %v8443
        %v8514 = vpop.f32.mrf.mxu0
        %v8515 = vadd.f32 %v8492, %v8514
        %v8516 = vpop.f32.mrf.mxu0
        %v8517 = vadd.f32 %v8492, %v8516
        %8518 = vmatmul.bf16.gmra.mxu0 %v8446
        %v8519 = vpop.f32.mrf.mxu0
        %v8520 = vadd.f32 %v8492, %v8519
        %v8521 = vpop.f32.mrf.mxu0
        %v8522 = vadd.f32 %v8492, %v8521
        %8523 = vmatmul.bf16.gmra.mxu0 %v8449
        %v8524 = vpop.f32.mrf.mxu0
        %v8525 = vadd.f32 %v8492, %v8524
        %v8526 = vpop.f32.mrf.mxu0
        %v8527 = vadd.f32 %v8492, %v8526
        %8528 = vdwg.mxu0
        %v8529 = vmax.f32 %v8510, 0.0
        %v8530 = vmax.f32 %v8512, 0.0
        %v8531 = vmax.f32 %v8515, 0.0
        %v8532 = vmax.f32 %v8517, 0.0
        %v8533 = vmax.f32 %v8520, 0.0
        %v8534 = vmax.f32 %v8522, 0.0
        %v8535 = vmax.f32 %v8525, 0.0
        %v8536 = vmax.f32 %v8527, 0.0
        %8537 = vst.msk [vmem:[#allocation2] sm:$0xff] %vm850, 0.0
        %8538 = vst.msk [vmem:[#allocation2 + $0x8] sm:$0xff] %vm850, 0.0
        %8539 = vst.msk [vmem:[#allocation2 + $0x10] sm:$0x3] %vm853, 0.0
        %8540 = vst.msk [vmem:[#allocation2 + $0x18] sm:$0xff] %vm850, 0.0
        %8541 = vst.msk [vmem:[#allocation2 + $0x20] sm:$0xff] %vm850, 0.0
        %8542 = vst.msk [vmem:[#allocation2 + $0x28] sm:$0x3] %vm853, 0.0
        %8543 = vst.msk [vmem:[#allocation2 + $0x30] sm:$0xff] %vm850, 0.0
        %8544 = vst.msk [vmem:[#allocation2 + $0x38] sm:$0xff] %vm850, 0.0
        %8545 = vst.msk [vmem:[#allocation2 + $0x40] sm:$0x3] %vm853, 0.0
        %8546 = vst.msk [vmem:[#allocation2 + $0x48] sm:$0xff] %vm850, 0.0
        %8547 = vst.msk [vmem:[#allocation2 + $0x50] sm:$0xff] %vm850, 0.0
        %8548 = vst.msk [vmem:[#allocation2 + $0x58] sm:$0x3] %vm853, 0.0
        %8549 = vst.msk [vmem:[#allocation2 + $0x60] sm:$0xff] %vm850, 0.0
        %8550 = vst.msk [vmem:[#allocation2 + $0x68] sm:$0xff] %vm850, 0.0
        %8551 = vst.msk [vmem:[#allocation2 + $0x70] sm:$0x3] %vm853, 0.0
        %8552 = vst.msk [vmem:[#allocation2 + $0x78] sm:$0xff] %vm850, 0.0
        %8553 = vst.msk [vmem:[#allocation2 + $0x80] sm:$0xff] %vm850, 0.0
        %8554 = vst.msk [vmem:[#allocation2 + $0x88] sm:$0x3] %vm853, 0.0
        %8555 = vst.msk [vmem:[#allocation2 + $0x90] sm:$0xff] %vm850, 0.0
        %8556 = vst.msk [vmem:[#allocation2 + $0x98] sm:$0xff] %vm850, 0.0
        %8557 = vst.msk [vmem:[#allocation2 + $0xa0] sm:$0x3] %vm853, 0.0
        %8558 = vst.msk [vmem:[#allocation2 + $0xa8] sm:$0xff] %vm850, 0.0
        %8559 = vst.msk [vmem:[#allocation2 + $0xb0] sm:$0xff] %vm850, 0.0
        %8560 = vst.msk [vmem:[#allocation2 + $0xb8] sm:$0x3] %vm853, 0.0
        %8561 = vst.msk [vmem:[#allocation2 + $0xc0] sm:$0xff] %vm850, 0.0
        %8562 = vst.msk [vmem:[#allocation2 + $0xc8] sm:$0xff] %vm850, 0.0
        %8563 = vst.msk [vmem:[#allocation2 + $0xd0] sm:$0x3] %vm853, 0.0
        %8564 = vst.msk [vmem:[#allocation2 + $0xd8] sm:$0xff] %vm850, 0.0
        %8565 = vst.msk [vmem:[#allocation2 + $0xe0] sm:$0xff] %vm850, 0.0
        %8566 = vst.msk [vmem:[#allocation2 + $0xe8] sm:$0x3] %vm853, 0.0
        %8567 = vst.msk [vmem:[#allocation2 + $0xf0] sm:$0xff] %vm850, 0.0
        %8568 = vst.msk [vmem:[#allocation2 + $0xf8] sm:$0xff] %vm850, 0.0
        %8569 = vst.msk [vmem:[#allocation2 + $0x100] sm:$0x3] %vm853, 0.0
        %8570 = vst.msk [vmem:[#allocation2 + $0x108] sm:$0xff] %vm850, 0.0
        %8571 = vst.msk [vmem:[#allocation2 + $0x110] sm:$0xff] %vm850, 0.0
        %8572 = vst.msk [vmem:[#allocation2 + $0x118] sm:$0x3] %vm853, 0.0
        %8573 = vst.msk [vmem:[#allocation2 + $0x120] sm:$0xff] %vm850, 0.0
        %8574 = vst.msk [vmem:[#allocation2 + $0x128] sm:$0xff] %vm850, 0.0
        %8575 = vst.msk [vmem:[#allocation2 + $0x130] sm:$0x3] %vm853, 0.0
        %8576 = vst.msk [vmem:[#allocation2 + $0x138] sm:$0xff] %vm850, 0.0
        %8577 = vst.msk [vmem:[#allocation2 + $0x140] sm:$0xff] %vm850, 0.0
        %8578 = vst.msk [vmem:[#allocation2 + $0x148] sm:$0x3] %vm853, 0.0
        %8579 = vst.msk [vmem:[#allocation2 + $0x150] sm:$0xff] %vm850, 0.0
        %8580 = vst.msk [vmem:[#allocation2 + $0x158] sm:$0xff] %vm850, 0.0
        %8581 = vst.msk [vmem:[#allocation2 + $0x160] sm:$0x3] %vm853, 0.0
        %8582 = vst.msk [vmem:[#allocation2 + $0x168] sm:$0xff] %vm850, 0.0
        %8583 = vst.msk [vmem:[#allocation2 + $0x170] sm:$0xff] %vm850, 0.0
        %8584 = vst.msk [vmem:[#allocation2 + $0x178] sm:$0x3] %vm853, 0.0
        %8585 = vst.msk [vmem:[#allocation2 + $0x180] sm:$0xff] %vm850, 0.0
        %8586 = vst.msk [vmem:[#allocation2 + $0x188] sm:$0xff] %vm850, 0.0
        %8587 = vst.msk [vmem:[#allocation2 + $0x190] sm:$0x3] %vm853, 0.0
        %8588 = vst.msk [vmem:[#allocation2 + $0x198] sm:$0xff] %vm850, 0.0
        %8589 = vst.msk [vmem:[#allocation2 + $0x1a0] sm:$0xff] %vm850, 0.0
        %8590 = vst.msk [vmem:[#allocation2 + $0x1a8] sm:$0x3] %vm853, 0.0
        %8591 = vst.msk [vmem:[%s906 + $0x1] sm:$0xff] %vm2285, %v8529
        %8592 = vst.msk [vmem:[%s906 + $0x19] sm:$0xff] %vm2285, %v8530
        %8593 = vst.msk [vmem:[%s906 + $0x31] sm:$0xff] %vm2285, %v8531
        %8594 = vst.msk [vmem:[%s906 + $0x49] sm:$0xff] %vm2285, %v8532
        %8595 = vst.msk [vmem:[%s906 + $0x61] sm:$0xff] %vm2285, %v8533
        %8596 = vst.msk [vmem:[%s906 + $0x79] sm:$0xff] %vm2285, %v8534
        %8597 = vst.msk [vmem:[%s906 + $0x91] sm:$0xff] %vm2285, %v8535
        %8598 = vst.msk [vmem:[%s906 + $0xa9] sm:$0xff] %vm2285, %v8536
        %v8599 = vld [vmem:[#allocation2] sm:$0xff]
        %v8600 = vld [vmem:[#allocation2 + $0x18] sm:$0xff]
        %v8601 = vld [vmem:[#allocation2 + $0x30] sm:$0xff]
        %v8602 = vld [vmem:[#allocation2 + $0x48] sm:$0xff]
        %v8603 = vld [vmem:[#allocation2 + $0x60] sm:$0xff]
        %v8604 = vld [vmem:[#allocation2 + $0x78] sm:$0xff]
        %v8605 = vld [vmem:[#allocation2 + $0x90] sm:$0xff]
        %v8606 = vld [vmem:[#allocation2 + $0xa8] sm:$0xff]
        %v8607 = vld [vmem:[#allocation2 + $0x1] sm:$0xff]
        %v8608 = vld [vmem:[#allocation2 + $0x19] sm:$0xff]
        %v8609 = vld [vmem:[#allocation2 + $0x31] sm:$0xff]
        %v8610 = vld [vmem:[#allocation2 + $0x49] sm:$0xff]
        %v8611 = vld [vmem:[#allocation2 + $0x61] sm:$0xff]
        %v8612 = vld [vmem:[#allocation2 + $0x79] sm:$0xff]
        %v8613 = vld [vmem:[#allocation2 + $0x91] sm:$0xff]
        %v8614 = vld [vmem:[#allocation2 + $0xa9] sm:$0xff]
        %v8615 = vld [vmem:[#allocation2 + $0x2] sm:$0xff]
        %v8616 = vld [vmem:[#allocation2 + $0x1a] sm:$0xff]
        %v8617 = vld [vmem:[#allocation2 + $0x32] sm:$0xff]
        %v8618 = vld [vmem:[#allocation2 + $0x4a] sm:$0xff]
        %v8619 = vld [vmem:[#allocation2 + $0x62] sm:$0xff]
        %v8620 = vld [vmem:[#allocation2 + $0x7a] sm:$0xff]
        %v8621 = vld [vmem:[#allocation2 + $0x92] sm:$0xff]
        %v8622 = vld [vmem:[#allocation2 + $0xaa] sm:$0xff]
        %v8623 = vld [vmem:[%s906] sm:$0xff]
        %v8624 = vld [vmem:[%s906 + $0x18] sm:$0xff]
        %v8625 = vld [vmem:[%s906 + $0x30] sm:$0xff]
        %v8626 = vld [vmem:[%s906 + $0x48] sm:$0xff]
        %v8627 = vld [vmem:[%s906 + $0x60] sm:$0xff]
        %v8628 = vld [vmem:[%s906 + $0x78] sm:$0xff]
        %v8629 = vld [vmem:[%s906 + $0x90] sm:$0xff]
        %v8630 = vld [vmem:[%s906 + $0xa8] sm:$0xff]
        %v8631 = vld [vmem:[%s906 + $0x1] sm:$0xff]
        %v8632 = vld [vmem:[%s906 + $0x19] sm:$0xff]
        %v8633 = vld [vmem:[%s906 + $0x31] sm:$0xff]
        %v8634 = vld [vmem:[%s906 + $0x49] sm:$0xff]
        %v8635 = vld [vmem:[%s906 + $0x61] sm:$0xff]
        %v8636 = vld [vmem:[%s906 + $0x79] sm:$0xff]
        %v8637 = vld [vmem:[%s906 + $0x91] sm:$0xff]
        %v8638 = vld [vmem:[%s906 + $0xa9] sm:$0xff]
        %v8639 = vld [vmem:[%s906 + $0x2] sm:$0xff]
        %v8640 = vld [vmem:[%s906 + $0x1a] sm:$0xff]
        %v8641 = vld [vmem:[%s906 + $0x32] sm:$0xff]
        %v8642 = vld [vmem:[%s906 + $0x4a] sm:$0xff]
        %v8643 = vld [vmem:[%s906 + $0x62] sm:$0xff]
        %v8644 = vld [vmem:[%s906 + $0x7a] sm:$0xff]
        %v8645 = vld [vmem:[%s906 + $0x92] sm:$0xff]
        %v8646 = vld [vmem:[%s906 + $0xaa] sm:$0xff]
        %v8647 = vld [vmem:[%s1132] sm:$0xff]
        %v8648 = vld [vmem:[%s1132 + $0x18] sm:$0xff]
        %v8649 = vld [vmem:[%s1132 + $0x30] sm:$0xff]
        %v8650 = vld [vmem:[%s1132 + $0x48] sm:$0xff]
        %v8651 = vld [vmem:[%s1132 + $0x60] sm:$0xff]
        %v8652 = vld [vmem:[%s1132 + $0x78] sm:$0xff]
        %v8653 = vld [vmem:[%s1132 + $0x90] sm:$0xff]
        %v8654 = vld [vmem:[%s1132 + $0xa8] sm:$0xff]
        %v8655 = vld [vmem:[%s1132 + $0x1] sm:$0xff]
        %v8656 = vld [vmem:[%s1132 + $0x19] sm:$0xff]
        %v8657 = vld [vmem:[%s1132 + $0x31] sm:$0xff]
        %v8658 = vld [vmem:[%s1132 + $0x49] sm:$0xff]
        %v8659 = vld [vmem:[%s1132 + $0x61] sm:$0xff]
        %v8660 = vld [vmem:[%s1132 + $0x79] sm:$0xff]
        %v8661 = vld [vmem:[%s1132 + $0x91] sm:$0xff]
        %v8662 = vld [vmem:[%s1132 + $0xa9] sm:$0xff]
        %v8663 = vld [vmem:[%s1132 + $0x2] sm:$0xff]
        %v8664 = vld [vmem:[%s1132 + $0x1a] sm:$0xff]
        %v8665 = vld [vmem:[%s1132 + $0x32] sm:$0xff]
        %v8666 = vld [vmem:[%s1132 + $0x4a] sm:$0xff]
        %v8667 = vld [vmem:[%s1132 + $0x62] sm:$0xff]
        %v8668 = vld [vmem:[%s1132 + $0x7a] sm:$0xff]
        %v8669 = vld [vmem:[%s1132 + $0x92] sm:$0xff]
        %v8670 = vld [vmem:[%s1132 + $0xaa] sm:$0xff]
        %8679 = vrot.lane.b32.xlu0 %v8607, 8
        %v8680 = vpop.permute.xlu0 %8679
        %8681 = vrot.lane.b32.xlu0 %v8608, 8
        %v8682 = vpop.permute.xlu0 %8681
        %8683 = vrot.lane.b32.xlu0 %v8609, 8
        %v8684 = vpop.permute.xlu0 %8683
        %8685 = vrot.lane.b32.xlu0 %v8610, 8
        %v8686 = vpop.permute.xlu0 %8685
        %8687 = vrot.lane.b32.xlu0 %v8611, 8
        %v8688 = vpop.permute.xlu0 %8687
        %8689 = vrot.lane.b32.xlu0 %v8612, 8
        %v8690 = vpop.permute.xlu0 %8689
        %8691 = vrot.lane.b32.xlu0 %v8613, 8
        %v8692 = vpop.permute.xlu0 %8691
        %8693 = vrot.lane.b32.xlu0 %v8614, 8
        %v8694 = vpop.permute.xlu0 %8693
        %8711 = vrot.lane.b32.xlu0 %v8615, 16
        %v8712 = vpop.permute.xlu0 %8711
        %8713 = vrot.lane.b32.xlu0 %v8616, 16
        %v8714 = vpop.permute.xlu0 %8713
        %8715 = vrot.lane.b32.xlu0 %v8617, 16
        %v8716 = vpop.permute.xlu0 %8715
        %8717 = vrot.lane.b32.xlu0 %v8618, 16
        %v8718 = vpop.permute.xlu0 %8717
        %8719 = vrot.lane.b32.xlu0 %v8619, 16
        %v8720 = vpop.permute.xlu0 %8719
        %8721 = vrot.lane.b32.xlu0 %v8620, 16
        %v8722 = vpop.permute.xlu0 %8721
        %8723 = vrot.lane.b32.xlu0 %v8621, 16
        %v8724 = vpop.permute.xlu0 %8723
        %8725 = vrot.lane.b32.xlu0 %v8622, 16
        %v8726 = vpop.permute.xlu0 %8725
        %8743 = vrot.lane.b32.xlu0 %v8623, 24
        %v8744 = vpop.permute.xlu0 %8743
        %8745 = vrot.lane.b32.xlu0 %v8624, 24
        %v8746 = vpop.permute.xlu0 %8745
        %8747 = vrot.lane.b32.xlu0 %v8625, 24
        %v8748 = vpop.permute.xlu0 %8747
        %8749 = vrot.lane.b32.xlu0 %v8626, 24
        %v8750 = vpop.permute.xlu0 %8749
        %8751 = vrot.lane.b32.xlu0 %v8627, 24
        %v8752 = vpop.permute.xlu0 %8751
        %8753 = vrot.lane.b32.xlu0 %v8628, 24
        %v8754 = vpop.permute.xlu0 %8753
        %8755 = vrot.lane.b32.xlu0 %v8629, 24
        %v8756 = vpop.permute.xlu0 %8755
        %8757 = vrot.lane.b32.xlu0 %v8630, 24
        %v8758 = vpop.permute.xlu0 %8757
        %8775 = vrot.lane.b32.xlu0 %v8631, 32
        %v8776 = vpop.permute.xlu0 %8775
        %8777 = vrot.lane.b32.xlu0 %v8632, 32
        %v8778 = vpop.permute.xlu0 %8777
        %8779 = vrot.lane.b32.xlu0 %v8633, 32
        %v8780 = vpop.permute.xlu0 %8779
        %8781 = vrot.lane.b32.xlu0 %v8634, 32
        %v8782 = vpop.permute.xlu0 %8781
        %8783 = vrot.lane.b32.xlu0 %v8635, 32
        %v8784 = vpop.permute.xlu0 %8783
        %8785 = vrot.lane.b32.xlu0 %v8636, 32
        %v8786 = vpop.permute.xlu0 %8785
        %8787 = vrot.lane.b32.xlu0 %v8637, 32
        %v8788 = vpop.permute.xlu0 %8787
        %8789 = vrot.lane.b32.xlu0 %v8638, 32
        %v8790 = vpop.permute.xlu0 %8789
        %8807 = vrot.lane.b32.xlu0 %v8639, 40
        %v8808 = vpop.permute.xlu0 %8807
        %8809 = vrot.lane.b32.xlu0 %v8640, 40
        %v8810 = vpop.permute.xlu0 %8809
        %8811 = vrot.lane.b32.xlu0 %v8641, 40
        %v8812 = vpop.permute.xlu0 %8811
        %8813 = vrot.lane.b32.xlu0 %v8642, 40
        %v8814 = vpop.permute.xlu0 %8813
        %8815 = vrot.lane.b32.xlu0 %v8643, 40
        %v8816 = vpop.permute.xlu0 %8815
        %8817 = vrot.lane.b32.xlu0 %v8644, 40
        %v8818 = vpop.permute.xlu0 %8817
        %8819 = vrot.lane.b32.xlu0 %v8645, 40
        %v8820 = vpop.permute.xlu0 %8819
        %8821 = vrot.lane.b32.xlu0 %v8646, 40
        %v8822 = vpop.permute.xlu0 %8821
        %8839 = vrot.lane.b32.xlu0 %v8647, 48
        %v8840 = vpop.permute.xlu0 %8839
        %8841 = vrot.lane.b32.xlu0 %v8648, 48
        %v8842 = vpop.permute.xlu0 %8841
        %8843 = vrot.lane.b32.xlu0 %v8649, 48
        %v8844 = vpop.permute.xlu0 %8843
        %8845 = vrot.lane.b32.xlu0 %v8650, 48
        %v8846 = vpop.permute.xlu0 %8845
        %8847 = vrot.lane.b32.xlu0 %v8651, 48
        %v8848 = vpop.permute.xlu0 %8847
        %8849 = vrot.lane.b32.xlu0 %v8652, 48
        %v8850 = vpop.permute.xlu0 %8849
        %8851 = vrot.lane.b32.xlu0 %v8653, 48
        %v8852 = vpop.permute.xlu0 %8851
        %8853 = vrot.lane.b32.xlu0 %v8654, 48
        %v8854 = vpop.permute.xlu0 %8853
        %8871 = vrot.lane.b32.xlu0 %v8655, 56
        %v8872 = vpop.permute.xlu0 %8871
        %8873 = vrot.lane.b32.xlu0 %v8656, 56
        %v8874 = vpop.permute.xlu0 %8873
        %8875 = vrot.lane.b32.xlu0 %v8657, 56
        %v8876 = vpop.permute.xlu0 %8875
        %8877 = vrot.lane.b32.xlu0 %v8658, 56
        %v8878 = vpop.permute.xlu0 %8877
        %8879 = vrot.lane.b32.xlu0 %v8659, 56
        %v8880 = vpop.permute.xlu0 %8879
        %8881 = vrot.lane.b32.xlu0 %v8660, 56
        %v8882 = vpop.permute.xlu0 %8881
        %8883 = vrot.lane.b32.xlu0 %v8661, 56
        %v8884 = vpop.permute.xlu0 %8883
        %8885 = vrot.lane.b32.xlu0 %v8662, 56
        %v8886 = vpop.permute.xlu0 %8885
        %8903 = vrot.lane.b32.xlu0 %v8663, 64
        %v8904 = vpop.permute.xlu0 %8903
        %8905 = vrot.lane.b32.xlu0 %v8664, 64
        %v8906 = vpop.permute.xlu0 %8905
        %8907 = vrot.lane.b32.xlu0 %v8665, 64
        %v8908 = vpop.permute.xlu0 %8907
        %8909 = vrot.lane.b32.xlu0 %v8666, 64
        %v8910 = vpop.permute.xlu0 %8909
        %8911 = vrot.lane.b32.xlu0 %v8667, 64
        %v8912 = vpop.permute.xlu0 %8911
        %8913 = vrot.lane.b32.xlu0 %v8668, 64
        %v8914 = vpop.permute.xlu0 %8913
        %8915 = vrot.lane.b32.xlu0 %v8669, 64
        %v8916 = vpop.permute.xlu0 %8915
        %8917 = vrot.lane.b32.xlu0 %v8670, 64
        %v8918 = vpop.permute.xlu0 %8917
        %v8927 = vsel %vm2285, %v8599, %v8680
        %v8928 = vsel %vm2285, %v8600, %v8682
        %v8929 = vsel %vm2285, %v8601, %v8684
        %v8930 = vsel %vm2285, %v8602, %v8686
        %v8931 = vsel %vm2285, %v8603, %v8688
        %v8932 = vsel %vm2285, %v8604, %v8690
        %v8933 = vsel %vm2285, %v8605, %v8692
        %v8934 = vsel %vm2285, %v8606, %v8694
        %v8935 = vsel %vm850, %v8927, %v8712
        %v8936 = vsel %vm850, %v8928, %v8714
        %v8937 = vsel %vm850, %v8929, %v8716
        %v8938 = vsel %vm850, %v8930, %v8718
        %v8939 = vsel %vm850, %v8931, %v8720
        %v8940 = vsel %vm850, %v8932, %v8722
        %v8941 = vsel %vm850, %v8933, %v8724
        %v8942 = vsel %vm850, %v8934, %v8726
        %v8943 = vsel %vm2416, %v8935, %v8744
        %v8944 = vsel %vm2416, %v8936, %v8746
        %v8945 = vsel %vm2416, %v8937, %v8748
        %v8946 = vsel %vm2416, %v8938, %v8750
        %v8947 = vsel %vm2416, %v8939, %v8752
        %v8948 = vsel %vm2416, %v8940, %v8754
        %v8949 = vsel %vm2416, %v8941, %v8756
        %v8950 = vsel %vm2416, %v8942, %v8758
        %v8951 = vsel %vm2482, %v8943, %v8776
        %v8952 = vsel %vm2482, %v8944, %v8778
        %v8953 = vsel %vm2482, %v8945, %v8780
        %v8954 = vsel %vm2482, %v8946, %v8782
        %v8955 = vsel %vm2482, %v8947, %v8784
        %v8956 = vsel %vm2482, %v8948, %v8786
        %v8957 = vsel %vm2482, %v8949, %v8788
        %v8958 = vsel %vm2482, %v8950, %v8790
        %v8959 = vsel %vm4287, %v8951, %v8808
        %v8960 = vsel %vm4287, %v8952, %v8810
        %v8961 = vsel %vm4287, %v8953, %v8812
        %v8962 = vsel %vm4287, %v8954, %v8814
        %v8963 = vsel %vm4287, %v8955, %v8816
        %v8964 = vsel %vm4287, %v8956, %v8818
        %v8965 = vsel %vm4287, %v8957, %v8820
        %v8966 = vsel %vm4287, %v8958, %v8822
        %v8967 = vsel %vm4320, %v8959, %v8840
        %v8968 = vsel %vm4320, %v8960, %v8842
        %v8969 = vsel %vm4320, %v8961, %v8844
        %v8970 = vsel %vm4320, %v8962, %v8846
        %v8971 = vsel %vm4320, %v8963, %v8848
        %v8972 = vsel %vm4320, %v8964, %v8850
        %v8973 = vsel %vm4320, %v8965, %v8852
        %v8974 = vsel %vm4320, %v8966, %v8854
        %v8975 = vsel %vm4353, %v8967, %v8872
        %v8976 = vsel %vm4353, %v8968, %v8874
        %v8977 = vsel %vm4353, %v8969, %v8876
        %v8978 = vsel %vm4353, %v8970, %v8878
        %v8979 = vsel %vm4353, %v8971, %v8880
        %v8980 = vsel %vm4353, %v8972, %v8882
        %v8981 = vsel %vm4353, %v8973, %v8884
        %v8982 = vsel %vm4353, %v8974, %v8886
        %v8983 = vsel %vm4386, %v8975, %v8904
        %v8984 = vsel %vm4386, %v8976, %v8906
        %v8985 = vsel %vm4386, %v8977, %v8908
        %v8986 = vsel %vm4386, %v8978, %v8910
        %v8987 = vsel %vm4386, %v8979, %v8912
        %v8988 = vsel %vm4386, %v8980, %v8914
        %v8989 = vsel %vm4386, %v8981, %v8916
        %v8990 = vsel %vm4386, %v8982, %v8918
        %v8991 = vpack.c.bf16 %v8984, %v8983
        %v8992 = vpack.c.bf16 %v8986, %v8985
        %v8993 = vpack.c.bf16 %v8988, %v8987
        %v8994 = vpack.c.bf16 %v8990, %v8989
        %v8995 = vld [vmem:[%s14] sm:$0xf]
        %v8996 = vld [vmem:[%s14 + $0x4] sm:$0xf]
        %v8997 = vld [vmem:[%s14 + $0x8] sm:$0xf]
        %v8998 = vld [vmem:[%s14 + $0xc] sm:$0xf]
        %v8999 = vld [vmem:[%s14 + $0x10] sm:$0xf]
        %v9000 = vld [vmem:[%s14 + $0x14] sm:$0xf]
        %v9001 = vld [vmem:[%s14 + $0x18] sm:$0xf]
        %v9002 = vld [vmem:[%s14 + $0x1c] sm:$0xf]
        %v9003 = vld [vmem:[%s14 + $0x20] sm:$0xf]
        %v9004 = vld [vmem:[%s13] sm:$0x1]
        %v9006 = vperm.slane %v9004, 0
        %v9017 = vunpack.c.l.b16 %v8995
        %v9018 = vunpack.c.l.b16 %v8996
        %v9019 = vunpack.c.l.b16 %v8997
        %v9020 = vunpack.c.l.b16 %v8998
        %v9021 = vunpack.c.l.b16 %v8999
        %v9022 = vunpack.c.l.b16 %v9000
        %v9023 = vunpack.c.l.b16 %v9001
        %v9024 = vunpack.c.l.b16 %v9002
        %v9025 = vunpack.c.l.b16 %v9003
        %v9026 = vpack.c.b16 %v9018, %v9017
        %v9027 = vpack.c.b16 %v9020, %v9019
        %v9028 = vpack.c.b16 %v9022, %v9021
        %v9029 = vpack.c.b16 %v9024, %v9023
        %v9030 = vpack.c.b16 %v9025, %v9025
        %v9036 = vsel %vm4475, %v8991, 0
        %v9039 = vsel %vm4475, %v8992, 0
        %v9042 = vsel %vm4475, %v8993, 0
        %v9045 = vsel %vm4475, %v8994, 0
        %v9048 = vsel %vm4524, %v9030, 0
        %9050 = vmatpush.bf16.msra.mxu0 0
        %9051 = vmatpush.bf16.msra.mxu0 0
        %9052 = vmatpush.bf16.msra.mxu0 0
        %9053 = vmatpush.bf16.msra.mxu0 %v9048
        %9054 = vmatpush.bf16.msra.mxu0 %v9029
        %9055 = vmatpush.bf16.msra.mxu0 %v9028
        %9056 = vmatpush.bf16.msra.mxu0 %v9027
        %9057 = vmatpush.bf16.msra.mxu0 %v9026
        %9058 = vmatmul.bf16.gmra.mxu0 %v9036
        %v9059 = vpop.f32.mrf.mxu0
        %v9060 = vadd.f32 %v9006, %v9059
        %v9061 = vpop.f32.mrf.mxu0
        %v9062 = vadd.f32 %v9006, %v9061
        %9063 = vmatmul.bf16.gmra.mxu0 %v9039
        %v9064 = vpop.f32.mrf.mxu0
        %v9065 = vadd.f32 %v9006, %v9064
        %v9066 = vpop.f32.mrf.mxu0
        %v9067 = vadd.f32 %v9006, %v9066
        %9068 = vmatmul.bf16.gmra.mxu0 %v9042
        %v9069 = vpop.f32.mrf.mxu0
        %v9070 = vadd.f32 %v9006, %v9069
        %v9071 = vpop.f32.mrf.mxu0
        %v9072 = vadd.f32 %v9006, %v9071
        %9073 = vmatmul.bf16.gmra.mxu0 %v9045
        %v9074 = vpop.f32.mrf.mxu0
        %v9075 = vadd.f32 %v9006, %v9074
        %v9076 = vpop.f32.mrf.mxu0
        %v9077 = vadd.f32 %v9006, %v9076
        %9078 = vdwg.mxu0
        %v9079 = vmax.f32 %v9060, 0.0
        %v9080 = vmax.f32 %v9062, 0.0
        %v9081 = vmax.f32 %v9065, 0.0
        %v9082 = vmax.f32 %v9067, 0.0
        %v9083 = vmax.f32 %v9070, 0.0
        %v9084 = vmax.f32 %v9072, 0.0
        %v9085 = vmax.f32 %v9075, 0.0
        %v9086 = vmax.f32 %v9077, 0.0
        %v9087 = vld [vmem:[%s16] sm:$0xf]
        %v9088 = vld [vmem:[%s16 + $0x4] sm:$0xf]
        %v9089 = vld [vmem:[%s15] sm:$0x1]
        %v9091 = vperm.slane %v9089, 0
        %v9095 = vunpack.c.l.b16 %v9087
        %v9096 = vunpack.c.l.b16 %v9088
        %v9097 = vpack.c.b16 %v9096, %v9095
        %9099 = vmatpush.bf16.msra.mxu0 0
        %9100 = vmatpush.bf16.msra.mxu0 0
        %9101 = vmatpush.bf16.msra.mxu0 0
        %9102 = vmatpush.bf16.msra.mxu0 0
        %9103 = vmatpush.bf16.msra.mxu0 0
        %9104 = vmatpush.bf16.msra.mxu0 0
        %9105 = vmatpush.bf16.msra.mxu0 0
        %9106 = vmatpush.bf16.msra.mxu0 %v9097
        %9107 = vmatmul.bf16.gmra.mxu0 %v8440
        %v9108 = vpop.f32.mrf.mxu0
        %v9109 = vadd.f32 %v9091, %v9108
        %v9110 = vpop.f32.mrf.mxu0
        %v9111 = vadd.f32 %v9091, %v9110
        %9112 = vmatmul.bf16.gmra.mxu0 %v8443
        %v9113 = vpop.f32.mrf.mxu0
        %v9114 = vadd.f32 %v9091, %v9113
        %v9115 = vpop.f32.mrf.mxu0
        %v9116 = vadd.f32 %v9091, %v9115
        %9117 = vmatmul.bf16.gmra.mxu0 %v8446
        %v9118 = vpop.f32.mrf.mxu0
        %v9119 = vadd.f32 %v9091, %v9118
        %v9120 = vpop.f32.mrf.mxu0
        %v9121 = vadd.f32 %v9091, %v9120
        %9122 = vmatmul.bf16.gmra.mxu0 %v8449
        %v9123 = vpop.f32.mrf.mxu0
        %v9124 = vadd.f32 %v9091, %v9123
        %v9125 = vpop.f32.mrf.mxu0
        %v9126 = vadd.f32 %v9091, %v9125
        %9127 = vdwg.mxu0
        %v9128 = vmax.f32 %v9109, 0.0
        %v9129 = vmax.f32 %v9111, 0.0
        %v9130 = vmax.f32 %v9114, 0.0
        %v9131 = vmax.f32 %v9116, 0.0
        %v9132 = vmax.f32 %v9119, 0.0
        %v9133 = vmax.f32 %v9121, 0.0
        %v9134 = vmax.f32 %v9124, 0.0
        %v9135 = vmax.f32 %v9126, 0.0
        %9136 = vst.msk [vmem:[#allocation2] sm:$0xff] %vm850, 0.0
        %9137 = vst.msk [vmem:[#allocation2 + $0x8] sm:$0xff] %vm850, 0.0
        %9138 = vst.msk [vmem:[#allocation2 + $0x10] sm:$0x3] %vm853, 0.0
        %9139 = vst.msk [vmem:[#allocation2 + $0x18] sm:$0xff] %vm850, 0.0
        %9140 = vst.msk [vmem:[#allocation2 + $0x20] sm:$0xff] %vm850, 0.0
        %9141 = vst.msk [vmem:[#allocation2 + $0x28] sm:$0x3] %vm853, 0.0
        %9142 = vst.msk [vmem:[#allocation2 + $0x30] sm:$0xff] %vm850, 0.0
        %9143 = vst.msk [vmem:[#allocation2 + $0x38] sm:$0xff] %vm850, 0.0
        %9144 = vst.msk [vmem:[#allocation2 + $0x40] sm:$0x3] %vm853, 0.0
        %9145 = vst.msk [vmem:[#allocation2 + $0x48] sm:$0xff] %vm850, 0.0
        %9146 = vst.msk [vmem:[#allocation2 + $0x50] sm:$0xff] %vm850, 0.0
        %9147 = vst.msk [vmem:[#allocation2 + $0x58] sm:$0x3] %vm853, 0.0
        %9148 = vst.msk [vmem:[#allocation2 + $0x60] sm:$0xff] %vm850, 0.0
        %9149 = vst.msk [vmem:[#allocation2 + $0x68] sm:$0xff] %vm850, 0.0
        %9150 = vst.msk [vmem:[#allocation2 + $0x70] sm:$0x3] %vm853, 0.0
        %9151 = vst.msk [vmem:[#allocation2 + $0x78] sm:$0xff] %vm850, 0.0
        %9152 = vst.msk [vmem:[#allocation2 + $0x80] sm:$0xff] %vm850, 0.0
        %9153 = vst.msk [vmem:[#allocation2 + $0x88] sm:$0x3] %vm853, 0.0
        %9154 = vst.msk [vmem:[#allocation2 + $0x90] sm:$0xff] %vm850, 0.0
        %9155 = vst.msk [vmem:[#allocation2 + $0x98] sm:$0xff] %vm850, 0.0
        %9156 = vst.msk [vmem:[#allocation2 + $0xa0] sm:$0x3] %vm853, 0.0
        %9157 = vst.msk [vmem:[#allocation2 + $0xa8] sm:$0xff] %vm850, 0.0
        %9158 = vst.msk [vmem:[#allocation2 + $0xb0] sm:$0xff] %vm850, 0.0
        %9159 = vst.msk [vmem:[#allocation2 + $0xb8] sm:$0x3] %vm853, 0.0
        %9160 = vst.msk [vmem:[#allocation2 + $0xc0] sm:$0xff] %vm850, 0.0
        %9161 = vst.msk [vmem:[#allocation2 + $0xc8] sm:$0xff] %vm850, 0.0
        %9162 = vst.msk [vmem:[#allocation2 + $0xd0] sm:$0x3] %vm853, 0.0
        %9163 = vst.msk [vmem:[#allocation2 + $0xd8] sm:$0xff] %vm850, 0.0
        %9164 = vst.msk [vmem:[#allocation2 + $0xe0] sm:$0xff] %vm850, 0.0
        %9165 = vst.msk [vmem:[#allocation2 + $0xe8] sm:$0x3] %vm853, 0.0
        %9166 = vst.msk [vmem:[#allocation2 + $0xf0] sm:$0xff] %vm850, 0.0
        %9167 = vst.msk [vmem:[#allocation2 + $0xf8] sm:$0xff] %vm850, 0.0
        %9168 = vst.msk [vmem:[#allocation2 + $0x100] sm:$0x3] %vm853, 0.0
        %9169 = vst.msk [vmem:[#allocation2 + $0x108] sm:$0xff] %vm850, 0.0
        %9170 = vst.msk [vmem:[#allocation2 + $0x110] sm:$0xff] %vm850, 0.0
        %9171 = vst.msk [vmem:[#allocation2 + $0x118] sm:$0x3] %vm853, 0.0
        %9172 = vst.msk [vmem:[#allocation2 + $0x120] sm:$0xff] %vm850, 0.0
        %9173 = vst.msk [vmem:[#allocation2 + $0x128] sm:$0xff] %vm850, 0.0
        %9174 = vst.msk [vmem:[#allocation2 + $0x130] sm:$0x3] %vm853, 0.0
        %9175 = vst.msk [vmem:[#allocation2 + $0x138] sm:$0xff] %vm850, 0.0
        %9176 = vst.msk [vmem:[#allocation2 + $0x140] sm:$0xff] %vm850, 0.0
        %9177 = vst.msk [vmem:[#allocation2 + $0x148] sm:$0x3] %vm853, 0.0
        %9178 = vst.msk [vmem:[#allocation2 + $0x150] sm:$0xff] %vm850, 0.0
        %9179 = vst.msk [vmem:[#allocation2 + $0x158] sm:$0xff] %vm850, 0.0
        %9180 = vst.msk [vmem:[#allocation2 + $0x160] sm:$0x3] %vm853, 0.0
        %9181 = vst.msk [vmem:[#allocation2 + $0x168] sm:$0xff] %vm850, 0.0
        %9182 = vst.msk [vmem:[#allocation2 + $0x170] sm:$0xff] %vm850, 0.0
        %9183 = vst.msk [vmem:[#allocation2 + $0x178] sm:$0x3] %vm853, 0.0
        %9184 = vst.msk [vmem:[#allocation2 + $0x180] sm:$0xff] %vm850, 0.0
        %9185 = vst.msk [vmem:[#allocation2 + $0x188] sm:$0xff] %vm850, 0.0
        %9186 = vst.msk [vmem:[#allocation2 + $0x190] sm:$0x3] %vm853, 0.0
        %9187 = vst.msk [vmem:[#allocation2 + $0x198] sm:$0xff] %vm850, 0.0
        %9188 = vst.msk [vmem:[#allocation2 + $0x1a0] sm:$0xff] %vm850, 0.0
        %9189 = vst.msk [vmem:[#allocation2 + $0x1a8] sm:$0x3] %vm853, 0.0
        %9190 = vst.msk [vmem:[%s1132 + $0x2] sm:$0xff] %vm2285, %v9128
        %9191 = vst.msk [vmem:[%s1132 + $0x1a] sm:$0xff] %vm2285, %v9129
        %9192 = vst.msk [vmem:[%s1132 + $0x32] sm:$0xff] %vm2285, %v9130
        %9193 = vst.msk [vmem:[%s1132 + $0x4a] sm:$0xff] %vm2285, %v9131
        %9194 = vst.msk [vmem:[%s1132 + $0x62] sm:$0xff] %vm2285, %v9132
        %9195 = vst.msk [vmem:[%s1132 + $0x7a] sm:$0xff] %vm2285, %v9133
        %9196 = vst.msk [vmem:[%s1132 + $0x92] sm:$0xff] %vm2285, %v9134
        %9197 = vst.msk [vmem:[%s1132 + $0xaa] sm:$0xff] %vm2285, %v9135
        %v9198 = vld [vmem:[#allocation2] sm:$0xff]
        %v9199 = vld [vmem:[#allocation2 + $0x18] sm:$0xff]
        %v9200 = vld [vmem:[#allocation2 + $0x30] sm:$0xff]
        %v9201 = vld [vmem:[#allocation2 + $0x48] sm:$0xff]
        %v9202 = vld [vmem:[#allocation2 + $0x60] sm:$0xff]
        %v9203 = vld [vmem:[#allocation2 + $0x78] sm:$0xff]
        %v9204 = vld [vmem:[#allocation2 + $0x90] sm:$0xff]
        %v9205 = vld [vmem:[#allocation2 + $0xa8] sm:$0xff]
        %v9206 = vld [vmem:[#allocation2 + $0x2] sm:$0xff]
        %v9207 = vld [vmem:[#allocation2 + $0x1a] sm:$0xff]
        %v9208 = vld [vmem:[#allocation2 + $0x32] sm:$0xff]
        %v9209 = vld [vmem:[#allocation2 + $0x4a] sm:$0xff]
        %v9210 = vld [vmem:[#allocation2 + $0x62] sm:$0xff]
        %v9211 = vld [vmem:[#allocation2 + $0x7a] sm:$0xff]
        %v9212 = vld [vmem:[#allocation2 + $0x92] sm:$0xff]
        %v9213 = vld [vmem:[#allocation2 + $0xaa] sm:$0xff]
        %v9214 = vld [vmem:[#allocation2 + $0x4] sm:$0xff]
        %v9215 = vld [vmem:[#allocation2 + $0x1c] sm:$0xff]
        %v9216 = vld [vmem:[#allocation2 + $0x34] sm:$0xff]
        %v9217 = vld [vmem:[#allocation2 + $0x4c] sm:$0xff]
        %v9218 = vld [vmem:[#allocation2 + $0x64] sm:$0xff]
        %v9219 = vld [vmem:[#allocation2 + $0x7c] sm:$0xff]
        %v9220 = vld [vmem:[#allocation2 + $0x94] sm:$0xff]
        %v9221 = vld [vmem:[#allocation2 + $0xac] sm:$0xff]
        %v9222 = vld [vmem:[%s1132] sm:$0xff]
        %v9223 = vld [vmem:[%s1132 + $0x18] sm:$0xff]
        %v9224 = vld [vmem:[%s1132 + $0x30] sm:$0xff]
        %v9225 = vld [vmem:[%s1132 + $0x48] sm:$0xff]
        %v9226 = vld [vmem:[%s1132 + $0x60] sm:$0xff]
        %v9227 = vld [vmem:[%s1132 + $0x78] sm:$0xff]
        %v9228 = vld [vmem:[%s1132 + $0x90] sm:$0xff]
        %v9229 = vld [vmem:[%s1132 + $0xa8] sm:$0xff]
        %v9230 = vld [vmem:[%s1132 + $0x2] sm:$0xff]
        %v9231 = vld [vmem:[%s1132 + $0x1a] sm:$0xff]
        %v9232 = vld [vmem:[%s1132 + $0x32] sm:$0xff]
        %v9233 = vld [vmem:[%s1132 + $0x4a] sm:$0xff]
        %v9234 = vld [vmem:[%s1132 + $0x62] sm:$0xff]
        %v9235 = vld [vmem:[%s1132 + $0x7a] sm:$0xff]
        %v9236 = vld [vmem:[%s1132 + $0x92] sm:$0xff]
        %v9237 = vld [vmem:[%s1132 + $0xaa] sm:$0xff]
        %v9238 = vld [vmem:[%s1132 + $0x4] sm:$0xff]
        %v9239 = vld [vmem:[%s1132 + $0x1c] sm:$0xff]
        %v9240 = vld [vmem:[%s1132 + $0x34] sm:$0xff]
        %v9241 = vld [vmem:[%s1132 + $0x4c] sm:$0xff]
        %v9242 = vld [vmem:[%s1132 + $0x64] sm:$0xff]
        %v9243 = vld [vmem:[%s1132 + $0x7c] sm:$0xff]
        %v9244 = vld [vmem:[%s1132 + $0x94] sm:$0xff]
        %v9245 = vld [vmem:[%s1132 + $0xac] sm:$0xff]
        %s9246 = scalar_lea.vmem [#allocation2], 96
        %v9247 = vld [vmem:[%s9246] sm:$0xff]
        %v9248 = vld [vmem:[%s9246 + $0x18] sm:$0xff]
        %v9249 = vld [vmem:[%s9246 + $0x30] sm:$0xff]
        %v9250 = vld [vmem:[%s9246 + $0x48] sm:$0xff]
        %v9251 = vld [vmem:[%s9246 + $0x60] sm:$0xff]
        %v9252 = vld [vmem:[%s9246 + $0x78] sm:$0xff]
        %v9253 = vld [vmem:[%s9246 + $0x90] sm:$0xff]
        %v9254 = vld [vmem:[%s9246 + $0xa8] sm:$0xff]
        %v9255 = vld [vmem:[%s9246 + $0x2] sm:$0xff]
        %v9256 = vld [vmem:[%s9246 + $0x1a] sm:$0xff]
        %v9257 = vld [vmem:[%s9246 + $0x32] sm:$0xff]
        %v9258 = vld [vmem:[%s9246 + $0x4a] sm:$0xff]
        %v9259 = vld [vmem:[%s9246 + $0x62] sm:$0xff]
        %v9260 = vld [vmem:[%s9246 + $0x7a] sm:$0xff]
        %v9261 = vld [vmem:[%s9246 + $0x92] sm:$0xff]
        %v9262 = vld [vmem:[%s9246 + $0xaa] sm:$0xff]
        %v9263 = vld [vmem:[%s9246 + $0x4] sm:$0xff]
        %v9264 = vld [vmem:[%s9246 + $0x1c] sm:$0xff]
        %v9265 = vld [vmem:[%s9246 + $0x34] sm:$0xff]
        %v9266 = vld [vmem:[%s9246 + $0x4c] sm:$0xff]
        %v9267 = vld [vmem:[%s9246 + $0x64] sm:$0xff]
        %v9268 = vld [vmem:[%s9246 + $0x7c] sm:$0xff]
        %v9269 = vld [vmem:[%s9246 + $0x94] sm:$0xff]
        %v9270 = vld [vmem:[%s9246 + $0xac] sm:$0xff]
        %9279 = vrot.lane.b32.xlu0 %v9206, 8
        %v9280 = vpop.permute.xlu0 %9279
        %9281 = vrot.lane.b32.xlu0 %v9207, 8
        %v9282 = vpop.permute.xlu0 %9281
        %9283 = vrot.lane.b32.xlu0 %v9208, 8
        %v9284 = vpop.permute.xlu0 %9283
        %9285 = vrot.lane.b32.xlu0 %v9209, 8
        %v9286 = vpop.permute.xlu0 %9285
        %9287 = vrot.lane.b32.xlu0 %v9210, 8
        %v9288 = vpop.permute.xlu0 %9287
        %9289 = vrot.lane.b32.xlu0 %v9211, 8
        %v9290 = vpop.permute.xlu0 %9289
        %9291 = vrot.lane.b32.xlu0 %v9212, 8
        %v9292 = vpop.permute.xlu0 %9291
        %9293 = vrot.lane.b32.xlu0 %v9213, 8
        %v9294 = vpop.permute.xlu0 %9293
        %9311 = vrot.lane.b32.xlu0 %v9214, 16
        %v9312 = vpop.permute.xlu0 %9311
        %9313 = vrot.lane.b32.xlu0 %v9215, 16
        %v9314 = vpop.permute.xlu0 %9313
        %9315 = vrot.lane.b32.xlu0 %v9216, 16
        %v9316 = vpop.permute.xlu0 %9315
        %9317 = vrot.lane.b32.xlu0 %v9217, 16
        %v9318 = vpop.permute.xlu0 %9317
        %9319 = vrot.lane.b32.xlu0 %v9218, 16
        %v9320 = vpop.permute.xlu0 %9319
        %9321 = vrot.lane.b32.xlu0 %v9219, 16
        %v9322 = vpop.permute.xlu0 %9321
        %9323 = vrot.lane.b32.xlu0 %v9220, 16
        %v9324 = vpop.permute.xlu0 %9323
        %9325 = vrot.lane.b32.xlu0 %v9221, 16
        %v9326 = vpop.permute.xlu0 %9325
        %9343 = vrot.lane.b32.xlu0 %v9222, 24
        %v9344 = vpop.permute.xlu0 %9343
        %9345 = vrot.lane.b32.xlu0 %v9223, 24
        %v9346 = vpop.permute.xlu0 %9345
        %9347 = vrot.lane.b32.xlu0 %v9224, 24
        %v9348 = vpop.permute.xlu0 %9347
        %9349 = vrot.lane.b32.xlu0 %v9225, 24
        %v9350 = vpop.permute.xlu0 %9349
        %9351 = vrot.lane.b32.xlu0 %v9226, 24
        %v9352 = vpop.permute.xlu0 %9351
        %9353 = vrot.lane.b32.xlu0 %v9227, 24
        %v9354 = vpop.permute.xlu0 %9353
        %9355 = vrot.lane.b32.xlu0 %v9228, 24
        %v9356 = vpop.permute.xlu0 %9355
        %9357 = vrot.lane.b32.xlu0 %v9229, 24
        %v9358 = vpop.permute.xlu0 %9357
        %9375 = vrot.lane.b32.xlu0 %v9230, 32
        %v9376 = vpop.permute.xlu0 %9375
        %9377 = vrot.lane.b32.xlu0 %v9231, 32
        %v9378 = vpop.permute.xlu0 %9377
        %9379 = vrot.lane.b32.xlu0 %v9232, 32
        %v9380 = vpop.permute.xlu0 %9379
        %9381 = vrot.lane.b32.xlu0 %v9233, 32
        %v9382 = vpop.permute.xlu0 %9381
        %9383 = vrot.lane.b32.xlu0 %v9234, 32
        %v9384 = vpop.permute.xlu0 %9383
        %9385 = vrot.lane.b32.xlu0 %v9235, 32
        %v9386 = vpop.permute.xlu0 %9385
        %9387 = vrot.lane.b32.xlu0 %v9236, 32
        %v9388 = vpop.permute.xlu0 %9387
        %9389 = vrot.lane.b32.xlu0 %v9237, 32
        %v9390 = vpop.permute.xlu0 %9389
        %9407 = vrot.lane.b32.xlu0 %v9238, 40
        %v9408 = vpop.permute.xlu0 %9407
        %9409 = vrot.lane.b32.xlu0 %v9239, 40
        %v9410 = vpop.permute.xlu0 %9409
        %9411 = vrot.lane.b32.xlu0 %v9240, 40
        %v9412 = vpop.permute.xlu0 %9411
        %9413 = vrot.lane.b32.xlu0 %v9241, 40
        %v9414 = vpop.permute.xlu0 %9413
        %9415 = vrot.lane.b32.xlu0 %v9242, 40
        %v9416 = vpop.permute.xlu0 %9415
        %9417 = vrot.lane.b32.xlu0 %v9243, 40
        %v9418 = vpop.permute.xlu0 %9417
        %9419 = vrot.lane.b32.xlu0 %v9244, 40
        %v9420 = vpop.permute.xlu0 %9419
        %9421 = vrot.lane.b32.xlu0 %v9245, 40
        %v9422 = vpop.permute.xlu0 %9421
        %9439 = vrot.lane.b32.xlu0 %v9247, 48
        %v9440 = vpop.permute.xlu0 %9439
        %9441 = vrot.lane.b32.xlu0 %v9248, 48
        %v9442 = vpop.permute.xlu0 %9441
        %9443 = vrot.lane.b32.xlu0 %v9249, 48
        %v9444 = vpop.permute.xlu0 %9443
        %9445 = vrot.lane.b32.xlu0 %v9250, 48
        %v9446 = vpop.permute.xlu0 %9445
        %9447 = vrot.lane.b32.xlu0 %v9251, 48
        %v9448 = vpop.permute.xlu0 %9447
        %9449 = vrot.lane.b32.xlu0 %v9252, 48
        %v9450 = vpop.permute.xlu0 %9449
        %9451 = vrot.lane.b32.xlu0 %v9253, 48
        %v9452 = vpop.permute.xlu0 %9451
        %9453 = vrot.lane.b32.xlu0 %v9254, 48
        %v9454 = vpop.permute.xlu0 %9453
        %9471 = vrot.lane.b32.xlu0 %v9255, 56
        %v9472 = vpop.permute.xlu0 %9471
        %9473 = vrot.lane.b32.xlu0 %v9256, 56
        %v9474 = vpop.permute.xlu0 %9473
        %9475 = vrot.lane.b32.xlu0 %v9257, 56
        %v9476 = vpop.permute.xlu0 %9475
        %9477 = vrot.lane.b32.xlu0 %v9258, 56
        %v9478 = vpop.permute.xlu0 %9477
        %9479 = vrot.lane.b32.xlu0 %v9259, 56
        %v9480 = vpop.permute.xlu0 %9479
        %9481 = vrot.lane.b32.xlu0 %v9260, 56
        %v9482 = vpop.permute.xlu0 %9481
        %9483 = vrot.lane.b32.xlu0 %v9261, 56
        %v9484 = vpop.permute.xlu0 %9483
        %9485 = vrot.lane.b32.xlu0 %v9262, 56
        %v9486 = vpop.permute.xlu0 %9485
        %9503 = vrot.lane.b32.xlu0 %v9263, 64
        %v9504 = vpop.permute.xlu0 %9503
        %9505 = vrot.lane.b32.xlu0 %v9264, 64
        %v9506 = vpop.permute.xlu0 %9505
        %9507 = vrot.lane.b32.xlu0 %v9265, 64
        %v9508 = vpop.permute.xlu0 %9507
        %9509 = vrot.lane.b32.xlu0 %v9266, 64
        %v9510 = vpop.permute.xlu0 %9509
        %9511 = vrot.lane.b32.xlu0 %v9267, 64
        %v9512 = vpop.permute.xlu0 %9511
        %9513 = vrot.lane.b32.xlu0 %v9268, 64
        %v9514 = vpop.permute.xlu0 %9513
        %9515 = vrot.lane.b32.xlu0 %v9269, 64
        %v9516 = vpop.permute.xlu0 %9515
        %9517 = vrot.lane.b32.xlu0 %v9270, 64
        %v9518 = vpop.permute.xlu0 %9517
        %v9527 = vsel %vm2285, %v9198, %v9280
        %v9528 = vsel %vm2285, %v9199, %v9282
        %v9529 = vsel %vm2285, %v9200, %v9284
        %v9530 = vsel %vm2285, %v9201, %v9286
        %v9531 = vsel %vm2285, %v9202, %v9288
        %v9532 = vsel %vm2285, %v9203, %v9290
        %v9533 = vsel %vm2285, %v9204, %v9292
        %v9534 = vsel %vm2285, %v9205, %v9294
        %v9535 = vsel %vm850, %v9527, %v9312
        %v9536 = vsel %vm850, %v9528, %v9314
        %v9537 = vsel %vm850, %v9529, %v9316
        %v9538 = vsel %vm850, %v9530, %v9318
        %v9539 = vsel %vm850, %v9531, %v9320
        %v9540 = vsel %vm850, %v9532, %v9322
        %v9541 = vsel %vm850, %v9533, %v9324
        %v9542 = vsel %vm850, %v9534, %v9326
        %v9543 = vsel %vm2416, %v9535, %v9344
        %v9544 = vsel %vm2416, %v9536, %v9346
        %v9545 = vsel %vm2416, %v9537, %v9348
        %v9546 = vsel %vm2416, %v9538, %v9350
        %v9547 = vsel %vm2416, %v9539, %v9352
        %v9548 = vsel %vm2416, %v9540, %v9354
        %v9549 = vsel %vm2416, %v9541, %v9356
        %v9550 = vsel %vm2416, %v9542, %v9358
        %v9551 = vsel %vm2482, %v9543, %v9376
        %v9552 = vsel %vm2482, %v9544, %v9378
        %v9553 = vsel %vm2482, %v9545, %v9380
        %v9554 = vsel %vm2482, %v9546, %v9382
        %v9555 = vsel %vm2482, %v9547, %v9384
        %v9556 = vsel %vm2482, %v9548, %v9386
        %v9557 = vsel %vm2482, %v9549, %v9388
        %v9558 = vsel %vm2482, %v9550, %v9390
        %v9559 = vsel %vm4287, %v9551, %v9408
        %v9560 = vsel %vm4287, %v9552, %v9410
        %v9561 = vsel %vm4287, %v9553, %v9412
        %v9562 = vsel %vm4287, %v9554, %v9414
        %v9563 = vsel %vm4287, %v9555, %v9416
        %v9564 = vsel %vm4287, %v9556, %v9418
        %v9565 = vsel %vm4287, %v9557, %v9420
        %v9566 = vsel %vm4287, %v9558, %v9422
        %v9567 = vsel %vm4320, %v9559, %v9440
        %v9568 = vsel %vm4320, %v9560, %v9442
        %v9569 = vsel %vm4320, %v9561, %v9444
        %v9570 = vsel %vm4320, %v9562, %v9446
        %v9571 = vsel %vm4320, %v9563, %v9448
        %v9572 = vsel %vm4320, %v9564, %v9450
        %v9573 = vsel %vm4320, %v9565, %v9452
        %v9574 = vsel %vm4320, %v9566, %v9454
        %v9575 = vsel %vm4353, %v9567, %v9472
        %v9576 = vsel %vm4353, %v9568, %v9474
        %v9577 = vsel %vm4353, %v9569, %v9476
        %v9578 = vsel %vm4353, %v9570, %v9478
        %v9579 = vsel %vm4353, %v9571, %v9480
        %v9580 = vsel %vm4353, %v9572, %v9482
        %v9581 = vsel %vm4353, %v9573, %v9484
        %v9582 = vsel %vm4353, %v9574, %v9486
        %v9583 = vsel %vm4386, %v9575, %v9504
        %v9584 = vsel %vm4386, %v9576, %v9506
        %v9585 = vsel %vm4386, %v9577, %v9508
        %v9586 = vsel %vm4386, %v9578, %v9510
        %v9587 = vsel %vm4386, %v9579, %v9512
        %v9588 = vsel %vm4386, %v9580, %v9514
        %v9589 = vsel %vm4386, %v9581, %v9516
        %v9590 = vsel %vm4386, %v9582, %v9518
        %v9591 = vpack.c.bf16 %v9584, %v9583
        %v9592 = vpack.c.bf16 %v9586, %v9585
        %v9593 = vpack.c.bf16 %v9588, %v9587
        %v9594 = vpack.c.bf16 %v9590, %v9589
        %v9595 = vld [vmem:[%s18] sm:$0xf]
        %v9596 = vld [vmem:[%s18 + $0x4] sm:$0xf]
        %v9597 = vld [vmem:[%s18 + $0x8] sm:$0xf]
        %v9598 = vld [vmem:[%s18 + $0xc] sm:$0xf]
        %v9599 = vld [vmem:[%s18 + $0x10] sm:$0xf]
        %v9600 = vld [vmem:[%s18 + $0x14] sm:$0xf]
        %v9601 = vld [vmem:[%s18 + $0x18] sm:$0xf]
        %v9602 = vld [vmem:[%s18 + $0x1c] sm:$0xf]
        %v9603 = vld [vmem:[%s18 + $0x20] sm:$0xf]
        %v9604 = vld [vmem:[%s17] sm:$0x1]
        %v9606 = vperm.slane %v9604, 0
        %v9617 = vunpack.c.l.b16 %v9595
        %v9618 = vunpack.c.l.b16 %v9596
        %v9619 = vunpack.c.l.b16 %v9597
        %v9620 = vunpack.c.l.b16 %v9598
        %v9621 = vunpack.c.l.b16 %v9599
        %v9622 = vunpack.c.l.b16 %v9600
        %v9623 = vunpack.c.l.b16 %v9601
        %v9624 = vunpack.c.l.b16 %v9602
        %v9625 = vunpack.c.l.b16 %v9603
        %v9626 = vpack.c.b16 %v9618, %v9617
        %v9627 = vpack.c.b16 %v9620, %v9619
        %v9628 = vpack.c.b16 %v9622, %v9621
        %v9629 = vpack.c.b16 %v9624, %v9623
        %v9630 = vpack.c.b16 %v9625, %v9625
        %v9636 = vsel %vm4475, %v9591, 0
        %v9639 = vsel %vm4475, %v9592, 0
        %v9642 = vsel %vm4475, %v9593, 0
        %v9645 = vsel %vm4475, %v9594, 0
        %v9648 = vsel %vm4524, %v9630, 0
        %9650 = vmatpush.bf16.msra.mxu0 0
        %9651 = vmatpush.bf16.msra.mxu0 0
        %9652 = vmatpush.bf16.msra.mxu0 0
        %9653 = vmatpush.bf16.msra.mxu0 %v9648
        %9654 = vmatpush.bf16.msra.mxu0 %v9629
        %9655 = vmatpush.bf16.msra.mxu0 %v9628
        %9656 = vmatpush.bf16.msra.mxu0 %v9627
        %9657 = vmatpush.bf16.msra.mxu0 %v9626
        %9658 = vmatmul.bf16.gmra.mxu0 %v9636
        %v9659 = vpop.f32.mrf.mxu0
        %v9660 = vadd.f32 %v9606, %v9659
        %v9661 = vpop.f32.mrf.mxu0
        %v9662 = vadd.f32 %v9606, %v9661
        %9663 = vmatmul.bf16.gmra.mxu0 %v9639
        %v9664 = vpop.f32.mrf.mxu0
        %v9665 = vadd.f32 %v9606, %v9664
        %v9666 = vpop.f32.mrf.mxu0
        %v9667 = vadd.f32 %v9606, %v9666
        %9668 = vmatmul.bf16.gmra.mxu0 %v9642
        %v9669 = vpop.f32.mrf.mxu0
        %v9670 = vadd.f32 %v9606, %v9669
        %v9671 = vpop.f32.mrf.mxu0
        %v9672 = vadd.f32 %v9606, %v9671
        %9673 = vmatmul.bf16.gmra.mxu0 %v9645
        %v9674 = vpop.f32.mrf.mxu0
        %v9675 = vadd.f32 %v9606, %v9674
        %v9676 = vpop.f32.mrf.mxu0
        %v9677 = vadd.f32 %v9606, %v9676
        %9678 = vdwg.mxu0
        %v9679 = vmax.f32 %v9660, 0.0
        %v9680 = vmax.f32 %v9662, 0.0
        %v9681 = vmax.f32 %v9665, 0.0
        %v9682 = vmax.f32 %v9667, 0.0
        %v9683 = vmax.f32 %v9670, 0.0
        %v9684 = vmax.f32 %v9672, 0.0
        %v9685 = vmax.f32 %v9675, 0.0
        %v9686 = vmax.f32 %v9677, 0.0
        %v9687 = vld [vmem:[%s19] sm:$0x1]
        %v9688 = vpack.c.bf16 %v8481, %v8480
        %v9689 = vpack.c.bf16 %v8483, %v8482
        %v9690 = vpack.c.bf16 %v8485, %v8484
        %v9691 = vpack.c.bf16 %v8487, %v8486
        %v9692 = vld [vmem:[%s20] sm:$0xf]
        %v9694 = vsel %vm2285, %v9688, 0
        %v9697 = vsel %vm2285, %v9689, 0
        %v9700 = vsel %vm2285, %v9690, 0
        %v9703 = vsel %vm2285, %v9691, 0
        %v9706 = vsel %vm4524, %v9692, 0
        %9708 = vmatpush.bf16.msra.mxu0 0
        %9709 = vmatpush.bf16.msra.mxu0 0
        %9710 = vmatpush.bf16.msra.mxu0 0
        %9711 = vmatpush.bf16.msra.mxu0 0
        %9712 = vmatpush.bf16.msra.mxu0 0
        %9713 = vmatpush.bf16.msra.mxu0 0
        %9714 = vmatpush.bf16.msra.mxu0 0
        %9715 = vmatpush.bf16.msra.mxu0 %v9706
        %9716 = vmatmul.bf16.gmra.mxu0 %v9694
        %v9717 = vpop.f32.mrf.mxu0
        %v9718 = vadd.f32 0.0, %v9717
        %v9719 = vpop.f32.mrf.mxu0
        %v9720 = vadd.f32 0.0, %v9719
        %9721 = vmatmul.bf16.gmra.mxu0 %v9697
        %v9722 = vpop.f32.mrf.mxu0
        %v9723 = vadd.f32 0.0, %v9722
        %v9724 = vpop.f32.mrf.mxu0
        %v9725 = vadd.f32 0.0, %v9724
        %9726 = vmatmul.bf16.gmra.mxu0 %v9700
        %v9727 = vpop.f32.mrf.mxu0
        %v9728 = vadd.f32 0.0, %v9727
        %v9729 = vpop.f32.mrf.mxu0
        %v9730 = vadd.f32 0.0, %v9729
        %9731 = vmatmul.bf16.gmra.mxu0 %v9703
        %v9732 = vpop.f32.mrf.mxu0
        %v9733 = vadd.f32 0.0, %v9732
        %v9734 = vpop.f32.mrf.mxu0
        %v9735 = vadd.f32 0.0, %v9734
        %9736 = vdwg.mxu0
        %v9738 = vperm.slane %v9687, 0
        %v9740 = vadd.f32 %v9738, %v9718
        %v9741 = vadd.f32 %v9738, %v9720
        %v9742 = vadd.f32 %v9738, %v9723
        %v9743 = vadd.f32 %v9738, %v9725
        %v9744 = vadd.f32 %v9738, %v9728
        %v9745 = vadd.f32 %v9738, %v9730
        %v9746 = vadd.f32 %v9738, %v9733
        %v9747 = vadd.f32 %v9738, %v9735
        %v9748 = vpack.c.bf16 %v9080, %v9079
        %v9749 = vpack.c.bf16 %v9082, %v9081
        %v9750 = vpack.c.bf16 %v9084, %v9083
        %v9751 = vpack.c.bf16 %v9086, %v9085
        %v9752 = vld [vmem:[%s20 + $0x4] sm:$0xf]
        %v9754 = vsel %vm2285, %v9748, 0
        %v9757 = vsel %vm2285, %v9749, 0
        %v9760 = vsel %vm2285, %v9750, 0
        %v9763 = vsel %vm2285, %v9751, 0
        %v9766 = vsel %vm4524, %v9752, 0
        %9768 = vmatpush.bf16.msra.mxu0 0
        %9769 = vmatpush.bf16.msra.mxu0 0
        %9770 = vmatpush.bf16.msra.mxu0 0
        %9771 = vmatpush.bf16.msra.mxu0 0
        %9772 = vmatpush.bf16.msra.mxu0 0
        %9773 = vmatpush.bf16.msra.mxu0 0
        %9774 = vmatpush.bf16.msra.mxu0 0
        %9775 = vmatpush.bf16.msra.mxu0 %v9766
        %9776 = vmatmul.bf16.gmra.mxu0 %v9754
        %v9777 = vpop.f32.mrf.mxu0
        %v9778 = vadd.f32 0.0, %v9777
        %v9779 = vpop.f32.mrf.mxu0
        %v9780 = vadd.f32 0.0, %v9779
        %9781 = vmatmul.bf16.gmra.mxu0 %v9757
        %v9782 = vpop.f32.mrf.mxu0
        %v9783 = vadd.f32 0.0, %v9782
        %v9784 = vpop.f32.mrf.mxu0
        %v9785 = vadd.f32 0.0, %v9784
        %9786 = vmatmul.bf16.gmra.mxu0 %v9760
        %v9787 = vpop.f32.mrf.mxu0
        %v9788 = vadd.f32 0.0, %v9787
        %v9789 = vpop.f32.mrf.mxu0
        %v9790 = vadd.f32 0.0, %v9789
        %9791 = vmatmul.bf16.gmra.mxu0 %v9763
        %v9792 = vpop.f32.mrf.mxu0
        %v9793 = vadd.f32 0.0, %v9792
        %v9794 = vpop.f32.mrf.mxu0
        %v9795 = vadd.f32 0.0, %v9794
        %9796 = vdwg.mxu0
        %v9797 = vadd.f32 %v9740, %v9778
        %v9798 = vadd.f32 %v9741, %v9780
        %v9799 = vadd.f32 %v9742, %v9783
        %v9800 = vadd.f32 %v9743, %v9785
        %v9801 = vadd.f32 %v9744, %v9788
        %v9802 = vadd.f32 %v9745, %v9790
        %v9803 = vadd.f32 %v9746, %v9793
        %v9804 = vadd.f32 %v9747, %v9795
        %v9805 = vpack.c.bf16 %v9680, %v9679
        %v9806 = vpack.c.bf16 %v9682, %v9681
        %v9807 = vpack.c.bf16 %v9684, %v9683
        %v9808 = vpack.c.bf16 %v9686, %v9685
        %v9809 = vld [vmem:[%s20 + $0x8] sm:$0xf]
        %v9811 = vsel %vm2285, %v9805, 0
        %v9814 = vsel %vm2285, %v9806, 0
        %v9817 = vsel %vm2285, %v9807, 0
        %v9820 = vsel %vm2285, %v9808, 0
        %v9823 = vsel %vm4524, %v9809, 0
        %9825 = vmatpush.bf16.msra.mxu0 0
        %9826 = vmatpush.bf16.msra.mxu0 0
        %9827 = vmatpush.bf16.msra.mxu0 0
        %9828 = vmatpush.bf16.msra.mxu0 0
        %9829 = vmatpush.bf16.msra.mxu0 0
        %9830 = vmatpush.bf16.msra.mxu0 0
        %9831 = vmatpush.bf16.msra.mxu0 0
        %9832 = vmatpush.bf16.msra.mxu0 %v9823
        %9833 = vmatmul.bf16.gmra.mxu0 %v9811
        %v9834 = vpop.f32.mrf.mxu0
        %v9835 = vadd.f32 0.0, %v9834
        %v9836 = vpop.f32.mrf.mxu0
        %v9837 = vadd.f32 0.0, %v9836
        %9838 = vmatmul.bf16.gmra.mxu0 %v9814
        %v9839 = vpop.f32.mrf.mxu0
        %v9840 = vadd.f32 0.0, %v9839
        %v9841 = vpop.f32.mrf.mxu0
        %v9842 = vadd.f32 0.0, %v9841
        %9843 = vmatmul.bf16.gmra.mxu0 %v9817
        %v9844 = vpop.f32.mrf.mxu0
        %v9845 = vadd.f32 0.0, %v9844
        %v9846 = vpop.f32.mrf.mxu0
        %v9847 = vadd.f32 0.0, %v9846
        %9848 = vmatmul.bf16.gmra.mxu0 %v9820
        %v9849 = vpop.f32.mrf.mxu0
        %v9850 = vadd.f32 0.0, %v9849
        %v9851 = vpop.f32.mrf.mxu0
        %v9852 = vadd.f32 0.0, %v9851
        %9853 = vdwg.mxu0
        %v9854 = vadd.f32 %v9797, %v9835
        %v9855 = vadd.f32 %v9798, %v9837
        %v9856 = vadd.f32 %v9799, %v9840
        %v9857 = vadd.f32 %v9800, %v9842
        %v9858 = vadd.f32 %v9801, %v9845
        %v9859 = vadd.f32 %v9802, %v9847
        %v9860 = vadd.f32 %v9803, %v9850
        %v9861 = vadd.f32 %v9804, %v9852
        %v9862 = vld [vmem:[%s22] sm:$0xf]
        %v9863 = vld [vmem:[%s22 + $0x4] sm:$0xf]
        %v9864 = vld [vmem:[%s21] sm:$0x1]
        %v9866 = vperm.slane %v9864, 0
        %v9870 = vunpack.c.l.b16 %v9862
        %v9871 = vunpack.c.l.b16 %v9863
        %v9872 = vpack.c.b16 %v9871, %v9870
        %9874 = vmatpush.bf16.msra.mxu0 0
        %9875 = vmatpush.bf16.msra.mxu0 0
        %9876 = vmatpush.bf16.msra.mxu0 0
        %9877 = vmatpush.bf16.msra.mxu0 0
        %9878 = vmatpush.bf16.msra.mxu0 0
        %9879 = vmatpush.bf16.msra.mxu0 0
        %9880 = vmatpush.bf16.msra.mxu0 0
        %9881 = vmatpush.bf16.msra.mxu0 %v9872
        %9882 = vmatmul.bf16.gmra.mxu0 %v8440
        %v9883 = vpop.f32.mrf.mxu0
        %v9884 = vadd.f32 %v9866, %v9883
        %v9885 = vpop.f32.mrf.mxu0
        %v9886 = vadd.f32 %v9866, %v9885
        %9887 = vmatmul.bf16.gmra.mxu0 %v8443
        %v9888 = vpop.f32.mrf.mxu0
        %v9889 = vadd.f32 %v9866, %v9888
        %v9890 = vpop.f32.mrf.mxu0
        %v9891 = vadd.f32 %v9866, %v9890
        %9892 = vmatmul.bf16.gmra.mxu0 %v8446
        %v9893 = vpop.f32.mrf.mxu0
        %v9894 = vadd.f32 %v9866, %v9893
        %v9895 = vpop.f32.mrf.mxu0
        %v9896 = vadd.f32 %v9866, %v9895
        %9897 = vmatmul.bf16.gmra.mxu0 %v8449
        %v9898 = vpop.f32.mrf.mxu0
        %v9899 = vadd.f32 %v9866, %v9898
        %v9900 = vpop.f32.mrf.mxu0
        %v9901 = vadd.f32 %v9866, %v9900
        %9902 = vdwg.mxu0
        %v9903 = vmul.f32 %v9854, 0.1
        %v9904 = vmul.f32 %v9855, 0.1
        %v9905 = vmul.f32 %v9856, 0.1
        %v9906 = vmul.f32 %v9857, 0.1
        %v9907 = vmul.f32 %v9858, 0.1
        %v9908 = vmul.f32 %v9859, 0.1
        %v9909 = vmul.f32 %v9860, 0.1
        %v9910 = vmul.f32 %v9861, 0.1
        %v9911 = vadd.f32 %v9903, %v9884
        %v9912 = vadd.f32 %v9904, %v9886
        %v9913 = vadd.f32 %v9905, %v9889
        %v9914 = vadd.f32 %v9906, %v9891
        %v9915 = vadd.f32 %v9907, %v9894
        %v9916 = vadd.f32 %v9908, %v9896
        %v9917 = vadd.f32 %v9909, %v9899
        %v9918 = vadd.f32 %v9910, %v9901
        %v9919 = vmax.f32 %v9911, 0.0
        %v9920 = vmax.f32 %v9912, 0.0
        %v9921 = vmax.f32 %v9913, 0.0
        %v9922 = vmax.f32 %v9914, 0.0
        %v9923 = vmax.f32 %v9915, 0.0
        %v9924 = vmax.f32 %v9916, 0.0
        %v9925 = vmax.f32 %v9917, 0.0
        %v9926 = vmax.f32 %v9918, 0.0
        %9927 = vst.msk [vmem:[#allocation2] sm:$0xff] %vm850, 0.0
        %9928 = vst.msk [vmem:[#allocation2 + $0x8] sm:$0xff] %vm850, 0.0
        %9929 = vst.msk [vmem:[#allocation2 + $0x10] sm:$0x3] %vm853, 0.0
        %9930 = vst.msk [vmem:[#allocation2 + $0x18] sm:$0xff] %vm850, 0.0
        %9931 = vst.msk [vmem:[#allocation2 + $0x20] sm:$0xff] %vm850, 0.0
        %9932 = vst.msk [vmem:[#allocation2 + $0x28] sm:$0x3] %vm853, 0.0
        %9933 = vst.msk [vmem:[#allocation2 + $0x30] sm:$0xff] %vm850, 0.0
        %9934 = vst.msk [vmem:[#allocation2 + $0x38] sm:$0xff] %vm850, 0.0
        %9935 = vst.msk [vmem:[#allocation2 + $0x40] sm:$0x3] %vm853, 0.0
        %9936 = vst.msk [vmem:[#allocation2 + $0x48] sm:$0xff] %vm850, 0.0
        %9937 = vst.msk [vmem:[#allocation2 + $0x50] sm:$0xff] %vm850, 0.0
        %9938 = vst.msk [vmem:[#allocation2 + $0x58] sm:$0x3] %vm853, 0.0
        %9939 = vst.msk [vmem:[#allocation2 + $0x60] sm:$0xff] %vm850, 0.0
        %9940 = vst.msk [vmem:[#allocation2 + $0x68] sm:$0xff] %vm850, 0.0
        %9941 = vst.msk [vmem:[#allocation2 + $0x70] sm:$0x3] %vm853, 0.0
        %9942 = vst.msk [vmem:[#allocation2 + $0x78] sm:$0xff] %vm850, 0.0
        %9943 = vst.msk [vmem:[#allocation2 + $0x80] sm:$0xff] %vm850, 0.0
        %9944 = vst.msk [vmem:[#allocation2 + $0x88] sm:$0x3] %vm853, 0.0
        %9945 = vst.msk [vmem:[#allocation2 + $0x90] sm:$0xff] %vm850, 0.0
        %9946 = vst.msk [vmem:[#allocation2 + $0x98] sm:$0xff] %vm850, 0.0
        %9947 = vst.msk [vmem:[#allocation2 + $0xa0] sm:$0x3] %vm853, 0.0
        %9948 = vst.msk [vmem:[#allocation2 + $0xa8] sm:$0xff] %vm850, 0.0
        %9949 = vst.msk [vmem:[#allocation2 + $0xb0] sm:$0xff] %vm850, 0.0
        %9950 = vst.msk [vmem:[#allocation2 + $0xb8] sm:$0x3] %vm853, 0.0
        %9951 = vst.msk [vmem:[#allocation2 + $0xc0] sm:$0xff] %vm850, 0.0
        %9952 = vst.msk [vmem:[#allocation2 + $0xc8] sm:$0xff] %vm850, 0.0
        %9953 = vst.msk [vmem:[#allocation2 + $0xd0] sm:$0x3] %vm853, 0.0
        %9954 = vst.msk [vmem:[#allocation2 + $0xd8] sm:$0xff] %vm850, 0.0
        %9955 = vst.msk [vmem:[#allocation2 + $0xe0] sm:$0xff] %vm850, 0.0
        %9956 = vst.msk [vmem:[#allocation2 + $0xe8] sm:$0x3] %vm853, 0.0
        %9957 = vst.msk [vmem:[#allocation2 + $0xf0] sm:$0xff] %vm850, 0.0
        %9958 = vst.msk [vmem:[#allocation2 + $0xf8] sm:$0xff] %vm850, 0.0
        %9959 = vst.msk [vmem:[#allocation2 + $0x100] sm:$0x3] %vm853, 0.0
        %9960 = vst.msk [vmem:[#allocation2 + $0x108] sm:$0xff] %vm850, 0.0
        %9961 = vst.msk [vmem:[#allocation2 + $0x110] sm:$0xff] %vm850, 0.0
        %9962 = vst.msk [vmem:[#allocation2 + $0x118] sm:$0x3] %vm853, 0.0
        %9963 = vst.msk [vmem:[#allocation2 + $0x120] sm:$0xff] %vm850, 0.0
        %9964 = vst.msk [vmem:[#allocation2 + $0x128] sm:$0xff] %vm850, 0.0
        %9965 = vst.msk [vmem:[#allocation2 + $0x130] sm:$0x3] %vm853, 0.0
        %9966 = vst.msk [vmem:[#allocation2 + $0x138] sm:$0xff] %vm850, 0.0
        %9967 = vst.msk [vmem:[#allocation2 + $0x140] sm:$0xff] %vm850, 0.0
        %9968 = vst.msk [vmem:[#allocation2 + $0x148] sm:$0x3] %vm853, 0.0
        %9969 = vst.msk [vmem:[#allocation2 + $0x150] sm:$0xff] %vm850, 0.0
        %9970 = vst.msk [vmem:[#allocation2 + $0x158] sm:$0xff] %vm850, 0.0
        %9971 = vst.msk [vmem:[#allocation2 + $0x160] sm:$0x3] %vm853, 0.0
        %9972 = vst.msk [vmem:[#allocation2 + $0x168] sm:$0xff] %vm850, 0.0
        %9973 = vst.msk [vmem:[#allocation2 + $0x170] sm:$0xff] %vm850, 0.0
        %9974 = vst.msk [vmem:[#allocation2 + $0x178] sm:$0x3] %vm853, 0.0
        %9975 = vst.msk [vmem:[#allocation2 + $0x180] sm:$0xff] %vm850, 0.0
        %9976 = vst.msk [vmem:[#allocation2 + $0x188] sm:$0xff] %vm850, 0.0
        %9977 = vst.msk [vmem:[#allocation2 + $0x190] sm:$0x3] %vm853, 0.0
        %9978 = vst.msk [vmem:[#allocation2 + $0x198] sm:$0xff] %vm850, 0.0
        %9979 = vst.msk [vmem:[#allocation2 + $0x1a0] sm:$0xff] %vm850, 0.0
        %9980 = vst.msk [vmem:[#allocation2 + $0x1a8] sm:$0x3] %vm853, 0.0
        %9981 = vst.msk [vmem:[%s906 + $0x1] sm:$0xff] %vm850, %v9919
        %9982 = vst.msk [vmem:[%s906 + $0x19] sm:$0xff] %vm850, %v9920
        %9983 = vst.msk [vmem:[%s906 + $0x31] sm:$0xff] %vm850, %v9921
        %9984 = vst.msk [vmem:[%s906 + $0x49] sm:$0xff] %vm850, %v9922
        %9985 = vst.msk [vmem:[%s906 + $0x61] sm:$0xff] %vm850, %v9923
        %9986 = vst.msk [vmem:[%s906 + $0x79] sm:$0xff] %vm850, %v9924
        %9987 = vst.msk [vmem:[%s906 + $0x91] sm:$0xff] %vm850, %v9925
        %9988 = vst.msk [vmem:[%s906 + $0xa9] sm:$0xff] %vm850, %v9926
        %v9989 = vld [vmem:[#allocation2] sm:$0xff]
        %v9990 = vld [vmem:[#allocation2 + $0x18] sm:$0xff]
        %v9991 = vld [vmem:[#allocation2 + $0x30] sm:$0xff]
        %v9992 = vld [vmem:[#allocation2 + $0x48] sm:$0xff]
        %v9993 = vld [vmem:[#allocation2 + $0x60] sm:$0xff]
        %v9994 = vld [vmem:[#allocation2 + $0x78] sm:$0xff]
        %v9995 = vld [vmem:[#allocation2 + $0x90] sm:$0xff]
        %v9996 = vld [vmem:[#allocation2 + $0xa8] sm:$0xff]
        %v9997 = vld [vmem:[#allocation2 + $0x1] sm:$0xff]
        %v9998 = vld [vmem:[#allocation2 + $0x19] sm:$0xff]
        %v9999 = vld [vmem:[#allocation2 + $0x31] sm:$0xff]
        %v10000 = vld [vmem:[#allocation2 + $0x49] sm:$0xff]
        %v10001 = vld [vmem:[#allocation2 + $0x61] sm:$0xff]
        %v10002 = vld [vmem:[#allocation2 + $0x79] sm:$0xff]
        %v10003 = vld [vmem:[#allocation2 + $0x91] sm:$0xff]
        %v10004 = vld [vmem:[#allocation2 + $0xa9] sm:$0xff]
        %v10005 = vld [vmem:[#allocation2 + $0x2] sm:$0xff]
        %v10006 = vld [vmem:[#allocation2 + $0x1a] sm:$0xff]
        %v10007 = vld [vmem:[#allocation2 + $0x32] sm:$0xff]
        %v10008 = vld [vmem:[#allocation2 + $0x4a] sm:$0xff]
        %v10009 = vld [vmem:[#allocation2 + $0x62] sm:$0xff]
        %v10010 = vld [vmem:[#allocation2 + $0x7a] sm:$0xff]
        %v10011 = vld [vmem:[#allocation2 + $0x92] sm:$0xff]
        %v10012 = vld [vmem:[#allocation2 + $0xaa] sm:$0xff]
        %v10013 = vld [vmem:[%s906] sm:$0xff]
        %v10014 = vld [vmem:[%s906 + $0x18] sm:$0xff]
        %v10015 = vld [vmem:[%s906 + $0x30] sm:$0xff]
        %v10016 = vld [vmem:[%s906 + $0x48] sm:$0xff]
        %v10017 = vld [vmem:[%s906 + $0x60] sm:$0xff]
        %v10018 = vld [vmem:[%s906 + $0x78] sm:$0xff]
        %v10019 = vld [vmem:[%s906 + $0x90] sm:$0xff]
        %v10020 = vld [vmem:[%s906 + $0xa8] sm:$0xff]
        %v10021 = vld [vmem:[%s906 + $0x1] sm:$0xff]
        %v10022 = vld [vmem:[%s906 + $0x19] sm:$0xff]
        %v10023 = vld [vmem:[%s906 + $0x31] sm:$0xff]
        %v10024 = vld [vmem:[%s906 + $0x49] sm:$0xff]
        %v10025 = vld [vmem:[%s906 + $0x61] sm:$0xff]
        %v10026 = vld [vmem:[%s906 + $0x79] sm:$0xff]
        %v10027 = vld [vmem:[%s906 + $0x91] sm:$0xff]
        %v10028 = vld [vmem:[%s906 + $0xa9] sm:$0xff]
        %v10029 = vld [vmem:[%s906 + $0x2] sm:$0xff]
        %v10030 = vld [vmem:[%s906 + $0x1a] sm:$0xff]
        %v10031 = vld [vmem:[%s906 + $0x32] sm:$0xff]
        %v10032 = vld [vmem:[%s906 + $0x4a] sm:$0xff]
        %v10033 = vld [vmem:[%s906 + $0x62] sm:$0xff]
        %v10034 = vld [vmem:[%s906 + $0x7a] sm:$0xff]
        %v10035 = vld [vmem:[%s906 + $0x92] sm:$0xff]
        %v10036 = vld [vmem:[%s906 + $0xaa] sm:$0xff]
        %v10037 = vld [vmem:[%s1132] sm:$0xff]
        %v10038 = vld [vmem:[%s1132 + $0x18] sm:$0xff]
        %v10039 = vld [vmem:[%s1132 + $0x30] sm:$0xff]
        %v10040 = vld [vmem:[%s1132 + $0x48] sm:$0xff]
        %v10041 = vld [vmem:[%s1132 + $0x60] sm:$0xff]
        %v10042 = vld [vmem:[%s1132 + $0x78] sm:$0xff]
        %v10043 = vld [vmem:[%s1132 + $0x90] sm:$0xff]
        %v10044 = vld [vmem:[%s1132 + $0xa8] sm:$0xff]
        %v10045 = vld [vmem:[%s1132 + $0x1] sm:$0xff]
        %v10046 = vld [vmem:[%s1132 + $0x19] sm:$0xff]
        %v10047 = vld [vmem:[%s1132 + $0x31] sm:$0xff]
        %v10048 = vld [vmem:[%s1132 + $0x49] sm:$0xff]
        %v10049 = vld [vmem:[%s1132 + $0x61] sm:$0xff]
        %v10050 = vld [vmem:[%s1132 + $0x79] sm:$0xff]
        %v10051 = vld [vmem:[%s1132 + $0x91] sm:$0xff]
        %v10052 = vld [vmem:[%s1132 + $0xa9] sm:$0xff]
        %v10053 = vld [vmem:[%s1132 + $0x2] sm:$0xff]
        %v10054 = vld [vmem:[%s1132 + $0x1a] sm:$0xff]
        %v10055 = vld [vmem:[%s1132 + $0x32] sm:$0xff]
        %v10056 = vld [vmem:[%s1132 + $0x4a] sm:$0xff]
        %v10057 = vld [vmem:[%s1132 + $0x62] sm:$0xff]
        %v10058 = vld [vmem:[%s1132 + $0x7a] sm:$0xff]
        %v10059 = vld [vmem:[%s1132 + $0x92] sm:$0xff]
        %v10060 = vld [vmem:[%s1132 + $0xaa] sm:$0xff]
        %10069 = vrot.lane.b32.xlu0 %v9997, 16
        %v10070 = vpop.permute.xlu0 %10069
        %10071 = vrot.lane.b32.xlu0 %v9998, 16
        %v10072 = vpop.permute.xlu0 %10071
        %10073 = vrot.lane.b32.xlu0 %v9999, 16
        %v10074 = vpop.permute.xlu0 %10073
        %10075 = vrot.lane.b32.xlu0 %v10000, 16
        %v10076 = vpop.permute.xlu0 %10075
        %10077 = vrot.lane.b32.xlu0 %v10001, 16
        %v10078 = vpop.permute.xlu0 %10077
        %10079 = vrot.lane.b32.xlu0 %v10002, 16
        %v10080 = vpop.permute.xlu0 %10079
        %10081 = vrot.lane.b32.xlu0 %v10003, 16
        %v10082 = vpop.permute.xlu0 %10081
        %10083 = vrot.lane.b32.xlu0 %v10004, 16
        %v10084 = vpop.permute.xlu0 %10083
        %10101 = vrot.lane.b32.xlu0 %v10005, 32
        %v10102 = vpop.permute.xlu0 %10101
        %10103 = vrot.lane.b32.xlu0 %v10006, 32
        %v10104 = vpop.permute.xlu0 %10103
        %10105 = vrot.lane.b32.xlu0 %v10007, 32
        %v10106 = vpop.permute.xlu0 %10105
        %10107 = vrot.lane.b32.xlu0 %v10008, 32
        %v10108 = vpop.permute.xlu0 %10107
        %10109 = vrot.lane.b32.xlu0 %v10009, 32
        %v10110 = vpop.permute.xlu0 %10109
        %10111 = vrot.lane.b32.xlu0 %v10010, 32
        %v10112 = vpop.permute.xlu0 %10111
        %10113 = vrot.lane.b32.xlu0 %v10011, 32
        %v10114 = vpop.permute.xlu0 %10113
        %10115 = vrot.lane.b32.xlu0 %v10012, 32
        %v10116 = vpop.permute.xlu0 %10115
        %10133 = vrot.lane.b32.xlu0 %v10013, 48
        %v10134 = vpop.permute.xlu0 %10133
        %10135 = vrot.lane.b32.xlu0 %v10014, 48
        %v10136 = vpop.permute.xlu0 %10135
        %10137 = vrot.lane.b32.xlu0 %v10015, 48
        %v10138 = vpop.permute.xlu0 %10137
        %10139 = vrot.lane.b32.xlu0 %v10016, 48
        %v10140 = vpop.permute.xlu0 %10139
        %10141 = vrot.lane.b32.xlu0 %v10017, 48
        %v10142 = vpop.permute.xlu0 %10141
        %10143 = vrot.lane.b32.xlu0 %v10018, 48
        %v10144 = vpop.permute.xlu0 %10143
        %10145 = vrot.lane.b32.xlu0 %v10019, 48
        %v10146 = vpop.permute.xlu0 %10145
        %10147 = vrot.lane.b32.xlu0 %v10020, 48
        %v10148 = vpop.permute.xlu0 %10147
        %10165 = vrot.lane.b32.xlu0 %v10021, 64
        %v10166 = vpop.permute.xlu0 %10165
        %10167 = vrot.lane.b32.xlu0 %v10022, 64
        %v10168 = vpop.permute.xlu0 %10167
        %10169 = vrot.lane.b32.xlu0 %v10023, 64
        %v10170 = vpop.permute.xlu0 %10169
        %10171 = vrot.lane.b32.xlu0 %v10024, 64
        %v10172 = vpop.permute.xlu0 %10171
        %10173 = vrot.lane.b32.xlu0 %v10025, 64
        %v10174 = vpop.permute.xlu0 %10173
        %10175 = vrot.lane.b32.xlu0 %v10026, 64
        %v10176 = vpop.permute.xlu0 %10175
        %10177 = vrot.lane.b32.xlu0 %v10027, 64
        %v10178 = vpop.permute.xlu0 %10177
        %10179 = vrot.lane.b32.xlu0 %v10028, 64
        %v10180 = vpop.permute.xlu0 %10179
        %10197 = vrot.lane.b32.xlu0 %v10029, 80
        %v10198 = vpop.permute.xlu0 %10197
        %10199 = vrot.lane.b32.xlu0 %v10030, 80
        %v10200 = vpop.permute.xlu0 %10199
        %10201 = vrot.lane.b32.xlu0 %v10031, 80
        %v10202 = vpop.permute.xlu0 %10201
        %10203 = vrot.lane.b32.xlu0 %v10032, 80
        %v10204 = vpop.permute.xlu0 %10203
        %10205 = vrot.lane.b32.xlu0 %v10033, 80
        %v10206 = vpop.permute.xlu0 %10205
        %10207 = vrot.lane.b32.xlu0 %v10034, 80
        %v10208 = vpop.permute.xlu0 %10207
        %10209 = vrot.lane.b32.xlu0 %v10035, 80
        %v10210 = vpop.permute.xlu0 %10209
        %10211 = vrot.lane.b32.xlu0 %v10036, 80
        %v10212 = vpop.permute.xlu0 %10211
        %10229 = vrot.lane.b32.xlu0 %v10037, 96
        %v10230 = vpop.permute.xlu0 %10229
        %10231 = vrot.lane.b32.xlu0 %v10038, 96
        %v10232 = vpop.permute.xlu0 %10231
        %10233 = vrot.lane.b32.xlu0 %v10039, 96
        %v10234 = vpop.permute.xlu0 %10233
        %10235 = vrot.lane.b32.xlu0 %v10040, 96
        %v10236 = vpop.permute.xlu0 %10235
        %10237 = vrot.lane.b32.xlu0 %v10041, 96
        %v10238 = vpop.permute.xlu0 %10237
        %10239 = vrot.lane.b32.xlu0 %v10042, 96
        %v10240 = vpop.permute.xlu0 %10239
        %10241 = vrot.lane.b32.xlu0 %v10043, 96
        %v10242 = vpop.permute.xlu0 %10241
        %10243 = vrot.lane.b32.xlu0 %v10044, 96
        %v10244 = vpop.permute.xlu0 %10243
        %10261 = vrot.lane.b32.xlu0 %v10045, 112
        %v10262 = vpop.permute.xlu0 %10261
        %10263 = vrot.lane.b32.xlu0 %v10046, 112
        %v10264 = vpop.permute.xlu0 %10263
        %10265 = vrot.lane.b32.xlu0 %v10047, 112
        %v10266 = vpop.permute.xlu0 %10265
        %10267 = vrot.lane.b32.xlu0 %v10048, 112
        %v10268 = vpop.permute.xlu0 %10267
        %10269 = vrot.lane.b32.xlu0 %v10049, 112
        %v10270 = vpop.permute.xlu0 %10269
        %10271 = vrot.lane.b32.xlu0 %v10050, 112
        %v10272 = vpop.permute.xlu0 %10271
        %10273 = vrot.lane.b32.xlu0 %v10051, 112
        %v10274 = vpop.permute.xlu0 %10273
        %10275 = vrot.lane.b32.xlu0 %v10052, 112
        %v10276 = vpop.permute.xlu0 %10275
        %v10285 = vsel %vm850, %v9989, %v10070
        %v10286 = vsel %vm850, %v9990, %v10072
        %v10287 = vsel %vm850, %v9991, %v10074
        %v10288 = vsel %vm850, %v9992, %v10076
        %v10289 = vsel %vm850, %v9993, %v10078
        %v10290 = vsel %vm850, %v9994, %v10080
        %v10291 = vsel %vm850, %v9995, %v10082
        %v10292 = vsel %vm850, %v9996, %v10084
        %v10293 = vsel %vm2482, %v10285, %v10102
        %v10294 = vsel %vm2482, %v10286, %v10104
        %v10295 = vsel %vm2482, %v10287, %v10106
        %v10296 = vsel %vm2482, %v10288, %v10108
        %v10297 = vsel %vm2482, %v10289, %v10110
        %v10298 = vsel %vm2482, %v10290, %v10112
        %v10299 = vsel %vm2482, %v10291, %v10114
        %v10300 = vsel %vm2482, %v10292, %v10116
        %v10301 = vsel %vm4320, %v10293, %v10134
        %v10302 = vsel %vm4320, %v10294, %v10136
        %v10303 = vsel %vm4320, %v10295, %v10138
        %v10304 = vsel %vm4320, %v10296, %v10140
        %v10305 = vsel %vm4320, %v10297, %v10142
        %v10306 = vsel %vm4320, %v10298, %v10144
        %v10307 = vsel %vm4320, %v10299, %v10146
        %v10308 = vsel %vm4320, %v10300, %v10148
        %v10309 = vsel %vm4386, %v10301, %v10166
        %v10310 = vsel %vm4386, %v10302, %v10168
        %v10311 = vsel %vm4386, %v10303, %v10170
        %v10312 = vsel %vm4386, %v10304, %v10172
        %v10313 = vsel %vm4386, %v10305, %v10174
        %v10314 = vsel %vm4386, %v10306, %v10176
        %v10315 = vsel %vm4386, %v10307, %v10178
        %v10316 = vsel %vm4386, %v10308, %v10180
        %vm10317 = vcmask 654336
        %v10318 = vsel %vm10317, %v10309, %v10198
        %v10319 = vsel %vm10317, %v10310, %v10200
        %v10320 = vsel %vm10317, %v10311, %v10202
        %v10321 = vsel %vm10317, %v10312, %v10204
        %v10322 = vsel %vm10317, %v10313, %v10206
        %v10323 = vsel %vm10317, %v10314, %v10208
        %v10324 = vsel %vm10317, %v10315, %v10210
        %v10325 = vsel %vm10317, %v10316, %v10212
        %vm10326 = vcmask 785408
        %v10327 = vsel %vm10326, %v10318, %v10230
        %v10328 = vsel %vm10326, %v10319, %v10232
        %v10329 = vsel %vm10326, %v10320, %v10234
        %v10330 = vsel %vm10326, %v10321, %v10236
        %v10331 = vsel %vm10326, %v10322, %v10238
        %v10332 = vsel %vm10326, %v10323, %v10240
        %v10333 = vsel %vm10326, %v10324, %v10242
        %v10334 = vsel %vm10326, %v10325, %v10244
        %vm10335 = vcmask 916480
        %v10336 = vsel %vm10335, %v10327, %v10262
        %v10337 = vsel %vm10335, %v10328, %v10264
        %v10338 = vsel %vm10335, %v10329, %v10266
        %v10339 = vsel %vm10335, %v10330, %v10268
        %v10340 = vsel %vm10335, %v10331, %v10270
        %v10341 = vsel %vm10335, %v10332, %v10272
        %v10342 = vsel %vm10335, %v10333, %v10274
        %v10343 = vsel %vm10335, %v10334, %v10276
        %v10344 = vpack.c.bf16 %v10337, %v10336
        %v10345 = vpack.c.bf16 %v10054, %v10053
        %v10346 = vpack.c.bf16 %v10339, %v10338
        %v10347 = vpack.c.bf16 %v10056, %v10055
        %v10348 = vpack.c.bf16 %v10341, %v10340
        %v10349 = vpack.c.bf16 %v10058, %v10057
        %v10350 = vpack.c.bf16 %v10343, %v10342
        %v10351 = vpack.c.bf16 %v10060, %v10059
        %v10352 = vld [vmem:[%s24] sm:$0xf]
        %v10353 = vld [vmem:[%s24 + $0x4] sm:$0xf]
        %v10354 = vld [vmem:[%s24 + $0x8] sm:$0xf]
        %v10355 = vld [vmem:[%s24 + $0xc] sm:$0xf]
        %v10356 = vld [vmem:[%s24 + $0x10] sm:$0xf]
        %v10357 = vld [vmem:[%s24 + $0x14] sm:$0xf]
        %v10358 = vld [vmem:[%s24 + $0x18] sm:$0xf]
        %v10359 = vld [vmem:[%s24 + $0x1c] sm:$0xf]
        %v10360 = vld [vmem:[%s24 + $0x20] sm:$0xf]
        %v10361 = vld [vmem:[%s24 + $0x24] sm:$0xf]
        %v10362 = vld [vmem:[%s24 + $0x28] sm:$0xf]
        %v10363 = vld [vmem:[%s24 + $0x2c] sm:$0xf]
        %v10364 = vld [vmem:[%s24 + $0x30] sm:$0xf]
        %v10365 = vld [vmem:[%s24 + $0x34] sm:$0xf]
        %v10366 = vld [vmem:[%s24 + $0x38] sm:$0xf]
        %v10367 = vld [vmem:[%s24 + $0x3c] sm:$0xf]
        %v10368 = vld [vmem:[%s24 + $0x40] sm:$0xf]
        %v10369 = vld [vmem:[%s24 + $0x44] sm:$0xf]
        %v10370 = vld [vmem:[%s23] sm:$0x1]
        %v10372 = vperm.slane %v10370, 0
        %v10392 = vunpack.c.l.b16 %v10352
        %v10393 = vunpack.c.l.b16 %v10353
        %v10394 = vunpack.c.l.b16 %v10354
        %v10395 = vunpack.c.l.b16 %v10355
        %v10396 = vunpack.c.l.b16 %v10356
        %v10397 = vunpack.c.l.b16 %v10357
        %v10398 = vunpack.c.l.b16 %v10358
        %v10399 = vunpack.c.l.b16 %v10359
        %v10400 = vunpack.c.l.b16 %v10360
        %v10401 = vunpack.c.l.b16 %v10361
        %v10402 = vunpack.c.l.b16 %v10362
        %v10403 = vunpack.c.l.b16 %v10363
        %v10404 = vunpack.c.l.b16 %v10364
        %v10405 = vunpack.c.l.b16 %v10365
        %v10406 = vunpack.c.l.b16 %v10366
        %v10407 = vunpack.c.l.b16 %v10367
        %v10408 = vunpack.c.l.b16 %v10368
        %v10409 = vunpack.c.l.b16 %v10369
        %v10410 = vpack.c.b16 %v10393, %v10392
        %v10411 = vpack.c.b16 %v10395, %v10394
        %v10412 = vpack.c.b16 %v10397, %v10396
        %v10413 = vpack.c.b16 %v10399, %v10398
        %v10414 = vpack.c.b16 %v10401, %v10400
        %v10415 = vpack.c.b16 %v10403, %v10402
        %v10416 = vpack.c.b16 %v10405, %v10404
        %v10417 = vpack.c.b16 %v10407, %v10406
        %v10418 = vpack.c.b16 %v10409, %v10408
        %v10429 = vsel %vm850, %v10345, 0
        %v10432 = vsel %vm850, %v10347, 0
        %v10435 = vsel %vm850, %v10349, 0
        %v10438 = vsel %vm850, %v10351, 0
        %10440 = vmatpush.bf16.msra.mxu0 %v10417
        %10441 = vmatpush.bf16.msra.mxu0 %v10416
        %10442 = vmatpush.bf16.msra.mxu0 %v10415
        %10443 = vmatpush.bf16.msra.mxu0 %v10414
        %10444 = vmatpush.bf16.msra.mxu0 %v10413
        %10445 = vmatpush.bf16.msra.mxu0 %v10412
        %10446 = vmatpush.bf16.msra.mxu0 %v10411
        %10447 = vmatpush.bf16.msra.mxu0 %v10410
        %10448 = vmatmul.bf16.gmra.mxu0 %v10344
        %v10449 = vpop.f32.mrf.mxu0
        %v10450 = vadd.f32 %v10372, %v10449
        %v10451 = vpop.f32.mrf.mxu0
        %v10452 = vadd.f32 %v10372, %v10451
        %10453 = vmatmul.bf16.gmra.mxu0 %v10346
        %v10454 = vpop.f32.mrf.mxu0
        %v10455 = vadd.f32 %v10372, %v10454
        %v10456 = vpop.f32.mrf.mxu0
        %v10457 = vadd.f32 %v10372, %v10456
        %10458 = vmatmul.bf16.gmra.mxu0 %v10348
        %v10459 = vpop.f32.mrf.mxu0
        %v10460 = vadd.f32 %v10372, %v10459
        %v10461 = vpop.f32.mrf.mxu0
        %v10462 = vadd.f32 %v10372, %v10461
        %10463 = vmatmul.bf16.gmra.mxu0 %v10350
        %v10464 = vpop.f32.mrf.mxu0
        %v10465 = vadd.f32 %v10372, %v10464
        %v10466 = vpop.f32.mrf.mxu0
        %v10467 = vadd.f32 %v10372, %v10466
        %10468 = vdwg.mxu0
        %10469 = vmatpush.bf16.msra.mxu0 0
        %10470 = vmatpush.bf16.msra.mxu0 0
        %10471 = vmatpush.bf16.msra.mxu0 0
        %10472 = vmatpush.bf16.msra.mxu0 0
        %10473 = vmatpush.bf16.msra.mxu0 0
        %10474 = vmatpush.bf16.msra.mxu0 0
        %10475 = vmatpush.bf16.msra.mxu0 0
        %10476 = vmatpush.bf16.msra.mxu0 %v10418
        %10477 = vmatmul.bf16.gmra.mxu0 %v10429
        %v10478 = vpop.f32.mrf.mxu0
        %v10479 = vadd.f32 %v10450, %v10478
        %v10480 = vpop.f32.mrf.mxu0
        %v10481 = vadd.f32 %v10452, %v10480
        %10482 = vmatmul.bf16.gmra.mxu0 %v10432
        %v10483 = vpop.f32.mrf.mxu0
        %v10484 = vadd.f32 %v10455, %v10483
        %v10485 = vpop.f32.mrf.mxu0
        %v10486 = vadd.f32 %v10457, %v10485
        %10487 = vmatmul.bf16.gmra.mxu0 %v10435
        %v10488 = vpop.f32.mrf.mxu0
        %v10489 = vadd.f32 %v10460, %v10488
        %v10490 = vpop.f32.mrf.mxu0
        %v10491 = vadd.f32 %v10462, %v10490
        %10492 = vmatmul.bf16.gmra.mxu0 %v10438
        %v10493 = vpop.f32.mrf.mxu0
        %v10494 = vadd.f32 %v10465, %v10493
        %v10495 = vpop.f32.mrf.mxu0
        %v10496 = vadd.f32 %v10467, %v10495
        %10497 = vdwg.mxu0
        %v10498 = vmul.f32 %v10479, 0.1
        %v10499 = vmul.f32 %v10481, 0.1
        %v10500 = vmul.f32 %v10484, 0.1
        %v10501 = vmul.f32 %v10486, 0.1
        %v10502 = vmul.f32 %v10489, 0.1
        %v10503 = vmul.f32 %v10491, 0.1
        %v10504 = vmul.f32 %v10494, 0.1
        %v10505 = vmul.f32 %v10496, 0.1
        %v10506 = vmax.f32 %v10479, %v10498
        %v10507 = vmax.f32 %v10481, %v10499
        %v10508 = vmax.f32 %v10484, %v10500
        %v10509 = vmax.f32 %v10486, %v10501
        %v10510 = vmax.f32 %v10489, %v10502
        %v10511 = vmax.f32 %v10491, %v10503
        %v10512 = vmax.f32 %v10494, %v10504
        %v10513 = vmax.f32 %v10496, %v10505
        %v10522 = vrot.slane %v10506, 1
        %v10523 = vrot.slane %v10506, 2
        %v10524 = vrot.slane %v10506, 3
        %v10525 = vrot.slane %v10506, 4
        %v10526 = vrot.slane %v10506, 5
        %v10527 = vrot.slane %v10506, 6
        %v10528 = vrot.slane %v10506, 7
        %v10529 = vrot.slane %v10507, 1
        %v10530 = vrot.slane %v10507, 2
        %v10531 = vrot.slane %v10507, 3
        %v10532 = vrot.slane %v10507, 4
        %v10533 = vrot.slane %v10507, 5
        %v10534 = vrot.slane %v10507, 6
        %v10535 = vrot.slane %v10507, 7
        %v10536 = vrot.slane %v10508, 1
        %v10537 = vrot.slane %v10508, 2
        %v10538 = vrot.slane %v10508, 3
        %v10539 = vrot.slane %v10508, 4
        %v10540 = vrot.slane %v10508, 5
        %v10541 = vrot.slane %v10508, 6
        %v10542 = vrot.slane %v10508, 7
        %v10543 = vrot.slane %v10509, 1
        %v10544 = vrot.slane %v10509, 2
        %v10545 = vrot.slane %v10509, 3
        %v10546 = vrot.slane %v10509, 4
        %v10547 = vrot.slane %v10509, 5
        %v10548 = vrot.slane %v10509, 6
        %v10549 = vrot.slane %v10509, 7
        %v10550 = vrot.slane %v10510, 1
        %v10551 = vrot.slane %v10510, 2
        %v10552 = vrot.slane %v10510, 3
        %v10553 = vrot.slane %v10510, 4
        %v10554 = vrot.slane %v10510, 5
        %v10555 = vrot.slane %v10510, 6
        %v10556 = vrot.slane %v10510, 7
        %v10557 = vrot.slane %v10511, 1
        %v10558 = vrot.slane %v10511, 2
        %v10559 = vrot.slane %v10511, 3
        %v10560 = vrot.slane %v10511, 4
        %v10561 = vrot.slane %v10511, 5
        %v10562 = vrot.slane %v10511, 6
        %v10563 = vrot.slane %v10511, 7
        %v10564 = vrot.slane %v10512, 1
        %v10565 = vrot.slane %v10512, 2
        %v10566 = vrot.slane %v10512, 3
        %v10567 = vrot.slane %v10512, 4
        %v10568 = vrot.slane %v10512, 5
        %v10569 = vrot.slane %v10512, 6
        %v10570 = vrot.slane %v10512, 7
        %v10571 = vrot.slane %v10513, 1
        %v10572 = vrot.slane %v10513, 2
        %v10573 = vrot.slane %v10513, 3
        %v10574 = vrot.slane %v10513, 4
        %v10575 = vrot.slane %v10513, 5
        %v10576 = vrot.slane %v10513, 6
        %v10577 = vrot.slane %v10513, 7
        %v10578 = vperm.slane %v10506, 0
        %v10579 = vperm.slane %v10522, 0
        %v10580 = vperm.slane %v10523, 0
        %v10581 = vperm.slane %v10524, 0
        %v10582 = vperm.slane %v10525, 0
        %v10583 = vperm.slane %v10526, 0
        %v10584 = vperm.slane %v10527, 0
        %v10585 = vperm.slane %v10528, 0
        %v10586 = vperm.slane %v10507, 0
        %v10587 = vperm.slane %v10529, 0
        %v10588 = vperm.slane %v10530, 0
        %v10589 = vperm.slane %v10531, 0
        %v10590 = vperm.slane %v10532, 0
        %v10591 = vperm.slane %v10533, 0
        %v10592 = vperm.slane %v10534, 0
        %v10593 = vperm.slane %v10535, 0
        %v10594 = vperm.slane %v10508, 0
        %v10595 = vperm.slane %v10536, 0
        %v10596 = vperm.slane %v10537, 0
        %v10597 = vperm.slane %v10538, 0
        %v10598 = vperm.slane %v10539, 0
        %v10599 = vperm.slane %v10540, 0
        %v10600 = vperm.slane %v10541, 0
        %v10601 = vperm.slane %v10542, 0
        %v10602 = vperm.slane %v10509, 0
        %v10603 = vperm.slane %v10543, 0
        %v10604 = vperm.slane %v10544, 0
        %v10605 = vperm.slane %v10545, 0
        %v10606 = vperm.slane %v10546, 0
        %v10607 = vperm.slane %v10547, 0
        %v10608 = vperm.slane %v10548, 0
        %v10609 = vperm.slane %v10549, 0
        %v10610 = vperm.slane %v10510, 0
        %v10611 = vperm.slane %v10550, 0
        %v10612 = vperm.slane %v10551, 0
        %v10613 = vperm.slane %v10552, 0
        %v10614 = vperm.slane %v10553, 0
        %v10615 = vperm.slane %v10554, 0
        %v10616 = vperm.slane %v10555, 0
        %v10617 = vperm.slane %v10556, 0
        %v10618 = vperm.slane %v10511, 0
        %v10619 = vperm.slane %v10557, 0
        %v10620 = vperm.slane %v10558, 0
        %v10621 = vperm.slane %v10559, 0
        %v10622 = vperm.slane %v10560, 0
        %v10623 = vperm.slane %v10561, 0
        %v10624 = vperm.slane %v10562, 0
        %v10625 = vperm.slane %v10563, 0
        %v10626 = vperm.slane %v10512, 0
        %v10627 = vperm.slane %v10564, 0
        %v10628 = vperm.slane %v10565, 0
        %v10629 = vperm.slane %v10566, 0
        %v10630 = vperm.slane %v10567, 0
        %v10631 = vperm.slane %v10568, 0
        %v10632 = vperm.slane %v10569, 0
        %v10633 = vperm.slane %v10570, 0
        %v10634 = vperm.slane %v10513, 0
        %v10635 = vperm.slane %v10571, 0
        %v10636 = vperm.slane %v10572, 0
        %v10637 = vperm.slane %v10573, 0
        %v10638 = vperm.slane %v10574, 0
        %v10639 = vperm.slane %v10575, 0
        %v10640 = vperm.slane %v10576, 0
        %v10641 = vperm.slane %v10577, 0
        %10642 = vst [vmem:[#allocation1] ss:$4 sm:$0xff] %v10578
        %s10643 = scalar_lea.vmem [#allocation1], 1
        %10644 = vst [vmem:[%s10643] ss:$4 sm:$0xff] %v10579
        %s10645 = scalar_lea.vmem [#allocation1], 2
        %10646 = vst [vmem:[%s10645] ss:$4 sm:$0xff] %v10580
        %s10647 = scalar_lea.vmem [#allocation1], 3
        %10648 = vst [vmem:[%s10647] ss:$4 sm:$0xff] %v10581
        %s10649 = scalar_lea.vmem [#allocation1], 32
        %10650 = vst [vmem:[%s10649] ss:$4 sm:$0xff] %v10582
        %s10651 = scalar_lea.vmem [#allocation1], 33
        %10652 = vst [vmem:[%s10651] ss:$4 sm:$0xff] %v10583
        %s10653 = scalar_lea.vmem [#allocation1], 34
        %10654 = vst [vmem:[%s10653] ss:$4 sm:$0xff] %v10584
        %s10655 = scalar_lea.vmem [#allocation1], 35
        %10656 = vst [vmem:[%s10655] ss:$4 sm:$0xff] %v10585
        %v10657 = vld.sshfl [vmem:[#allocation1] sm:$0xff pattern:$0x73625140]
        %v10658 = vld.sshfl [vmem:[#allocation1 + $0x20] sm:$0xff pattern:$0x73625140]
        %10659 = vst [vmem:[#allocation1] ss:$4 sm:$0xff] %v10578
        %10660 = vst [vmem:[%s10643] ss:$4 sm:$0xff] %v10579
        %10661 = vst [vmem:[%s10645] ss:$4 sm:$0xff] %v10580
        %10662 = vst [vmem:[%s10647] ss:$4 sm:$0xff] %v10581
        %10663 = vst [vmem:[%s10649] ss:$4 sm:$0xff] %v10582
        %10664 = vst [vmem:[%s10651] ss:$4 sm:$0xff] %v10583
        %10665 = vst [vmem:[%s10653] ss:$4 sm:$0xff] %v10584
        %10666 = vst [vmem:[%s10655] ss:$4 sm:$0xff] %v10585
        %v10667 = vld.sshfl [vmem:[#allocation1] sm:$0xff pattern:$0x73625140]
        %v10668 = vld.sshfl [vmem:[#allocation1 + $0x20] sm:$0xff pattern:$0x73625140]
        %10669 = vst [vmem:[#allocation1] ss:$4 sm:$0xff] %v10586
        %10670 = vst [vmem:[%s10643] ss:$4 sm:$0xff] %v10587
        %10671 = vst [vmem:[%s10645] ss:$4 sm:$0xff] %v10588
        %10672 = vst [vmem:[%s10647] ss:$4 sm:$0xff] %v10589
        %10673 = vst [vmem:[%s10649] ss:$4 sm:$0xff] %v10590
        %10674 = vst [vmem:[%s10651] ss:$4 sm:$0xff] %v10591
        %10675 = vst [vmem:[%s10653] ss:$4 sm:$0xff] %v10592
        %10676 = vst [vmem:[%s10655] ss:$4 sm:$0xff] %v10593
        %v10677 = vld.sshfl [vmem:[#allocation1] sm:$0xff pattern:$0x73625140]
        %v10678 = vld.sshfl [vmem:[#allocation1 + $0x20] sm:$0xff pattern:$0x73625140]
        %10679 = vst [vmem:[#allocation1] ss:$4 sm:$0xff] %v10586
        %10680 = vst [vmem:[%s10643] ss:$4 sm:$0xff] %v10587
        %10681 = vst [vmem:[%s10645] ss:$4 sm:$0xff] %v10588
        %10682 = vst [vmem:[%s10647] ss:$4 sm:$0xff] %v10589
        %10683 = vst [vmem:[%s10649] ss:$4 sm:$0xff] %v10590
        %10684 = vst [vmem:[%s10651] ss:$4 sm:$0xff] %v10591
        %10685 = vst [vmem:[%s10653] ss:$4 sm:$0xff] %v10592
        %10686 = vst [vmem:[%s10655] ss:$4 sm:$0xff] %v10593
        %v10687 = vld.sshfl [vmem:[#allocation1] sm:$0xff pattern:$0x73625140]
        %v10688 = vld.sshfl [vmem:[#allocation1 + $0x20] sm:$0xff pattern:$0x73625140]
        %10689 = vst [vmem:[#allocation1] ss:$4 sm:$0xff] %v10594
        %10690 = vst [vmem:[%s10643] ss:$4 sm:$0xff] %v10595
        %10691 = vst [vmem:[%s10645] ss:$4 sm:$0xff] %v10596
        %10692 = vst [vmem:[%s10647] ss:$4 sm:$0xff] %v10597
        %10693 = vst [vmem:[%s10649] ss:$4 sm:$0xff] %v10598
        %10694 = vst [vmem:[%s10651] ss:$4 sm:$0xff] %v10599
        %10695 = vst [vmem:[%s10653] ss:$4 sm:$0xff] %v10600
        %10696 = vst [vmem:[%s10655] ss:$4 sm:$0xff] %v10601
        %v10697 = vld.sshfl [vmem:[#allocation1] sm:$0xff pattern:$0x73625140]
        %v10698 = vld.sshfl [vmem:[#allocation1 + $0x20] sm:$0xff pattern:$0x73625140]
        %10699 = vst [vmem:[#allocation1] ss:$4 sm:$0xff] %v10594
        %10700 = vst [vmem:[%s10643] ss:$4 sm:$0xff] %v10595
        %10701 = vst [vmem:[%s10645] ss:$4 sm:$0xff] %v10596
        %10702 = vst [vmem:[%s10647] ss:$4 sm:$0xff] %v10597
        %10703 = vst [vmem:[%s10649] ss:$4 sm:$0xff] %v10598
        %10704 = vst [vmem:[%s10651] ss:$4 sm:$0xff] %v10599
        %10705 = vst [vmem:[%s10653] ss:$4 sm:$0xff] %v10600
        %10706 = vst [vmem:[%s10655] ss:$4 sm:$0xff] %v10601
        %v10707 = vld.sshfl [vmem:[#allocation1] sm:$0xff pattern:$0x73625140]
        %v10708 = vld.sshfl [vmem:[#allocation1 + $0x20] sm:$0xff pattern:$0x73625140]
        %10709 = vst [vmem:[#allocation1] ss:$4 sm:$0xff] %v10602
        %10710 = vst [vmem:[%s10643] ss:$4 sm:$0xff] %v10603
        %10711 = vst [vmem:[%s10645] ss:$4 sm:$0xff] %v10604
        %10712 = vst [vmem:[%s10647] ss:$4 sm:$0xff] %v10605
        %10713 = vst [vmem:[%s10649] ss:$4 sm:$0xff] %v10606
        %10714 = vst [vmem:[%s10651] ss:$4 sm:$0xff] %v10607
        %10715 = vst [vmem:[%s10653] ss:$4 sm:$0xff] %v10608
        %10716 = vst [vmem:[%s10655] ss:$4 sm:$0xff] %v10609
        %v10717 = vld.sshfl [vmem:[#allocation1] sm:$0xff pattern:$0x73625140]
        %v10718 = vld.sshfl [vmem:[#allocation1 + $0x20] sm:$0xff pattern:$0x73625140]
        %10719 = vst [vmem:[#allocation1] ss:$4 sm:$0xff] %v10602
        %10720 = vst [vmem:[%s10643] ss:$4 sm:$0xff] %v10603
        %10721 = vst [vmem:[%s10645] ss:$4 sm:$0xff] %v10604
        %10722 = vst [vmem:[%s10647] ss:$4 sm:$0xff] %v10605
        %10723 = vst [vmem:[%s10649] ss:$4 sm:$0xff] %v10606
        %10724 = vst [vmem:[%s10651] ss:$4 sm:$0xff] %v10607
        %10725 = vst [vmem:[%s10653] ss:$4 sm:$0xff] %v10608
        %10726 = vst [vmem:[%s10655] ss:$4 sm:$0xff] %v10609
        %v10727 = vld.sshfl [vmem:[#allocation1] sm:$0xff pattern:$0x73625140]
        %v10728 = vld.sshfl [vmem:[#allocation1 + $0x20] sm:$0xff pattern:$0x73625140]
        %10729 = vst [vmem:[#allocation1] ss:$4 sm:$0xff] %v10610
        %10730 = vst [vmem:[%s10643] ss:$4 sm:$0xff] %v10611
        %10731 = vst [vmem:[%s10645] ss:$4 sm:$0xff] %v10612
        %10732 = vst [vmem:[%s10647] ss:$4 sm:$0xff] %v10613
        %10733 = vst [vmem:[%s10649] ss:$4 sm:$0xff] %v10614
        %10734 = vst [vmem:[%s10651] ss:$4 sm:$0xff] %v10615
        %10735 = vst [vmem:[%s10653] ss:$4 sm:$0xff] %v10616
        %10736 = vst [vmem:[%s10655] ss:$4 sm:$0xff] %v10617
        %v10737 = vld.sshfl [vmem:[#allocation1] sm:$0xff pattern:$0x73625140]
        %v10738 = vld.sshfl [vmem:[#allocation1 + $0x20] sm:$0xff pattern:$0x73625140]
        %10739 = vst [vmem:[#allocation1] ss:$4 sm:$0xff] %v10610
        %10740 = vst [vmem:[%s10643] ss:$4 sm:$0xff] %v10611
        %10741 = vst [vmem:[%s10645] ss:$4 sm:$0xff] %v10612
        %10742 = vst [vmem:[%s10647] ss:$4 sm:$0xff] %v10613
        %10743 = vst [vmem:[%s10649] ss:$4 sm:$0xff] %v10614
        %10744 = vst [vmem:[%s10651] ss:$4 sm:$0xff] %v10615
        %10745 = vst [vmem:[%s10653] ss:$4 sm:$0xff] %v10616
        %10746 = vst [vmem:[%s10655] ss:$4 sm:$0xff] %v10617
        %v10747 = vld.sshfl [vmem:[#allocation1] sm:$0xff pattern:$0x73625140]
        %v10748 = vld.sshfl [vmem:[#allocation1 + $0x20] sm:$0xff pattern:$0x73625140]
        %10749 = vst [vmem:[#allocation1] ss:$4 sm:$0xff] %v10618
        %10750 = vst [vmem:[%s10643] ss:$4 sm:$0xff] %v10619
        %10751 = vst [vmem:[%s10645] ss:$4 sm:$0xff] %v10620
        %10752 = vst [vmem:[%s10647] ss:$4 sm:$0xff] %v10621
        %10753 = vst [vmem:[%s10649] ss:$4 sm:$0xff] %v10622
        %10754 = vst [vmem:[%s10651] ss:$4 sm:$0xff] %v10623
        %10755 = vst [vmem:[%s10653] ss:$4 sm:$0xff] %v10624
        %10756 = vst [vmem:[%s10655] ss:$4 sm:$0xff] %v10625
        %v10757 = vld.sshfl [vmem:[#allocation1] sm:$0xff pattern:$0x73625140]
        %v10758 = vld.sshfl [vmem:[#allocation1 + $0x20] sm:$0xff pattern:$0x73625140]
        %10759 = vst [vmem:[#allocation1] ss:$4 sm:$0xff] %v10618
        %10760 = vst [vmem:[%s10643] ss:$4 sm:$0xff] %v10619
        %10761 = vst [vmem:[%s10645] ss:$4 sm:$0xff] %v10620
        %10762 = vst [vmem:[%s10647] ss:$4 sm:$0xff] %v10621
        %10763 = vst [vmem:[%s10649] ss:$4 sm:$0xff] %v10622
        %10764 = vst [vmem:[%s10651] ss:$4 sm:$0xff] %v10623
        %10765 = vst [vmem:[%s10653] ss:$4 sm:$0xff] %v10624
        %10766 = vst [vmem:[%s10655] ss:$4 sm:$0xff] %v10625
        %v10767 = vld.sshfl [vmem:[#allocation1] sm:$0xff pattern:$0x73625140]
        %v10768 = vld.sshfl [vmem:[#allocation1 + $0x20] sm:$0xff pattern:$0x73625140]
        %10769 = vst [vmem:[#allocation1] ss:$4 sm:$0xff] %v10626
        %10770 = vst [vmem:[%s10643] ss:$4 sm:$0xff] %v10627
        %10771 = vst [vmem:[%s10645] ss:$4 sm:$0xff] %v10628
        %10772 = vst [vmem:[%s10647] ss:$4 sm:$0xff] %v10629
        %10773 = vst [vmem:[%s10649] ss:$4 sm:$0xff] %v10630
        %10774 = vst [vmem:[%s10651] ss:$4 sm:$0xff] %v10631
        %10775 = vst [vmem:[%s10653] ss:$4 sm:$0xff] %v10632
        %10776 = vst [vmem:[%s10655] ss:$4 sm:$0xff] %v10633
        %v10777 = vld.sshfl [vmem:[#allocation1] sm:$0xff pattern:$0x73625140]
        %v10778 = vld.sshfl [vmem:[#allocation1 + $0x20] sm:$0xff pattern:$0x73625140]
        %10779 = vst [vmem:[#allocation1] ss:$4 sm:$0xff] %v10626
        %10780 = vst [vmem:[%s10643] ss:$4 sm:$0xff] %v10627
        %10781 = vst [vmem:[%s10645] ss:$4 sm:$0xff] %v10628
        %10782 = vst [vmem:[%s10647] ss:$4 sm:$0xff] %v10629
        %10783 = vst [vmem:[%s10649] ss:$4 sm:$0xff] %v10630
        %10784 = vst [vmem:[%s10651] ss:$4 sm:$0xff] %v10631
        %10785 = vst [vmem:[%s10653] ss:$4 sm:$0xff] %v10632
        %10786 = vst [vmem:[%s10655] ss:$4 sm:$0xff] %v10633
        %v10787 = vld.sshfl [vmem:[#allocation1] sm:$0xff pattern:$0x73625140]
        %v10788 = vld.sshfl [vmem:[#allocation1 + $0x20] sm:$0xff pattern:$0x73625140]
        %10789 = vst [vmem:[#allocation1] ss:$4 sm:$0xff] %v10634
        %10790 = vst [vmem:[%s10643] ss:$4 sm:$0xff] %v10635
        %10791 = vst [vmem:[%s10645] ss:$4 sm:$0xff] %v10636
        %10792 = vst [vmem:[%s10647] ss:$4 sm:$0xff] %v10637
        %10793 = vst [vmem:[%s10649] ss:$4 sm:$0xff] %v10638
        %10794 = vst [vmem:[%s10651] ss:$4 sm:$0xff] %v10639
        %10795 = vst [vmem:[%s10653] ss:$4 sm:$0xff] %v10640
        %10796 = vst [vmem:[%s10655] ss:$4 sm:$0xff] %v10641
        %v10797 = vld.sshfl [vmem:[#allocation1] sm:$0xff pattern:$0x73625140]
        %v10798 = vld.sshfl [vmem:[#allocation1 + $0x20] sm:$0xff pattern:$0x73625140]
        %10799 = vst [vmem:[#allocation1] ss:$4 sm:$0xff] %v10634
        %10800 = vst [vmem:[%s10643] ss:$4 sm:$0xff] %v10635
        %10801 = vst [vmem:[%s10645] ss:$4 sm:$0xff] %v10636
        %10802 = vst [vmem:[%s10647] ss:$4 sm:$0xff] %v10637
        %10803 = vst [vmem:[%s10649] ss:$4 sm:$0xff] %v10638
        %10804 = vst [vmem:[%s10651] ss:$4 sm:$0xff] %v10639
        %10805 = vst [vmem:[%s10653] ss:$4 sm:$0xff] %v10640
        %10806 = vst [vmem:[%s10655] ss:$4 sm:$0xff] %v10641
        %v10807 = vld.sshfl [vmem:[#allocation1] sm:$0xff pattern:$0x73625140]
        %v10808 = vld.sshfl [vmem:[#allocation1 + $0x20] sm:$0xff pattern:$0x73625140]
        %10841 = vrot.lane.b32.xlu0 %v6824, 32
        %v10842 = vpop.permute.xlu0 %10841
        %10843 = vrot.lane.b32.xlu0 %v6825, 32
        %v10844 = vpop.permute.xlu0 %10843
        %10845 = vrot.lane.b32.xlu0 %v6826, 32
        %v10846 = vpop.permute.xlu0 %10845
        %10847 = vrot.lane.b32.xlu0 %v6827, 32
        %v10848 = vpop.permute.xlu0 %10847
        %10849 = vrot.lane.b32.xlu0 %v6828, 32
        %v10850 = vpop.permute.xlu0 %10849
        %10851 = vrot.lane.b32.xlu0 %v6829, 32
        %v10852 = vpop.permute.xlu0 %10851
        %10853 = vrot.lane.b32.xlu0 %v6830, 32
        %v10854 = vpop.permute.xlu0 %10853
        %10855 = vrot.lane.b32.xlu0 %v6831, 32
        %v10856 = vpop.permute.xlu0 %10855
        %10857 = vrot.lane.b32.xlu0 %v6832, 32
        %v10858 = vpop.permute.xlu0 %10857
        %10859 = vrot.lane.b32.xlu0 %v6833, 32
        %v10860 = vpop.permute.xlu0 %10859
        %10861 = vrot.lane.b32.xlu0 %v6834, 32
        %v10862 = vpop.permute.xlu0 %10861
        %10863 = vrot.lane.b32.xlu0 %v6835, 32
        %v10864 = vpop.permute.xlu0 %10863
        %10865 = vrot.lane.b32.xlu0 %v6836, 32
        %v10866 = vpop.permute.xlu0 %10865
        %10867 = vrot.lane.b32.xlu0 %v6837, 32
        %v10868 = vpop.permute.xlu0 %10867
        %10869 = vrot.lane.b32.xlu0 %v6838, 32
        %v10870 = vpop.permute.xlu0 %10869
        %10871 = vrot.lane.b32.xlu0 %v6839, 32
        %v10872 = vpop.permute.xlu0 %10871
        %10873 = vrot.lane.b32.xlu0 %v6840, 32
        %v10874 = vpop.permute.xlu0 %10873
        %10875 = vrot.lane.b32.xlu0 %v6841, 32
        %v10876 = vpop.permute.xlu0 %10875
        %10877 = vrot.lane.b32.xlu0 %v6842, 32
        %v10878 = vpop.permute.xlu0 %10877
        %10879 = vrot.lane.b32.xlu0 %v6843, 32
        %v10880 = vpop.permute.xlu0 %10879
        %10881 = vrot.lane.b32.xlu0 %v6844, 32
        %v10882 = vpop.permute.xlu0 %10881
        %10883 = vrot.lane.b32.xlu0 %v6845, 32
        %v10884 = vpop.permute.xlu0 %10883
        %10885 = vrot.lane.b32.xlu0 %v6846, 32
        %v10886 = vpop.permute.xlu0 %10885
        %10887 = vrot.lane.b32.xlu0 %v6847, 32
        %v10888 = vpop.permute.xlu0 %10887
        %10889 = vrot.lane.b32.xlu0 %v6848, 32
        %v10890 = vpop.permute.xlu0 %10889
        %10891 = vrot.lane.b32.xlu0 %v6849, 32
        %v10892 = vpop.permute.xlu0 %10891
        %10893 = vrot.lane.b32.xlu0 %v6850, 32
        %v10894 = vpop.permute.xlu0 %10893
        %10895 = vrot.lane.b32.xlu0 %v6851, 32
        %v10896 = vpop.permute.xlu0 %10895
        %10897 = vrot.lane.b32.xlu0 %v6852, 32
        %v10898 = vpop.permute.xlu0 %10897
        %10899 = vrot.lane.b32.xlu0 %v6853, 32
        %v10900 = vpop.permute.xlu0 %10899
        %10901 = vrot.lane.b32.xlu0 %v6854, 32
        %v10902 = vpop.permute.xlu0 %10901
        %10903 = vrot.lane.b32.xlu0 %v6855, 32
        %v10904 = vpop.permute.xlu0 %10903
        %v10937 = vsel %vm2482, %v10657, %v10842
        %v10938 = vsel %vm2482, %v10658, %v10844
        %v10939 = vsel %vm2482, %v10667, %v10846
        %v10940 = vsel %vm2482, %v10668, %v10848
        %v10941 = vsel %vm2482, %v10677, %v10850
        %v10942 = vsel %vm2482, %v10678, %v10852
        %v10943 = vsel %vm2482, %v10687, %v10854
        %v10944 = vsel %vm2482, %v10688, %v10856
        %v10945 = vsel %vm2482, %v10697, %v10858
        %v10946 = vsel %vm2482, %v10698, %v10860
        %v10947 = vsel %vm2482, %v10707, %v10862
        %v10948 = vsel %vm2482, %v10708, %v10864
        %v10949 = vsel %vm2482, %v10717, %v10866
        %v10950 = vsel %vm2482, %v10718, %v10868
        %v10951 = vsel %vm2482, %v10727, %v10870
        %v10952 = vsel %vm2482, %v10728, %v10872
        %v10953 = vsel %vm2482, %v10737, %v10874
        %v10954 = vsel %vm2482, %v10738, %v10876
        %v10955 = vsel %vm2482, %v10747, %v10878
        %v10956 = vsel %vm2482, %v10748, %v10880
        %v10957 = vsel %vm2482, %v10757, %v10882
        %v10958 = vsel %vm2482, %v10758, %v10884
        %v10959 = vsel %vm2482, %v10767, %v10886
        %v10960 = vsel %vm2482, %v10768, %v10888
        %v10961 = vsel %vm2482, %v10777, %v10890
        %v10962 = vsel %vm2482, %v10778, %v10892
        %v10963 = vsel %vm2482, %v10787, %v10894
        %v10964 = vsel %vm2482, %v10788, %v10896
        %v10965 = vsel %vm2482, %v10797, %v10898
        %v10966 = vsel %vm2482, %v10798, %v10900
        %v10967 = vsel %vm2482, %v10807, %v10902
        %v10968 = vsel %vm2482, %v10808, %v10904
        %v10969 = vpack.c.bf16 %v10938, %v10937
        %v10970 = vpack.c.bf16 %v10940, %v10939
        %v10971 = vpack.c.bf16 %v10942, %v10941
        %v10972 = vpack.c.bf16 %v10944, %v10943
        %v10973 = vpack.c.bf16 %v10946, %v10945
        %v10974 = vpack.c.bf16 %v10948, %v10947
        %v10975 = vpack.c.bf16 %v10950, %v10949
        %v10976 = vpack.c.bf16 %v10952, %v10951
        %v10977 = vpack.c.bf16 %v10954, %v10953
        %v10978 = vpack.c.bf16 %v10956, %v10955
        %v10979 = vpack.c.bf16 %v10958, %v10957
        %v10980 = vpack.c.bf16 %v10960, %v10959
        %v10981 = vpack.c.bf16 %v10962, %v10961
        %v10982 = vpack.c.bf16 %v10964, %v10963
        %v10983 = vpack.c.bf16 %v10966, %v10965
        %v10984 = vpack.c.bf16 %v10968, %v10967
        %v10985 = vld [vmem:[%s26] sm:$0xf]
        %v10986 = vld [vmem:[%s26 + $0x4] sm:$0xf]
        %v10987 = vld [vmem:[%s26 + $0x8] sm:$0xf]
        %v10988 = vld [vmem:[%s26 + $0xc] sm:$0xf]
        %v10989 = vld [vmem:[%s26 + $0x10] sm:$0xf]
        %v10990 = vld [vmem:[%s26 + $0x14] sm:$0xf]
        %v10991 = vld [vmem:[%s25] sm:$0x1]
        %v10993 = vperm.slane %v10991, 0
        %v11001 = vunpack.c.l.b16 %v10985
        %v11002 = vunpack.c.l.b16 %v10986
        %v11003 = vunpack.c.l.b16 %v10987
        %v11004 = vunpack.c.l.b16 %v10988
        %v11005 = vunpack.c.l.b16 %v10989
        %v11006 = vunpack.c.l.b16 %v10990
        %v11007 = vpack.c.b16 %v11002, %v11001
        %v11008 = vpack.c.b16 %v11004, %v11003
        %v11009 = vpack.c.b16 %v11006, %v11005
        %v11014 = vsel %vm4320, %v10969, 0
        %v11017 = vsel %vm4320, %v10970, 0
        %v11020 = vsel %vm4320, %v10971, 0
        %v11023 = vsel %vm4320, %v10972, 0
        %v11026 = vsel %vm4320, %v10973, 0
        %v11029 = vsel %vm4320, %v10974, 0
        %v11032 = vsel %vm4320, %v10975, 0
        %v11035 = vsel %vm4320, %v10976, 0
        %v11038 = vsel %vm4320, %v10977, 0
        %v11041 = vsel %vm4320, %v10978, 0
        %v11044 = vsel %vm4320, %v10979, 0
        %v11047 = vsel %vm4320, %v10980, 0
        %v11050 = vsel %vm4320, %v10981, 0
        %v11053 = vsel %vm4320, %v10982, 0
        %v11056 = vsel %vm4320, %v10983, 0
        %v11059 = vsel %vm4320, %v10984, 0
        %11061 = vmatpush.bf16.msra.mxu0 0
        %11062 = vmatpush.bf16.msra.mxu0 0
        %11063 = vmatpush.bf16.msra.mxu0 0
        %11064 = vmatpush.bf16.msra.mxu0 0
        %11065 = vmatpush.bf16.msra.mxu0 0
        %11066 = vmatpush.bf16.msra.mxu0 %v11009
        %11067 = vmatpush.bf16.msra.mxu0 %v11008
        %11068 = vmatpush.bf16.msra.mxu0 %v11007
        %11069 = vmatmul.bf16.gmra.mxu0 %v11014
        %v11070 = vpop.f32.mrf.mxu0
        %v11071 = vadd.f32 %v10993, %v11070
        %v11072 = vpop.f32.mrf.mxu0
        %v11073 = vadd.f32 %v10993, %v11072
        %11074 = vmatmul.bf16.gmra.mxu0 %v11017
        %v11075 = vpop.f32.mrf.mxu0
        %v11076 = vadd.f32 %v10993, %v11075
        %v11077 = vpop.f32.mrf.mxu0
        %v11078 = vadd.f32 %v10993, %v11077
        %11079 = vmatmul.bf16.gmra.mxu0 %v11020
        %v11080 = vpop.f32.mrf.mxu0
        %v11081 = vadd.f32 %v10993, %v11080
        %v11082 = vpop.f32.mrf.mxu0
        %v11083 = vadd.f32 %v10993, %v11082
        %11084 = vmatmul.bf16.gmra.mxu0 %v11023
        %v11085 = vpop.f32.mrf.mxu0
        %v11086 = vadd.f32 %v10993, %v11085
        %v11087 = vpop.f32.mrf.mxu0
        %v11088 = vadd.f32 %v10993, %v11087
        %11089 = vmatmul.bf16.gmra.mxu0 %v11026
        %v11090 = vpop.f32.mrf.mxu0
        %v11091 = vadd.f32 %v10993, %v11090
        %v11092 = vpop.f32.mrf.mxu0
        %v11093 = vadd.f32 %v10993, %v11092
        %11094 = vmatmul.bf16.gmra.mxu0 %v11029
        %v11095 = vpop.f32.mrf.mxu0
        %v11096 = vadd.f32 %v10993, %v11095
        %v11097 = vpop.f32.mrf.mxu0
        %v11098 = vadd.f32 %v10993, %v11097
        %11099 = vmatmul.bf16.gmra.mxu0 %v11032
        %v11100 = vpop.f32.mrf.mxu0
        %v11101 = vadd.f32 %v10993, %v11100
        %v11102 = vpop.f32.mrf.mxu0
        %v11103 = vadd.f32 %v10993, %v11102
        %11104 = vmatmul.bf16.gmra.mxu0 %v11035
        %v11105 = vpop.f32.mrf.mxu0
        %v11106 = vadd.f32 %v10993, %v11105
        %v11107 = vpop.f32.mrf.mxu0
        %v11108 = vadd.f32 %v10993, %v11107
        %11109 = vmatmul.bf16.gmra.mxu0 %v11038
        %v11110 = vpop.f32.mrf.mxu0
        %v11111 = vadd.f32 %v10993, %v11110
        %v11112 = vpop.f32.mrf.mxu0
        %v11113 = vadd.f32 %v10993, %v11112
        %11114 = vmatmul.bf16.gmra.mxu0 %v11041
        %v11115 = vpop.f32.mrf.mxu0
        %v11116 = vadd.f32 %v10993, %v11115
        %v11117 = vpop.f32.mrf.mxu0
        %v11118 = vadd.f32 %v10993, %v11117
        %11119 = vmatmul.bf16.gmra.mxu0 %v11044
        %v11120 = vpop.f32.mrf.mxu0
        %v11121 = vadd.f32 %v10993, %v11120
        %v11122 = vpop.f32.mrf.mxu0
        %v11123 = vadd.f32 %v10993, %v11122
        %11124 = vmatmul.bf16.gmra.mxu0 %v11047
        %v11125 = vpop.f32.mrf.mxu0
        %v11126 = vadd.f32 %v10993, %v11125
        %v11127 = vpop.f32.mrf.mxu0
        %v11128 = vadd.f32 %v10993, %v11127
        %11129 = vmatmul.bf16.gmra.mxu0 %v11050
        %v11130 = vpop.f32.mrf.mxu0
        %v11131 = vadd.f32 %v10993, %v11130
        %v11132 = vpop.f32.mrf.mxu0
        %v11133 = vadd.f32 %v10993, %v11132
        %11134 = vmatmul.bf16.gmra.mxu0 %v11053
        %v11135 = vpop.f32.mrf.mxu0
        %v11136 = vadd.f32 %v10993, %v11135
        %v11137 = vpop.f32.mrf.mxu0
        %v11138 = vadd.f32 %v10993, %v11137
        %11139 = vmatmul.bf16.gmra.mxu0 %v11056
        %v11140 = vpop.f32.mrf.mxu0
        %v11141 = vadd.f32 %v10993, %v11140
        %v11142 = vpop.f32.mrf.mxu0
        %v11143 = vadd.f32 %v10993, %v11142
        %11144 = vmatmul.bf16.gmra.mxu0 %v11059
        %v11145 = vpop.f32.mrf.mxu0
        %v11146 = vadd.f32 %v10993, %v11145
        %v11147 = vpop.f32.mrf.mxu0
        %v11148 = vadd.f32 %v10993, %v11147
        %11149 = vdwg.mxu0
        %v11150 = vmul.f32 %v11071, 0.1
        %v11151 = vmul.f32 %v11073, 0.1
        %v11152 = vmul.f32 %v11076, 0.1
        %v11153 = vmul.f32 %v11078, 0.1
        %v11154 = vmul.f32 %v11081, 0.1
        %v11155 = vmul.f32 %v11083, 0.1
        %v11156 = vmul.f32 %v11086, 0.1
        %v11157 = vmul.f32 %v11088, 0.1
        %v11158 = vmul.f32 %v11091, 0.1
        %v11159 = vmul.f32 %v11093, 0.1
        %v11160 = vmul.f32 %v11096, 0.1
        %v11161 = vmul.f32 %v11098, 0.1
        %v11162 = vmul.f32 %v11101, 0.1
        %v11163 = vmul.f32 %v11103, 0.1
        %v11164 = vmul.f32 %v11106, 0.1
        %v11165 = vmul.f32 %v11108, 0.1
        %v11166 = vmul.f32 %v11111, 0.1
        %v11167 = vmul.f32 %v11113, 0.1
        %v11168 = vmul.f32 %v11116, 0.1
        %v11169 = vmul.f32 %v11118, 0.1
        %v11170 = vmul.f32 %v11121, 0.1
        %v11171 = vmul.f32 %v11123, 0.1
        %v11172 = vmul.f32 %v11126, 0.1
        %v11173 = vmul.f32 %v11128, 0.1
        %v11174 = vmul.f32 %v11131, 0.1
        %v11175 = vmul.f32 %v11133, 0.1
        %v11176 = vmul.f32 %v11136, 0.1
        %v11177 = vmul.f32 %v11138, 0.1
        %v11178 = vmul.f32 %v11141, 0.1
        %v11179 = vmul.f32 %v11143, 0.1
        %v11180 = vmul.f32 %v11146, 0.1
        %v11181 = vmul.f32 %v11148, 0.1
        %v11182 = vmax.f32 %v11071, %v11150
        %v11183 = vmax.f32 %v11073, %v11151
        %v11184 = vmax.f32 %v11076, %v11152
        %v11185 = vmax.f32 %v11078, %v11153
        %v11186 = vmax.f32 %v11081, %v11154
        %v11187 = vmax.f32 %v11083, %v11155
        %v11188 = vmax.f32 %v11086, %v11156
        %v11189 = vmax.f32 %v11088, %v11157
        %v11190 = vmax.f32 %v11091, %v11158
        %v11191 = vmax.f32 %v11093, %v11159
        %v11192 = vmax.f32 %v11096, %v11160
        %v11193 = vmax.f32 %v11098, %v11161
        %v11194 = vmax.f32 %v11101, %v11162
        %v11195 = vmax.f32 %v11103, %v11163
        %v11196 = vmax.f32 %v11106, %v11164
        %v11197 = vmax.f32 %v11108, %v11165
        %v11198 = vmax.f32 %v11111, %v11166
        %v11199 = vmax.f32 %v11113, %v11167
        %v11200 = vmax.f32 %v11116, %v11168
        %v11201 = vmax.f32 %v11118, %v11169
        %v11202 = vmax.f32 %v11121, %v11170
        %v11203 = vmax.f32 %v11123, %v11171
        %v11204 = vmax.f32 %v11126, %v11172
        %v11205 = vmax.f32 %v11128, %v11173
        %v11206 = vmax.f32 %v11131, %v11174
        %v11207 = vmax.f32 %v11133, %v11175
        %v11208 = vmax.f32 %v11136, %v11176
        %v11209 = vmax.f32 %v11138, %v11177
        %v11210 = vmax.f32 %v11141, %v11178
        %v11211 = vmax.f32 %v11143, %v11179
        %v11212 = vmax.f32 %v11146, %v11180
        %v11213 = vmax.f32 %v11148, %v11181
        %11214 = vst.msk [vmem:[%s811] sm:$0xff] %vm850, %v11182
        %11215 = vst.msk [vmem:[%s811 + $0x8] sm:$0xff] %vm850, %v11183
        %11216 = vst.msk [vmem:[%s811 + $0x10] sm:$0xff] %vm850, %v11184
        %11217 = vst.msk [vmem:[%s811 + $0x18] sm:$0xff] %vm850, %v11185
        %11218 = vst.msk [vmem:[%s811 + $0x20] sm:$0xff] %vm850, %v11186
        %11219 = vst.msk [vmem:[%s811 + $0x28] sm:$0xff] %vm850, %v11187
        %11220 = vst.msk [vmem:[%s811 + $0x30] sm:$0xff] %vm850, %v11188
        %11221 = vst.msk [vmem:[%s811 + $0x38] sm:$0xff] %vm850, %v11189
        %11222 = vst.msk [vmem:[%s811 + $0x40] sm:$0xff] %vm850, %v11190
        %11223 = vst.msk [vmem:[%s811 + $0x48] sm:$0xff] %vm850, %v11191
        %11224 = vst.msk [vmem:[%s811 + $0x50] sm:$0xff] %vm850, %v11192
        %11225 = vst.msk [vmem:[%s811 + $0x58] sm:$0xff] %vm850, %v11193
        %11226 = vst.msk [vmem:[%s811 + $0x60] sm:$0xff] %vm850, %v11194
        %11227 = vst.msk [vmem:[%s811 + $0x68] sm:$0xff] %vm850, %v11195
        %11228 = vst.msk [vmem:[%s811 + $0x70] sm:$0xff] %vm850, %v11196
        %11229 = vst.msk [vmem:[%s811 + $0x78] sm:$0xff] %vm850, %v11197
        %11230 = vst.msk [vmem:[%s811 + $0x80] sm:$0xff] %vm850, %v11198
        %11231 = vst.msk [vmem:[%s811 + $0x88] sm:$0xff] %vm850, %v11199
        %11232 = vst.msk [vmem:[%s811 + $0x90] sm:$0xff] %vm850, %v11200
        %11233 = vst.msk [vmem:[%s811 + $0x98] sm:$0xff] %vm850, %v11201
        %11234 = vst.msk [vmem:[%s811 + $0xa0] sm:$0xff] %vm850, %v11202
        %11235 = vst.msk [vmem:[%s811 + $0xa8] sm:$0xff] %vm850, %v11203
        %11236 = vst.msk [vmem:[%s811 + $0xb0] sm:$0xff] %vm850, %v11204
        %11237 = vst.msk [vmem:[%s811 + $0xb8] sm:$0xff] %vm850, %v11205
        %11238 = vst.msk [vmem:[%s811 + $0xc0] sm:$0xff] %vm850, %v11206
        %11239 = vst.msk [vmem:[%s811 + $0xc8] sm:$0xff] %vm850, %v11207
        %11240 = vst.msk [vmem:[%s811 + $0xd0] sm:$0xff] %vm850, %v11208
        %11241 = vst.msk [vmem:[%s811 + $0xd8] sm:$0xff] %vm850, %v11209
        %11242 = vst.msk [vmem:[%s811 + $0xe0] sm:$0xff] %vm850, %v11210
        %11243 = vst.msk [vmem:[%s811 + $0xe8] sm:$0xff] %vm850, %v11211
        %11244 = vst.msk [vmem:[%s811 + $0xf0] sm:$0xff] %vm850, %v11212
        %11245 = vst.msk [vmem:[%s811 + $0xf8] sm:$0xff] %vm850, %v11213
        %s11246 = sand.u32 %s621, 1
        %s11247 = scalar_lea.sflag [#allocation4], %s11246
        %s11248 = sand.u32 %s621, 1
        %s11249 = smul.addr %s11248, 256
        %s11250 = scalar_lea.vmem [#allocation3], %s11249
        // Predicated region
        $region129: #{tpu_custom_call.1} parent=127 // pred_check
          %p11251 = pneg %p631
        $region130: #{tpu_custom_call.1} parent=127 // pred_check_branch
          %11253 = sbr.rel (%p11251) target = $region132
        $region131: #{tpu_custom_call.1} parent=127 // pred_region
          %11255 = vsyncadd %s11247, 0
          %s11256 = smul.addr %s41, 32
          %s11257 = smul.addr %s11256, 8
          %s11258 = scalar_lea.hbm %s27, %s11257
          %s11259 = sshll.u32 %s11250, 4
          %s11260 = int_to_ptr.vmem [resolvable:$true] %s11259
          %s11261 = sshll.u32 %s11258, 4
          %s11262 = int_to_ptr.hbm [resolvable:$true] %s11261
          %11267 = dma.vmem_to_hbm [thread:$0]  %s11260, 4096, %s11262, %s11247, 128, 128, 8
        $region132: #{tpu_custom_call.1} parent=127 // pred_fallthru
          _
      $region128: #{tpu_custom_call.1} parent=5 // pred_fallthru
        _
      %p11268 = scmp.le.s32.totalorder 2, %s36
      // Predicated region
      $region133: #{tpu_custom_call.1} parent=5 // pred_check
        %p11269 = pneg %p11268
      $region134: #{tpu_custom_call.1} parent=5 // pred_check_branch
        %11271 = sbr.rel (%p11269) target = $region136
      $region135: #{tpu_custom_call.1} parent=5 // pred_region
        %s11272 = ssub.s32 %s36, 2
        // Predicated region
        $region137: #{tpu_custom_call.1} parent=135 // pred_check
          %p11273 = pneg %p637
        $region138: #{tpu_custom_call.1} parent=135 // pred_check_branch
          %11275 = sbr.rel (%p11273) target = $region140
        $region139: #{tpu_custom_call.1} parent=135 // pred_region
          %s11276 = sand.u32 %s622, 1
          %s11277 = scalar_lea.sflag [#allocation4], %s11276
          %s11278 = sand.u32 %s622, 1
          %s11279 = smul.addr %s11278, 256
          %s11280 = scalar_lea.vmem [#allocation3], %s11279
          %11282 = dma.done %s11277, 4096
        $region140: #{tpu_custom_call.1} parent=135 // pred_fallthru
          _
      $region136: #{tpu_custom_call.1} parent=5 // pred_fallthru
        _
    $region6: #{tpu_custom_call.1} parent=1 // loop_footer
      %s40 = sadd.s32 1, %s36
    $region7: #{tpu_custom_call.1} parent=1 // loop_footer_branch
      %35 = sbr.rel target = $region3
    $region8: #{tpu_custom_call.1} parent=1 // loop_exit
      _
    %11283 = vsyncpa [#allocation4], 1
    %s11284 = scalar_lea.sflag [#allocation4], 1
    %11285 = vsyncpa %s11284, 1

</llo_original>
